<compile_context>
chip_gen: v7x
topology: tpu7x:2x2x1
jax: 0.10.0
libtpu: 0.0.40
codegen_flags: <defaults>
</compile_context>

<pallas_src>
import functools
import math

import jax
import jax.numpy as jnp
from jax.experimental import pallas as pl
from jax.experimental.pallas import tpu as pltpu


_VMEM_LIMIT = 32 * 1024 * 1024  # conservative scoped-VMEM cap; fits v7x's 64 MiB physical


# -----------------------------------------------------------------------------
# Pallas kernels
# -----------------------------------------------------------------------------
def _mm_kernel(a_ref, b_ref, bias_ref, o_ref, acc_ref, *, relu):
    """Tiled GEMM with fp32 accumulator scratch and fused bias(+ReLU) epilogue."""
    k = pl.program_id(2)

    @pl.when(k == 0)
    def _init():
        acc_ref[...] = jnp.zeros_like(acc_ref)

    acc_ref[...] += jnp.dot(a_ref[...], b_ref[...],
                            preferred_element_type=jnp.float32)

    @pl.when(k == pl.num_programs(2) - 1)
    def _store():
        out = acc_ref[...] + bias_ref[...]
        if relu:
            out = jnp.maximum(out, 0.0)
        o_ref[...] = out.astype(o_ref.dtype)


def _ln_kernel(x_ref, g_ref, b_ref, o_ref):
    x = x_ref[...].astype(jnp.float32)
    mean = jnp.mean(x, axis=-1, keepdims=True)
    xc = x - mean
    var = jnp.mean(xc * xc, axis=-1, keepdims=True)
    o_ref[...] = (xc * jax.lax.rsqrt(var + 1e-5) * g_ref[...] + b_ref[...]).astype(o_ref.dtype)


def _add_ln_kernel(x_ref, d_ref, g_ref, b_ref, s_ref, o_ref):
    """Fused residual add + LayerNorm: s = x + d; o = LN(s)."""
    s = x_ref[...].astype(jnp.float32) + d_ref[...].astype(jnp.float32)
    s_ref[...] = s
    mean = jnp.mean(s, axis=-1, keepdims=True)
    sc = s - mean
    var = jnp.mean(sc * sc, axis=-1, keepdims=True)
    o_ref[...] = sc * jax.lax.rsqrt(var + 1e-5) * g_ref[...] + b_ref[...]


def _attn_kernel(qkv_ref, o_ref, *, nhead, dmodel, scale):
    """Per-batch multi-head attention on a fused (T, 3*D) QKV block."""
    qkv = qkv_ref[0]                          # (T, 3D), bf16
    hd = dmodel // nhead
    outs = []
    for h in range(nhead):                    # static head loop, lane slices
        qs = qkv[:, h * hd:(h + 1) * hd]
        ks = qkv[:, dmodel + h * hd:dmodel + (h + 1) * hd]
        vs = qkv[:, 2 * dmodel + h * hd:2 * dmodel + (h + 1) * hd]
        # q @ k^T without an explicit transpose (contract last dims).
        s = jax.lax.dot_general(qs, ks, (((1,), (1,)), ((), ())),
                                preferred_element_type=jnp.float32) * scale
        s = s - jnp.max(s, axis=-1, keepdims=True)
        p = jnp.exp(s)
        p = p * pl.reciprocal(jnp.sum(p, axis=-1, keepdims=True), approx=True)
        outs.append(jnp.dot(p.astype(qkv.dtype), vs,
                            preferred_element_type=jnp.float32))
    o_ref[0] = jnp.concatenate(outs, axis=-1).astype(o_ref.dtype)


# -----------------------------------------------------------------------------
# Pallas wrappers
# -----------------------------------------------------------------------------
def matmul_bias(a, b, bias, relu=False, out_dtype=jnp.float32):
    """a:(M,K) @ b:(K,N) + bias:(N,), optional fused ReLU.  bf16 in / fp32 acc."""
    M, K = a.shape
    N = b.shape[1]
    a16 = a.astype(jnp.bfloat16)
    b16 = b.astype(jnp.bfloat16)
    bias2d = bias.astype(jnp.float32).reshape(1, N)

    # Tile sizes: full-extent blocks for small dims (exempt from the (8,128) rule),
    # 256-wide tiles otherwise (ragged M/N edges are masked by Pallas).  K is never
    # tiled raggedly (garbage would pollute the reduction).
    tm = M if M <= 256 else 256
    tn = N if N <= 512 else 256
    if K <= 1024:
        tk = K
    elif K % 512 == 0:
        tk = 512
    elif K % 256 == 0:
        tk = 256
    else:
        tk = K  # TODO(synk): pad K for very large, non-aligned K (not hit by this model)

    grid = (pl.cdiv(M, tm), pl.cdiv(N, tn), pl.cdiv(K, tk))
    cost = pl.CostEstimate(
        flops=2 * M * N * K,
        transcendentals=0,
        bytes_accessed=2 * (M * K + K * N) + 4 * N + jnp.dtype(out_dtype).itemsize * M * N,
    )
    return pl.pallas_call(
        functools.partial(_mm_kernel, relu=relu),
        out_shape=jax.ShapeDtypeStruct((M, N), out_dtype),
        grid=grid,
        in_specs=[
            pl.BlockSpec((tm, tk), lambda i, j, k: (i, k)),
            pl.BlockSpec((tk, tn), lambda i, j, k: (k, j)),
            pl.BlockSpec((1, tn), lambda i, j, k: (0, j)),
        ],
        out_specs=pl.BlockSpec((tm, tn), lambda i, j, k: (i, j)),
        scratch_shapes=[pltpu.VMEM((tm, tn), jnp.float32)],
        compiler_params=pltpu.CompilerParams(
            dimension_semantics=("parallel", "parallel", "arbitrary"),
            vmem_limit_bytes=_VMEM_LIMIT,
        ),
        cost_estimate=cost,
    )(a16, b16, bias2d)


def layer_norm(x, gamma, beta):
    """x: (B, T, D) layer-normalized over last axis (row-tiled)."""
    B, T, D = x.shape
    R = B * T
    tr = R if R <= 256 else 256
    out = pl.pallas_call(
        _ln_kernel,
        out_shape=jax.ShapeDtypeStruct((R, D), jnp.float32),
        grid=(pl.cdiv(R, tr),),
        in_specs=[pl.BlockSpec((tr, D), lambda i: (i, 0)),
                  pl.BlockSpec((1, D), lambda i: (0, 0)),
                  pl.BlockSpec((1, D), lambda i: (0, 0))],
        out_specs=pl.BlockSpec((tr, D), lambda i: (i, 0)),
        compiler_params=pltpu.CompilerParams(dimension_semantics=("parallel",)),
    )(x.reshape(R, D), gamma.reshape(1, D), beta.reshape(1, D))
    return out.reshape(B, T, D)


def add_layer_norm(x, delta, gamma, beta):
    """Fused residual add + LayerNorm.  Returns (x + delta, LN(x + delta))."""
    B, T, D = x.shape
    R = B * T
    tr = R if R <= 256 else 256
    spec = pl.BlockSpec((tr, D), lambda i: (i, 0))
    vspec = pl.BlockSpec((1, D), lambda i: (0, 0))
    s, o = pl.pallas_call(
        _add_ln_kernel,
        out_shape=(jax.ShapeDtypeStruct((R, D), jnp.float32),
                   jax.ShapeDtypeStruct((R, D), jnp.float32)),
        grid=(pl.cdiv(R, tr),),
        in_specs=[spec, spec, vspec, vspec],
        out_specs=(spec, spec),
        compiler_params=pltpu.CompilerParams(dimension_semantics=("parallel",)),
    )(x.reshape(R, D), delta.reshape(R, D), gamma.reshape(1, D), beta.reshape(1, D))
    return s.reshape(B, T, D), o.reshape(B, T, D)


def attention_qkv(qkv, nhead):
    """qkv: (B, T, 3*D) fused projections -> (B, T, D) attention output (bf16)."""
    B, T, D3 = qkv.shape
    D = D3 // 3
    hd = D // nhead
    scale = 1.0 / math.sqrt(hd)
    return pl.pallas_call(
        functools.partial(_attn_kernel, nhead=nhead, dmodel=D, scale=scale),
        out_shape=jax.ShapeDtypeStruct((B, T, D), jnp.bfloat16),
        grid=(B,),
        in_specs=[pl.BlockSpec((1, T, D3), lambda b: (b, 0, 0))],
        out_specs=pl.BlockSpec((1, T, D), lambda b: (b, 0, 0)),
        compiler_params=pltpu.CompilerParams(dimension_semantics=("parallel",)),
    )(qkv.astype(jnp.bfloat16))


# -----------------------------------------------------------------------------
# Conv / pooling glue (NHWC, im2col feeds the Pallas matmul kernel)
# -----------------------------------------------------------------------------
def conv2d_nhwc(x, w, b, pad, relu=False):
    """x: (B, H, W, Cin); w: (Cout, Cin, KH, KW) (torch layout); returns NHWC bf16."""
    B, H, W, Cin = x.shape
    Cout, _, KH, KW = w.shape
    ph, pw = pad
    xp = jnp.pad(x, ((0, 0), (ph, ph), (pw, pw), (0, 0)))
    Ho = H + 2 * ph - KH + 1
    Wo = W + 2 * pw - KW + 1
    cols = [xp[:, kh:kh + Ho, kw:kw + Wo, :] for kh in range(KH) for kw in range(KW)]
    A = jnp.stack(cols, axis=3).reshape(B * Ho * Wo, KH * KW * Cin)
    Wm = jnp.transpose(w, (2, 3, 1, 0)).reshape(KH * KW * Cin, Cout)
    out = matmul_bias(A, Wm, b, relu=relu, out_dtype=jnp.bfloat16)
    return out.reshape(B, Ho, Wo, Cout)


def maxpool_w3(x):
    """MaxPool2d(kernel=(1,3), stride=(1,3)) on NHWC (pools W = axis 2)."""
    B, H, W, C = x.shape
    Wo = W // 3
    return jnp.max(x[:, :, :Wo * 3, :].reshape(B, H, Wo, 3, C), axis=3)


# -----------------------------------------------------------------------------
# Transformer encoder (pre-norm, full context approximation)
# -----------------------------------------------------------------------------
def sinusoidal_pe(T, d):
    pos = jnp.arange(T, dtype=jnp.float32)[:, None]
    div = jnp.exp(jnp.arange(0, d, 2, dtype=jnp.float32) * (-math.log(10000.0) / d))
    pe = jnp.zeros((T, d), jnp.float32)
    pe = pe.at[:, 0::2].set(jnp.sin(pos * div))
    pe = pe.at[:, 1::2].set(jnp.cos(pos * div))
    return pe


def mha(x, lp, nhead):
    B, T, D = x.shape
    xf = x.reshape(B * T, D)
    qkv = matmul_bias(xf, lp["wqkv"], lp["bqkv"], out_dtype=jnp.bfloat16)   # fused Q/K/V
    o = attention_qkv(qkv.reshape(B, T, 3 * D), nhead)                      # (B,T,D) bf16
    o = matmul_bias(o.reshape(B * T, D), lp["wo"], lp["bo"])
    return o.reshape(B, T, D)


def ffn(x, lp):
    B, T, D = x.shape
    xf = x.reshape(B * T, D)
    f = matmul_bias(xf, lp["w1"], lp["b1"], relu=True, out_dtype=jnp.bfloat16)
    f = matmul_bias(f, lp["w2"], lp["b2"])
    return f.reshape(B, T, D)


def encoder_forward(x, params, nhead):
    B, T, D = x.shape
    x = x.astype(jnp.float32) * math.sqrt(D) + sinusoidal_pe(T, D)[None]
    layers = params["layers"]
    n = len(layers)
    # Pre-norm chain with the residual add fused into the following LayerNorm:
    #   h = LN1_0(x); for i: x,h = add_ln(x, mha(h), LN2_i); x,h = add_ln(x, ff(h), LN_next)
    h = layer_norm(x, layers[0]["ln1_g"], layers[0]["ln1_b"])
    for i, lp in enumerate(layers):
        attn = mha(h, lp, nhead)
        x, h = add_layer_norm(x, attn, lp["ln2_g"], lp["ln2_b"])
        ff = ffn(h, lp)
        if i + 1 < n:
            g_next, b_next = layers[i + 1]["ln1_g"], layers[i + 1]["ln1_b"]
        else:
            g_next, b_next = params["ln_f_g"], params["ln_f_b"]
        x, h = add_layer_norm(x, ff, g_next, b_next)
    enc = h  # == LN_f(final residual stream)
    t = enc  # TODO(synk): context/summary embeddings of the block encoder approximated
    return enc, t


# -----------------------------------------------------------------------------
# Full model forward
# -----------------------------------------------------------------------------
def forward(x, params, nhead):
    # Conv front-end in NHWC; ReLU fused into the conv GEMM (relu/maxpool commute).
    x = x[..., None]                                              # (B, T, F, 1)
    x = conv2d_nhwc(x, params["conv1_w"], params["conv1_b"], (2, 0), relu=True)
    x = x[:, :-2, :, :]
    x = maxpool_w3(x)                                             # dropout1: identity
    x = conv2d_nhwc(x, params["conv2_w"], params["conv2_b"], (0, 0), relu=True)
    x = maxpool_w3(x)                                             # dropout2: identity
    x = conv2d_nhwc(x, params["conv3_w"], params["conv3_b"], (1, 0), relu=True)
    x = x[:, :-1, :, :]
    x = maxpool_w3(x)                                             # dropout3: identity
    x = x[:, :, 0, :]                                             # (B, T, dmodel)

    h, t = encoder_forward(x, params, nhead)

    B, T, D = h.shape
    hr = jnp.maximum(h, 0.0)
    logits = matmul_bias(hr.reshape(B * T, D), params["out_w"], params["out_b"])
    logits = logits.reshape(B, T, -1)

    t = jnp.maximum(t, 0.0)                                       # dropout_t: identity
    t = jnp.mean(t, axis=1)                                       # (B, D)
    t_out = matmul_bias(t, params["out_t_w"], params["out_t_b"])
    return logits, t_out


# -----------------------------------------------------------------------------
# Deterministic parameter init
# -----------------------------------------------------------------------------
def init_params(key, dmodel, nhead, d_hid, nlayers, ntoken):
    keys = iter(jax.random.split(key, 64))

    def w(shape, scale=0.02):
        return jax.random.normal(next(keys), shape, jnp.float32) * scale

    p = {
        "conv1_w": w((32, 1, 3, 3)), "conv1_b": jnp.zeros((32,), jnp.float32),
        "conv2_w": w((64, 32, 1, 12)), "conv2_b": jnp.zeros((64,), jnp.float32),
        "conv3_w": w((dmodel, 64, 2, 6)), "conv3_b": jnp.zeros((dmodel,), jnp.float32),
        "ln_f_g": jnp.ones((dmodel,), jnp.float32), "ln_f_b": jnp.zeros((dmodel,), jnp.float32),
        "out_w": w((dmodel, ntoken)), "out_b": jnp.zeros((ntoken,), jnp.float32),
        "out_t_w": w((dmodel, 300)), "out_t_b": jnp.zeros((300,), jnp.float32),
        "layers": [],
    }
    for _ in range(nlayers):
        p["layers"].append(dict(
            ln1_g=jnp.ones((dmodel,), jnp.float32), ln1_b=jnp.zeros((dmodel,), jnp.float32),
            ln2_g=jnp.ones((dmodel,), jnp.float32), ln2_b=jnp.zeros((dmodel,), jnp.float32),
            wqkv=w((dmodel, 3 * dmodel)), bqkv=jnp.zeros((3 * dmodel,), jnp.float32),
            wo=w((dmodel, dmodel)), bo=jnp.zeros((dmodel,), jnp.float32),
            w1=w((dmodel, d_hid)), b1=jnp.zeros((d_hid,), jnp.float32),
            w2=w((d_hid, dmodel)), b2=jnp.zeros((dmodel,), jnp.float32),
        ))
    return p


# -----------------------------------------------------------------------------
if __name__ == "__main__":
    # Small but shape-consistent config (feature dim 128 is required by the conv
    # chain so that the final width collapses to 1 before the squeeze).
    B, T, F = 2, 16, 128
    dmodel, nhead, d_hid, nlayers, ntoken = 64, 2, 128, 2, 2

    key = jax.random.PRNGKey(0)
    kx, kp = jax.random.split(key)
    x = jax.random.normal(kx, (B, T, F), jnp.float32)
    params = init_params(kp, dmodel, nhead, d_hid, nlayers, ntoken)

    fwd = jax.jit(functools.partial(forward, nhead=nhead))
    logits, t_out = fwd(x, params)
    jax.block_until_ready((logits, t_out))

    assert logits.shape == (B, T, ntoken), logits.shape
    assert t_out.shape == (B, 300), t_out.shape
    print("KERNEL_OK")
</pallas_src>

<mosaic_0001>
module attributes {stable_mosaic.version = 11 : i64} {
  func.func @_mm_kernel(%arg0: i32, %arg1: i32, %arg2: i32, %arg3: memref<256x9xbf16, #tpu.memory_space<vmem>>, %arg4: memref<9x32xbf16, #tpu.memory_space<vmem>>, %arg5: memref<1x32xf32, #tpu.memory_space<vmem>>, %arg6: memref<256x32xbf16, #tpu.memory_space<vmem>>, %arg7: memref<256x32xf32, #tpu.memory_space<vmem>>) attributes {dimension_semantics = [#tpu.dimension_semantics<parallel>, #tpu.dimension_semantics<parallel>, #tpu.dimension_semantics<arbitrary>], iteration_bounds = array<i64: 18, 1, 1>, scalar_prefetch = 0 : i64, scratch_operands = 1 : i64, tpu.core_type = #tpu.core_type<tc>, window_params = [{transform_indices = @transform_0, window_bounds = array<i64: 256, 9>}, {transform_indices = @transform_1, window_bounds = array<i64: 9, 32>}, {transform_indices = @transform_2, window_bounds = array<i64: 1, 32>}, {transform_indices = @transform_3, window_bounds = array<i64: 256, 32>}]} {
    %c0_i32 = arith.constant 0 : i32
    %0 = arith.cmpi eq, %arg2, %c0_i32 : i32
    %1 = arith.extui %0 : i1 to i32
    %c0_i32_0 = arith.constant 0 : i32
    %2 = arith.cmpi ne, %1, %c0_i32_0 : i32
    scf.if %2 {
      %cst_10 = arith.constant 0.000000e+00 : f32
      %12 = vector.broadcast %cst_10 : f32 to vector<256x32xf32>
      %c0_11 = arith.constant 0 : index
      %c0_12 = arith.constant 0 : index
      %13 = vector.load %arg7[%c0_11, %c0_12] : memref<256x32xf32, #tpu.memory_space<vmem>>, vector<256x32xf32>
      tpu.vector_store %arg7[%c0_11, %c0_12], %12 {strides = array<i32>} : memref<256x32xf32, #tpu.memory_space<vmem>>, vector<256x32xf32>,
    } else {
    }
    %c0 = arith.constant 0 : index
    %c0_1 = arith.constant 0 : index
    %3 = vector.load %arg7[%c0, %c0_1] : memref<256x32xf32, #tpu.memory_space<vmem>>, vector<256x32xf32>
    %c0_2 = arith.constant 0 : index
    %c0_3 = arith.constant 0 : index
    %4 = vector.load %arg3[%c0_2, %c0_3] : memref<256x9xbf16, #tpu.memory_space<vmem>>, vector<256x9xbf16>
    %c0_4 = arith.constant 0 : index
    %c0_5 = arith.constant 0 : index
    %5 = vector.load %arg4[%c0_4, %c0_5] : memref<9x32xbf16, #tpu.memory_space<vmem>>, vector<9x32xbf16>
    %cst = arith.constant dense<0.000000e+00> : vector<256x32xf32>
    %6 = tpu.matmul %4, %5, %cst {dimension_numbers = #tpu.dot_dimension_numbers<[1], [0], [0], [1], [0, 0, 1, 1], [], []>} : vector<256x9xbf16>, vector<9x32xbf16>, vector<256x32xf32> -> vector<256x32xf32>
    %7 = arith.addf %3, %6 : vector<256x32xf32>
    %c0_6 = arith.constant 0 : index
    %c0_7 = arith.constant 0 : index
    %8 = vector.load %arg7[%c0_6, %c0_7] : memref<256x32xf32, #tpu.memory_space<vmem>>, vector<256x32xf32>
    tpu.vector_store %arg7[%c0_6, %c0_7], %7 {strides = array<i32>} : memref<256x32xf32, #tpu.memory_space<vmem>>, vector<256x32xf32>,
    %c0_i32_8 = arith.constant 0 : i32
    %9 = arith.cmpi eq, %arg2, %c0_i32_8 : i32
    %10 = arith.extui %9 : i1 to i32
    %c0_i32_9 = arith.constant 0 : i32
    %11 = arith.cmpi ne, %10, %c0_i32_9 : i32
    scf.if %11 {
      %c0_10 = arith.constant 0 : index
      %c0_11 = arith.constant 0 : index
      %12 = vector.load %arg7[%c0_10, %c0_11] : memref<256x32xf32, #tpu.memory_space<vmem>>, vector<256x32xf32>
      %c0_12 = arith.constant 0 : index
      %c0_13 = arith.constant 0 : index
      %13 = vector.load %arg5[%c0_12, %c0_13] : memref<1x32xf32, #tpu.memory_space<vmem>>, vector<1x32xf32>
      %14 = vector.broadcast %13 : vector<1x32xf32> to vector<256x32xf32>
      %15 = arith.addf %12, %14 : vector<256x32xf32>
      %cst_14 = arith.constant 0.000000e+00 : f32
      %16 = vector.broadcast %cst_14 : f32 to vector<256x32xf32>
      %17 = arith.maximumf %15, %16 : vector<256x32xf32>
      %18 = arith.truncf %17 : vector<256x32xf32> to vector<256x32xbf16>
      %c0_15 = arith.constant 0 : index
      %c0_16 = arith.constant 0 : index
      %19 = vector.load %arg6[%c0_15, %c0_16] : memref<256x32xbf16, #tpu.memory_space<vmem>>, vector<256x32xbf16>
      tpu.vector_store %arg6[%c0_15, %c0_16], %18 {strides = array<i32>} : memref<256x32xbf16, #tpu.memory_space<vmem>>, vector<256x32xbf16>,
    } else {
    }
    return
  }
  func.func @transform_0(%arg0: i32, %arg1: i32, %arg2: i32) -> (i32, i32) {
    %c0_i32 = arith.constant 0 : i32
    return %arg0, %arg2 : i32, i32
  }
  func.func @transform_1(%arg0: i32, %arg1: i32, %arg2: i32) -> (i32, i32) {
    %c0_i32 = arith.constant 0 : i32
    return %arg2, %arg1 : i32, i32
  }
  func.func @transform_2(%arg0: i32, %arg1: i32, %arg2: i32) -> (i32, i32) {
    %c0_i32 = arith.constant 0 : i32
    %c0_i32_0 = arith.constant 0 : i32
    return %c0_i32, %arg1 : i32, i32
  }
  func.func @transform_3(%arg0: i32, %arg1: i32, %arg2: i32) -> (i32, i32) {
    %c0_i32 = arith.constant 0 : i32
    return %arg0, %arg1 : i32, i32
  }
}

module attributes {stable_mosaic.version = 11 : i64} {
  func.func @_mm_kernel(%arg0: i32, %arg1: i32, %arg2: i32, %arg3: memref<256x384xbf16, #tpu.memory_space<vmem>>, %arg4: memref<384x64xbf16, #tpu.memory_space<vmem>>, %arg5: memref<1x64xf32, #tpu.memory_space<vmem>>, %arg6: memref<256x64xbf16, #tpu.memory_space<vmem>>, %arg7: memref<256x64xf32, #tpu.memory_space<vmem>>) attributes {dimension_semantics = [#tpu.dimension_semantics<parallel>, #tpu.dimension_semantics<parallel>, #tpu.dimension_semantics<arbitrary>], iteration_bounds = array<i64: 4, 1, 1>, scalar_prefetch = 0 : i64, scratch_operands = 1 : i64, tpu.core_type = #tpu.core_type<tc>, window_params = [{transform_indices = @transform_0, window_bounds = array<i64: 256, 384>}, {transform_indices = @transform_1, window_bounds = array<i64: 384, 64>}, {transform_indices = @transform_2, window_bounds = array<i64: 1, 64>}, {transform_indices = @transform_3, window_bounds = array<i64: 256, 64>}]} {
    %c0_i32 = arith.constant 0 : i32
    %0 = arith.cmpi eq, %arg2, %c0_i32 : i32
    %1 = arith.extui %0 : i1 to i32
    %c0_i32_0 = arith.constant 0 : i32
    %2 = arith.cmpi ne, %1, %c0_i32_0 : i32
    scf.if %2 {
      %cst_10 = arith.constant 0.000000e+00 : f32
      %12 = vector.broadcast %cst_10 : f32 to vector<256x64xf32>
      %c0_11 = arith.constant 0 : index
      %c0_12 = arith.constant 0 : index
      %13 = vector.load %arg7[%c0_11, %c0_12] : memref<256x64xf32, #tpu.memory_space<vmem>>, vector<256x64xf32>
      tpu.vector_store %arg7[%c0_11, %c0_12], %12 {strides = array<i32>} : memref<256x64xf32, #tpu.memory_space<vmem>>, vector<256x64xf32>,
    } else {
    }
    %c0 = arith.constant 0 : index
    %c0_1 = arith.constant 0 : index
    %3 = vector.load %arg7[%c0, %c0_1] : memref<256x64xf32, #tpu.memory_space<vmem>>, vector<256x64xf32>
    %c0_2 = arith.constant 0 : index
    %c0_3 = arith.constant 0 : index
    %4 = vector.load %arg3[%c0_2, %c0_3] : memref<256x384xbf16, #tpu.memory_space<vmem>>, vector<256x384xbf16>
    %c0_4 = arith.constant 0 : index
    %c0_5 = arith.constant 0 : index
    %5 = vector.load %arg4[%c0_4, %c0_5] : memref<384x64xbf16, #tpu.memory_space<vmem>>, vector<384x64xbf16>
    %cst = arith.constant dense<0.000000e+00> : vector<256x64xf32>
    %6 = tpu.matmul %4, %5, %cst {dimension_numbers = #tpu.dot_dimension_numbers<[1], [0], [0], [1], [0, 0, 1, 1], [], []>} : vector<256x384xbf16>, vector<384x64xbf16>, vector<256x64xf32> -> vector<256x64xf32>
    %7 = arith.addf %3, %6 : vector<256x64xf32>
    %c0_6 = arith.constant 0 : index
    %c0_7 = arith.constant 0 : index
    %8 = vector.load %arg7[%c0_6, %c0_7] : memref<256x64xf32, #tpu.memory_space<vmem>>, vector<256x64xf32>
    tpu.vector_store %arg7[%c0_6, %c0_7], %7 {strides = array<i32>} : memref<256x64xf32, #tpu.memory_space<vmem>>, vector<256x64xf32>,
    %c0_i32_8 = arith.constant 0 : i32
    %9 = arith.cmpi eq, %arg2, %c0_i32_8 : i32
    %10 = arith.extui %9 : i1 to i32
    %c0_i32_9 = arith.constant 0 : i32
    %11 = arith.cmpi ne, %10, %c0_i32_9 : i32
    scf.if %11 {
      %c0_10 = arith.constant 0 : index
      %c0_11 = arith.constant 0 : index
      %12 = vector.load %arg7[%c0_10, %c0_11] : memref<256x64xf32, #tpu.memory_space<vmem>>, vector<256x64xf32>
      %c0_12 = arith.constant 0 : index
      %c0_13 = arith.constant 0 : index
      %13 = vector.load %arg5[%c0_12, %c0_13] : memref<1x64xf32, #tpu.memory_space<vmem>>, vector<1x64xf32>
      %14 = vector.broadcast %13 : vector<1x64xf32> to vector<256x64xf32>
      %15 = arith.addf %12, %14 : vector<256x64xf32>
      %cst_14 = arith.constant 0.000000e+00 : f32
      %16 = vector.broadcast %cst_14 : f32 to vector<256x64xf32>
      %17 = arith.maximumf %15, %16 : vector<256x64xf32>
      %18 = arith.truncf %17 : vector<256x64xf32> to vector<256x64xbf16>
      %c0_15 = arith.constant 0 : index
      %c0_16 = arith.constant 0 : index
      %19 = vector.load %arg6[%c0_15, %c0_16] : memref<256x64xbf16, #tpu.memory_space<vmem>>, vector<256x64xbf16>
      tpu.vector_store %arg6[%c0_15, %c0_16], %18 {strides = array<i32>} : memref<256x64xbf16, #tpu.memory_space<vmem>>, vector<256x64xbf16>,
    } else {
    }
    return
  }
  func.func @transform_0(%arg0: i32, %arg1: i32, %arg2: i32) -> (i32, i32) {
    %c0_i32 = arith.constant 0 : i32
    return %arg0, %arg2 : i32, i32
  }
  func.func @transform_1(%arg0: i32, %arg1: i32, %arg2: i32) -> (i32, i32) {
    %c0_i32 = arith.constant 0 : i32
    return %arg2, %arg1 : i32, i32
  }
  func.func @transform_2(%arg0: i32, %arg1: i32, %arg2: i32) -> (i32, i32) {
    %c0_i32 = arith.constant 0 : i32
    %c0_i32_0 = arith.constant 0 : i32
    return %c0_i32, %arg1 : i32, i32
  }
  func.func @transform_3(%arg0: i32, %arg1: i32, %arg2: i32) -> (i32, i32) {
    %c0_i32 = arith.constant 0 : i32
    return %arg0, %arg1 : i32, i32
  }
}

module attributes {stable_mosaic.version = 11 : i64} {
  func.func @_mm_kernel(%arg0: i32, %arg1: i32, %arg2: i32, %arg3: memref<170x768xbf16, #tpu.memory_space<vmem>>, %arg4: memref<768x64xbf16, #tpu.memory_space<vmem>>, %arg5: memref<1x64xf32, #tpu.memory_space<vmem>>, %arg6: memref<170x64xbf16, #tpu.memory_space<vmem>>, %arg7: memref<170x64xf32, #tpu.memory_space<vmem>>) attributes {dimension_semantics = [#tpu.dimension_semantics<parallel>, #tpu.dimension_semantics<parallel>, #tpu.dimension_semantics<arbitrary>], iteration_bounds = array<i64: 1, 1, 1>, scalar_prefetch = 0 : i64, scratch_operands = 1 : i64, tpu.core_type = #tpu.core_type<tc>, window_params = [{transform_indices = @transform_0, window_bounds = array<i64: 170, 768>}, {transform_indices = @transform_1, window_bounds = array<i64: 768, 64>}, {transform_indices = @transform_2, window_bounds = array<i64: 1, 64>}, {transform_indices = @transform_3, window_bounds = array<i64: 170, 64>}]} {
    %c0_i32 = arith.constant 0 : i32
    %0 = arith.cmpi eq, %arg2, %c0_i32 : i32
    %1 = arith.extui %0 : i1 to i32
    %c0_i32_0 = arith.constant 0 : i32
    %2 = arith.cmpi ne, %1, %c0_i32_0 : i32
    scf.if %2 {
      %cst_10 = arith.constant 0.000000e+00 : f32
      %12 = vector.broadcast %cst_10 : f32 to vector<170x64xf32>
      %c0_11 = arith.constant 0 : index
      %c0_12 = arith.constant 0 : index
      %13 = vector.load %arg7[%c0_11, %c0_12] : memref<170x64xf32, #tpu.memory_space<vmem>>, vector<170x64xf32>
      tpu.vector_store %arg7[%c0_11, %c0_12], %12 {strides = array<i32>} : memref<170x64xf32, #tpu.memory_space<vmem>>, vector<170x64xf32>,
    } else {
    }
    %c0 = arith.constant 0 : index
    %c0_1 = arith.constant 0 : index
    %3 = vector.load %arg7[%c0, %c0_1] : memref<170x64xf32, #tpu.memory_space<vmem>>, vector<170x64xf32>
    %c0_2 = arith.constant 0 : index
    %c0_3 = arith.constant 0 : index
    %4 = vector.load %arg3[%c0_2, %c0_3] : memref<170x768xbf16, #tpu.memory_space<vmem>>, vector<170x768xbf16>
    %c0_4 = arith.constant 0 : index
    %c0_5 = arith.constant 0 : index
    %5 = vector.load %arg4[%c0_4, %c0_5] : memref<768x64xbf16, #tpu.memory_space<vmem>>, vector<768x64xbf16>
    %cst = arith.constant dense<0.000000e+00> : vector<170x64xf32>
    %6 = tpu.matmul %4, %5, %cst {dimension_numbers = #tpu.dot_dimension_numbers<[1], [0], [0], [1], [0, 0, 1, 1], [], []>} : vector<170x768xbf16>, vector<768x64xbf16>, vector<170x64xf32> -> vector<170x64xf32>
    %7 = arith.addf %3, %6 : vector<170x64xf32>
    %c0_6 = arith.constant 0 : index
    %c0_7 = arith.constant 0 : index
    %8 = vector.load %arg7[%c0_6, %c0_7] : memref<170x64xf32, #tpu.memory_space<vmem>>, vector<170x64xf32>
    tpu.vector_store %arg7[%c0_6, %c0_7], %7 {strides = array<i32>} : memref<170x64xf32, #tpu.memory_space<vmem>>, vector<170x64xf32>,
    %c0_i32_8 = arith.constant 0 : i32
    %9 = arith.cmpi eq, %arg2, %c0_i32_8 : i32
    %10 = arith.extui %9 : i1 to i32
    %c0_i32_9 = arith.constant 0 : i32
    %11 = arith.cmpi ne, %10, %c0_i32_9 : i32
    scf.if %11 {
      %c0_10 = arith.constant 0 : index
      %c0_11 = arith.constant 0 : index
      %12 = vector.load %arg7[%c0_10, %c0_11] : memref<170x64xf32, #tpu.memory_space<vmem>>, vector<170x64xf32>
      %c0_12 = arith.constant 0 : index
      %c0_13 = arith.constant 0 : index
      %13 = vector.load %arg5[%c0_12, %c0_13] : memref<1x64xf32, #tpu.memory_space<vmem>>, vector<1x64xf32>
      %14 = vector.broadcast %13 : vector<1x64xf32> to vector<170x64xf32>
      %15 = arith.addf %12, %14 : vector<170x64xf32>
      %cst_14 = arith.constant 0.000000e+00 : f32
      %16 = vector.broadcast %cst_14 : f32 to vector<170x64xf32>
      %17 = arith.maximumf %15, %16 : vector<170x64xf32>
      %18 = arith.truncf %17 : vector<170x64xf32> to vector<170x64xbf16>
      %c0_15 = arith.constant 0 : index
      %c0_16 = arith.constant 0 : index
      %19 = vector.load %arg6[%c0_15, %c0_16] : memref<170x64xbf16, #tpu.memory_space<vmem>>, vector<170x64xbf16>
      tpu.vector_store %arg6[%c0_15, %c0_16], %18 {strides = array<i32>} : memref<170x64xbf16, #tpu.memory_space<vmem>>, vector<170x64xbf16>,
    } else {
    }
    return
  }
  func.func @transform_0(%arg0: i32, %arg1: i32, %arg2: i32) -> (i32, i32) {
    %c0_i32 = arith.constant 0 : i32
    return %arg0, %arg2 : i32, i32
  }
  func.func @transform_1(%arg0: i32, %arg1: i32, %arg2: i32) -> (i32, i32) {
    %c0_i32 = arith.constant 0 : i32
    return %arg2, %arg1 : i32, i32
  }
  func.func @transform_2(%arg0: i32, %arg1: i32, %arg2: i32) -> (i32, i32) {
    %c0_i32 = arith.constant 0 : i32
    %c0_i32_0 = arith.constant 0 : i32
    return %c0_i32, %arg1 : i32, i32
  }
  func.func @transform_3(%arg0: i32, %arg1: i32, %arg2: i32) -> (i32, i32) {
    %c0_i32 = arith.constant 0 : i32
    return %arg0, %arg1 : i32, i32
  }
}

module attributes {stable_mosaic.version = 11 : i64} {
  func.func @_mm_kernel(%arg0: i32, %arg1: i32, %arg2: i32, %arg3: memref<32x64xbf16, #tpu.memory_space<vmem>>, %arg4: memref<64x192xbf16, #tpu.memory_space<vmem>>, %arg5: memref<1x192xf32, #tpu.memory_space<vmem>>, %arg6: memref<32x192xbf16, #tpu.memory_space<vmem>>, %arg7: memref<32x192xf32, #tpu.memory_space<vmem>>) attributes {dimension_semantics = [#tpu.dimension_semantics<parallel>, #tpu.dimension_semantics<parallel>, #tpu.dimension_semantics<arbitrary>], iteration_bounds = array<i64: 1, 1, 1>, scalar_prefetch = 0 : i64, scratch_operands = 1 : i64, tpu.core_type = #tpu.core_type<tc>, window_params = [{transform_indices = @transform_0, window_bounds = array<i64: 32, 64>}, {transform_indices = @transform_1, window_bounds = array<i64: 64, 192>}, {transform_indices = @transform_2, window_bounds = array<i64: 1, 192>}, {transform_indices = @transform_3, window_bounds = array<i64: 32, 192>}]} {
    %c0_i32 = arith.constant 0 : i32
    %0 = arith.cmpi eq, %arg2, %c0_i32 : i32
    %1 = arith.extui %0 : i1 to i32
    %c0_i32_0 = arith.constant 0 : i32
    %2 = arith.cmpi ne, %1, %c0_i32_0 : i32
    scf.if %2 {
      %cst_10 = arith.constant 0.000000e+00 : f32
      %12 = vector.broadcast %cst_10 : f32 to vector<32x192xf32>
      %c0_11 = arith.constant 0 : index
      %c0_12 = arith.constant 0 : index
      %13 = vector.load %arg7[%c0_11, %c0_12] : memref<32x192xf32, #tpu.memory_space<vmem>>, vector<32x192xf32>
      tpu.vector_store %arg7[%c0_11, %c0_12], %12 {strides = array<i32>} : memref<32x192xf32, #tpu.memory_space<vmem>>, vector<32x192xf32>,
    } else {
    }
    %c0 = arith.constant 0 : index
    %c0_1 = arith.constant 0 : index
    %3 = vector.load %arg7[%c0, %c0_1] : memref<32x192xf32, #tpu.memory_space<vmem>>, vector<32x192xf32>
    %c0_2 = arith.constant 0 : index
    %c0_3 = arith.constant 0 : index
    %4 = vector.load %arg3[%c0_2, %c0_3] : memref<32x64xbf16, #tpu.memory_space<vmem>>, vector<32x64xbf16>
    %c0_4 = arith.constant 0 : index
    %c0_5 = arith.constant 0 : index
    %5 = vector.load %arg4[%c0_4, %c0_5] : memref<64x192xbf16, #tpu.memory_space<vmem>>, vector<64x192xbf16>
    %cst = arith.constant dense<0.000000e+00> : vector<32x192xf32>
    %6 = tpu.matmul %4, %5, %cst {dimension_numbers = #tpu.dot_dimension_numbers<[1], [0], [0], [1], [0, 0, 1, 1], [], []>} : vector<32x64xbf16>, vector<64x192xbf16>, vector<32x192xf32> -> vector<32x192xf32>
    %7 = arith.addf %3, %6 : vector<32x192xf32>
    %c0_6 = arith.constant 0 : index
    %c0_7 = arith.constant 0 : index
    %8 = vector.load %arg7[%c0_6, %c0_7] : memref<32x192xf32, #tpu.memory_space<vmem>>, vector<32x192xf32>
    tpu.vector_store %arg7[%c0_6, %c0_7], %7 {strides = array<i32>} : memref<32x192xf32, #tpu.memory_space<vmem>>, vector<32x192xf32>,
    %c0_i32_8 = arith.constant 0 : i32
    %9 = arith.cmpi eq, %arg2, %c0_i32_8 : i32
    %10 = arith.extui %9 : i1 to i32
    %c0_i32_9 = arith.constant 0 : i32
    %11 = arith.cmpi ne, %10, %c0_i32_9 : i32
    scf.if %11 {
      %c0_10 = arith.constant 0 : index
      %c0_11 = arith.constant 0 : index
      %12 = vector.load %arg7[%c0_10, %c0_11] : memref<32x192xf32, #tpu.memory_space<vmem>>, vector<32x192xf32>
      %c0_12 = arith.constant 0 : index
      %c0_13 = arith.constant 0 : index
      %13 = vector.load %arg5[%c0_12, %c0_13] : memref<1x192xf32, #tpu.memory_space<vmem>>, vector<1x192xf32>
      %14 = vector.broadcast %13 : vector<1x192xf32> to vector<32x192xf32>
      %15 = arith.addf %12, %14 : vector<32x192xf32>
      %16 = arith.truncf %15 : vector<32x192xf32> to vector<32x192xbf16>
      %c0_14 = arith.constant 0 : index
      %c0_15 = arith.constant 0 : index
      %17 = vector.load %arg6[%c0_14, %c0_15] : memref<32x192xbf16, #tpu.memory_space<vmem>>, vector<32x192xbf16>
      tpu.vector_store %arg6[%c0_14, %c0_15], %16 {strides = array<i32>} : memref<32x192xbf16, #tpu.memory_space<vmem>>, vector<32x192xbf16>,
    } else {
    }
    return
  }
  func.func @transform_0(%arg0: i32, %arg1: i32, %arg2: i32) -> (i32, i32) {
    %c0_i32 = arith.constant 0 : i32
    return %arg0, %arg2 : i32, i32
  }
  func.func @transform_1(%arg0: i32, %arg1: i32, %arg2: i32) -> (i32, i32) {
    %c0_i32 = arith.constant 0 : i32
    return %arg2, %arg1 : i32, i32
  }
  func.func @transform_2(%arg0: i32, %arg1: i32, %arg2: i32) -> (i32, i32) {
    %c0_i32 = arith.constant 0 : i32
    %c0_i32_0 = arith.constant 0 : i32
    return %c0_i32, %arg1 : i32, i32
  }
  func.func @transform_3(%arg0: i32, %arg1: i32, %arg2: i32) -> (i32, i32) {
    %c0_i32 = arith.constant 0 : i32
    return %arg0, %arg1 : i32, i32
  }
}

module attributes {stable_mosaic.version = 11 : i64} {
  func.func @_attn_kernel(%arg0: i32, %arg1: memref<1x16x192xbf16, #tpu.memory_space<vmem>>, %arg2: memref<1x16x64xbf16, #tpu.memory_space<vmem>>) attributes {dimension_semantics = [#tpu.dimension_semantics<parallel>], iteration_bounds = array<i64: 2>, scalar_prefetch = 0 : i64, scratch_operands = 0 : i64, tpu.core_type = #tpu.core_type<tc>, window_params = [{transform_indices = @transform_0, window_bounds = array<i64: 1, 16, 192>}, {transform_indices = @transform_1, window_bounds = array<i64: 1, 16, 64>}]} {
    %c0 = arith.constant 0 : index
    %c0_0 = arith.constant 0 : index
    %c0_1 = arith.constant 0 : index
    %0 = vector.load %arg1[%c0, %c0_0, %c0_1] : memref<1x16x192xbf16, #tpu.memory_space<vmem>>, vector<1x16x192xbf16>
    %1 = vector.shape_cast %0 : vector<1x16x192xbf16> to vector<16x192xbf16>
    %2 = vector.extract_strided_slice %1 {offsets = [0, 0], sizes = [16, 32], strides = [1, 1]} : vector<16x192xbf16> to vector<16x32xbf16>
    %3 = vector.extract_strided_slice %1 {offsets = [0, 64], sizes = [16, 32], strides = [1, 1]} : vector<16x192xbf16> to vector<16x32xbf16>
    %4 = vector.extract_strided_slice %1 {offsets = [0, 128], sizes = [16, 32], strides = [1, 1]} : vector<16x192xbf16> to vector<16x32xbf16>
    %cst = arith.constant dense<0.000000e+00> : vector<16x16xf32>
    %5 = tpu.matmul %2, %3, %cst {dimension_numbers = #tpu.dot_dimension_numbers<[1], [1], [0], [0], [0, 0, 1, 0], [], []>} : vector<16x32xbf16>, vector<16x32xbf16>, vector<16x16xf32> -> vector<16x16xf32>
    %cst_2 = arith.constant 0.176776692 : f32
    %6 = vector.broadcast %cst_2 : f32 to vector<16x16xf32>
    %7 = arith.mulf %5, %6 : vector<16x16xf32>
    %cst_3 = arith.constant dense<0xFF800000> : vector<16xf32>
    %8 = vector.multi_reduction <maximumf>, %7, %cst_3 [1] : vector<16x16xf32> to vector<16xf32>
    %9 = vector.shape_cast %8 : vector<16xf32> to vector<16x1xf32>
    %10 = vector.broadcast %9 : vector<16x1xf32> to vector<16x16xf32>
    %11 = arith.subf %7, %10 : vector<16x16xf32>
    %12 = math.exp %11 : vector<16x16xf32>
    %cst_4 = arith.constant dense<0.000000e+00> : vector<16xf32>
    %13 = vector.multi_reduction <add>, %12, %cst_4 [1] : vector<16x16xf32> to vector<16xf32>
    %14 = vector.shape_cast %13 : vector<16xf32> to vector<16x1xf32>
    %15 = tpu.reciprocal %14 {approx = true} : vector<16x1xf32> -> vector<16x1xf32>
    %16 = vector.broadcast %15 : vector<16x1xf32> to vector<16x16xf32>
    %17 = arith.mulf %12, %16 : vector<16x16xf32>
    %18 = arith.truncf %17 : vector<16x16xf32> to vector<16x16xbf16>
    %cst_5 = arith.constant dense<0.000000e+00> : vector<16x32xf32>
    %19 = tpu.matmul %18, %4, %cst_5 {dimension_numbers = #tpu.dot_dimension_numbers<[1], [0], [0], [1], [0, 0, 1, 1], [], []>} : vector<16x16xbf16>, vector<16x32xbf16>, vector<16x32xf32> -> vector<16x32xf32>
    %20 = vector.extract_strided_slice %1 {offsets = [0, 32], sizes = [16, 32], strides = [1, 1]} : vector<16x192xbf16> to vector<16x32xbf16>
    %21 = vector.extract_strided_slice %1 {offsets = [0, 96], sizes = [16, 32], strides = [1, 1]} : vector<16x192xbf16> to vector<16x32xbf16>
    %22 = vector.extract_strided_slice %1 {offsets = [0, 160], sizes = [16, 32], strides = [1, 1]} : vector<16x192xbf16> to vector<16x32xbf16>
    %cst_6 = arith.constant dense<0.000000e+00> : vector<16x16xf32>
    %23 = tpu.matmul %20, %21, %cst_6 {dimension_numbers = #tpu.dot_dimension_numbers<[1], [1], [0], [0], [0, 0, 1, 0], [], []>} : vector<16x32xbf16>, vector<16x32xbf16>, vector<16x16xf32> -> vector<16x16xf32>
    %cst_7 = arith.constant 0.176776692 : f32
    %24 = vector.broadcast %cst_7 : f32 to vector<16x16xf32>
    %25 = arith.mulf %23, %24 : vector<16x16xf32>
    %cst_8 = arith.constant dense<0xFF800000> : vector<16xf32>
    %26 = vector.multi_reduction <maximumf>, %25, %cst_8 [1] : vector<16x16xf32> to vector<16xf32>
    %27 = vector.shape_cast %26 : vector<16xf32> to vector<16x1xf32>
    %28 = vector.broadcast %27 : vector<16x1xf32> to vector<16x16xf32>
    %29 = arith.subf %25, %28 : vector<16x16xf32>
    %30 = math.exp %29 : vector<16x16xf32>
    %cst_9 = arith.constant dense<0.000000e+00> : vector<16xf32>
    %31 = vector.multi_reduction <add>, %30, %cst_9 [1] : vector<16x16xf32> to vector<16xf32>
    %32 = vector.shape_cast %31 : vector<16xf32> to vector<16x1xf32>
    %33 = tpu.reciprocal %32 {approx = true} : vector<16x1xf32> -> vector<16x1xf32>
    %34 = vector.broadcast %33 : vector<16x1xf32> to vector<16x16xf32>
    %35 = arith.mulf %30, %34 : vector<16x16xf32>
    %36 = arith.truncf %35 : vector<16x16xf32> to vector<16x16xbf16>
    %cst_10 = arith.constant dense<0.000000e+00> : vector<16x32xf32>
    %37 = tpu.matmul %36, %22, %cst_10 {dimension_numbers = #tpu.dot_dimension_numbers<[1], [0], [0], [1], [0, 0, 1, 1], [], []>} : vector<16x16xbf16>, vector<16x32xbf16>, vector<16x32xf32> -> vector<16x32xf32>
    %38 = tpu.concatenate %19, %37 in 1 : vector<16x32xf32>, vector<16x32xf32> -> vector<16x64xf32>
    %39 = arith.truncf %38 : vector<16x64xf32> to vector<16x64xbf16>
    %c0_11 = arith.constant 0 : index
    %c0_12 = arith.constant 0 : index
    %c0_13 = arith.constant 0 : index
    %40 = vector.load %arg2[%c0_11, %c0_12, %c0_13] : memref<1x16x64xbf16, #tpu.memory_space<vmem>>, vector<1x16x64xbf16>
    %41 = vector.shape_cast %40 : vector<1x16x64xbf16> to vector<16x64xbf16>
    %42 = vector.shape_cast %39 : vector<16x64xbf16> to vector<1x16x64xbf16>
    tpu.vector_store %arg2[%c0_11, %c0_12, %c0_13], %42 {strides = array<i32>} : memref<1x16x64xbf16, #tpu.memory_space<vmem>>, vector<1x16x64xbf16>,
    return
  }
  func.func @transform_0(%arg0: i32) -> (i32, i32, i32) {
    %c0_i32 = arith.constant 0 : i32
    %c0_i32_0 = arith.constant 0 : i32
    %c0_i32_1 = arith.constant 0 : i32
    return %arg0, %c0_i32, %c0_i32_0 : i32, i32, i32
  }
  func.func @transform_1(%arg0: i32) -> (i32, i32, i32) {
    %c0_i32 = arith.constant 0 : i32
    %c0_i32_0 = arith.constant 0 : i32
    %c0_i32_1 = arith.constant 0 : i32
    return %arg0, %c0_i32, %c0_i32_0 : i32, i32, i32
  }
}

module attributes {stable_mosaic.version = 11 : i64} {
  func.func @_ln_kernel(%arg0: i32, %arg1: memref<32x64xf32, #tpu.memory_space<vmem>>, %arg2: memref<1x64xf32, #tpu.memory_space<vmem>>, %arg3: memref<1x64xf32, #tpu.memory_space<vmem>>, %arg4: memref<32x64xf32, #tpu.memory_space<vmem>>) attributes {dimension_semantics = [#tpu.dimension_semantics<parallel>], iteration_bounds = array<i64: 1>, scalar_prefetch = 0 : i64, scratch_operands = 0 : i64, tpu.core_type = #tpu.core_type<tc>, window_params = [{transform_indices = @transform_0, window_bounds = array<i64: 32, 64>}, {pipeline_mode = #tpu.pipeline_mode<synchronous>, transform_indices = @transform_1, window_bounds = array<i64: 1, 64>}, {pipeline_mode = #tpu.pipeline_mode<synchronous>, transform_indices = @transform_2, window_bounds = array<i64: 1, 64>}, {transform_indices = @transform_3, window_bounds = array<i64: 32, 64>}]} {
    %c0 = arith.constant 0 : index
    %c0_0 = arith.constant 0 : index
    %0 = vector.load %arg1[%c0, %c0_0] : memref<32x64xf32, #tpu.memory_space<vmem>>, vector<32x64xf32>
    %cst = arith.constant dense<0.000000e+00> : vector<32xf32>
    %1 = vector.multi_reduction <add>, %0, %cst [1] : vector<32x64xf32> to vector<32xf32>
    %2 = vector.shape_cast %1 : vector<32xf32> to vector<32x1xf32>
    %cst_1 = arith.constant 6.400000e+01 : f32
    %3 = vector.broadcast %cst_1 : f32 to vector<32x1xf32>
    %4 = arith.divf %2, %3 : vector<32x1xf32>
    %5 = vector.broadcast %4 : vector<32x1xf32> to vector<32x64xf32>
    %6 = arith.subf %0, %5 : vector<32x64xf32>
    %7 = arith.mulf %6, %6 : vector<32x64xf32>
    %cst_2 = arith.constant dense<0.000000e+00> : vector<32xf32>
    %8 = vector.multi_reduction <add>, %7, %cst_2 [1] : vector<32x64xf32> to vector<32xf32>
    %9 = vector.shape_cast %8 : vector<32xf32> to vector<32x1xf32>
    %cst_3 = arith.constant 6.400000e+01 : f32
    %10 = vector.broadcast %cst_3 : f32 to vector<32x1xf32>
    %11 = arith.divf %9, %10 : vector<32x1xf32>
    %cst_4 = arith.constant 9.99999974E-6 : f32
    %12 = vector.broadcast %cst_4 : f32 to vector<32x1xf32>
    %13 = arith.addf %11, %12 : vector<32x1xf32>
    %14 = math.rsqrt %13 : vector<32x1xf32>
    %15 = vector.broadcast %14 : vector<32x1xf32> to vector<32x64xf32>
    %16 = arith.mulf %6, %15 : vector<32x64xf32>
    %c0_5 = arith.constant 0 : index
    %c0_6 = arith.constant 0 : index
    %17 = vector.load %arg2[%c0_5, %c0_6] : memref<1x64xf32, #tpu.memory_space<vmem>>, vector<1x64xf32>
    %18 = vector.broadcast %17 : vector<1x64xf32> to vector<32x64xf32>
    %19 = arith.mulf %16, %18 : vector<32x64xf32>
    %c0_7 = arith.constant 0 : index
    %c0_8 = arith.constant 0 : index
    %20 = vector.load %arg3[%c0_7, %c0_8] : memref<1x64xf32, #tpu.memory_space<vmem>>, vector<1x64xf32>
    %21 = vector.broadcast %20 : vector<1x64xf32> to vector<32x64xf32>
    %22 = arith.addf %19, %21 : vector<32x64xf32>
    %c0_9 = arith.constant 0 : index
    %c0_10 = arith.constant 0 : index
    %23 = vector.load %arg4[%c0_9, %c0_10] : memref<32x64xf32, #tpu.memory_space<vmem>>, vector<32x64xf32>
    tpu.vector_store %arg4[%c0_9, %c0_10], %22 {strides = array<i32>} : memref<32x64xf32, #tpu.memory_space<vmem>>, vector<32x64xf32>,
    return
  }
  func.func @transform_0(%arg0: i32) -> (i32, i32) {
    %c0_i32 = arith.constant 0 : i32
    %c0_i32_0 = arith.constant 0 : i32
    return %arg0, %c0_i32 : i32, i32
  }
  func.func @transform_1(%arg0: i32) -> (i32, i32) {
    %c0_i32 = arith.constant 0 : i32
    %c0_i32_0 = arith.constant 0 : i32
    %c0_i32_1 = arith.constant 0 : i32
    return %c0_i32, %c0_i32_0 : i32, i32
  }
  func.func @transform_2(%arg0: i32) -> (i32, i32) {
    %c0_i32 = arith.constant 0 : i32
    %c0_i32_0 = arith.constant 0 : i32
    %c0_i32_1 = arith.constant 0 : i32
    return %c0_i32, %c0_i32_0 : i32, i32
  }
  func.func @transform_3(%arg0: i32) -> (i32, i32) {
    %c0_i32 = arith.constant 0 : i32
    %c0_i32_0 = arith.constant 0 : i32
    return %arg0, %c0_i32 : i32, i32
  }
}

module attributes {stable_mosaic.version = 11 : i64} {
  func.func @_mm_kernel(%arg0: i32, %arg1: i32, %arg2: i32, %arg3: memref<32x64xbf16, #tpu.memory_space<vmem>>, %arg4: memref<64x64xbf16, #tpu.memory_space<vmem>>, %arg5: memref<1x64xf32, #tpu.memory_space<vmem>>, %arg6: memref<32x64xf32, #tpu.memory_space<vmem>>, %arg7: memref<32x64xf32, #tpu.memory_space<vmem>>) attributes {dimension_semantics = [#tpu.dimension_semantics<parallel>, #tpu.dimension_semantics<parallel>, #tpu.dimension_semantics<arbitrary>], iteration_bounds = array<i64: 1, 1, 1>, scalar_prefetch = 0 : i64, scratch_operands = 1 : i64, tpu.core_type = #tpu.core_type<tc>, window_params = [{transform_indices = @transform_0, window_bounds = array<i64: 32, 64>}, {transform_indices = @transform_1, window_bounds = array<i64: 64, 64>}, {transform_indices = @transform_2, window_bounds = array<i64: 1, 64>}, {transform_indices = @transform_3, window_bounds = array<i64: 32, 64>}]} {
    %c0_i32 = arith.constant 0 : i32
    %0 = arith.cmpi eq, %arg2, %c0_i32 : i32
    %1 = arith.extui %0 : i1 to i32
    %c0_i32_0 = arith.constant 0 : i32
    %2 = arith.cmpi ne, %1, %c0_i32_0 : i32
    scf.if %2 {
      %cst_10 = arith.constant 0.000000e+00 : f32
      %12 = vector.broadcast %cst_10 : f32 to vector<32x64xf32>
      %c0_11 = arith.constant 0 : index
      %c0_12 = arith.constant 0 : index
      %13 = vector.load %arg7[%c0_11, %c0_12] : memref<32x64xf32, #tpu.memory_space<vmem>>, vector<32x64xf32>
      tpu.vector_store %arg7[%c0_11, %c0_12], %12 {strides = array<i32>} : memref<32x64xf32, #tpu.memory_space<vmem>>, vector<32x64xf32>,
    } else {
    }
    %c0 = arith.constant 0 : index
    %c0_1 = arith.constant 0 : index
    %3 = vector.load %arg7[%c0, %c0_1] : memref<32x64xf32, #tpu.memory_space<vmem>>, vector<32x64xf32>
    %c0_2 = arith.constant 0 : index
    %c0_3 = arith.constant 0 : index
    %4 = vector.load %arg3[%c0_2, %c0_3] : memref<32x64xbf16, #tpu.memory_space<vmem>>, vector<32x64xbf16>
    %c0_4 = arith.constant 0 : index
    %c0_5 = arith.constant 0 : index
    %5 = vector.load %arg4[%c0_4, %c0_5] : memref<64x64xbf16, #tpu.memory_space<vmem>>, vector<64x64xbf16>
    %cst = arith.constant dense<0.000000e+00> : vector<32x64xf32>
    %6 = tpu.matmul %4, %5, %cst {dimension_numbers = #tpu.dot_dimension_numbers<[1], [0], [0], [1], [0, 0, 1, 1], [], []>} : vector<32x64xbf16>, vector<64x64xbf16>, vector<32x64xf32> -> vector<32x64xf32>
    %7 = arith.addf %3, %6 : vector<32x64xf32>
    %c0_6 = arith.constant 0 : index
    %c0_7 = arith.constant 0 : index
    %8 = vector.load %arg7[%c0_6, %c0_7] : memref<32x64xf32, #tpu.memory_space<vmem>>, vector<32x64xf32>
    tpu.vector_store %arg7[%c0_6, %c0_7], %7 {strides = array<i32>} : memref<32x64xf32, #tpu.memory_space<vmem>>, vector<32x64xf32>,
    %c0_i32_8 = arith.constant 0 : i32
    %9 = arith.cmpi eq, %arg2, %c0_i32_8 : i32
    %10 = arith.extui %9 : i1 to i32
    %c0_i32_9 = arith.constant 0 : i32
    %11 = arith.cmpi ne, %10, %c0_i32_9 : i32
    scf.if %11 {
      %c0_10 = arith.constant 0 : index
      %c0_11 = arith.constant 0 : index
      %12 = vector.load %arg7[%c0_10, %c0_11] : memref<32x64xf32, #tpu.memory_space<vmem>>, vector<32x64xf32>
      %c0_12 = arith.constant 0 : index
      %c0_13 = arith.constant 0 : index
      %13 = vector.load %arg5[%c0_12, %c0_13] : memref<1x64xf32, #tpu.memory_space<vmem>>, vector<1x64xf32>
      %14 = vector.broadcast %13 : vector<1x64xf32> to vector<32x64xf32>
      %15 = arith.addf %12, %14 : vector<32x64xf32>
      %c0_14 = arith.constant 0 : index
      %c0_15 = arith.constant 0 : index
      %16 = vector.load %arg6[%c0_14, %c0_15] : memref<32x64xf32, #tpu.memory_space<vmem>>, vector<32x64xf32>
      tpu.vector_store %arg6[%c0_14, %c0_15], %15 {strides = array<i32>} : memref<32x64xf32, #tpu.memory_space<vmem>>, vector<32x64xf32>,
    } else {
    }
    return
  }
  func.func @transform_0(%arg0: i32, %arg1: i32, %arg2: i32) -> (i32, i32) {
    %c0_i32 = arith.constant 0 : i32
    return %arg0, %arg2 : i32, i32
  }
  func.func @transform_1(%arg0: i32, %arg1: i32, %arg2: i32) -> (i32, i32) {
    %c0_i32 = arith.constant 0 : i32
    return %arg2, %arg1 : i32, i32
  }
  func.func @transform_2(%arg0: i32, %arg1: i32, %arg2: i32) -> (i32, i32) {
    %c0_i32 = arith.constant 0 : i32
    %c0_i32_0 = arith.constant 0 : i32
    return %c0_i32, %arg1 : i32, i32
  }
  func.func @transform_3(%arg0: i32, %arg1: i32, %arg2: i32) -> (i32, i32) {
    %c0_i32 = arith.constant 0 : i32
    return %arg0, %arg1 : i32, i32
  }
}

module attributes {stable_mosaic.version = 11 : i64} {
  func.func @_mm_kernel(%arg0: i32, %arg1: i32, %arg2: i32, %arg3: memref<32x64xbf16, #tpu.memory_space<vmem>>, %arg4: memref<64x128xbf16, #tpu.memory_space<vmem>>, %arg5: memref<1x128xf32, #tpu.memory_space<vmem>>, %arg6: memref<32x128xbf16, #tpu.memory_space<vmem>>, %arg7: memref<32x128xf32, #tpu.memory_space<vmem>>) attributes {dimension_semantics = [#tpu.dimension_semantics<parallel>, #tpu.dimension_semantics<parallel>, #tpu.dimension_semantics<arbitrary>], iteration_bounds = array<i64: 1, 1, 1>, scalar_prefetch = 0 : i64, scratch_operands = 1 : i64, tpu.core_type = #tpu.core_type<tc>, window_params = [{transform_indices = @transform_0, window_bounds = array<i64: 32, 64>}, {transform_indices = @transform_1, window_bounds = array<i64: 64, 128>}, {transform_indices = @transform_2, window_bounds = array<i64: 1, 128>}, {transform_indices = @transform_3, window_bounds = array<i64: 32, 128>}]} {
    %c0_i32 = arith.constant 0 : i32
    %0 = arith.cmpi eq, %arg2, %c0_i32 : i32
    %1 = arith.extui %0 : i1 to i32
    %c0_i32_0 = arith.constant 0 : i32
    %2 = arith.cmpi ne, %1, %c0_i32_0 : i32
    scf.if %2 {
      %cst_10 = arith.constant 0.000000e+00 : f32
      %12 = vector.broadcast %cst_10 : f32 to vector<32x128xf32>
      %c0_11 = arith.constant 0 : index
      %c0_12 = arith.constant 0 : index
      %13 = vector.load %arg7[%c0_11, %c0_12] : memref<32x128xf32, #tpu.memory_space<vmem>>, vector<32x128xf32>
      tpu.vector_store %arg7[%c0_11, %c0_12], %12 {strides = array<i32>} : memref<32x128xf32, #tpu.memory_space<vmem>>, vector<32x128xf32>,
    } else {
    }
    %c0 = arith.constant 0 : index
    %c0_1 = arith.constant 0 : index
    %3 = vector.load %arg7[%c0, %c0_1] : memref<32x128xf32, #tpu.memory_space<vmem>>, vector<32x128xf32>
    %c0_2 = arith.constant 0 : index
    %c0_3 = arith.constant 0 : index
    %4 = vector.load %arg3[%c0_2, %c0_3] : memref<32x64xbf16, #tpu.memory_space<vmem>>, vector<32x64xbf16>
    %c0_4 = arith.constant 0 : index
    %c0_5 = arith.constant 0 : index
    %5 = vector.load %arg4[%c0_4, %c0_5] : memref<64x128xbf16, #tpu.memory_space<vmem>>, vector<64x128xbf16>
    %cst = arith.constant dense<0.000000e+00> : vector<32x128xf32>
    %6 = tpu.matmul %4, %5, %cst {dimension_numbers = #tpu.dot_dimension_numbers<[1], [0], [0], [1], [0, 0, 1, 1], [], []>} : vector<32x64xbf16>, vector<64x128xbf16>, vector<32x128xf32> -> vector<32x128xf32>
    %7 = arith.addf %3, %6 : vector<32x128xf32>
    %c0_6 = arith.constant 0 : index
    %c0_7 = arith.constant 0 : index
    %8 = vector.load %arg7[%c0_6, %c0_7] : memref<32x128xf32, #tpu.memory_space<vmem>>, vector<32x128xf32>
    tpu.vector_store %arg7[%c0_6, %c0_7], %7 {strides = array<i32>} : memref<32x128xf32, #tpu.memory_space<vmem>>, vector<32x128xf32>,
    %c0_i32_8 = arith.constant 0 : i32
    %9 = arith.cmpi eq, %arg2, %c0_i32_8 : i32
    %10 = arith.extui %9 : i1 to i32
    %c0_i32_9 = arith.constant 0 : i32
    %11 = arith.cmpi ne, %10, %c0_i32_9 : i32
    scf.if %11 {
      %c0_10 = arith.constant 0 : index
      %c0_11 = arith.constant 0 : index
      %12 = vector.load %arg7[%c0_10, %c0_11] : memref<32x128xf32, #tpu.memory_space<vmem>>, vector<32x128xf32>
      %c0_12 = arith.constant 0 : index
      %c0_13 = arith.constant 0 : index
      %13 = vector.load %arg5[%c0_12, %c0_13] : memref<1x128xf32, #tpu.memory_space<vmem>>, vector<1x128xf32>
      %14 = vector.broadcast %13 : vector<1x128xf32> to vector<32x128xf32>
      %15 = arith.addf %12, %14 : vector<32x128xf32>
      %cst_14 = arith.constant 0.000000e+00 : f32
      %16 = vector.broadcast %cst_14 : f32 to vector<32x128xf32>
      %17 = arith.maximumf %15, %16 : vector<32x128xf32>
      %18 = arith.truncf %17 : vector<32x128xf32> to vector<32x128xbf16>
      %c0_15 = arith.constant 0 : index
      %c0_16 = arith.constant 0 : index
      %19 = vector.load %arg6[%c0_15, %c0_16] : memref<32x128xbf16, #tpu.memory_space<vmem>>, vector<32x128xbf16>
      tpu.vector_store %arg6[%c0_15, %c0_16], %18 {strides = array<i32>} : memref<32x128xbf16, #tpu.memory_space<vmem>>, vector<32x128xbf16>,
    } else {
    }
    return
  }
  func.func @transform_0(%arg0: i32, %arg1: i32, %arg2: i32) -> (i32, i32) {
    %c0_i32 = arith.constant 0 : i32
    return %arg0, %arg2 : i32, i32
  }
  func.func @transform_1(%arg0: i32, %arg1: i32, %arg2: i32) -> (i32, i32) {
    %c0_i32 = arith.constant 0 : i32
    return %arg2, %arg1 : i32, i32
  }
  func.func @transform_2(%arg0: i32, %arg1: i32, %arg2: i32) -> (i32, i32) {
    %c0_i32 = arith.constant 0 : i32
    %c0_i32_0 = arith.constant 0 : i32
    return %c0_i32, %arg1 : i32, i32
  }
  func.func @transform_3(%arg0: i32, %arg1: i32, %arg2: i32) -> (i32, i32) {
    %c0_i32 = arith.constant 0 : i32
    return %arg0, %arg1 : i32, i32
  }
}

module attributes {stable_mosaic.version = 11 : i64} {
  func.func @_add_ln_kernel(%arg0: i32, %arg1: memref<32x64xf32, #tpu.memory_space<vmem>>, %arg2: memref<32x64xf32, #tpu.memory_space<vmem>>, %arg3: memref<1x64xf32, #tpu.memory_space<vmem>>, %arg4: memref<1x64xf32, #tpu.memory_space<vmem>>, %arg5: memref<32x64xf32, #tpu.memory_space<vmem>>, %arg6: memref<32x64xf32, #tpu.memory_space<vmem>>) attributes {dimension_semantics = [#tpu.dimension_semantics<parallel>], iteration_bounds = array<i64: 1>, scalar_prefetch = 0 : i64, scratch_operands = 0 : i64, tpu.core_type = #tpu.core_type<tc>, window_params = [{transform_indices = @transform_0, window_bounds = array<i64: 32, 64>}, {transform_indices = @transform_1, window_bounds = array<i64: 32, 64>}, {pipeline_mode = #tpu.pipeline_mode<synchronous>, transform_indices = @transform_2, window_bounds = array<i64: 1, 64>}, {pipeline_mode = #tpu.pipeline_mode<synchronous>, transform_indices = @transform_3, window_bounds = array<i64: 1, 64>}, {transform_indices = @transform_4, window_bounds = array<i64: 32, 64>}, {transform_indices = @transform_5, window_bounds = array<i64: 32, 64>}]} {
    %c0 = arith.constant 0 : index
    %c0_0 = arith.constant 0 : index
    %0 = vector.load %arg1[%c0, %c0_0] : memref<32x64xf32, #tpu.memory_space<vmem>>, vector<32x64xf32>
    %c0_1 = arith.constant 0 : index
    %c0_2 = arith.constant 0 : index
    %1 = vector.load %arg2[%c0_1, %c0_2] : memref<32x64xf32, #tpu.memory_space<vmem>>, vector<32x64xf32>
    %2 = arith.addf %0, %1 : vector<32x64xf32>
    %c0_3 = arith.constant 0 : index
    %c0_4 = arith.constant 0 : index
    %3 = vector.load %arg5[%c0_3, %c0_4] : memref<32x64xf32, #tpu.memory_space<vmem>>, vector<32x64xf32>
    tpu.vector_store %arg5[%c0_3, %c0_4], %2 {strides = array<i32>} : memref<32x64xf32, #tpu.memory_space<vmem>>, vector<32x64xf32>,
    %cst = arith.constant dense<0.000000e+00> : vector<32xf32>
    %4 = vector.multi_reduction <add>, %2, %cst [1] : vector<32x64xf32> to vector<32xf32>
    %5 = vector.shape_cast %4 : vector<32xf32> to vector<32x1xf32>
    %cst_5 = arith.constant 6.400000e+01 : f32
    %6 = vector.broadcast %cst_5 : f32 to vector<32x1xf32>
    %7 = arith.divf %5, %6 : vector<32x1xf32>
    %8 = vector.broadcast %7 : vector<32x1xf32> to vector<32x64xf32>
    %9 = arith.subf %2, %8 : vector<32x64xf32>
    %10 = arith.mulf %9, %9 : vector<32x64xf32>
    %cst_6 = arith.constant dense<0.000000e+00> : vector<32xf32>
    %11 = vector.multi_reduction <add>, %10, %cst_6 [1] : vector<32x64xf32> to vector<32xf32>
    %12 = vector.shape_cast %11 : vector<32xf32> to vector<32x1xf32>
    %cst_7 = arith.constant 6.400000e+01 : f32
    %13 = vector.broadcast %cst_7 : f32 to vector<32x1xf32>
    %14 = arith.divf %12, %13 : vector<32x1xf32>
    %cst_8 = arith.constant 9.99999974E-6 : f32
    %15 = vector.broadcast %cst_8 : f32 to vector<32x1xf32>
    %16 = arith.addf %14, %15 : vector<32x1xf32>
    %17 = math.rsqrt %16 : vector<32x1xf32>
    %18 = vector.broadcast %17 : vector<32x1xf32> to vector<32x64xf32>
    %19 = arith.mulf %9, %18 : vector<32x64xf32>
    %c0_9 = arith.constant 0 : index
    %c0_10 = arith.constant 0 : index
    %20 = vector.load %arg3[%c0_9, %c0_10] : memref<1x64xf32, #tpu.memory_space<vmem>>, vector<1x64xf32>
    %21 = vector.broadcast %20 : vector<1x64xf32> to vector<32x64xf32>
    %22 = arith.mulf %19, %21 : vector<32x64xf32>
    %c0_11 = arith.constant 0 : index
    %c0_12 = arith.constant 0 : index
    %23 = vector.load %arg4[%c0_11, %c0_12] : memref<1x64xf32, #tpu.memory_space<vmem>>, vector<1x64xf32>
    %24 = vector.broadcast %23 : vector<1x64xf32> to vector<32x64xf32>
    %25 = arith.addf %22, %24 : vector<32x64xf32>
    %c0_13 = arith.constant 0 : index
    %c0_14 = arith.constant 0 : index
    %26 = vector.load %arg6[%c0_13, %c0_14] : memref<32x64xf32, #tpu.memory_space<vmem>>, vector<32x64xf32>
    tpu.vector_store %arg6[%c0_13, %c0_14], %25 {strides = array<i32>} : memref<32x64xf32, #tpu.memory_space<vmem>>, vector<32x64xf32>,
    return
  }
  func.func @transform_0(%arg0: i32) -> (i32, i32) {
    %c0_i32 = arith.constant 0 : i32
    %c0_i32_0 = arith.constant 0 : i32
    return %arg0, %c0_i32 : i32, i32
  }
  func.func @transform_1(%arg0: i32) -> (i32, i32) {
    %c0_i32 = arith.constant 0 : i32
    %c0_i32_0 = arith.constant 0 : i32
    return %arg0, %c0_i32 : i32, i32
  }
  func.func @transform_2(%arg0: i32) -> (i32, i32) {
    %c0_i32 = arith.constant 0 : i32
    %c0_i32_0 = arith.constant 0 : i32
    %c0_i32_1 = arith.constant 0 : i32
    return %c0_i32, %c0_i32_0 : i32, i32
  }
  func.func @transform_3(%arg0: i32) -> (i32, i32) {
    %c0_i32 = arith.constant 0 : i32
    %c0_i32_0 = arith.constant 0 : i32
    %c0_i32_1 = arith.constant 0 : i32
    return %c0_i32, %c0_i32_0 : i32, i32
  }
  func.func @transform_4(%arg0: i32) -> (i32, i32) {
    %c0_i32 = arith.constant 0 : i32
    %c0_i32_0 = arith.constant 0 : i32
    return %arg0, %c0_i32 : i32, i32
  }
  func.func @transform_5(%arg0: i32) -> (i32, i32) {
    %c0_i32 = arith.constant 0 : i32
    %c0_i32_0 = arith.constant 0 : i32
    return %arg0, %c0_i32 : i32, i32
  }
}

module attributes {stable_mosaic.version = 11 : i64} {
  func.func @_add_ln_kernel(%arg0: i32, %arg1: memref<32x64xf32, #tpu.memory_space<vmem>>, %arg2: memref<32x64xf32, #tpu.memory_space<vmem>>, %arg3: memref<1x64xf32, #tpu.memory_space<vmem>>, %arg4: memref<1x64xf32, #tpu.memory_space<vmem>>, %arg5: memref<32x64xf32, #tpu.memory_space<vmem>>, %arg6: memref<32x64xf32, #tpu.memory_space<vmem>>) attributes {dimension_semantics = [#tpu.dimension_semantics<parallel>], iteration_bounds = array<i64: 1>, scalar_prefetch = 0 : i64, scratch_operands = 0 : i64, tpu.core_type = #tpu.core_type<tc>, window_params = [{transform_indices = @transform_0, window_bounds = array<i64: 32, 64>}, {transform_indices = @transform_1, window_bounds = array<i64: 32, 64>}, {pipeline_mode = #tpu.pipeline_mode<synchronous>, transform_indices = @transform_2, window_bounds = array<i64: 1, 64>}, {pipeline_mode = #tpu.pipeline_mode<synchronous>, transform_indices = @transform_3, window_bounds = array<i64: 1, 64>}, {transform_indices = @transform_4, window_bounds = array<i64: 32, 64>}, {transform_indices = @transform_5, window_bounds = array<i64: 32, 64>}]} {
    %c0 = arith.constant 0 : index
    %c0_0 = arith.constant 0 : index
    %0 = vector.load %arg1[%c0, %c0_0] : memref<32x64xf32, #tpu.memory_space<vmem>>, vector<32x64xf32>
    %c0_1 = arith.constant 0 : index
    %c0_2 = arith.constant 0 : index
    %1 = vector.load %arg2[%c0_1, %c0_2] : memref<32x64xf32, #tpu.memory_space<vmem>>, vector<32x64xf32>
    %2 = arith.addf %0, %1 : vector<32x64xf32>
    %c0_3 = arith.constant 0 : index
    %c0_4 = arith.constant 0 : index
    %3 = vector.load %arg5[%c0_3, %c0_4] : memref<32x64xf32, #tpu.memory_space<vmem>>, vector<32x64xf32>
    tpu.vector_store %arg5[%c0_3, %c0_4], %2 {strides = array<i32>} : memref<32x64xf32, #tpu.memory_space<vmem>>, vector<32x64xf32>,
    %cst = arith.constant dense<0.000000e+00> : vector<32xf32>
    %4 = vector.multi_reduction <add>, %2, %cst [1] : vector<32x64xf32> to vector<32xf32>
    %5 = vector.shape_cast %4 : vector<32xf32> to vector<32x1xf32>
    %cst_5 = arith.constant 6.400000e+01 : f32
    %6 = vector.broadcast %cst_5 : f32 to vector<32x1xf32>
    %7 = arith.divf %5, %6 : vector<32x1xf32>
    %8 = vector.broadcast %7 : vector<32x1xf32> to vector<32x64xf32>
    %9 = arith.subf %2, %8 : vector<32x64xf32>
    %10 = arith.mulf %9, %9 : vector<32x64xf32>
    %cst_6 = arith.constant dense<0.000000e+00> : vector<32xf32>
    %11 = vector.multi_reduction <add>, %10, %cst_6 [1] : vector<32x64xf32> to vector<32xf32>
    %12 = vector.shape_cast %11 : vector<32xf32> to vector<32x1xf32>
    %cst_7 = arith.constant 6.400000e+01 : f32
    %13 = vector.broadcast %cst_7 : f32 to vector<32x1xf32>
    %14 = arith.divf %12, %13 : vector<32x1xf32>
    %cst_8 = arith.constant 9.99999974E-6 : f32
    %15 = vector.broadcast %cst_8 : f32 to vector<32x1xf32>
    %16 = arith.addf %14, %15 : vector<32x1xf32>
    %17 = math.rsqrt %16 : vector<32x1xf32>
    %18 = vector.broadcast %17 : vector<32x1xf32> to vector<32x64xf32>
    %19 = arith.mulf %9, %18 : vector<32x64xf32>
    %c0_9 = arith.constant 0 : index
    %c0_10 = arith.constant 0 : index
    %20 = vector.load %arg3[%c0_9, %c0_10] : memref<1x64xf32, #tpu.memory_space<vmem>>, vector<1x64xf32>
    %21 = vector.broadcast %20 : vector<1x64xf32> to vector<32x64xf32>
    %22 = arith.mulf %19, %21 : vector<32x64xf32>
    %c0_11 = arith.constant 0 : index
    %c0_12 = arith.constant 0 : index
    %23 = vector.load %arg4[%c0_11, %c0_12] : memref<1x64xf32, #tpu.memory_space<vmem>>, vector<1x64xf32>
    %24 = vector.broadcast %23 : vector<1x64xf32> to vector<32x64xf32>
    %25 = arith.addf %22, %24 : vector<32x64xf32>
    %c0_13 = arith.constant 0 : index
    %c0_14 = arith.constant 0 : index
    %26 = vector.load %arg6[%c0_13, %c0_14] : memref<32x64xf32, #tpu.memory_space<vmem>>, vector<32x64xf32>
    tpu.vector_store %arg6[%c0_13, %c0_14], %25 {strides = array<i32>} : memref<32x64xf32, #tpu.memory_space<vmem>>, vector<32x64xf32>,
    return
  }
  func.func @transform_0(%arg0: i32) -> (i32, i32) {
    %c0_i32 = arith.constant 0 : i32
    %c0_i32_0 = arith.constant 0 : i32
    return %arg0, %c0_i32 : i32, i32
  }
  func.func @transform_1(%arg0: i32) -> (i32, i32) {
    %c0_i32 = arith.constant 0 : i32
    %c0_i32_0 = arith.constant 0 : i32
    return %arg0, %c0_i32 : i32, i32
  }
  func.func @transform_2(%arg0: i32) -> (i32, i32) {
    %c0_i32 = arith.constant 0 : i32
    %c0_i32_0 = arith.constant 0 : i32
    %c0_i32_1 = arith.constant 0 : i32
    return %c0_i32, %c0_i32_0 : i32, i32
  }
  func.func @transform_3(%arg0: i32) -> (i32, i32) {
    %c0_i32 = arith.constant 0 : i32
    %c0_i32_0 = arith.constant 0 : i32
    %c0_i32_1 = arith.constant 0 : i32
    return %c0_i32, %c0_i32_0 : i32, i32
  }
  func.func @transform_4(%arg0: i32) -> (i32, i32) {
    %c0_i32 = arith.constant 0 : i32
    %c0_i32_0 = arith.constant 0 : i32
    return %arg0, %c0_i32 : i32, i32
  }
  func.func @transform_5(%arg0: i32) -> (i32, i32) {
    %c0_i32 = arith.constant 0 : i32
    %c0_i32_0 = arith.constant 0 : i32
    return %arg0, %c0_i32 : i32, i32
  }
}

module attributes {stable_mosaic.version = 11 : i64} {
  func.func @_mm_kernel(%arg0: i32, %arg1: i32, %arg2: i32, %arg3: memref<32x128xbf16, #tpu.memory_space<vmem>>, %arg4: memref<128x64xbf16, #tpu.memory_space<vmem>>, %arg5: memref<1x64xf32, #tpu.memory_space<vmem>>, %arg6: memref<32x64xf32, #tpu.memory_space<vmem>>, %arg7: memref<32x64xf32, #tpu.memory_space<vmem>>) attributes {dimension_semantics = [#tpu.dimension_semantics<parallel>, #tpu.dimension_semantics<parallel>, #tpu.dimension_semantics<arbitrary>], iteration_bounds = array<i64: 1, 1, 1>, scalar_prefetch = 0 : i64, scratch_operands = 1 : i64, tpu.core_type = #tpu.core_type<tc>, window_params = [{transform_indices = @transform_0, window_bounds = array<i64: 32, 128>}, {transform_indices = @transform_1, window_bounds = array<i64: 128, 64>}, {transform_indices = @transform_2, window_bounds = array<i64: 1, 64>}, {transform_indices = @transform_3, window_bounds = array<i64: 32, 64>}]} {
    %c0_i32 = arith.constant 0 : i32
    %0 = arith.cmpi eq, %arg2, %c0_i32 : i32
    %1 = arith.extui %0 : i1 to i32
    %c0_i32_0 = arith.constant 0 : i32
    %2 = arith.cmpi ne, %1, %c0_i32_0 : i32
    scf.if %2 {
      %cst_10 = arith.constant 0.000000e+00 : f32
      %12 = vector.broadcast %cst_10 : f32 to vector<32x64xf32>
      %c0_11 = arith.constant 0 : index
      %c0_12 = arith.constant 0 : index
      %13 = vector.load %arg7[%c0_11, %c0_12] : memref<32x64xf32, #tpu.memory_space<vmem>>, vector<32x64xf32>
      tpu.vector_store %arg7[%c0_11, %c0_12], %12 {strides = array<i32>} : memref<32x64xf32, #tpu.memory_space<vmem>>, vector<32x64xf32>,
    } else {
    }
    %c0 = arith.constant 0 : index
    %c0_1 = arith.constant 0 : index
    %3 = vector.load %arg7[%c0, %c0_1] : memref<32x64xf32, #tpu.memory_space<vmem>>, vector<32x64xf32>
    %c0_2 = arith.constant 0 : index
    %c0_3 = arith.constant 0 : index
    %4 = vector.load %arg3[%c0_2, %c0_3] : memref<32x128xbf16, #tpu.memory_space<vmem>>, vector<32x128xbf16>
    %c0_4 = arith.constant 0 : index
    %c0_5 = arith.constant 0 : index
    %5 = vector.load %arg4[%c0_4, %c0_5] : memref<128x64xbf16, #tpu.memory_space<vmem>>, vector<128x64xbf16>
    %cst = arith.constant dense<0.000000e+00> : vector<32x64xf32>
    %6 = tpu.matmul %4, %5, %cst {dimension_numbers = #tpu.dot_dimension_numbers<[1], [0], [0], [1], [0, 0, 1, 1], [], []>} : vector<32x128xbf16>, vector<128x64xbf16>, vector<32x64xf32> -> vector<32x64xf32>
    %7 = arith.addf %3, %6 : vector<32x64xf32>
    %c0_6 = arith.constant 0 : index
    %c0_7 = arith.constant 0 : index
    %8 = vector.load %arg7[%c0_6, %c0_7] : memref<32x64xf32, #tpu.memory_space<vmem>>, vector<32x64xf32>
    tpu.vector_store %arg7[%c0_6, %c0_7], %7 {strides = array<i32>} : memref<32x64xf32, #tpu.memory_space<vmem>>, vector<32x64xf32>,
    %c0_i32_8 = arith.constant 0 : i32
    %9 = arith.cmpi eq, %arg2, %c0_i32_8 : i32
    %10 = arith.extui %9 : i1 to i32
    %c0_i32_9 = arith.constant 0 : i32
    %11 = arith.cmpi ne, %10, %c0_i32_9 : i32
    scf.if %11 {
      %c0_10 = arith.constant 0 : index
      %c0_11 = arith.constant 0 : index
      %12 = vector.load %arg7[%c0_10, %c0_11] : memref<32x64xf32, #tpu.memory_space<vmem>>, vector<32x64xf32>
      %c0_12 = arith.constant 0 : index
      %c0_13 = arith.constant 0 : index
      %13 = vector.load %arg5[%c0_12, %c0_13] : memref<1x64xf32, #tpu.memory_space<vmem>>, vector<1x64xf32>
      %14 = vector.broadcast %13 : vector<1x64xf32> to vector<32x64xf32>
      %15 = arith.addf %12, %14 : vector<32x64xf32>
      %c0_14 = arith.constant 0 : index
      %c0_15 = arith.constant 0 : index
      %16 = vector.load %arg6[%c0_14, %c0_15] : memref<32x64xf32, #tpu.memory_space<vmem>>, vector<32x64xf32>
      tpu.vector_store %arg6[%c0_14, %c0_15], %15 {strides = array<i32>} : memref<32x64xf32, #tpu.memory_space<vmem>>, vector<32x64xf32>,
    } else {
    }
    return
  }
  func.func @transform_0(%arg0: i32, %arg1: i32, %arg2: i32) -> (i32, i32) {
    %c0_i32 = arith.constant 0 : i32
    return %arg0, %arg2 : i32, i32
  }
  func.func @transform_1(%arg0: i32, %arg1: i32, %arg2: i32) -> (i32, i32) {
    %c0_i32 = arith.constant 0 : i32
    return %arg2, %arg1 : i32, i32
  }
  func.func @transform_2(%arg0: i32, %arg1: i32, %arg2: i32) -> (i32, i32) {
    %c0_i32 = arith.constant 0 : i32
    %c0_i32_0 = arith.constant 0 : i32
    return %c0_i32, %arg1 : i32, i32
  }
  func.func @transform_3(%arg0: i32, %arg1: i32, %arg2: i32) -> (i32, i32) {
    %c0_i32 = arith.constant 0 : i32
    return %arg0, %arg1 : i32, i32
  }
}

module attributes {stable_mosaic.version = 11 : i64} {
  func.func @_mm_kernel(%arg0: i32, %arg1: i32, %arg2: i32, %arg3: memref<2x64xbf16, #tpu.memory_space<vmem>>, %arg4: memref<64x300xbf16, #tpu.memory_space<vmem>>, %arg5: memref<1x300xf32, #tpu.memory_space<vmem>>, %arg6: memref<2x300xf32, #tpu.memory_space<vmem>>, %arg7: memref<2x300xf32, #tpu.memory_space<vmem>>) attributes {dimension_semantics = [#tpu.dimension_semantics<parallel>, #tpu.dimension_semantics<parallel>, #tpu.dimension_semantics<arbitrary>], iteration_bounds = array<i64: 1, 1, 1>, scalar_prefetch = 0 : i64, scratch_operands = 1 : i64, tpu.core_type = #tpu.core_type<tc>, window_params = [{transform_indices = @transform_0, window_bounds = array<i64: 2, 64>}, {transform_indices = @transform_1, window_bounds = array<i64: 64, 300>}, {transform_indices = @transform_2, window_bounds = array<i64: 1, 300>}, {transform_indices = @transform_3, window_bounds = array<i64: 2, 300>}]} {
    %c0_i32 = arith.constant 0 : i32
    %0 = arith.cmpi eq, %arg2, %c0_i32 : i32
    %1 = arith.extui %0 : i1 to i32
    %c0_i32_0 = arith.constant 0 : i32
    %2 = arith.cmpi ne, %1, %c0_i32_0 : i32
    scf.if %2 {
      %cst_10 = arith.constant 0.000000e+00 : f32
      %12 = vector.broadcast %cst_10 : f32 to vector<2x300xf32>
      %c0_11 = arith.constant 0 : index
      %c0_12 = arith.constant 0 : index
      %13 = vector.load %arg7[%c0_11, %c0_12] : memref<2x300xf32, #tpu.memory_space<vmem>>, vector<2x300xf32>
      tpu.vector_store %arg7[%c0_11, %c0_12], %12 {strides = array<i32>} : memref<2x300xf32, #tpu.memory_space<vmem>>, vector<2x300xf32>,
    } else {
    }
    %c0 = arith.constant 0 : index
    %c0_1 = arith.constant 0 : index
    %3 = vector.load %arg7[%c0, %c0_1] : memref<2x300xf32, #tpu.memory_space<vmem>>, vector<2x300xf32>
    %c0_2 = arith.constant 0 : index
    %c0_3 = arith.constant 0 : index
    %4 = vector.load %arg3[%c0_2, %c0_3] : memref<2x64xbf16, #tpu.memory_space<vmem>>, vector<2x64xbf16>
    %c0_4 = arith.constant 0 : index
    %c0_5 = arith.constant 0 : index
    %5 = vector.load %arg4[%c0_4, %c0_5] : memref<64x300xbf16, #tpu.memory_space<vmem>>, vector<64x300xbf16>
    %cst = arith.constant dense<0.000000e+00> : vector<2x300xf32>
    %6 = tpu.matmul %4, %5, %cst {dimension_numbers = #tpu.dot_dimension_numbers<[1], [0], [0], [1], [0, 0, 1, 1], [], []>} : vector<2x64xbf16>, vector<64x300xbf16>, vector<2x300xf32> -> vector<2x300xf32>
    %7 = arith.addf %3, %6 : vector<2x300xf32>
    %c0_6 = arith.constant 0 : index
    %c0_7 = arith.constant 0 : index
    %8 = vector.load %arg7[%c0_6, %c0_7] : memref<2x300xf32, #tpu.memory_space<vmem>>, vector<2x300xf32>
    tpu.vector_store %arg7[%c0_6, %c0_7], %7 {strides = array<i32>} : memref<2x300xf32, #tpu.memory_space<vmem>>, vector<2x300xf32>,
    %c0_i32_8 = arith.constant 0 : i32
    %9 = arith.cmpi eq, %arg2, %c0_i32_8 : i32
    %10 = arith.extui %9 : i1 to i32
    %c0_i32_9 = arith.constant 0 : i32
    %11 = arith.cmpi ne, %10, %c0_i32_9 : i32
    scf.if %11 {
      %c0_10 = arith.constant 0 : index
      %c0_11 = arith.constant 0 : index
      %12 = vector.load %arg7[%c0_10, %c0_11] : memref<2x300xf32, #tpu.memory_space<vmem>>, vector<2x300xf32>
      %c0_12 = arith.constant 0 : index
      %c0_13 = arith.constant 0 : index
      %13 = vector.load %arg5[%c0_12, %c0_13] : memref<1x300xf32, #tpu.memory_space<vmem>>, vector<1x300xf32>
      %14 = vector.broadcast %13 : vector<1x300xf32> to vector<2x300xf32>
      %15 = arith.addf %12, %14 : vector<2x300xf32>
      %c0_14 = arith.constant 0 : index
      %c0_15 = arith.constant 0 : index
      %16 = vector.load %arg6[%c0_14, %c0_15] : memref<2x300xf32, #tpu.memory_space<vmem>>, vector<2x300xf32>
      tpu.vector_store %arg6[%c0_14, %c0_15], %15 {strides = array<i32>} : memref<2x300xf32, #tpu.memory_space<vmem>>, vector<2x300xf32>,
    } else {
    }
    return
  }
  func.func @transform_0(%arg0: i32, %arg1: i32, %arg2: i32) -> (i32, i32) {
    %c0_i32 = arith.constant 0 : i32
    return %arg0, %arg2 : i32, i32
  }
  func.func @transform_1(%arg0: i32, %arg1: i32, %arg2: i32) -> (i32, i32) {
    %c0_i32 = arith.constant 0 : i32
    return %arg2, %arg1 : i32, i32
  }
  func.func @transform_2(%arg0: i32, %arg1: i32, %arg2: i32) -> (i32, i32) {
    %c0_i32 = arith.constant 0 : i32
    %c0_i32_0 = arith.constant 0 : i32
    return %c0_i32, %arg1 : i32, i32
  }
  func.func @transform_3(%arg0: i32, %arg1: i32, %arg2: i32) -> (i32, i32) {
    %c0_i32 = arith.constant 0 : i32
    return %arg0, %arg1 : i32, i32
  }
}

module attributes {stable_mosaic.version = 11 : i64} {
  func.func @_mm_kernel(%arg0: i32, %arg1: i32, %arg2: i32, %arg3: memref<32x64xbf16, #tpu.memory_space<vmem>>, %arg4: memref<64x2xbf16, #tpu.memory_space<vmem>>, %arg5: memref<1x2xf32, #tpu.memory_space<vmem>>, %arg6: memref<32x2xf32, #tpu.memory_space<vmem>>, %arg7: memref<32x2xf32, #tpu.memory_space<vmem>>) attributes {dimension_semantics = [#tpu.dimension_semantics<parallel>, #tpu.dimension_semantics<parallel>, #tpu.dimension_semantics<arbitrary>], iteration_bounds = array<i64: 1, 1, 1>, scalar_prefetch = 0 : i64, scratch_operands = 1 : i64, tpu.core_type = #tpu.core_type<tc>, window_params = [{transform_indices = @transform_0, window_bounds = array<i64: 32, 64>}, {transform_indices = @transform_1, window_bounds = array<i64: 64, 2>}, {transform_indices = @transform_2, window_bounds = array<i64: 1, 2>}, {transform_indices = @transform_3, window_bounds = array<i64: 32, 2>}]} {
    %c0_i32 = arith.constant 0 : i32
    %0 = arith.cmpi eq, %arg2, %c0_i32 : i32
    %1 = arith.extui %0 : i1 to i32
    %c0_i32_0 = arith.constant 0 : i32
    %2 = arith.cmpi ne, %1, %c0_i32_0 : i32
    scf.if %2 {
      %cst_10 = arith.constant 0.000000e+00 : f32
      %12 = vector.broadcast %cst_10 : f32 to vector<32x2xf32>
      %c0_11 = arith.constant 0 : index
      %c0_12 = arith.constant 0 : index
      %13 = vector.load %arg7[%c0_11, %c0_12] : memref<32x2xf32, #tpu.memory_space<vmem>>, vector<32x2xf32>
      tpu.vector_store %arg7[%c0_11, %c0_12], %12 {strides = array<i32>} : memref<32x2xf32, #tpu.memory_space<vmem>>, vector<32x2xf32>,
    } else {
    }
    %c0 = arith.constant 0 : index
    %c0_1 = arith.constant 0 : index
    %3 = vector.load %arg7[%c0, %c0_1] : memref<32x2xf32, #tpu.memory_space<vmem>>, vector<32x2xf32>
    %c0_2 = arith.constant 0 : index
    %c0_3 = arith.constant 0 : index
    %4 = vector.load %arg3[%c0_2, %c0_3] : memref<32x64xbf16, #tpu.memory_space<vmem>>, vector<32x64xbf16>
    %c0_4 = arith.constant 0 : index
    %c0_5 = arith.constant 0 : index
    %5 = vector.load %arg4[%c0_4, %c0_5] : memref<64x2xbf16, #tpu.memory_space<vmem>>, vector<64x2xbf16>
    %cst = arith.constant dense<0.000000e+00> : vector<32x2xf32>
    %6 = tpu.matmul %4, %5, %cst {dimension_numbers = #tpu.dot_dimension_numbers<[1], [0], [0], [1], [0, 0, 1, 1], [], []>} : vector<32x64xbf16>, vector<64x2xbf16>, vector<32x2xf32> -> vector<32x2xf32>
    %7 = arith.addf %3, %6 : vector<32x2xf32>
    %c0_6 = arith.constant 0 : index
    %c0_7 = arith.constant 0 : index
    %8 = vector.load %arg7[%c0_6, %c0_7] : memref<32x2xf32, #tpu.memory_space<vmem>>, vector<32x2xf32>
    tpu.vector_store %arg7[%c0_6, %c0_7], %7 {strides = array<i32>} : memref<32x2xf32, #tpu.memory_space<vmem>>, vector<32x2xf32>,
    %c0_i32_8 = arith.constant 0 : i32
    %9 = arith.cmpi eq, %arg2, %c0_i32_8 : i32
    %10 = arith.extui %9 : i1 to i32
    %c0_i32_9 = arith.constant 0 : i32
    %11 = arith.cmpi ne, %10, %c0_i32_9 : i32
    scf.if %11 {
      %c0_10 = arith.constant 0 : index
      %c0_11 = arith.constant 0 : index
      %12 = vector.load %arg7[%c0_10, %c0_11] : memref<32x2xf32, #tpu.memory_space<vmem>>, vector<32x2xf32>
      %c0_12 = arith.constant 0 : index
      %c0_13 = arith.constant 0 : index
      %13 = vector.load %arg5[%c0_12, %c0_13] : memref<1x2xf32, #tpu.memory_space<vmem>>, vector<1x2xf32>
      %14 = vector.broadcast %13 : vector<1x2xf32> to vector<32x2xf32>
      %15 = arith.addf %12, %14 : vector<32x2xf32>
      %c0_14 = arith.constant 0 : index
      %c0_15 = arith.constant 0 : index
      %16 = vector.load %arg6[%c0_14, %c0_15] : memref<32x2xf32, #tpu.memory_space<vmem>>, vector<32x2xf32>
      tpu.vector_store %arg6[%c0_14, %c0_15], %15 {strides = array<i32>} : memref<32x2xf32, #tpu.memory_space<vmem>>, vector<32x2xf32>,
    } else {
    }
    return
  }
  func.func @transform_0(%arg0: i32, %arg1: i32, %arg2: i32) -> (i32, i32) {
    %c0_i32 = arith.constant 0 : i32
    return %arg0, %arg2 : i32, i32
  }
  func.func @transform_1(%arg0: i32, %arg1: i32, %arg2: i32) -> (i32, i32) {
    %c0_i32 = arith.constant 0 : i32
    return %arg2, %arg1 : i32, i32
  }
  func.func @transform_2(%arg0: i32, %arg1: i32, %arg2: i32) -> (i32, i32) {
    %c0_i32 = arith.constant 0 : i32
    %c0_i32_0 = arith.constant 0 : i32
    return %c0_i32, %arg1 : i32, i32
  }
  func.func @transform_3(%arg0: i32, %arg1: i32, %arg2: i32) -> (i32, i32) {
    %c0_i32 = arith.constant 0 : i32
    return %arg0, %arg1 : i32, i32
  }
}

</mosaic_0001>

<llo_original>
// kernel: forward.20
$region0: #{forward.20}
  #allocation0 [shape = 'u32[]', space=smem, size = 0x4, offset = 0x4, fixed_abs, tag = 'smem constant byte address 0x4 - core index']
  #allocation1 [shape = 'u32[144,128]{1,0:T(1,128)}', space=vmem, size = 0x12000, scoped, tag = 'internal scratch']
  #allocation2 [shape = 'f32[256,32]{1,0:T(8,128)}', space=vmem, size = 0x20000, scoped, tag = 'scratch operand']
  %s0 = inlined_call_operand.vmem [shape: bf16[4536,9], index: 0, kind: input, shape index: {}]
  %s1 = inlined_call_operand.vmem [shape: bf16[9,32], index: 1, kind: input, shape index: {}]
  %s2 = inlined_call_operand.hbm [shape: f32[1,32], index: 2, kind: input, shape index: {}]
  %s3 = inlined_call_operand.vmem [shape: bf16[4536,32], index: 3, kind: output, shape index: {}]
  %s4 = sld [smem:[#allocation0]]
  $region101: #{forward.20} parent=0
    _
  %s6 = ssub.s32 1, %s4
  %s7 = scalar_select 0, %s6, %s4
  $region1: #{forward.20} parent=0
    #allocation3 [shape = 'u8[512]{0}', space=vmem, size = 0x400, scoped, tag = 'input window, operand 2, single buffered']
    #allocation4 [shape = 's32[2]{0}', space=sflag, size = 0x8, scoped, tag = 'scoped memory for forward.20']
    #allocation5 [shape = 'u8[131072]{0}', space=vmem, size = 0x20000, scoped, tag = 'output window, operand 0']
    %8 = vsyncpa [#allocation4], 0
    loop: start=0, step=1, limit=20
    $region2: #{forward.20} parent=1 // loop_pre_header
      _
    $region3: #{forward.20} parent=1 // loop_header
      %s10 = sphi 0, %s14
      %p11 = scmp.ge.s32.totalorder %s10, 20
      %s17 = sphi 0, %s36
      %s18 = sphi 0, %s32
      %s19 = sphi 0, %s28
      %s20 = sphi 0, %s17
      %s21 = sphi 0, %s18
      %s22 = sphi 0, %s19
      %s23 = sphi 0, %s20
      %s24 = sphi 0, %s21
      %s25 = sphi 0, %s22
      %s41 = sphi 0, %s43
      %s44 = sphi 0, %s41
      %s45 = sphi 0, %s44
      %s61 = sphi 0, %s45
      %s69 = sphi 0, %s71
      %s72 = sphi 0, %s69
      %s73 = sphi 0, %s72
      %s89 = sphi 0, %s73
      %s95 = sphi 0, %s97
      %s98 = sphi 0, %s95
      %s99 = sphi 0, %s98
      %s115 = sphi 0, %s99
      %s123 = sphi 0, %s125
      %s126 = sphi 0, %s123
      %s127 = sphi 0, %s126
      %s143 = sphi 0, %s127
    $region4: #{forward.20} parent=1 // loop_header_branch
      %13 = sbr.rel (%p11) target = $region8
    $region5: #{forward.20} parent=1 // loop_body
      %s15 = ssub.s32 %s10, 1
      %s16 = ssub.s32 %s10, 2
      %s26 = sadd.s32 1, %s19
      %p27 = scmp.ge.s32.totalorder %s26, 1
      %s28 = scalar_select %p27, 0, %s26
      %s29 = sadd.s32 1, %s18
      %s30 = scalar_select %p27, %s29, %s18
      %p31 = scmp.ge.s32.totalorder %s30, 1
      %s32 = scalar_select %p31, 0, %s30
      %s33 = sadd.s32 1, %s17
      %s34 = scalar_select %p31, %s33, %s17
      %p35 = scmp.ge.s32.totalorder %s34, 18
      %s36 = scalar_select %p35, 0, %s34
      %s37 = ssub.s32 %s17, %s36
      %s38 = ssub.s32 %s19, %s28
      %s39 = sor.u32 %s37, %s38
      %p40 = scmp.eq.s32.totalorder %s39, 0
      %s42 = sadd.s32 %s41, 1
      %s43 = scalar_select %p40, %s41, %s42
      %p46 = pneg %p40
      %p47 = scmp.eq.s32.totalorder %s10, 17
      %p48 = por %p46, %p47
      %p49 = scmp.ne.s32.totalorder %s41, %s44
      %p50 = scmp.eq.s32.totalorder %s10, 0
      %p51 = por %p49, %p50
      %p52 = scmp.ne.s32.totalorder %s41, %s44
      %p53 = scmp.eq.s32.totalorder %s15, 17
      %p54 = por %p52, %p53
      %p55 = scmp.ne.s32.totalorder %s44, %s45
      %p56 = scmp.eq.s32.totalorder %s15, 0
      %p57 = por %p55, %p56
      %p58 = scmp.ne.s32.totalorder %s44, %s45
      %p59 = scmp.eq.s32.totalorder %s16, 17
      %p60 = por %p58, %p59
      %p62 = scmp.ne.s32.totalorder %s45, %s61
      %p63 = scmp.eq.s32.totalorder %s16, 0
      %p64 = por %p62, %p63
      %s65 = ssub.s32 %s19, %s28
      %s66 = ssub.s32 %s18, %s32
      %s67 = sor.u32 %s65, %s66
      %p68 = scmp.eq.s32.totalorder %s67, 0
      %s70 = sadd.s32 %s69, 1
      %s71 = scalar_select %p68, %s69, %s70
      %p74 = pneg %p68
      %p75 = scmp.eq.s32.totalorder %s10, 17
      %p76 = por %p74, %p75
      %p77 = scmp.ne.s32.totalorder %s69, %s72
      %p78 = scmp.eq.s32.totalorder %s10, 0
      %p79 = por %p77, %p78
      %p80 = scmp.ne.s32.totalorder %s69, %s72
      %p81 = scmp.eq.s32.totalorder %s15, 17
      %p82 = por %p80, %p81
      %p83 = scmp.ne.s32.totalorder %s72, %s73
      %p84 = scmp.eq.s32.totalorder %s15, 0
      %p85 = por %p83, %p84
      %p86 = scmp.ne.s32.totalorder %s72, %s73
      %p87 = scmp.eq.s32.totalorder %s16, 17
      %p88 = por %p86, %p87
      %p90 = scmp.ne.s32.totalorder %s73, %s89
      %p91 = scmp.eq.s32.totalorder %s16, 0
      %p92 = por %p90, %p91
      %s93 = ssub.s32 %s18, %s32
      %p94 = scmp.eq.s32.totalorder %s93, 0
      %s96 = sadd.s32 %s95, 1
      %s97 = scalar_select %p94, %s95, %s96
      %p100 = pneg %p94
      %p101 = scmp.eq.s32.totalorder %s10, 17
      %p102 = por %p100, %p101
      %p103 = scmp.ne.s32.totalorder %s95, %s98
      %p104 = scmp.eq.s32.totalorder %s10, 0
      %p105 = por %p103, %p104
      %p106 = scmp.ne.s32.totalorder %s95, %s98
      %p107 = scmp.eq.s32.totalorder %s15, 17
      %p108 = por %p106, %p107
      %p109 = scmp.ne.s32.totalorder %s98, %s99
      %p110 = scmp.eq.s32.totalorder %s15, 0
      %p111 = por %p109, %p110
      %p112 = scmp.ne.s32.totalorder %s98, %s99
      %p113 = scmp.eq.s32.totalorder %s16, 17
      %p114 = por %p112, %p113
      %p116 = scmp.ne.s32.totalorder %s99, %s115
      %p117 = scmp.eq.s32.totalorder %s16, 0
      %p118 = por %p116, %p117
      %s119 = ssub.s32 %s17, %s36
      %s120 = ssub.s32 %s18, %s32
      %s121 = sor.u32 %s119, %s120
      %p122 = scmp.eq.s32.totalorder %s121, 0
      %s124 = sadd.s32 %s123, 1
      %s125 = scalar_select %p122, %s123, %s124
      %p128 = pneg %p122
      %p129 = scmp.eq.s32.totalorder %s10, 17
      %p130 = por %p128, %p129
      %p131 = scmp.ne.s32.totalorder %s123, %s126
      %p132 = scmp.eq.s32.totalorder %s10, 0
      %p133 = por %p131, %p132
      %p134 = scmp.ne.s32.totalorder %s123, %s126
      %p135 = scmp.eq.s32.totalorder %s15, 17
      %p136 = por %p134, %p135
      %p137 = scmp.ne.s32.totalorder %s126, %s127
      %p138 = scmp.eq.s32.totalorder %s15, 0
      %p139 = por %p137, %p138
      %p140 = scmp.ne.s32.totalorder %s126, %s127
      %p141 = scmp.eq.s32.totalorder %s16, 17
      %p142 = por %p140, %p141
      %p144 = scmp.ne.s32.totalorder %s127, %s143
      %p145 = scmp.eq.s32.totalorder %s16, 0
      %p146 = por %p144, %p145
      %p147 = scmp.le.s32.totalorder 1, %s10
      %p148 = scmp.lt.s32.totalorder %s10, 19
      %p149 = pnand %p147, %p148
      %p150 = pneg %p149
      // Predicated region
      $region9: #{forward.20} parent=5 // pred_check
        _
      $region10: #{forward.20} parent=5 // pred_check_branch
        %152 = sbr.rel (%p149) target = $region12
      $region11: #{forward.20} parent=5 // pred_region
        %s153 = ssub.s32 %s10, 1
        // Predicated region
        $region13: #{forward.20} parent=11 // pred_check
          %p154 = pneg %p85
        $region14: #{forward.20} parent=11 // pred_check_branch
          %156 = sbr.rel (%p154) target = $region16
        $region15: #{forward.20} parent=11 // pred_region
          %s157 = smul.u32 2, %s22
          %p158 = scmp.lt.s32.totalorder %s157, 1
          %s159 = scalar_select %p158, %s157, 1
          %p160 = scmp.lt.s32.totalorder %s21, 0
          %s161 = scalar_select %p160, %s21, 0
          %s162 = sadd.s32 %s161, %s159
          %s163 = smul.addr %s162, 4
          %s164 = scalar_lea.vmem %s1, %s163
          %s165 = smul.u32 2, %s22
        $region16: #{forward.20} parent=11 // pred_fallthru
          _
        // Predicated region
        $region17: #{forward.20} parent=11 // pred_check
          %p166 = pneg %p111
        $region18: #{forward.20} parent=11 // pred_check_branch
          %168 = sbr.rel (%p166) target = $region20
        $region19: #{forward.20} parent=11 // pred_region
          %s170 = ssub.s32 16, 16
          %171 = vsyncadd [#allocation4], %s170
          %s172 = smul.addr %s21, 16
          %s173 = scalar_lea.hbm %s2, %s172
          %s175 = sshll.u32 [#allocation3], 4
          %s176 = int_to_ptr.vmem [resolvable:$true] %s175
          %178 = dma.hbm_to_vmem [thread:$0]  %s173, 16, %s176, [#allocation4]
        $region20: #{forward.20} parent=11 // pred_fallthru
          _
      $region12: #{forward.20} parent=5 // pred_fallthru
        _
      %p179 = scmp.lt.s32.totalorder %s10, 18
      // Predicated region
      $region21: #{forward.20} parent=5 // pred_check
        %p180 = pneg %p179
      $region22: #{forward.20} parent=5 // pred_check_branch
        %182 = sbr.rel (%p180) target = $region24
      $region23: #{forward.20} parent=5 // pred_region
        // Predicated region
        $region25: #{forward.20} parent=23 // pred_check
          %p183 = pneg %p51
        $region26: #{forward.20} parent=23 // pred_check_branch
          %185 = sbr.rel (%p183) target = $region28
        $region27: #{forward.20} parent=23 // pred_region
          %s186 = smul.u32 32, %s17
          %s187 = ssub.s32 567, %s186
          %p188 = scmp.lt.s32.totalorder %s187, 32
          %s189 = scalar_select %p188, %s187, 32
          %s190 = smul.u32 64, %s189
          %p191 = scmp.lt.s32.totalorder %s186, 566
          %s192 = scalar_select %p191, %s186, 566
          %p193 = scmp.lt.s32.totalorder %s19, 0
          %s194 = scalar_select %p193, %s19, 0
          %s195 = sadd.s32 %s194, %s192
          %s196 = smul.addr %s195, 4
          %s197 = scalar_lea.vmem %s0, %s196
          %s198 = smul.u32 32, %s17
          %s199 = ssub.s32 567, %s198
          %p200 = scmp.lt.s32.totalorder %s199, 32
          %s201 = scalar_select %p200, %s199, 32
          %s202 = smul.u32 64, %s201
        $region28: #{forward.20} parent=23 // pred_fallthru
          _
      $region24: #{forward.20} parent=5 // pred_fallthru
        _
      %p203 = scmp.le.s32.totalorder 1, %s10
      %p204 = scmp.lt.s32.totalorder %s10, 19
      %p205 = pnand %p203, %p204
      %p206 = pneg %p205
      // Predicated region
      $region29: #{forward.20} parent=5 // pred_check
        _
      $region30: #{forward.20} parent=5 // pred_check_branch
        %208 = sbr.rel (%p205) target = $region32
      $region31: #{forward.20} parent=5 // pred_region
        %s209 = ssub.s32 %s10, 1
        // Predicated region
        $region33: #{forward.20} parent=31 // pred_check
          %p210 = pneg %p111
        $region34: #{forward.20} parent=31 // pred_check_branch
          %212 = sbr.rel (%p210) target = $region36
        $region35: #{forward.20} parent=31 // pred_region
          %213 = dma.done [#allocation4], 16
        $region36: #{forward.20} parent=31 // pred_fallthru
          _
        %s214 = smul.u32 32, %s20
        %s215 = ssub.s32 567, %s214
        %p216 = scmp.lt.s32.totalorder %s215, 32
        %s217 = scalar_select %p216, %s215, 32
        %s218 = smul.u32 64, %s217
        %p219 = scmp.lt.s32.totalorder %s214, 566
        %s220 = scalar_select %p219, %s214, 566
        %p221 = scmp.lt.s32.totalorder %s22, 0
        %s222 = scalar_select %p221, %s22, 0
        %s223 = sadd.s32 %s222, %s220
        %s224 = smul.addr %s223, 4
        %s225 = scalar_lea.vmem %s0, %s224
        %p226 = pneg %p57
        %p227 = pneg %p54
        %s228 = smul.u32 2, %s22
        %p229 = scmp.lt.s32.totalorder %s228, 1
        %s230 = scalar_select %p229, %s228, 1
        %p231 = scmp.lt.s32.totalorder %s21, 0
        %s232 = scalar_select %p231, %s21, 0
        %s233 = sadd.s32 %s232, %s230
        %s234 = smul.addr %s233, 4
        %s235 = scalar_lea.vmem %s1, %s234
        %p236 = pneg %p85
        %p237 = pneg %p82
        %p238 = pneg %p111
        %p239 = pneg %p108
        %p240 = pneg %p139
        %p241 = pneg %p136
        %s242 = sand.u32 %s126, 1
        %s243 = sand.u32 %s126, 1
        %s244 = smul.addr %s243, 128
        %s245 = scalar_lea.vmem [#allocation5], %s244
        %s246 = smul.u32 32, %s20
        %s247 = ssub.s32 567, %s246
        %p248 = scmp.lt.s32.totalorder %s247, 32
        %s249 = scalar_select %p248, %s247, 32
        %s250 = smul.u32 64, %s249
        %p251 = scmp.lt.s32.totalorder %s246, 566
        %s252 = scalar_select %p251, %s246, 566
        %p253 = scmp.lt.s32.totalorder %s22, 0
        %s254 = scalar_select %p253, %s22, 0
        %s255 = sadd.s32 %s254, %s252
        %s256 = smul.addr %s255, 4
        %s257 = scalar_lea.vmem %s0, %s256
        %s258 = smul.u32 32, %s20
        %s259 = ssub.s32 567, %s258
        %p260 = scmp.lt.s32.totalorder %s259, 32
        %s261 = scalar_select %p260, %s259, 32
        %s262 = smul.u32 64, %s261
        %s263 = smul.u32 2, %s22
        %p264 = scmp.lt.s32.totalorder %s263, 1
        %s265 = scalar_select %p264, %s263, 1
        %p266 = scmp.lt.s32.totalorder %s21, 0
        %s267 = scalar_select %p266, %s21, 0
        %s268 = sadd.s32 %s267, %s265
        %s269 = smul.addr %s268, 4
        %s270 = scalar_lea.vmem %s1, %s269
        %s271 = smul.u32 2, %s22
        %s272 = smul.u32 32, %s20
        %s273 = ssub.s32 567, %s272
        %p274 = scmp.lt.s32.totalorder %s273, 32
        %s275 = scalar_select %p274, %s273, 32
        %s276 = smul.u32 64, %s275
        %p278 = scmp.eq.s32.totalorder %s22, 0
        // Predicated region
        $region37: #{forward.20} parent=31 // pred_check
          %p279 = pneg %p278
        $region38: #{forward.20} parent=31 // pred_check_branch
          %281 = sbr.rel (%p279) target = $region40
        $region39: #{forward.20} parent=31 // pred_region
          %vm282 = vcmask 261120
          %283 = vst.msk [vmem:[#allocation2] sm:$0xff] %vm282, 0.0
          %284 = vst.msk [vmem:[#allocation2 + $0x8] sm:$0xff] %vm282, 0.0
          %285 = vst.msk [vmem:[#allocation2 + $0x10] sm:$0xff] %vm282, 0.0
          %286 = vst.msk [vmem:[#allocation2 + $0x18] sm:$0xff] %vm282, 0.0
          %287 = vst.msk [vmem:[#allocation2 + $0x20] sm:$0xff] %vm282, 0.0
          %288 = vst.msk [vmem:[#allocation2 + $0x28] sm:$0xff] %vm282, 0.0
          %289 = vst.msk [vmem:[#allocation2 + $0x30] sm:$0xff] %vm282, 0.0
          %290 = vst.msk [vmem:[#allocation2 + $0x38] sm:$0xff] %vm282, 0.0
          %291 = vst.msk [vmem:[#allocation2 + $0x40] sm:$0xff] %vm282, 0.0
          %292 = vst.msk [vmem:[#allocation2 + $0x48] sm:$0xff] %vm282, 0.0
          %293 = vst.msk [vmem:[#allocation2 + $0x50] sm:$0xff] %vm282, 0.0
          %294 = vst.msk [vmem:[#allocation2 + $0x58] sm:$0xff] %vm282, 0.0
          %295 = vst.msk [vmem:[#allocation2 + $0x60] sm:$0xff] %vm282, 0.0
          %296 = vst.msk [vmem:[#allocation2 + $0x68] sm:$0xff] %vm282, 0.0
          %297 = vst.msk [vmem:[#allocation2 + $0x70] sm:$0xff] %vm282, 0.0
          %298 = vst.msk [vmem:[#allocation2 + $0x78] sm:$0xff] %vm282, 0.0
          %299 = vst.msk [vmem:[#allocation2 + $0x80] sm:$0xff] %vm282, 0.0
          %300 = vst.msk [vmem:[#allocation2 + $0x88] sm:$0xff] %vm282, 0.0
          %301 = vst.msk [vmem:[#allocation2 + $0x90] sm:$0xff] %vm282, 0.0
          %302 = vst.msk [vmem:[#allocation2 + $0x98] sm:$0xff] %vm282, 0.0
          %303 = vst.msk [vmem:[#allocation2 + $0xa0] sm:$0xff] %vm282, 0.0
          %304 = vst.msk [vmem:[#allocation2 + $0xa8] sm:$0xff] %vm282, 0.0
          %305 = vst.msk [vmem:[#allocation2 + $0xb0] sm:$0xff] %vm282, 0.0
          %306 = vst.msk [vmem:[#allocation2 + $0xb8] sm:$0xff] %vm282, 0.0
          %307 = vst.msk [vmem:[#allocation2 + $0xc0] sm:$0xff] %vm282, 0.0
          %308 = vst.msk [vmem:[#allocation2 + $0xc8] sm:$0xff] %vm282, 0.0
          %309 = vst.msk [vmem:[#allocation2 + $0xd0] sm:$0xff] %vm282, 0.0
          %310 = vst.msk [vmem:[#allocation2 + $0xd8] sm:$0xff] %vm282, 0.0
          %311 = vst.msk [vmem:[#allocation2 + $0xe0] sm:$0xff] %vm282, 0.0
          %312 = vst.msk [vmem:[#allocation2 + $0xe8] sm:$0xff] %vm282, 0.0
          %313 = vst.msk [vmem:[#allocation2 + $0xf0] sm:$0xff] %vm282, 0.0
          %314 = vst.msk [vmem:[#allocation2 + $0xf8] sm:$0xff] %vm282, 0.0
        $region40: #{forward.20} parent=31 // pred_fallthru
          _
        %v315 = vld [vmem:[#allocation2] sm:$0xff]
        %v316 = vld [vmem:[#allocation2 + $0x8] sm:$0xff]
        %v317 = vld [vmem:[#allocation2 + $0x10] sm:$0xff]
        %v318 = vld [vmem:[#allocation2 + $0x18] sm:$0xff]
        %v319 = vld [vmem:[#allocation2 + $0x20] sm:$0xff]
        %v320 = vld [vmem:[#allocation2 + $0x28] sm:$0xff]
        %v321 = vld [vmem:[#allocation2 + $0x30] sm:$0xff]
        %v322 = vld [vmem:[#allocation2 + $0x38] sm:$0xff]
        %v323 = vld [vmem:[#allocation2 + $0x40] sm:$0xff]
        %v324 = vld [vmem:[#allocation2 + $0x48] sm:$0xff]
        %v325 = vld [vmem:[#allocation2 + $0x50] sm:$0xff]
        %v326 = vld [vmem:[#allocation2 + $0x58] sm:$0xff]
        %v327 = vld [vmem:[#allocation2 + $0x60] sm:$0xff]
        %v328 = vld [vmem:[#allocation2 + $0x68] sm:$0xff]
        %v329 = vld [vmem:[#allocation2 + $0x70] sm:$0xff]
        %v330 = vld [vmem:[#allocation2 + $0x78] sm:$0xff]
        %v331 = vld [vmem:[#allocation2 + $0x80] sm:$0xff]
        %v332 = vld [vmem:[#allocation2 + $0x88] sm:$0xff]
        %v333 = vld [vmem:[#allocation2 + $0x90] sm:$0xff]
        %v334 = vld [vmem:[#allocation2 + $0x98] sm:$0xff]
        %v335 = vld [vmem:[#allocation2 + $0xa0] sm:$0xff]
        %v336 = vld [vmem:[#allocation2 + $0xa8] sm:$0xff]
        %v337 = vld [vmem:[#allocation2 + $0xb0] sm:$0xff]
        %v338 = vld [vmem:[#allocation2 + $0xb8] sm:$0xff]
        %v339 = vld [vmem:[#allocation2 + $0xc0] sm:$0xff]
        %v340 = vld [vmem:[#allocation2 + $0xc8] sm:$0xff]
        %v341 = vld [vmem:[#allocation2 + $0xd0] sm:$0xff]
        %v342 = vld [vmem:[#allocation2 + $0xd8] sm:$0xff]
        %v343 = vld [vmem:[#allocation2 + $0xe0] sm:$0xff]
        %v344 = vld [vmem:[#allocation2 + $0xe8] sm:$0xff]
        %v345 = vld [vmem:[#allocation2 + $0xf0] sm:$0xff]
        %v346 = vld [vmem:[#allocation2 + $0xf8] sm:$0xff]
        %v347 = vld [vmem:[%s257] sm:$0xf]
        %v348 = vld [vmem:[%s257 + $0x4] sm:$0xf]
        %v349 = vld [vmem:[%s257 + $0x8] sm:$0xf]
        %v350 = vld [vmem:[%s257 + $0xc] sm:$0xf]
        %v351 = vld [vmem:[%s257 + $0x10] sm:$0xf]
        %v352 = vld [vmem:[%s257 + $0x14] sm:$0xf]
        %v353 = vld [vmem:[%s257 + $0x18] sm:$0xf]
        %v354 = vld [vmem:[%s257 + $0x1c] sm:$0xf]
        %v355 = vld [vmem:[%s257 + $0x20] sm:$0xf]
        %v356 = vld [vmem:[%s257 + $0x24] sm:$0xf]
        %v357 = vld [vmem:[%s257 + $0x28] sm:$0xf]
        %v358 = vld [vmem:[%s257 + $0x2c] sm:$0xf]
        %v359 = vld [vmem:[%s257 + $0x30] sm:$0xf]
        %v360 = vld [vmem:[%s257 + $0x34] sm:$0xf]
        %v361 = vld [vmem:[%s257 + $0x38] sm:$0xf]
        %v362 = vld [vmem:[%s257 + $0x3c] sm:$0xf]
        %v363 = vld [vmem:[%s257 + $0x40] sm:$0xf]
        %v364 = vld [vmem:[%s257 + $0x44] sm:$0xf]
        %v365 = vld [vmem:[%s257 + $0x48] sm:$0xf]
        %v366 = vld [vmem:[%s257 + $0x4c] sm:$0xf]
        %v367 = vld [vmem:[%s257 + $0x50] sm:$0xf]
        %v368 = vld [vmem:[%s257 + $0x54] sm:$0xf]
        %v369 = vld [vmem:[%s257 + $0x58] sm:$0xf]
        %v370 = vld [vmem:[%s257 + $0x5c] sm:$0xf]
        %v371 = vld [vmem:[%s257 + $0x60] sm:$0xf]
        %v372 = vld [vmem:[%s257 + $0x64] sm:$0xf]
        %v373 = vld [vmem:[%s257 + $0x68] sm:$0xf]
        %v374 = vld [vmem:[%s257 + $0x6c] sm:$0xf]
        %v375 = vld [vmem:[%s257 + $0x70] sm:$0xf]
        %v376 = vld [vmem:[%s257 + $0x74] sm:$0xf]
        %v377 = vld [vmem:[%s257 + $0x78] sm:$0xf]
        %v378 = vld [vmem:[%s257 + $0x7c] sm:$0xf]
        %v379 = vld [vmem:[%s270] sm:$0xf]
        %v380 = vld [vmem:[%s270 + $0x4] sm:$0x1]
        %v413 = vunpack.c.l.b16 %v347
        %v414 = vunpack.c.l.b16 %v348
        %v415 = vunpack.c.l.b16 %v349
        %v416 = vunpack.c.l.b16 %v350
        %v417 = vunpack.c.l.b16 %v351
        %v418 = vunpack.c.l.b16 %v352
        %v419 = vunpack.c.l.b16 %v353
        %v420 = vunpack.c.l.b16 %v354
        %v421 = vunpack.c.l.b16 %v355
        %v422 = vunpack.c.l.b16 %v356
        %v423 = vunpack.c.l.b16 %v357
        %v424 = vunpack.c.l.b16 %v358
        %v425 = vunpack.c.l.b16 %v359
        %v426 = vunpack.c.l.b16 %v360
        %v427 = vunpack.c.l.b16 %v361
        %v428 = vunpack.c.l.b16 %v362
        %v429 = vunpack.c.l.b16 %v363
        %v430 = vunpack.c.l.b16 %v364
        %v431 = vunpack.c.l.b16 %v365
        %v432 = vunpack.c.l.b16 %v366
        %v433 = vunpack.c.l.b16 %v367
        %v434 = vunpack.c.l.b16 %v368
        %v435 = vunpack.c.l.b16 %v369
        %v436 = vunpack.c.l.b16 %v370
        %v437 = vunpack.c.l.b16 %v371
        %v438 = vunpack.c.l.b16 %v372
        %v439 = vunpack.c.l.b16 %v373
        %v440 = vunpack.c.l.b16 %v374
        %v441 = vunpack.c.l.b16 %v375
        %v442 = vunpack.c.l.b16 %v376
        %v443 = vunpack.c.l.b16 %v377
        %v444 = vunpack.c.l.b16 %v378
        %v445 = vpack.c.b16 %v414, %v413
        %v446 = vpack.c.b16 %v416, %v415
        %v447 = vpack.c.b16 %v418, %v417
        %v448 = vpack.c.b16 %v420, %v419
        %v449 = vpack.c.b16 %v422, %v421
        %v450 = vpack.c.b16 %v424, %v423
        %v451 = vpack.c.b16 %v426, %v425
        %v452 = vpack.c.b16 %v428, %v427
        %v453 = vpack.c.b16 %v430, %v429
        %v454 = vpack.c.b16 %v432, %v431
        %v455 = vpack.c.b16 %v434, %v433
        %v456 = vpack.c.b16 %v436, %v435
        %v457 = vpack.c.b16 %v438, %v437
        %v458 = vpack.c.b16 %v440, %v439
        %v459 = vpack.c.b16 %v442, %v441
        %v460 = vpack.c.b16 %v444, %v443
        %v463 = vunpack.c.l.b16 %v379
        %v464 = vunpack.c.l.b16 %v380
        %v465 = vpack.c.b16 %v464, %v463
        %vm466 = vcmask 72704
        %v468 = vsel %vm466, %v445, 0
        %v471 = vsel %vm466, %v446, 0
        %v474 = vsel %vm466, %v447, 0
        %v477 = vsel %vm466, %v448, 0
        %v480 = vsel %vm466, %v449, 0
        %v483 = vsel %vm466, %v450, 0
        %v486 = vsel %vm466, %v451, 0
        %v489 = vsel %vm466, %v452, 0
        %v492 = vsel %vm466, %v453, 0
        %v495 = vsel %vm466, %v454, 0
        %v498 = vsel %vm466, %v455, 0
        %v501 = vsel %vm466, %v456, 0
        %v504 = vsel %vm466, %v457, 0
        %v507 = vsel %vm466, %v458, 0
        %v510 = vsel %vm466, %v459, 0
        %v513 = vsel %vm466, %v460, 0
        %vm515 = vcmask 1043456
        %vm516 = vcmask 1044480
        %v517 = vsel %vm515, 4294967295, 65535
        %v518 = vsel %vm516, %v517, 0
        %v520 = vand.u32 %v465, %v518
        %522 = vmatprep.subr.bf16.mxu0 0
        %523 = vmatpush1.bf16.msra.mxu0 %v520
        %524 = vmatprep.subr.bf16.mxu0 0
        %525 = vmatpush1.bf16.msra.mxu0 0
        %526 = vmatprep.subr.bf16.mxu0 0
        %527 = vmatpush1.bf16.msra.mxu0 0
        %528 = vmatprep.subr.bf16.mxu0 0
        %529 = vmatpush1.bf16.msra.mxu0 0
        %530 = vmatprep.subr.bf16.mxu0 0
        %531 = vmatpush1.bf16.msra.mxu0 0
        %532 = vmatprep.subr.bf16.mxu0 0
        %533 = vmatpush1.bf16.msra.mxu0 0
        %534 = vmatprep.subr.bf16.mxu0 0
        %535 = vmatpush1.bf16.msra.mxu0 0
        %536 = vmatprep.subr.bf16.mxu0 0
        %537 = vmatpush1.bf16.msra.mxu0 0
        %538 = vmatprep.subr.bf16.mxu0 0
        %539 = vmatpush1.bf16.msra.mxu0 0
        %540 = vmatprep.subr.bf16.mxu0 0
        %541 = vmatpush1.bf16.msra.mxu0 0
        %542 = vmatprep.subr.bf16.mxu0 0
        %543 = vmatpush1.bf16.msra.mxu0 0
        %544 = vmatprep.subr.bf16.mxu0 0
        %545 = vmatpush1.bf16.msra.mxu0 0
        %546 = vmatprep.subr.bf16.mxu0 0
        %547 = vmatpush1.bf16.msra.mxu0 0
        %548 = vmatprep.subr.bf16.mxu0 0
        %549 = vmatpush1.bf16.msra.mxu0 0
        %550 = vmatprep.subr.bf16.mxu0 0
        %551 = vmatpush1.bf16.msra.mxu0 0
        %552 = vmatprep.subr.bf16.mxu0 0
        %553 = vmatpush1.bf16.msra.mxu0 0
        %554 = vmatprep.mubr.bf16.mxu0 0
        %555 = vmatmul.mubr.bf16.gmra.mrb[0].mxu0 %v468
        %v556 = vpop.f32.mrb[0].mxu0
        %v557 = vadd.f32 0.0, %v556
        %v558 = vpop.f32.mrb[0].mxu0
        %v559 = vpop.f32.mrb[0].mxu0
        %v560 = vadd.f32 0.0, %v559
        %v561 = vpop.f32.mrb[0].mxu0
        %562 = vmatprep.mubr.bf16.mxu0 0
        %563 = vmatmul.mubr.bf16.gmra.mrb[0].mxu0 %v471
        %v564 = vpop.f32.mrb[0].mxu0
        %v565 = vadd.f32 0.0, %v564
        %v566 = vpop.f32.mrb[0].mxu0
        %v567 = vpop.f32.mrb[0].mxu0
        %v568 = vadd.f32 0.0, %v567
        %v569 = vpop.f32.mrb[0].mxu0
        %570 = vmatprep.mubr.bf16.mxu0 0
        %571 = vmatmul.mubr.bf16.gmra.mrb[0].mxu0 %v474
        %v572 = vpop.f32.mrb[0].mxu0
        %v573 = vadd.f32 0.0, %v572
        %v574 = vpop.f32.mrb[0].mxu0
        %v575 = vpop.f32.mrb[0].mxu0
        %v576 = vadd.f32 0.0, %v575
        %v577 = vpop.f32.mrb[0].mxu0
        %578 = vmatprep.mubr.bf16.mxu0 0
        %579 = vmatmul.mubr.bf16.gmra.mrb[0].mxu0 %v477
        %v580 = vpop.f32.mrb[0].mxu0
        %v581 = vadd.f32 0.0, %v580
        %v582 = vpop.f32.mrb[0].mxu0
        %v583 = vpop.f32.mrb[0].mxu0
        %v584 = vadd.f32 0.0, %v583
        %v585 = vpop.f32.mrb[0].mxu0
        %586 = vmatprep.mubr.bf16.mxu0 0
        %587 = vmatmul.mubr.bf16.gmra.mrb[0].mxu0 %v480
        %v588 = vpop.f32.mrb[0].mxu0
        %v589 = vadd.f32 0.0, %v588
        %v590 = vpop.f32.mrb[0].mxu0
        %v591 = vpop.f32.mrb[0].mxu0
        %v592 = vadd.f32 0.0, %v591
        %v593 = vpop.f32.mrb[0].mxu0
        %594 = vmatprep.mubr.bf16.mxu0 0
        %595 = vmatmul.mubr.bf16.gmra.mrb[0].mxu0 %v483
        %v596 = vpop.f32.mrb[0].mxu0
        %v597 = vadd.f32 0.0, %v596
        %v598 = vpop.f32.mrb[0].mxu0
        %v599 = vpop.f32.mrb[0].mxu0
        %v600 = vadd.f32 0.0, %v599
        %v601 = vpop.f32.mrb[0].mxu0
        %602 = vmatprep.mubr.bf16.mxu0 0
        %603 = vmatmul.mubr.bf16.gmra.mrb[0].mxu0 %v486
        %v604 = vpop.f32.mrb[0].mxu0
        %v605 = vadd.f32 0.0, %v604
        %v606 = vpop.f32.mrb[0].mxu0
        %v607 = vpop.f32.mrb[0].mxu0
        %v608 = vadd.f32 0.0, %v607
        %v609 = vpop.f32.mrb[0].mxu0
        %610 = vmatprep.mubr.bf16.mxu0 0
        %611 = vmatmul.mubr.bf16.gmra.mrb[0].mxu0 %v489
        %v612 = vpop.f32.mrb[0].mxu0
        %v613 = vadd.f32 0.0, %v612
        %v614 = vpop.f32.mrb[0].mxu0
        %v615 = vpop.f32.mrb[0].mxu0
        %v616 = vadd.f32 0.0, %v615
        %v617 = vpop.f32.mrb[0].mxu0
        %618 = vmatprep.mubr.bf16.mxu0 0
        %619 = vmatmul.mubr.bf16.gmra.mrb[0].mxu0 %v492
        %v620 = vpop.f32.mrb[0].mxu0
        %v621 = vadd.f32 0.0, %v620
        %v622 = vpop.f32.mrb[0].mxu0
        %v623 = vpop.f32.mrb[0].mxu0
        %v624 = vadd.f32 0.0, %v623
        %v625 = vpop.f32.mrb[0].mxu0
        %626 = vmatprep.mubr.bf16.mxu0 0
        %627 = vmatmul.mubr.bf16.gmra.mrb[0].mxu0 %v495
        %v628 = vpop.f32.mrb[0].mxu0
        %v629 = vadd.f32 0.0, %v628
        %v630 = vpop.f32.mrb[0].mxu0
        %v631 = vpop.f32.mrb[0].mxu0
        %v632 = vadd.f32 0.0, %v631
        %v633 = vpop.f32.mrb[0].mxu0
        %634 = vmatprep.mubr.bf16.mxu0 0
        %635 = vmatmul.mubr.bf16.gmra.mrb[0].mxu0 %v498
        %v636 = vpop.f32.mrb[0].mxu0
        %v637 = vadd.f32 0.0, %v636
        %v638 = vpop.f32.mrb[0].mxu0
        %v639 = vpop.f32.mrb[0].mxu0
        %v640 = vadd.f32 0.0, %v639
        %v641 = vpop.f32.mrb[0].mxu0
        %642 = vmatprep.mubr.bf16.mxu0 0
        %643 = vmatmul.mubr.bf16.gmra.mrb[0].mxu0 %v501
        %v644 = vpop.f32.mrb[0].mxu0
        %v645 = vadd.f32 0.0, %v644
        %v646 = vpop.f32.mrb[0].mxu0
        %v647 = vpop.f32.mrb[0].mxu0
        %v648 = vadd.f32 0.0, %v647
        %v649 = vpop.f32.mrb[0].mxu0
        %650 = vmatprep.mubr.bf16.mxu0 0
        %651 = vmatmul.mubr.bf16.gmra.mrb[0].mxu0 %v504
        %v652 = vpop.f32.mrb[0].mxu0
        %v653 = vadd.f32 0.0, %v652
        %v654 = vpop.f32.mrb[0].mxu0
        %v655 = vpop.f32.mrb[0].mxu0
        %v656 = vadd.f32 0.0, %v655
        %v657 = vpop.f32.mrb[0].mxu0
        %658 = vmatprep.mubr.bf16.mxu0 0
        %659 = vmatmul.mubr.bf16.gmra.mrb[0].mxu0 %v507
        %v660 = vpop.f32.mrb[0].mxu0
        %v661 = vadd.f32 0.0, %v660
        %v662 = vpop.f32.mrb[0].mxu0
        %v663 = vpop.f32.mrb[0].mxu0
        %v664 = vadd.f32 0.0, %v663
        %v665 = vpop.f32.mrb[0].mxu0
        %666 = vmatprep.mubr.bf16.mxu0 0
        %667 = vmatmul.mubr.bf16.gmra.mrb[0].mxu0 %v510
        %v668 = vpop.f32.mrb[0].mxu0
        %v669 = vadd.f32 0.0, %v668
        %v670 = vpop.f32.mrb[0].mxu0
        %v671 = vpop.f32.mrb[0].mxu0
        %v672 = vadd.f32 0.0, %v671
        %v673 = vpop.f32.mrb[0].mxu0
        %674 = vmatprep.mubr.bf16.mxu0 0
        %675 = vmatmul.mubr.bf16.gmra.mrb[0].mxu0 %v513
        %v676 = vpop.f32.mrb[0].mxu0
        %v677 = vadd.f32 0.0, %v676
        %v678 = vpop.f32.mrb[0].mxu0
        %v679 = vpop.f32.mrb[0].mxu0
        %v680 = vadd.f32 0.0, %v679
        %v681 = vpop.f32.mrb[0].mxu0
        %682 = vdwg.mxu0
        %v683 = vadd.f32 %v315, %v557
        %v684 = vadd.f32 %v316, %v560
        %v685 = vadd.f32 %v317, %v565
        %v686 = vadd.f32 %v318, %v568
        %v687 = vadd.f32 %v319, %v573
        %v688 = vadd.f32 %v320, %v576
        %v689 = vadd.f32 %v321, %v581
        %v690 = vadd.f32 %v322, %v584
        %v691 = vadd.f32 %v323, %v589
        %v692 = vadd.f32 %v324, %v592
        %v693 = vadd.f32 %v325, %v597
        %v694 = vadd.f32 %v326, %v600
        %v695 = vadd.f32 %v327, %v605
        %v696 = vadd.f32 %v328, %v608
        %v697 = vadd.f32 %v329, %v613
        %v698 = vadd.f32 %v330, %v616
        %v699 = vadd.f32 %v331, %v621
        %v700 = vadd.f32 %v332, %v624
        %v701 = vadd.f32 %v333, %v629
        %v702 = vadd.f32 %v334, %v632
        %v703 = vadd.f32 %v335, %v637
        %v704 = vadd.f32 %v336, %v640
        %v705 = vadd.f32 %v337, %v645
        %v706 = vadd.f32 %v338, %v648
        %v707 = vadd.f32 %v339, %v653
        %v708 = vadd.f32 %v340, %v656
        %v709 = vadd.f32 %v341, %v661
        %v710 = vadd.f32 %v342, %v664
        %v711 = vadd.f32 %v343, %v669
        %v712 = vadd.f32 %v344, %v672
        %v713 = vadd.f32 %v345, %v677
        %v714 = vadd.f32 %v346, %v680
        %vm715 = vcmask 261120
        %716 = vst.msk [vmem:[#allocation2] sm:$0xff] %vm715, %v683
        %717 = vst.msk [vmem:[#allocation2 + $0x8] sm:$0xff] %vm715, %v684
        %718 = vst.msk [vmem:[#allocation2 + $0x10] sm:$0xff] %vm715, %v685
        %719 = vst.msk [vmem:[#allocation2 + $0x18] sm:$0xff] %vm715, %v686
        %720 = vst.msk [vmem:[#allocation2 + $0x20] sm:$0xff] %vm715, %v687
        %721 = vst.msk [vmem:[#allocation2 + $0x28] sm:$0xff] %vm715, %v688
        %722 = vst.msk [vmem:[#allocation2 + $0x30] sm:$0xff] %vm715, %v689
        %723 = vst.msk [vmem:[#allocation2 + $0x38] sm:$0xff] %vm715, %v690
        %724 = vst.msk [vmem:[#allocation2 + $0x40] sm:$0xff] %vm715, %v691
        %725 = vst.msk [vmem:[#allocation2 + $0x48] sm:$0xff] %vm715, %v692
        %726 = vst.msk [vmem:[#allocation2 + $0x50] sm:$0xff] %vm715, %v693
        %727 = vst.msk [vmem:[#allocation2 + $0x58] sm:$0xff] %vm715, %v694
        %728 = vst.msk [vmem:[#allocation2 + $0x60] sm:$0xff] %vm715, %v695
        %729 = vst.msk [vmem:[#allocation2 + $0x68] sm:$0xff] %vm715, %v696
        %730 = vst.msk [vmem:[#allocation2 + $0x70] sm:$0xff] %vm715, %v697
        %731 = vst.msk [vmem:[#allocation2 + $0x78] sm:$0xff] %vm715, %v698
        %732 = vst.msk [vmem:[#allocation2 + $0x80] sm:$0xff] %vm715, %v699
        %733 = vst.msk [vmem:[#allocation2 + $0x88] sm:$0xff] %vm715, %v700
        %734 = vst.msk [vmem:[#allocation2 + $0x90] sm:$0xff] %vm715, %v701
        %735 = vst.msk [vmem:[#allocation2 + $0x98] sm:$0xff] %vm715, %v702
        %736 = vst.msk [vmem:[#allocation2 + $0xa0] sm:$0xff] %vm715, %v703
        %737 = vst.msk [vmem:[#allocation2 + $0xa8] sm:$0xff] %vm715, %v704
        %738 = vst.msk [vmem:[#allocation2 + $0xb0] sm:$0xff] %vm715, %v705
        %739 = vst.msk [vmem:[#allocation2 + $0xb8] sm:$0xff] %vm715, %v706
        %740 = vst.msk [vmem:[#allocation2 + $0xc0] sm:$0xff] %vm715, %v707
        %741 = vst.msk [vmem:[#allocation2 + $0xc8] sm:$0xff] %vm715, %v708
        %742 = vst.msk [vmem:[#allocation2 + $0xd0] sm:$0xff] %vm715, %v709
        %743 = vst.msk [vmem:[#allocation2 + $0xd8] sm:$0xff] %vm715, %v710
        %744 = vst.msk [vmem:[#allocation2 + $0xe0] sm:$0xff] %vm715, %v711
        %745 = vst.msk [vmem:[#allocation2 + $0xe8] sm:$0xff] %vm715, %v712
        %746 = vst.msk [vmem:[#allocation2 + $0xf0] sm:$0xff] %vm715, %v713
        %747 = vst.msk [vmem:[#allocation2 + $0xf8] sm:$0xff] %vm715, %v714
        // Predicated region
        $region41: #{forward.20} parent=31 // pred_check
          %p748 = pneg %p278
        $region42: #{forward.20} parent=31 // pred_check_branch
          %750 = sbr.rel (%p748) target = $region44
        $region43: #{forward.20} parent=31 // pred_region
          %v751 = vld [vmem:[#allocation2] sm:$0xff]
          %v752 = vld [vmem:[#allocation2 + $0x8] sm:$0xff]
          %v753 = vld [vmem:[#allocation2 + $0x10] sm:$0xff]
          %v754 = vld [vmem:[#allocation2 + $0x18] sm:$0xff]
          %v755 = vld [vmem:[#allocation2 + $0x20] sm:$0xff]
          %v756 = vld [vmem:[#allocation2 + $0x28] sm:$0xff]
          %v757 = vld [vmem:[#allocation2 + $0x30] sm:$0xff]
          %v758 = vld [vmem:[#allocation2 + $0x38] sm:$0xff]
          %v759 = vld [vmem:[#allocation2 + $0x40] sm:$0xff]
          %v760 = vld [vmem:[#allocation2 + $0x48] sm:$0xff]
          %v761 = vld [vmem:[#allocation2 + $0x50] sm:$0xff]
          %v762 = vld [vmem:[#allocation2 + $0x58] sm:$0xff]
          %v763 = vld [vmem:[#allocation2 + $0x60] sm:$0xff]
          %v764 = vld [vmem:[#allocation2 + $0x68] sm:$0xff]
          %v765 = vld [vmem:[#allocation2 + $0x70] sm:$0xff]
          %v766 = vld [vmem:[#allocation2 + $0x78] sm:$0xff]
          %v767 = vld [vmem:[#allocation2 + $0x80] sm:$0xff]
          %v768 = vld [vmem:[#allocation2 + $0x88] sm:$0xff]
          %v769 = vld [vmem:[#allocation2 + $0x90] sm:$0xff]
          %v770 = vld [vmem:[#allocation2 + $0x98] sm:$0xff]
          %v771 = vld [vmem:[#allocation2 + $0xa0] sm:$0xff]
          %v772 = vld [vmem:[#allocation2 + $0xa8] sm:$0xff]
          %v773 = vld [vmem:[#allocation2 + $0xb0] sm:$0xff]
          %v774 = vld [vmem:[#allocation2 + $0xb8] sm:$0xff]
          %v775 = vld [vmem:[#allocation2 + $0xc0] sm:$0xff]
          %v776 = vld [vmem:[#allocation2 + $0xc8] sm:$0xff]
          %v777 = vld [vmem:[#allocation2 + $0xd0] sm:$0xff]
          %v778 = vld [vmem:[#allocation2 + $0xd8] sm:$0xff]
          %v779 = vld [vmem:[#allocation2 + $0xe0] sm:$0xff]
          %v780 = vld [vmem:[#allocation2 + $0xe8] sm:$0xff]
          %v781 = vld [vmem:[#allocation2 + $0xf0] sm:$0xff]
          %v782 = vld [vmem:[#allocation2 + $0xf8] sm:$0xff]
          %v783 = vld [vmem:[#allocation3] sm:$0x1]
          %v785 = vlaneseq
          %v786 = vshrl.u32 %v785, 7
          %v787 = vsub.s32 0, %v786
          %v788 = vrot.slane %v783, %v787
          %v790 = vadd.f32 %v751, %v788
          %v791 = vadd.f32 %v752, %v788
          %v792 = vadd.f32 %v753, %v788
          %v793 = vadd.f32 %v754, %v788
          %v794 = vadd.f32 %v755, %v788
          %v795 = vadd.f32 %v756, %v788
          %v796 = vadd.f32 %v757, %v788
          %v797 = vadd.f32 %v758, %v788
          %v798 = vadd.f32 %v759, %v788
          %v799 = vadd.f32 %v760, %v788
          %v800 = vadd.f32 %v761, %v788
          %v801 = vadd.f32 %v762, %v788
          %v802 = vadd.f32 %v763, %v788
          %v803 = vadd.f32 %v764, %v788
          %v804 = vadd.f32 %v765, %v788
          %v805 = vadd.f32 %v766, %v788
          %v806 = vadd.f32 %v767, %v788
          %v807 = vadd.f32 %v768, %v788
          %v808 = vadd.f32 %v769, %v788
          %v809 = vadd.f32 %v770, %v788
          %v810 = vadd.f32 %v771, %v788
          %v811 = vadd.f32 %v772, %v788
          %v812 = vadd.f32 %v773, %v788
          %v813 = vadd.f32 %v774, %v788
          %v814 = vadd.f32 %v775, %v788
          %v815 = vadd.f32 %v776, %v788
          %v816 = vadd.f32 %v777, %v788
          %v817 = vadd.f32 %v778, %v788
          %v818 = vadd.f32 %v779, %v788
          %v819 = vadd.f32 %v780, %v788
          %v820 = vadd.f32 %v781, %v788
          %v821 = vadd.f32 %v782, %v788
          %v822 = vmax.f32 %v790, 0.0
          %v823 = vmax.f32 %v791, 0.0
          %v824 = vmax.f32 %v792, 0.0
          %v825 = vmax.f32 %v793, 0.0
          %v826 = vmax.f32 %v794, 0.0
          %v827 = vmax.f32 %v795, 0.0
          %v828 = vmax.f32 %v796, 0.0
          %v829 = vmax.f32 %v797, 0.0
          %v830 = vmax.f32 %v798, 0.0
          %v831 = vmax.f32 %v799, 0.0
          %v832 = vmax.f32 %v800, 0.0
          %v833 = vmax.f32 %v801, 0.0
          %v834 = vmax.f32 %v802, 0.0
          %v835 = vmax.f32 %v803, 0.0
          %v836 = vmax.f32 %v804, 0.0
          %v837 = vmax.f32 %v805, 0.0
          %v838 = vmax.f32 %v806, 0.0
          %v839 = vmax.f32 %v807, 0.0
          %v840 = vmax.f32 %v808, 0.0
          %v841 = vmax.f32 %v809, 0.0
          %v842 = vmax.f32 %v810, 0.0
          %v843 = vmax.f32 %v811, 0.0
          %v844 = vmax.f32 %v812, 0.0
          %v845 = vmax.f32 %v813, 0.0
          %v846 = vmax.f32 %v814, 0.0
          %v847 = vmax.f32 %v815, 0.0
          %v848 = vmax.f32 %v816, 0.0
          %v849 = vmax.f32 %v817, 0.0
          %v850 = vmax.f32 %v818, 0.0
          %v851 = vmax.f32 %v819, 0.0
          %v852 = vmax.f32 %v820, 0.0
          %v853 = vmax.f32 %v821, 0.0
          %v854 = vpack.c.bf16 %v823, %v822
          %v855 = vpack.c.bf16 %v825, %v824
          %v856 = vpack.c.bf16 %v827, %v826
          %v857 = vpack.c.bf16 %v829, %v828
          %v858 = vpack.c.bf16 %v831, %v830
          %v859 = vpack.c.bf16 %v833, %v832
          %v860 = vpack.c.bf16 %v835, %v834
          %v861 = vpack.c.bf16 %v837, %v836
          %v862 = vpack.c.bf16 %v839, %v838
          %v863 = vpack.c.bf16 %v841, %v840
          %v864 = vpack.c.bf16 %v843, %v842
          %v865 = vpack.c.bf16 %v845, %v844
          %v866 = vpack.c.bf16 %v847, %v846
          %v867 = vpack.c.bf16 %v849, %v848
          %v868 = vpack.c.bf16 %v851, %v850
          %v869 = vpack.c.bf16 %v853, %v852
          %v886 = vunpack.c.l.b16 %v854
          %v887 = vunpack.c.h.b16 %v854
          %v888 = vunpack.c.l.b16 %v855
          %v889 = vunpack.c.h.b16 %v855
          %v890 = vunpack.c.l.b16 %v856
          %v891 = vunpack.c.h.b16 %v856
          %v892 = vunpack.c.l.b16 %v857
          %v893 = vunpack.c.h.b16 %v857
          %v894 = vunpack.c.l.b16 %v858
          %v895 = vunpack.c.h.b16 %v858
          %v896 = vunpack.c.l.b16 %v859
          %v897 = vunpack.c.h.b16 %v859
          %v898 = vunpack.c.l.b16 %v860
          %v899 = vunpack.c.h.b16 %v860
          %v900 = vunpack.c.l.b16 %v861
          %v901 = vunpack.c.h.b16 %v861
          %v902 = vunpack.c.l.b16 %v862
          %v903 = vunpack.c.h.b16 %v862
          %v904 = vunpack.c.l.b16 %v863
          %v905 = vunpack.c.h.b16 %v863
          %v906 = vunpack.c.l.b16 %v864
          %v907 = vunpack.c.h.b16 %v864
          %v908 = vunpack.c.l.b16 %v865
          %v909 = vunpack.c.h.b16 %v865
          %v910 = vunpack.c.l.b16 %v866
          %v911 = vunpack.c.h.b16 %v866
          %v912 = vunpack.c.l.b16 %v867
          %v913 = vunpack.c.h.b16 %v867
          %v914 = vunpack.c.l.b16 %v868
          %v915 = vunpack.c.h.b16 %v868
          %v916 = vunpack.c.l.b16 %v869
          %v917 = vunpack.c.h.b16 %v869
          %v918 = vpack.c.b16 %v886, %v886
          %v919 = vpack.c.b16 %v887, %v887
          %v920 = vpack.c.b16 %v888, %v888
          %v921 = vpack.c.b16 %v889, %v889
          %v922 = vpack.c.b16 %v890, %v890
          %v923 = vpack.c.b16 %v891, %v891
          %v924 = vpack.c.b16 %v892, %v892
          %v925 = vpack.c.b16 %v893, %v893
          %v926 = vpack.c.b16 %v894, %v894
          %v927 = vpack.c.b16 %v895, %v895
          %v928 = vpack.c.b16 %v896, %v896
          %v929 = vpack.c.b16 %v897, %v897
          %v930 = vpack.c.b16 %v898, %v898
          %v931 = vpack.c.b16 %v899, %v899
          %v932 = vpack.c.b16 %v900, %v900
          %v933 = vpack.c.b16 %v901, %v901
          %v934 = vpack.c.b16 %v902, %v902
          %v935 = vpack.c.b16 %v903, %v903
          %v936 = vpack.c.b16 %v904, %v904
          %v937 = vpack.c.b16 %v905, %v905
          %v938 = vpack.c.b16 %v906, %v906
          %v939 = vpack.c.b16 %v907, %v907
          %v940 = vpack.c.b16 %v908, %v908
          %v941 = vpack.c.b16 %v909, %v909
          %v942 = vpack.c.b16 %v910, %v910
          %v943 = vpack.c.b16 %v911, %v911
          %v944 = vpack.c.b16 %v912, %v912
          %v945 = vpack.c.b16 %v913, %v913
          %v946 = vpack.c.b16 %v914, %v914
          %v947 = vpack.c.b16 %v915, %v915
          %v948 = vpack.c.b16 %v916, %v916
          %v949 = vpack.c.b16 %v917, %v917
          %vm982 = vcmask 257024
          %983 = vst.msk [vmem:[%s245] sm:$0xf] %vm982, %v918
          %984 = vst.msk [vmem:[%s245 + $0x4] sm:$0xf] %vm982, %v919
          %985 = vst.msk [vmem:[%s245 + $0x8] sm:$0xf] %vm982, %v920
          %986 = vst.msk [vmem:[%s245 + $0xc] sm:$0xf] %vm982, %v921
          %987 = vst.msk [vmem:[%s245 + $0x10] sm:$0xf] %vm982, %v922
          %988 = vst.msk [vmem:[%s245 + $0x14] sm:$0xf] %vm982, %v923
          %989 = vst.msk [vmem:[%s245 + $0x18] sm:$0xf] %vm982, %v924
          %990 = vst.msk [vmem:[%s245 + $0x1c] sm:$0xf] %vm982, %v925
          %991 = vst.msk [vmem:[%s245 + $0x20] sm:$0xf] %vm982, %v926
          %992 = vst.msk [vmem:[%s245 + $0x24] sm:$0xf] %vm982, %v927
          %993 = vst.msk [vmem:[%s245 + $0x28] sm:$0xf] %vm982, %v928
          %994 = vst.msk [vmem:[%s245 + $0x2c] sm:$0xf] %vm982, %v929
          %995 = vst.msk [vmem:[%s245 + $0x30] sm:$0xf] %vm982, %v930
          %996 = vst.msk [vmem:[%s245 + $0x34] sm:$0xf] %vm982, %v931
          %997 = vst.msk [vmem:[%s245 + $0x38] sm:$0xf] %vm982, %v932
          %998 = vst.msk [vmem:[%s245 + $0x3c] sm:$0xf] %vm982, %v933
          %999 = vst.msk [vmem:[%s245 + $0x40] sm:$0xf] %vm982, %v934
          %1000 = vst.msk [vmem:[%s245 + $0x44] sm:$0xf] %vm982, %v935
          %1001 = vst.msk [vmem:[%s245 + $0x48] sm:$0xf] %vm982, %v936
          %1002 = vst.msk [vmem:[%s245 + $0x4c] sm:$0xf] %vm982, %v937
          %1003 = vst.msk [vmem:[%s245 + $0x50] sm:$0xf] %vm982, %v938
          %1004 = vst.msk [vmem:[%s245 + $0x54] sm:$0xf] %vm982, %v939
          %1005 = vst.msk [vmem:[%s245 + $0x58] sm:$0xf] %vm982, %v940
          %1006 = vst.msk [vmem:[%s245 + $0x5c] sm:$0xf] %vm982, %v941
          %1007 = vst.msk [vmem:[%s245 + $0x60] sm:$0xf] %vm982, %v942
          %1008 = vst.msk [vmem:[%s245 + $0x64] sm:$0xf] %vm982, %v943
          %1009 = vst.msk [vmem:[%s245 + $0x68] sm:$0xf] %vm982, %v944
          %1010 = vst.msk [vmem:[%s245 + $0x6c] sm:$0xf] %vm982, %v945
          %1011 = vst.msk [vmem:[%s245 + $0x70] sm:$0xf] %vm982, %v946
          %1012 = vst.msk [vmem:[%s245 + $0x74] sm:$0xf] %vm982, %v947
          %1013 = vst.msk [vmem:[%s245 + $0x78] sm:$0xf] %vm982, %v948
          %1014 = vst.msk [vmem:[%s245 + $0x7c] sm:$0xf] %vm982, %v949
        $region44: #{forward.20} parent=31 // pred_fallthru
          _
        %s1015 = sand.u32 %s126, 1
        %s1016 = sand.u32 %s126, 1
        %s1017 = smul.addr %s1016, 128
        %s1018 = scalar_lea.vmem [#allocation5], %s1017
        // Predicated region
        $region45: #{forward.20} parent=31 // pred_check
          %p1019 = pneg %p136
        $region46: #{forward.20} parent=31 // pred_check_branch
          %1021 = sbr.rel (%p1019) target = $region48
        $region47: #{forward.20} parent=31 // pred_region
          %s1022 = smul.u32 32, %s20
          %s1023 = ssub.s32 567, %s1022
          %p1024 = scmp.lt.s32.totalorder %s1023, 32
          %s1025 = scalar_select %p1024, %s1023, 32
          %s1026 = smul.u32 64, %s1025
          %p1027 = scmp.ne.s32.totalorder 0, %s1026
          %s1028 = sadd.s32 %s21, %s1022
          %s1029 = smul.addr %s1028, 4
          %s1030 = scalar_lea.vmem %s3, %s1029
          // Predicated region
          $region49: #{forward.20} parent=47 // pred_check
            %p1031 = pneg %p1027
          $region50: #{forward.20} parent=47 // pred_check_branch
            %1033 = sbr.rel (%p1031) target = $region52
          $region51: #{forward.20} parent=47 // pred_region
            // Predicated region
            $region53: #{forward.20} parent=51 // pred_check
              _
            $region54: #{forward.20} parent=51 // pred_check_branch
              %1035 = sbr.rel target = $region56
            $region55: #{forward.20} parent=51 // pred_region
              // Predicated region
              $region75: #{forward.20} parent=55 // pred_check
                _
              $region76: #{forward.20} parent=55 // pred_check_branch
                %1146 = sbr.rel (0) target = $region78
              $region77: #{forward.20} parent=55 // pred_region
                %s1148 = sshrl.u32 %s1025, 5
                // While loop
                $region79: #{forward.20} parent=77 // loop_pre_header
                  _
                $region80: #{forward.20} parent=77 // loop_header
                  %s1150 = sphi 0, %s1152
                  %p1151 = scmp.ge.s32.totalorder %s1150, %s1148
                  %s1155 = sphi 0, %s1224
                  %s1156 = sphi %s1018, %s1227
                  %s1157 = sphi %s1030, %s1228
                $region81: #{forward.20} parent=77 // loop_header_branch
                  %1154 = sbr.rel (%p1151) target = $region85
                $region82: #{forward.20} parent=77 // loop_body
                  %v1158 = vld [vmem:[%s1156] sm:$0xf]
                  %1159 = vst [vmem:[%s1157] sm:$0xf] %v1158
                  %v1160 = vld [vmem:[%s1156 + $0x4] sm:$0xf]
                  %1161 = vst [vmem:[%s1157 + $0x4] sm:$0xf] %v1160
                  %v1162 = vld [vmem:[%s1156 + $0x8] sm:$0xf]
                  %1163 = vst [vmem:[%s1157 + $0x8] sm:$0xf] %v1162
                  %v1164 = vld [vmem:[%s1156 + $0xc] sm:$0xf]
                  %1165 = vst [vmem:[%s1157 + $0xc] sm:$0xf] %v1164
                  %v1166 = vld [vmem:[%s1156 + $0x10] sm:$0xf]
                  %1167 = vst [vmem:[%s1157 + $0x10] sm:$0xf] %v1166
                  %v1168 = vld [vmem:[%s1156 + $0x14] sm:$0xf]
                  %1169 = vst [vmem:[%s1157 + $0x14] sm:$0xf] %v1168
                  %v1170 = vld [vmem:[%s1156 + $0x18] sm:$0xf]
                  %1171 = vst [vmem:[%s1157 + $0x18] sm:$0xf] %v1170
                  %v1172 = vld [vmem:[%s1156 + $0x1c] sm:$0xf]
                  %1173 = vst [vmem:[%s1157 + $0x1c] sm:$0xf] %v1172
                  %v1174 = vld [vmem:[%s1156 + $0x20] sm:$0xf]
                  %1175 = vst [vmem:[%s1157 + $0x20] sm:$0xf] %v1174
                  %v1176 = vld [vmem:[%s1156 + $0x24] sm:$0xf]
                  %1177 = vst [vmem:[%s1157 + $0x24] sm:$0xf] %v1176
                  %v1178 = vld [vmem:[%s1156 + $0x28] sm:$0xf]
                  %1179 = vst [vmem:[%s1157 + $0x28] sm:$0xf] %v1178
                  %v1180 = vld [vmem:[%s1156 + $0x2c] sm:$0xf]
                  %1181 = vst [vmem:[%s1157 + $0x2c] sm:$0xf] %v1180
                  %v1182 = vld [vmem:[%s1156 + $0x30] sm:$0xf]
                  %1183 = vst [vmem:[%s1157 + $0x30] sm:$0xf] %v1182
                  %v1184 = vld [vmem:[%s1156 + $0x34] sm:$0xf]
                  %1185 = vst [vmem:[%s1157 + $0x34] sm:$0xf] %v1184
                  %v1186 = vld [vmem:[%s1156 + $0x38] sm:$0xf]
                  %1187 = vst [vmem:[%s1157 + $0x38] sm:$0xf] %v1186
                  %v1188 = vld [vmem:[%s1156 + $0x3c] sm:$0xf]
                  %1189 = vst [vmem:[%s1157 + $0x3c] sm:$0xf] %v1188
                  %v1190 = vld [vmem:[%s1156 + $0x40] sm:$0xf]
                  %1191 = vst [vmem:[%s1157 + $0x40] sm:$0xf] %v1190
                  %v1192 = vld [vmem:[%s1156 + $0x44] sm:$0xf]
                  %1193 = vst [vmem:[%s1157 + $0x44] sm:$0xf] %v1192
                  %v1194 = vld [vmem:[%s1156 + $0x48] sm:$0xf]
                  %1195 = vst [vmem:[%s1157 + $0x48] sm:$0xf] %v1194
                  %v1196 = vld [vmem:[%s1156 + $0x4c] sm:$0xf]
                  %1197 = vst [vmem:[%s1157 + $0x4c] sm:$0xf] %v1196
                  %v1198 = vld [vmem:[%s1156 + $0x50] sm:$0xf]
                  %1199 = vst [vmem:[%s1157 + $0x50] sm:$0xf] %v1198
                  %v1200 = vld [vmem:[%s1156 + $0x54] sm:$0xf]
                  %1201 = vst [vmem:[%s1157 + $0x54] sm:$0xf] %v1200
                  %v1202 = vld [vmem:[%s1156 + $0x58] sm:$0xf]
                  %1203 = vst [vmem:[%s1157 + $0x58] sm:$0xf] %v1202
                  %v1204 = vld [vmem:[%s1156 + $0x5c] sm:$0xf]
                  %1205 = vst [vmem:[%s1157 + $0x5c] sm:$0xf] %v1204
                  %v1206 = vld [vmem:[%s1156 + $0x60] sm:$0xf]
                  %1207 = vst [vmem:[%s1157 + $0x60] sm:$0xf] %v1206
                  %v1208 = vld [vmem:[%s1156 + $0x64] sm:$0xf]
                  %1209 = vst [vmem:[%s1157 + $0x64] sm:$0xf] %v1208
                  %v1210 = vld [vmem:[%s1156 + $0x68] sm:$0xf]
                  %1211 = vst [vmem:[%s1157 + $0x68] sm:$0xf] %v1210
                  %v1212 = vld [vmem:[%s1156 + $0x6c] sm:$0xf]
                  %1213 = vst [vmem:[%s1157 + $0x6c] sm:$0xf] %v1212
                  %v1214 = vld [vmem:[%s1156 + $0x70] sm:$0xf]
                  %1215 = vst [vmem:[%s1157 + $0x70] sm:$0xf] %v1214
                  %v1216 = vld [vmem:[%s1156 + $0x74] sm:$0xf]
                  %1217 = vst [vmem:[%s1157 + $0x74] sm:$0xf] %v1216
                  %v1218 = vld [vmem:[%s1156 + $0x78] sm:$0xf]
                  %1219 = vst [vmem:[%s1157 + $0x78] sm:$0xf] %v1218
                  %v1220 = vld [vmem:[%s1156 + $0x7c] sm:$0xf]
                  %1221 = vst [vmem:[%s1157 + $0x7c] sm:$0xf] %v1220
                  %s1222 = sadd.s32 1, %s1155
                  %p1223 = scmp.ge.s32.totalorder %s1222, %s1148
                  %s1224 = scalar_select %p1223, 0, %s1222
                  %s1225 = smul.u32 %s1224, 128
                  %s1226 = smul.u32 %s1224, 128
                  %s1227 = scalar_lea.vmem %s1018, %s1225 [#allocation5]
                  %s1228 = scalar_lea.vmem %s1030, %s1226
                $region83: #{forward.20} parent=77 // loop_footer
                  %s1152 = sadd.s32 %s1150, 1
                $region84: #{forward.20} parent=77 // loop_footer_branch
                  %1149 = sbr.rel target = $region80
                $region85: #{forward.20} parent=77 // loop_exit
                  _
                %s1229 = sshrl.u32 %s1025, 5
                %s1230 = sand.u32 %s1025, 31
                %s1231 = smul.u32 %s1229, 32
                %s1232 = smul.u32 4, %s1231
                %s1233 = scalar_lea.vmem %s1018, %s1232 [#allocation5]
                %s1234 = smul.u32 4, %s1231
                %s1235 = scalar_lea.vmem %s1030, %s1234
                // While loop
                $region86: #{forward.20} parent=77 // loop_pre_header
                  _
                $region87: #{forward.20} parent=77 // loop_header
                  %s1237 = sphi 0, %s1239
                  %p1238 = scmp.ge.s32.totalorder %s1237, %s1230
                  %s1242 = sphi 0, %s1249
                  %s1243 = sphi %s1233, %s1252
                  %s1244 = sphi %s1235, %s1253
                $region88: #{forward.20} parent=77 // loop_header_branch
                  %1241 = sbr.rel (%p1238) target = $region92
                $region89: #{forward.20} parent=77 // loop_body
                  %v1245 = vld [vmem:[%s1243] sm:$0xf]
                  %1246 = vst [vmem:[%s1244] sm:$0xf] %v1245
                  %s1247 = sadd.s32 1, %s1242
                  %p1248 = scmp.ge.s32.totalorder %s1247, %s1230
                  %s1249 = scalar_select %p1248, 0, %s1247
                  %s1250 = smul.u32 %s1249, 4
                  %s1251 = smul.u32 %s1249, 4
                  %s1252 = scalar_lea.vmem %s1233, %s1250 [#allocation5]
                  %s1253 = scalar_lea.vmem %s1235, %s1251
                $region90: #{forward.20} parent=77 // loop_footer
                  %s1239 = sadd.s32 %s1237, 1
                $region91: #{forward.20} parent=77 // loop_footer_branch
                  %1236 = sbr.rel target = $region87
                $region92: #{forward.20} parent=77 // loop_exit
                  _
              $region78: #{forward.20} parent=55 // pred_fallthru
                _
            $region56: #{forward.20} parent=51 // pred_fallthru
              _
            // Predicated region
            $region57: #{forward.20} parent=51 // pred_check
              _
            $region58: #{forward.20} parent=51 // pred_check_branch
              %1037 = sbr.rel (0) target = $region60
            $region59: #{forward.20} parent=51 // pred_region
              %s1039 = sshrl.u32 %s1025, 5
              // While loop
              $region61: #{forward.20} parent=59 // loop_pre_header
                _
              $region62: #{forward.20} parent=59 // loop_header
                %s1041 = sphi 0, %s1043
                %p1042 = scmp.ge.s32.totalorder %s1041, %s1039
                %s1046 = sphi 0, %s1115
                %s1047 = sphi %s1018, %s1118
                %s1048 = sphi %s1030, %s1119
              $region63: #{forward.20} parent=59 // loop_header_branch
                %1045 = sbr.rel (%p1042) target = $region67
              $region64: #{forward.20} parent=59 // loop_body
                %v1049 = vld [vmem:[%s1047] sm:$0xf]
                %1050 = vst [vmem:[%s1048] sm:$0xf] %v1049
                %v1051 = vld [vmem:[%s1047 + $0x4] sm:$0xf]
                %1052 = vst [vmem:[%s1048 + $0x4] sm:$0xf] %v1051
                %v1053 = vld [vmem:[%s1047 + $0x8] sm:$0xf]
                %1054 = vst [vmem:[%s1048 + $0x8] sm:$0xf] %v1053
                %v1055 = vld [vmem:[%s1047 + $0xc] sm:$0xf]
                %1056 = vst [vmem:[%s1048 + $0xc] sm:$0xf] %v1055
                %v1057 = vld [vmem:[%s1047 + $0x10] sm:$0xf]
                %1058 = vst [vmem:[%s1048 + $0x10] sm:$0xf] %v1057
                %v1059 = vld [vmem:[%s1047 + $0x14] sm:$0xf]
                %1060 = vst [vmem:[%s1048 + $0x14] sm:$0xf] %v1059
                %v1061 = vld [vmem:[%s1047 + $0x18] sm:$0xf]
                %1062 = vst [vmem:[%s1048 + $0x18] sm:$0xf] %v1061
                %v1063 = vld [vmem:[%s1047 + $0x1c] sm:$0xf]
                %1064 = vst [vmem:[%s1048 + $0x1c] sm:$0xf] %v1063
                %v1065 = vld [vmem:[%s1047 + $0x20] sm:$0xf]
                %1066 = vst [vmem:[%s1048 + $0x20] sm:$0xf] %v1065
                %v1067 = vld [vmem:[%s1047 + $0x24] sm:$0xf]
                %1068 = vst [vmem:[%s1048 + $0x24] sm:$0xf] %v1067
                %v1069 = vld [vmem:[%s1047 + $0x28] sm:$0xf]
                %1070 = vst [vmem:[%s1048 + $0x28] sm:$0xf] %v1069
                %v1071 = vld [vmem:[%s1047 + $0x2c] sm:$0xf]
                %1072 = vst [vmem:[%s1048 + $0x2c] sm:$0xf] %v1071
                %v1073 = vld [vmem:[%s1047 + $0x30] sm:$0xf]
                %1074 = vst [vmem:[%s1048 + $0x30] sm:$0xf] %v1073
                %v1075 = vld [vmem:[%s1047 + $0x34] sm:$0xf]
                %1076 = vst [vmem:[%s1048 + $0x34] sm:$0xf] %v1075
                %v1077 = vld [vmem:[%s1047 + $0x38] sm:$0xf]
                %1078 = vst [vmem:[%s1048 + $0x38] sm:$0xf] %v1077
                %v1079 = vld [vmem:[%s1047 + $0x3c] sm:$0xf]
                %1080 = vst [vmem:[%s1048 + $0x3c] sm:$0xf] %v1079
                %v1081 = vld [vmem:[%s1047 + $0x40] sm:$0xf]
                %1082 = vst [vmem:[%s1048 + $0x40] sm:$0xf] %v1081
                %v1083 = vld [vmem:[%s1047 + $0x44] sm:$0xf]
                %1084 = vst [vmem:[%s1048 + $0x44] sm:$0xf] %v1083
                %v1085 = vld [vmem:[%s1047 + $0x48] sm:$0xf]
                %1086 = vst [vmem:[%s1048 + $0x48] sm:$0xf] %v1085
                %v1087 = vld [vmem:[%s1047 + $0x4c] sm:$0xf]
                %1088 = vst [vmem:[%s1048 + $0x4c] sm:$0xf] %v1087
                %v1089 = vld [vmem:[%s1047 + $0x50] sm:$0xf]
                %1090 = vst [vmem:[%s1048 + $0x50] sm:$0xf] %v1089
                %v1091 = vld [vmem:[%s1047 + $0x54] sm:$0xf]
                %1092 = vst [vmem:[%s1048 + $0x54] sm:$0xf] %v1091
                %v1093 = vld [vmem:[%s1047 + $0x58] sm:$0xf]
                %1094 = vst [vmem:[%s1048 + $0x58] sm:$0xf] %v1093
                %v1095 = vld [vmem:[%s1047 + $0x5c] sm:$0xf]
                %1096 = vst [vmem:[%s1048 + $0x5c] sm:$0xf] %v1095
                %v1097 = vld [vmem:[%s1047 + $0x60] sm:$0xf]
                %1098 = vst [vmem:[%s1048 + $0x60] sm:$0xf] %v1097
                %v1099 = vld [vmem:[%s1047 + $0x64] sm:$0xf]
                %1100 = vst [vmem:[%s1048 + $0x64] sm:$0xf] %v1099
                %v1101 = vld [vmem:[%s1047 + $0x68] sm:$0xf]
                %1102 = vst [vmem:[%s1048 + $0x68] sm:$0xf] %v1101
                %v1103 = vld [vmem:[%s1047 + $0x6c] sm:$0xf]
                %1104 = vst [vmem:[%s1048 + $0x6c] sm:$0xf] %v1103
                %v1105 = vld [vmem:[%s1047 + $0x70] sm:$0xf]
                %1106 = vst [vmem:[%s1048 + $0x70] sm:$0xf] %v1105
                %v1107 = vld [vmem:[%s1047 + $0x74] sm:$0xf]
                %1108 = vst [vmem:[%s1048 + $0x74] sm:$0xf] %v1107
                %v1109 = vld [vmem:[%s1047 + $0x78] sm:$0xf]
                %1110 = vst [vmem:[%s1048 + $0x78] sm:$0xf] %v1109
                %v1111 = vld [vmem:[%s1047 + $0x7c] sm:$0xf]
                %1112 = vst [vmem:[%s1048 + $0x7c] sm:$0xf] %v1111
                %s1113 = sadd.s32 1, %s1046
                %p1114 = scmp.ge.s32.totalorder %s1113, %s1039
                %s1115 = scalar_select %p1114, 0, %s1113
                %s1116 = smul.u32 %s1115, 128
                %s1117 = smul.u32 %s1115, 128
                %s1118 = scalar_lea.vmem %s1018, %s1116 [#allocation5]
                %s1119 = scalar_lea.vmem %s1030, %s1117
              $region65: #{forward.20} parent=59 // loop_footer
                %s1043 = sadd.s32 %s1041, 1
              $region66: #{forward.20} parent=59 // loop_footer_branch
                %1040 = sbr.rel target = $region62
              $region67: #{forward.20} parent=59 // loop_exit
                _
              %s1120 = sshrl.u32 %s1025, 5
              %s1121 = sand.u32 %s1025, 31
              %s1122 = smul.u32 %s1120, 32
              %s1123 = smul.u32 4, %s1122
              %s1124 = scalar_lea.vmem %s1018, %s1123 [#allocation5]
              %s1125 = smul.u32 4, %s1122
              %s1126 = scalar_lea.vmem %s1030, %s1125
              // While loop
              $region68: #{forward.20} parent=59 // loop_pre_header
                _
              $region69: #{forward.20} parent=59 // loop_header
                %s1128 = sphi 0, %s1130
                %p1129 = scmp.ge.s32.totalorder %s1128, %s1121
                %s1133 = sphi 0, %s1140
                %s1134 = sphi %s1124, %s1143
                %s1135 = sphi %s1126, %s1144
              $region70: #{forward.20} parent=59 // loop_header_branch
                %1132 = sbr.rel (%p1129) target = $region74
              $region71: #{forward.20} parent=59 // loop_body
                %v1136 = vld [vmem:[%s1134] sm:$0xf]
                %1137 = vst [vmem:[%s1135] sm:$0xf] %v1136
                %s1138 = sadd.s32 1, %s1133
                %p1139 = scmp.ge.s32.totalorder %s1138, %s1121
                %s1140 = scalar_select %p1139, 0, %s1138
                %s1141 = smul.u32 %s1140, 4
                %s1142 = smul.u32 %s1140, 4
                %s1143 = scalar_lea.vmem %s1124, %s1141 [#allocation5]
                %s1144 = scalar_lea.vmem %s1126, %s1142
              $region72: #{forward.20} parent=59 // loop_footer
                %s1130 = sadd.s32 %s1128, 1
              $region73: #{forward.20} parent=59 // loop_footer_branch
                %1127 = sbr.rel target = $region69
              $region74: #{forward.20} parent=59 // loop_exit
                _
            $region60: #{forward.20} parent=51 // pred_fallthru
              _
          $region52: #{forward.20} parent=47 // pred_fallthru
            _
          %1254 = vnop
        $region48: #{forward.20} parent=31 // pred_fallthru
          _
      $region32: #{forward.20} parent=5 // pred_fallthru
        _
      %p1255 = scmp.le.s32.totalorder 2, %s10
      // Predicated region
      $region93: #{forward.20} parent=5 // pred_check
        %p1256 = pneg %p1255
      $region94: #{forward.20} parent=5 // pred_check_branch
        %1258 = sbr.rel (%p1256) target = $region96
      $region95: #{forward.20} parent=5 // pred_region
        %s1259 = ssub.s32 %s10, 2
        // Predicated region
        $region97: #{forward.20} parent=95 // pred_check
          %p1260 = pneg %p142
        $region98: #{forward.20} parent=95 // pred_check_branch
          %1262 = sbr.rel (%p1260) target = $region100
        $region99: #{forward.20} parent=95 // pred_region
          %s1263 = sand.u32 %s127, 1
          %s1264 = sand.u32 %s127, 1
          %s1265 = smul.addr %s1264, 128
          %s1266 = scalar_lea.vmem [#allocation5], %s1265
        $region100: #{forward.20} parent=95 // pred_fallthru
          _
      $region96: #{forward.20} parent=5 // pred_fallthru
        _
    $region6: #{forward.20} parent=1 // loop_footer
      %s14 = sadd.s32 1, %s10
    $region7: #{forward.20} parent=1 // loop_footer_branch
      %9 = sbr.rel target = $region3
    $region8: #{forward.20} parent=1 // loop_exit
      _
    %1267 = vsyncpa [#allocation4], 1
    %s1268 = scalar_lea.sflag [#allocation4], 1
    %1269 = vsyncpa %s1268, 1

// kernel: forward.21
$region0: #{forward.21}
  #allocation0 [shape = 'u32[]', space=smem, size = 0x4, offset = 0x4, fixed_abs, tag = 'smem constant byte address 0x4 - core index']
  #allocation1 [shape = 'u32[144,128]{1,0:T(1,128)}', space=vmem, size = 0x12000, scoped, tag = 'internal scratch']
  #allocation2 [shape = 'f32[256,64]{1,0:T(8,128)}', space=vmem, size = 0x20000, scoped, tag = 'scratch operand']
  %s0 = inlined_call_operand.vmem [shape: bf16[992,384], index: 0, kind: input, shape index: {}]
  %s1 = inlined_call_operand.vmem [shape: bf16[384,64], index: 1, kind: input, shape index: {}]
  %s2 = inlined_call_operand.vmem [shape: f32[1,64], index: 2, kind: input, shape index: {}]
  %s3 = inlined_call_operand.vmem [shape: bf16[992,64], index: 3, kind: output, shape index: {}]
  %s4 = sld [smem:[#allocation0]]
  $region97: #{forward.21} parent=0
    _
  %s6 = ssub.s32 1, %s4
  %s7 = scalar_select 0, %s6, %s4
  $region1: #{forward.21} parent=0
    #allocation3 [shape = 'u8[131072]{0}', space=vmem, size = 0x20000, scoped, tag = 'output window, operand 0']
    loop: start=0, step=1, limit=6
    $region2: #{forward.21} parent=1 // loop_pre_header
      _
    $region3: #{forward.21} parent=1 // loop_header
      %s9 = sphi 0, %s13
      %p10 = scmp.ge.s32.totalorder %s9, 6
      %s16 = sphi 0, %s35
      %s17 = sphi 0, %s31
      %s18 = sphi 0, %s27
      %s19 = sphi 0, %s16
      %s20 = sphi 0, %s17
      %s21 = sphi 0, %s18
      %s22 = sphi 0, %s19
      %s23 = sphi 0, %s20
      %s24 = sphi 0, %s21
      %s40 = sphi 0, %s42
      %s43 = sphi 0, %s40
      %s44 = sphi 0, %s43
      %s60 = sphi 0, %s44
      %s68 = sphi 0, %s70
      %s71 = sphi 0, %s68
      %s72 = sphi 0, %s71
      %s88 = sphi 0, %s72
      %s94 = sphi 0, %s96
      %s97 = sphi 0, %s94
      %s98 = sphi 0, %s97
      %s114 = sphi 0, %s98
      %s122 = sphi 0, %s124
      %s125 = sphi 0, %s122
      %s126 = sphi 0, %s125
      %s142 = sphi 0, %s126
    $region4: #{forward.21} parent=1 // loop_header_branch
      %12 = sbr.rel (%p10) target = $region8
    $region5: #{forward.21} parent=1 // loop_body
      %s14 = ssub.s32 %s9, 1
      %s15 = ssub.s32 %s9, 2
      %s25 = sadd.s32 1, %s18
      %p26 = scmp.ge.s32.totalorder %s25, 1
      %s27 = scalar_select %p26, 0, %s25
      %s28 = sadd.s32 1, %s17
      %s29 = scalar_select %p26, %s28, %s17
      %p30 = scmp.ge.s32.totalorder %s29, 1
      %s31 = scalar_select %p30, 0, %s29
      %s32 = sadd.s32 1, %s16
      %s33 = scalar_select %p30, %s32, %s16
      %p34 = scmp.ge.s32.totalorder %s33, 4
      %s35 = scalar_select %p34, 0, %s33
      %s36 = ssub.s32 %s16, %s35
      %s37 = ssub.s32 %s18, %s27
      %s38 = sor.u32 %s36, %s37
      %p39 = scmp.eq.s32.totalorder %s38, 0
      %s41 = sadd.s32 %s40, 1
      %s42 = scalar_select %p39, %s40, %s41
      %p45 = pneg %p39
      %p46 = scmp.eq.s32.totalorder %s9, 3
      %p47 = por %p45, %p46
      %p48 = scmp.ne.s32.totalorder %s40, %s43
      %p49 = scmp.eq.s32.totalorder %s9, 0
      %p50 = por %p48, %p49
      %p51 = scmp.ne.s32.totalorder %s40, %s43
      %p52 = scmp.eq.s32.totalorder %s14, 3
      %p53 = por %p51, %p52
      %p54 = scmp.ne.s32.totalorder %s43, %s44
      %p55 = scmp.eq.s32.totalorder %s14, 0
      %p56 = por %p54, %p55
      %p57 = scmp.ne.s32.totalorder %s43, %s44
      %p58 = scmp.eq.s32.totalorder %s15, 3
      %p59 = por %p57, %p58
      %p61 = scmp.ne.s32.totalorder %s44, %s60
      %p62 = scmp.eq.s32.totalorder %s15, 0
      %p63 = por %p61, %p62
      %s64 = ssub.s32 %s18, %s27
      %s65 = ssub.s32 %s17, %s31
      %s66 = sor.u32 %s64, %s65
      %p67 = scmp.eq.s32.totalorder %s66, 0
      %s69 = sadd.s32 %s68, 1
      %s70 = scalar_select %p67, %s68, %s69
      %p73 = pneg %p67
      %p74 = scmp.eq.s32.totalorder %s9, 3
      %p75 = por %p73, %p74
      %p76 = scmp.ne.s32.totalorder %s68, %s71
      %p77 = scmp.eq.s32.totalorder %s9, 0
      %p78 = por %p76, %p77
      %p79 = scmp.ne.s32.totalorder %s68, %s71
      %p80 = scmp.eq.s32.totalorder %s14, 3
      %p81 = por %p79, %p80
      %p82 = scmp.ne.s32.totalorder %s71, %s72
      %p83 = scmp.eq.s32.totalorder %s14, 0
      %p84 = por %p82, %p83
      %p85 = scmp.ne.s32.totalorder %s71, %s72
      %p86 = scmp.eq.s32.totalorder %s15, 3
      %p87 = por %p85, %p86
      %p89 = scmp.ne.s32.totalorder %s72, %s88
      %p90 = scmp.eq.s32.totalorder %s15, 0
      %p91 = por %p89, %p90
      %s92 = ssub.s32 %s17, %s31
      %p93 = scmp.eq.s32.totalorder %s92, 0
      %s95 = sadd.s32 %s94, 1
      %s96 = scalar_select %p93, %s94, %s95
      %p99 = pneg %p93
      %p100 = scmp.eq.s32.totalorder %s9, 3
      %p101 = por %p99, %p100
      %p102 = scmp.ne.s32.totalorder %s94, %s97
      %p103 = scmp.eq.s32.totalorder %s9, 0
      %p104 = por %p102, %p103
      %p105 = scmp.ne.s32.totalorder %s94, %s97
      %p106 = scmp.eq.s32.totalorder %s14, 3
      %p107 = por %p105, %p106
      %p108 = scmp.ne.s32.totalorder %s97, %s98
      %p109 = scmp.eq.s32.totalorder %s14, 0
      %p110 = por %p108, %p109
      %p111 = scmp.ne.s32.totalorder %s97, %s98
      %p112 = scmp.eq.s32.totalorder %s15, 3
      %p113 = por %p111, %p112
      %p115 = scmp.ne.s32.totalorder %s98, %s114
      %p116 = scmp.eq.s32.totalorder %s15, 0
      %p117 = por %p115, %p116
      %s118 = ssub.s32 %s16, %s35
      %s119 = ssub.s32 %s17, %s31
      %s120 = sor.u32 %s118, %s119
      %p121 = scmp.eq.s32.totalorder %s120, 0
      %s123 = sadd.s32 %s122, 1
      %s124 = scalar_select %p121, %s122, %s123
      %p127 = pneg %p121
      %p128 = scmp.eq.s32.totalorder %s9, 3
      %p129 = por %p127, %p128
      %p130 = scmp.ne.s32.totalorder %s122, %s125
      %p131 = scmp.eq.s32.totalorder %s9, 0
      %p132 = por %p130, %p131
      %p133 = scmp.ne.s32.totalorder %s122, %s125
      %p134 = scmp.eq.s32.totalorder %s14, 3
      %p135 = por %p133, %p134
      %p136 = scmp.ne.s32.totalorder %s125, %s126
      %p137 = scmp.eq.s32.totalorder %s14, 0
      %p138 = por %p136, %p137
      %p139 = scmp.ne.s32.totalorder %s125, %s126
      %p140 = scmp.eq.s32.totalorder %s15, 3
      %p141 = por %p139, %p140
      %p143 = scmp.ne.s32.totalorder %s126, %s142
      %p144 = scmp.eq.s32.totalorder %s15, 0
      %p145 = por %p143, %p144
      %p146 = scmp.le.s32.totalorder 1, %s9
      %p147 = scmp.lt.s32.totalorder %s9, 5
      %p148 = pnand %p146, %p147
      %p149 = pneg %p148
      // Predicated region
      $region9: #{forward.21} parent=5 // pred_check
        _
      $region10: #{forward.21} parent=5 // pred_check_branch
        %151 = sbr.rel (%p148) target = $region12
      $region11: #{forward.21} parent=5 // pred_region
        %s152 = ssub.s32 %s9, 1
        // Predicated region
        $region13: #{forward.21} parent=11 // pred_check
          %p153 = pneg %p84
        $region14: #{forward.21} parent=11 // pred_check_branch
          %155 = sbr.rel (%p153) target = $region16
        $region15: #{forward.21} parent=11 // pred_region
          %s156 = smul.u32 48, %s21
          %p157 = scmp.lt.s32.totalorder %s156, 47
          %s158 = scalar_select %p157, %s156, 47
          %p159 = scmp.lt.s32.totalorder %s20, 0
          %s160 = scalar_select %p159, %s20, 0
          %s161 = sadd.s32 %s160, %s158
          %s162 = smul.addr %s161, 4
          %s163 = scalar_lea.vmem %s1, %s162
          %s164 = smul.u32 48, %s21
        $region16: #{forward.21} parent=11 // pred_fallthru
          _
        // Predicated region
        $region17: #{forward.21} parent=11 // pred_check
          %p165 = pneg %p110
        $region18: #{forward.21} parent=11 // pred_check_branch
          %167 = sbr.rel (%p165) target = $region20
        $region19: #{forward.21} parent=11 // pred_region
          %p168 = scmp.lt.s32.totalorder %s20, 0
          %s169 = scalar_select %p168, %s20, 0
          %s170 = scalar_lea.vmem %s2, %s169
        $region20: #{forward.21} parent=11 // pred_fallthru
          _
      $region12: #{forward.21} parent=5 // pred_fallthru
        _
      %p171 = scmp.lt.s32.totalorder %s9, 4
      // Predicated region
      $region21: #{forward.21} parent=5 // pred_check
        %p172 = pneg %p171
      $region22: #{forward.21} parent=5 // pred_check_branch
        %174 = sbr.rel (%p172) target = $region24
      $region23: #{forward.21} parent=5 // pred_region
        // Predicated region
        $region25: #{forward.21} parent=23 // pred_check
          %p175 = pneg %p50
        $region26: #{forward.21} parent=23 // pred_check_branch
          %177 = sbr.rel (%p175) target = $region28
        $region27: #{forward.21} parent=23 // pred_region
          %s178 = smul.u32 32, %s16
          %s179 = smul.u32 3, %s18
          %s180 = ssub.s32 124, %s178
          %p181 = scmp.lt.s32.totalorder %s180, 32
          %s182 = scalar_select %p181, %s180, 32
          %s183 = smul.u32 64, %s182
          %s184 = smul.u32 %s183, 3
          %p185 = scmp.lt.s32.totalorder %s178, 123
          %s186 = scalar_select %p185, %s178, 123
          %p187 = scmp.lt.s32.totalorder %s179, 2
          %s188 = scalar_select %p187, %s179, 2
          %s189 = smul.addr %s186, 3
          %s190 = sadd.s32 %s188, %s189
          %s191 = smul.addr %s190, 4
          %s192 = scalar_lea.vmem %s0, %s191
          %s193 = smul.u32 32, %s16
          %s194 = smul.u32 3, %s18
          %s195 = ssub.s32 124, %s193
          %p196 = scmp.lt.s32.totalorder %s195, 32
          %s197 = scalar_select %p196, %s195, 32
          %s198 = smul.u32 64, %s197
          %s199 = smul.u32 %s198, 3
        $region28: #{forward.21} parent=23 // pred_fallthru
          _
      $region24: #{forward.21} parent=5 // pred_fallthru
        _
      %p200 = scmp.le.s32.totalorder 1, %s9
      %p201 = scmp.lt.s32.totalorder %s9, 5
      %p202 = pnand %p200, %p201
      %p203 = pneg %p202
      // Predicated region
      $region29: #{forward.21} parent=5 // pred_check
        _
      $region30: #{forward.21} parent=5 // pred_check_branch
        %205 = sbr.rel (%p202) target = $region32
      $region31: #{forward.21} parent=5 // pred_region
        %s206 = ssub.s32 %s9, 1
        %s207 = smul.u32 32, %s19
        %s208 = smul.u32 3, %s21
        %s209 = ssub.s32 124, %s207
        %p210 = scmp.lt.s32.totalorder %s209, 32
        %s211 = scalar_select %p210, %s209, 32
        %s212 = smul.u32 64, %s211
        %s213 = smul.u32 %s212, 3
        %p214 = scmp.lt.s32.totalorder %s207, 123
        %s215 = scalar_select %p214, %s207, 123
        %p216 = scmp.lt.s32.totalorder %s208, 2
        %s217 = scalar_select %p216, %s208, 2
        %s218 = smul.addr %s215, 3
        %s219 = sadd.s32 %s217, %s218
        %s220 = smul.addr %s219, 4
        %s221 = scalar_lea.vmem %s0, %s220
        %p222 = pneg %p56
        %p223 = pneg %p53
        %s224 = smul.u32 48, %s21
        %p225 = scmp.lt.s32.totalorder %s224, 47
        %s226 = scalar_select %p225, %s224, 47
        %p227 = scmp.lt.s32.totalorder %s20, 0
        %s228 = scalar_select %p227, %s20, 0
        %s229 = sadd.s32 %s228, %s226
        %s230 = smul.addr %s229, 4
        %s231 = scalar_lea.vmem %s1, %s230
        %p232 = pneg %p84
        %p233 = pneg %p81
        %p234 = scmp.lt.s32.totalorder %s20, 0
        %s235 = scalar_select %p234, %s20, 0
        %s236 = scalar_lea.vmem %s2, %s235
        %p237 = pneg %p110
        %p238 = pneg %p107
        %p239 = pneg %p138
        %p240 = pneg %p135
        %s241 = sand.u32 %s125, 1
        %s242 = sand.u32 %s125, 1
        %s243 = smul.addr %s242, 128
        %s244 = scalar_lea.vmem [#allocation3], %s243
        %s245 = smul.u32 32, %s19
        %s246 = smul.u32 3, %s21
        %s247 = ssub.s32 124, %s245
        %p248 = scmp.lt.s32.totalorder %s247, 32
        %s249 = scalar_select %p248, %s247, 32
        %s250 = smul.u32 64, %s249
        %s251 = smul.u32 %s250, 3
        %p252 = scmp.lt.s32.totalorder %s245, 123
        %s253 = scalar_select %p252, %s245, 123
        %p254 = scmp.lt.s32.totalorder %s246, 2
        %s255 = scalar_select %p254, %s246, 2
        %s256 = smul.addr %s253, 3
        %s257 = sadd.s32 %s255, %s256
        %s258 = smul.addr %s257, 4
        %s259 = scalar_lea.vmem %s0, %s258
        %s260 = smul.u32 32, %s19
        %s261 = smul.u32 3, %s21
        %s262 = ssub.s32 124, %s260
        %p263 = scmp.lt.s32.totalorder %s262, 32
        %s264 = scalar_select %p263, %s262, 32
        %s265 = smul.u32 64, %s264
        %s266 = smul.u32 %s265, 3
        %s267 = smul.u32 48, %s21
        %p268 = scmp.lt.s32.totalorder %s267, 47
        %s269 = scalar_select %p268, %s267, 47
        %p270 = scmp.lt.s32.totalorder %s20, 0
        %s271 = scalar_select %p270, %s20, 0
        %s272 = sadd.s32 %s271, %s269
        %s273 = smul.addr %s272, 4
        %s274 = scalar_lea.vmem %s1, %s273
        %s275 = smul.u32 48, %s21
        %p276 = scmp.lt.s32.totalorder %s20, 0
        %s277 = scalar_select %p276, %s20, 0
        %s278 = scalar_lea.vmem %s2, %s277
        %s279 = smul.u32 32, %s19
        %s280 = ssub.s32 124, %s279
        %p281 = scmp.lt.s32.totalorder %s280, 32
        %s282 = scalar_select %p281, %s280, 32
        %s283 = smul.u32 64, %s282
        %p285 = scmp.eq.s32.totalorder %s21, 0
        // Predicated region
        $region33: #{forward.21} parent=31 // pred_check
          %p286 = pneg %p285
        $region34: #{forward.21} parent=31 // pred_check_branch
          %288 = sbr.rel (%p286) target = $region36
        $region35: #{forward.21} parent=31 // pred_region
          %vm289 = vcmask 523264
          %290 = vst.msk [vmem:[#allocation2] sm:$0xff] %vm289, 0.0
          %291 = vst.msk [vmem:[#allocation2 + $0x8] sm:$0xff] %vm289, 0.0
          %292 = vst.msk [vmem:[#allocation2 + $0x10] sm:$0xff] %vm289, 0.0
          %293 = vst.msk [vmem:[#allocation2 + $0x18] sm:$0xff] %vm289, 0.0
          %294 = vst.msk [vmem:[#allocation2 + $0x20] sm:$0xff] %vm289, 0.0
          %295 = vst.msk [vmem:[#allocation2 + $0x28] sm:$0xff] %vm289, 0.0
          %296 = vst.msk [vmem:[#allocation2 + $0x30] sm:$0xff] %vm289, 0.0
          %297 = vst.msk [vmem:[#allocation2 + $0x38] sm:$0xff] %vm289, 0.0
          %298 = vst.msk [vmem:[#allocation2 + $0x40] sm:$0xff] %vm289, 0.0
          %299 = vst.msk [vmem:[#allocation2 + $0x48] sm:$0xff] %vm289, 0.0
          %300 = vst.msk [vmem:[#allocation2 + $0x50] sm:$0xff] %vm289, 0.0
          %301 = vst.msk [vmem:[#allocation2 + $0x58] sm:$0xff] %vm289, 0.0
          %302 = vst.msk [vmem:[#allocation2 + $0x60] sm:$0xff] %vm289, 0.0
          %303 = vst.msk [vmem:[#allocation2 + $0x68] sm:$0xff] %vm289, 0.0
          %304 = vst.msk [vmem:[#allocation2 + $0x70] sm:$0xff] %vm289, 0.0
          %305 = vst.msk [vmem:[#allocation2 + $0x78] sm:$0xff] %vm289, 0.0
          %306 = vst.msk [vmem:[#allocation2 + $0x80] sm:$0xff] %vm289, 0.0
          %307 = vst.msk [vmem:[#allocation2 + $0x88] sm:$0xff] %vm289, 0.0
          %308 = vst.msk [vmem:[#allocation2 + $0x90] sm:$0xff] %vm289, 0.0
          %309 = vst.msk [vmem:[#allocation2 + $0x98] sm:$0xff] %vm289, 0.0
          %310 = vst.msk [vmem:[#allocation2 + $0xa0] sm:$0xff] %vm289, 0.0
          %311 = vst.msk [vmem:[#allocation2 + $0xa8] sm:$0xff] %vm289, 0.0
          %312 = vst.msk [vmem:[#allocation2 + $0xb0] sm:$0xff] %vm289, 0.0
          %313 = vst.msk [vmem:[#allocation2 + $0xb8] sm:$0xff] %vm289, 0.0
          %314 = vst.msk [vmem:[#allocation2 + $0xc0] sm:$0xff] %vm289, 0.0
          %315 = vst.msk [vmem:[#allocation2 + $0xc8] sm:$0xff] %vm289, 0.0
          %316 = vst.msk [vmem:[#allocation2 + $0xd0] sm:$0xff] %vm289, 0.0
          %317 = vst.msk [vmem:[#allocation2 + $0xd8] sm:$0xff] %vm289, 0.0
          %318 = vst.msk [vmem:[#allocation2 + $0xe0] sm:$0xff] %vm289, 0.0
          %319 = vst.msk [vmem:[#allocation2 + $0xe8] sm:$0xff] %vm289, 0.0
          %320 = vst.msk [vmem:[#allocation2 + $0xf0] sm:$0xff] %vm289, 0.0
          %321 = vst.msk [vmem:[#allocation2 + $0xf8] sm:$0xff] %vm289, 0.0
        $region36: #{forward.21} parent=31 // pred_fallthru
          _
        %v322 = vld [vmem:[#allocation2] sm:$0xff]
        %v323 = vld [vmem:[#allocation2 + $0x8] sm:$0xff]
        %v324 = vld [vmem:[#allocation2 + $0x10] sm:$0xff]
        %v325 = vld [vmem:[#allocation2 + $0x18] sm:$0xff]
        %v326 = vld [vmem:[#allocation2 + $0x20] sm:$0xff]
        %v327 = vld [vmem:[#allocation2 + $0x28] sm:$0xff]
        %v328 = vld [vmem:[#allocation2 + $0x30] sm:$0xff]
        %v329 = vld [vmem:[#allocation2 + $0x38] sm:$0xff]
        %v330 = vld [vmem:[#allocation2 + $0x40] sm:$0xff]
        %v331 = vld [vmem:[#allocation2 + $0x48] sm:$0xff]
        %v332 = vld [vmem:[#allocation2 + $0x50] sm:$0xff]
        %v333 = vld [vmem:[#allocation2 + $0x58] sm:$0xff]
        %v334 = vld [vmem:[#allocation2 + $0x60] sm:$0xff]
        %v335 = vld [vmem:[#allocation2 + $0x68] sm:$0xff]
        %v336 = vld [vmem:[#allocation2 + $0x70] sm:$0xff]
        %v337 = vld [vmem:[#allocation2 + $0x78] sm:$0xff]
        %v338 = vld [vmem:[#allocation2 + $0x80] sm:$0xff]
        %v339 = vld [vmem:[#allocation2 + $0x88] sm:$0xff]
        %v340 = vld [vmem:[#allocation2 + $0x90] sm:$0xff]
        %v341 = vld [vmem:[#allocation2 + $0x98] sm:$0xff]
        %v342 = vld [vmem:[#allocation2 + $0xa0] sm:$0xff]
        %v343 = vld [vmem:[#allocation2 + $0xa8] sm:$0xff]
        %v344 = vld [vmem:[#allocation2 + $0xb0] sm:$0xff]
        %v345 = vld [vmem:[#allocation2 + $0xb8] sm:$0xff]
        %v346 = vld [vmem:[#allocation2 + $0xc0] sm:$0xff]
        %v347 = vld [vmem:[#allocation2 + $0xc8] sm:$0xff]
        %v348 = vld [vmem:[#allocation2 + $0xd0] sm:$0xff]
        %v349 = vld [vmem:[#allocation2 + $0xd8] sm:$0xff]
        %v350 = vld [vmem:[#allocation2 + $0xe0] sm:$0xff]
        %v351 = vld [vmem:[#allocation2 + $0xe8] sm:$0xff]
        %v352 = vld [vmem:[#allocation2 + $0xf0] sm:$0xff]
        %v353 = vld [vmem:[#allocation2 + $0xf8] sm:$0xff]
        %v354 = vld [vmem:[%s259] sm:$0xff]
        %v355 = vld [vmem:[%s259 + $0x8] sm:$0xf]
        %v356 = vld [vmem:[%s259 + $0xc] sm:$0xff]
        %v357 = vld [vmem:[%s259 + $0x14] sm:$0xf]
        %v358 = vld [vmem:[%s259 + $0x18] sm:$0xff]
        %v359 = vld [vmem:[%s259 + $0x20] sm:$0xf]
        %v360 = vld [vmem:[%s259 + $0x24] sm:$0xff]
        %v361 = vld [vmem:[%s259 + $0x2c] sm:$0xf]
        %v362 = vld [vmem:[%s259 + $0x30] sm:$0xff]
        %v363 = vld [vmem:[%s259 + $0x38] sm:$0xf]
        %v364 = vld [vmem:[%s259 + $0x3c] sm:$0xff]
        %v365 = vld [vmem:[%s259 + $0x44] sm:$0xf]
        %v366 = vld [vmem:[%s259 + $0x48] sm:$0xff]
        %v367 = vld [vmem:[%s259 + $0x50] sm:$0xf]
        %v368 = vld [vmem:[%s259 + $0x54] sm:$0xff]
        %v369 = vld [vmem:[%s259 + $0x5c] sm:$0xf]
        %v370 = vld [vmem:[%s259 + $0x60] sm:$0xff]
        %v371 = vld [vmem:[%s259 + $0x68] sm:$0xf]
        %v372 = vld [vmem:[%s259 + $0x6c] sm:$0xff]
        %v373 = vld [vmem:[%s259 + $0x74] sm:$0xf]
        %v374 = vld [vmem:[%s259 + $0x78] sm:$0xff]
        %v375 = vld [vmem:[%s259 + $0x80] sm:$0xf]
        %v376 = vld [vmem:[%s259 + $0x84] sm:$0xff]
        %v377 = vld [vmem:[%s259 + $0x8c] sm:$0xf]
        %v378 = vld [vmem:[%s259 + $0x90] sm:$0xff]
        %v379 = vld [vmem:[%s259 + $0x98] sm:$0xf]
        %v380 = vld [vmem:[%s259 + $0x9c] sm:$0xff]
        %v381 = vld [vmem:[%s259 + $0xa4] sm:$0xf]
        %v382 = vld [vmem:[%s259 + $0xa8] sm:$0xff]
        %v383 = vld [vmem:[%s259 + $0xb0] sm:$0xf]
        %v384 = vld [vmem:[%s259 + $0xb4] sm:$0xff]
        %v385 = vld [vmem:[%s259 + $0xbc] sm:$0xf]
        %v386 = vld [vmem:[%s259 + $0xc0] sm:$0xff]
        %v387 = vld [vmem:[%s259 + $0xc8] sm:$0xf]
        %v388 = vld [vmem:[%s259 + $0xcc] sm:$0xff]
        %v389 = vld [vmem:[%s259 + $0xd4] sm:$0xf]
        %v390 = vld [vmem:[%s259 + $0xd8] sm:$0xff]
        %v391 = vld [vmem:[%s259 + $0xe0] sm:$0xf]
        %v392 = vld [vmem:[%s259 + $0xe4] sm:$0xff]
        %v393 = vld [vmem:[%s259 + $0xec] sm:$0xf]
        %v394 = vld [vmem:[%s259 + $0xf0] sm:$0xff]
        %v395 = vld [vmem:[%s259 + $0xf8] sm:$0xf]
        %v396 = vld [vmem:[%s259 + $0xfc] sm:$0xff]
        %v397 = vld [vmem:[%s259 + $0x104] sm:$0xf]
        %v398 = vld [vmem:[%s259 + $0x108] sm:$0xff]
        %v399 = vld [vmem:[%s259 + $0x110] sm:$0xf]
        %v400 = vld [vmem:[%s259 + $0x114] sm:$0xff]
        %v401 = vld [vmem:[%s259 + $0x11c] sm:$0xf]
        %v402 = vld [vmem:[%s259 + $0x120] sm:$0xff]
        %v403 = vld [vmem:[%s259 + $0x128] sm:$0xf]
        %v404 = vld [vmem:[%s259 + $0x12c] sm:$0xff]
        %v405 = vld [vmem:[%s259 + $0x134] sm:$0xf]
        %v406 = vld [vmem:[%s259 + $0x138] sm:$0xff]
        %v407 = vld [vmem:[%s259 + $0x140] sm:$0xf]
        %v408 = vld [vmem:[%s259 + $0x144] sm:$0xff]
        %v409 = vld [vmem:[%s259 + $0x14c] sm:$0xf]
        %v410 = vld [vmem:[%s259 + $0x150] sm:$0xff]
        %v411 = vld [vmem:[%s259 + $0x158] sm:$0xf]
        %v412 = vld [vmem:[%s259 + $0x15c] sm:$0xff]
        %v413 = vld [vmem:[%s259 + $0x164] sm:$0xf]
        %v414 = vld [vmem:[%s259 + $0x168] sm:$0xff]
        %v415 = vld [vmem:[%s259 + $0x170] sm:$0xf]
        %v416 = vld [vmem:[%s259 + $0x174] sm:$0xff]
        %v417 = vld [vmem:[%s259 + $0x17c] sm:$0xf]
        %v418 = vld [vmem:[%s274] sm:$0xf]
        %v419 = vld [vmem:[%s274 + $0x4] sm:$0xf]
        %v420 = vld [vmem:[%s274 + $0x8] sm:$0xf]
        %v421 = vld [vmem:[%s274 + $0xc] sm:$0xf]
        %v422 = vld [vmem:[%s274 + $0x10] sm:$0xf]
        %v423 = vld [vmem:[%s274 + $0x14] sm:$0xf]
        %v424 = vld [vmem:[%s274 + $0x18] sm:$0xf]
        %v425 = vld [vmem:[%s274 + $0x1c] sm:$0xf]
        %v426 = vld [vmem:[%s274 + $0x20] sm:$0xf]
        %v427 = vld [vmem:[%s274 + $0x24] sm:$0xf]
        %v428 = vld [vmem:[%s274 + $0x28] sm:$0xf]
        %v429 = vld [vmem:[%s274 + $0x2c] sm:$0xf]
        %v430 = vld [vmem:[%s274 + $0x30] sm:$0xf]
        %v431 = vld [vmem:[%s274 + $0x34] sm:$0xf]
        %v432 = vld [vmem:[%s274 + $0x38] sm:$0xf]
        %v433 = vld [vmem:[%s274 + $0x3c] sm:$0xf]
        %v434 = vld [vmem:[%s274 + $0x40] sm:$0xf]
        %v435 = vld [vmem:[%s274 + $0x44] sm:$0xf]
        %v436 = vld [vmem:[%s274 + $0x48] sm:$0xf]
        %v437 = vld [vmem:[%s274 + $0x4c] sm:$0xf]
        %v438 = vld [vmem:[%s274 + $0x50] sm:$0xf]
        %v439 = vld [vmem:[%s274 + $0x54] sm:$0xf]
        %v440 = vld [vmem:[%s274 + $0x58] sm:$0xf]
        %v441 = vld [vmem:[%s274 + $0x5c] sm:$0xf]
        %v442 = vld [vmem:[%s274 + $0x60] sm:$0xf]
        %v443 = vld [vmem:[%s274 + $0x64] sm:$0xf]
        %v444 = vld [vmem:[%s274 + $0x68] sm:$0xf]
        %v445 = vld [vmem:[%s274 + $0x6c] sm:$0xf]
        %v446 = vld [vmem:[%s274 + $0x70] sm:$0xf]
        %v447 = vld [vmem:[%s274 + $0x74] sm:$0xf]
        %v448 = vld [vmem:[%s274 + $0x78] sm:$0xf]
        %v449 = vld [vmem:[%s274 + $0x7c] sm:$0xf]
        %v450 = vld [vmem:[%s274 + $0x80] sm:$0xf]
        %v451 = vld [vmem:[%s274 + $0x84] sm:$0xf]
        %v452 = vld [vmem:[%s274 + $0x88] sm:$0xf]
        %v453 = vld [vmem:[%s274 + $0x8c] sm:$0xf]
        %v454 = vld [vmem:[%s274 + $0x90] sm:$0xf]
        %v455 = vld [vmem:[%s274 + $0x94] sm:$0xf]
        %v456 = vld [vmem:[%s274 + $0x98] sm:$0xf]
        %v457 = vld [vmem:[%s274 + $0x9c] sm:$0xf]
        %v458 = vld [vmem:[%s274 + $0xa0] sm:$0xf]
        %v459 = vld [vmem:[%s274 + $0xa4] sm:$0xf]
        %v460 = vld [vmem:[%s274 + $0xa8] sm:$0xf]
        %v461 = vld [vmem:[%s274 + $0xac] sm:$0xf]
        %v462 = vld [vmem:[%s274 + $0xb0] sm:$0xf]
        %v463 = vld [vmem:[%s274 + $0xb4] sm:$0xf]
        %v464 = vld [vmem:[%s274 + $0xb8] sm:$0xf]
        %v465 = vld [vmem:[%s274 + $0xbc] sm:$0xf]
        %v530 = vunpack.c.l.b16 %v354
        %v531 = vunpack.c.h.b16 %v354
        %v532 = vunpack.c.l.b16 %v355
        %v533 = vunpack.c.l.b16 %v356
        %v534 = vunpack.c.h.b16 %v356
        %v535 = vunpack.c.l.b16 %v357
        %v536 = vunpack.c.l.b16 %v358
        %v537 = vunpack.c.h.b16 %v358
        %v538 = vunpack.c.l.b16 %v359
        %v539 = vunpack.c.l.b16 %v360
        %v540 = vunpack.c.h.b16 %v360
        %v541 = vunpack.c.l.b16 %v361
        %v542 = vunpack.c.l.b16 %v362
        %v543 = vunpack.c.h.b16 %v362
        %v544 = vunpack.c.l.b16 %v363
        %v545 = vunpack.c.l.b16 %v364
        %v546 = vunpack.c.h.b16 %v364
        %v547 = vunpack.c.l.b16 %v365
        %v548 = vunpack.c.l.b16 %v366
        %v549 = vunpack.c.h.b16 %v366
        %v550 = vunpack.c.l.b16 %v367
        %v551 = vunpack.c.l.b16 %v368
        %v552 = vunpack.c.h.b16 %v368
        %v553 = vunpack.c.l.b16 %v369
        %v554 = vunpack.c.l.b16 %v370
        %v555 = vunpack.c.h.b16 %v370
        %v556 = vunpack.c.l.b16 %v371
        %v557 = vunpack.c.l.b16 %v372
        %v558 = vunpack.c.h.b16 %v372
        %v559 = vunpack.c.l.b16 %v373
        %v560 = vunpack.c.l.b16 %v374
        %v561 = vunpack.c.h.b16 %v374
        %v562 = vunpack.c.l.b16 %v375
        %v563 = vunpack.c.l.b16 %v376
        %v564 = vunpack.c.h.b16 %v376
        %v565 = vunpack.c.l.b16 %v377
        %v566 = vunpack.c.l.b16 %v378
        %v567 = vunpack.c.h.b16 %v378
        %v568 = vunpack.c.l.b16 %v379
        %v569 = vunpack.c.l.b16 %v380
        %v570 = vunpack.c.h.b16 %v380
        %v571 = vunpack.c.l.b16 %v381
        %v572 = vunpack.c.l.b16 %v382
        %v573 = vunpack.c.h.b16 %v382
        %v574 = vunpack.c.l.b16 %v383
        %v575 = vunpack.c.l.b16 %v384
        %v576 = vunpack.c.h.b16 %v384
        %v577 = vunpack.c.l.b16 %v385
        %v578 = vunpack.c.l.b16 %v386
        %v579 = vunpack.c.h.b16 %v386
        %v580 = vunpack.c.l.b16 %v387
        %v581 = vunpack.c.l.b16 %v388
        %v582 = vunpack.c.h.b16 %v388
        %v583 = vunpack.c.l.b16 %v389
        %v584 = vunpack.c.l.b16 %v390
        %v585 = vunpack.c.h.b16 %v390
        %v586 = vunpack.c.l.b16 %v391
        %v587 = vunpack.c.l.b16 %v392
        %v588 = vunpack.c.h.b16 %v392
        %v589 = vunpack.c.l.b16 %v393
        %v590 = vunpack.c.l.b16 %v394
        %v591 = vunpack.c.h.b16 %v394
        %v592 = vunpack.c.l.b16 %v395
        %v593 = vunpack.c.l.b16 %v396
        %v594 = vunpack.c.h.b16 %v396
        %v595 = vunpack.c.l.b16 %v397
        %v596 = vunpack.c.l.b16 %v398
        %v597 = vunpack.c.h.b16 %v398
        %v598 = vunpack.c.l.b16 %v399
        %v599 = vunpack.c.l.b16 %v400
        %v600 = vunpack.c.h.b16 %v400
        %v601 = vunpack.c.l.b16 %v401
        %v602 = vunpack.c.l.b16 %v402
        %v603 = vunpack.c.h.b16 %v402
        %v604 = vunpack.c.l.b16 %v403
        %v605 = vunpack.c.l.b16 %v404
        %v606 = vunpack.c.h.b16 %v404
        %v607 = vunpack.c.l.b16 %v405
        %v608 = vunpack.c.l.b16 %v406
        %v609 = vunpack.c.h.b16 %v406
        %v610 = vunpack.c.l.b16 %v407
        %v611 = vunpack.c.l.b16 %v408
        %v612 = vunpack.c.h.b16 %v408
        %v613 = vunpack.c.l.b16 %v409
        %v614 = vunpack.c.l.b16 %v410
        %v615 = vunpack.c.h.b16 %v410
        %v616 = vunpack.c.l.b16 %v411
        %v617 = vunpack.c.l.b16 %v412
        %v618 = vunpack.c.h.b16 %v412
        %v619 = vunpack.c.l.b16 %v413
        %v620 = vunpack.c.l.b16 %v414
        %v621 = vunpack.c.h.b16 %v414
        %v622 = vunpack.c.l.b16 %v415
        %v623 = vunpack.c.l.b16 %v416
        %v624 = vunpack.c.h.b16 %v416
        %v625 = vunpack.c.l.b16 %v417
        %v626 = vpack.c.b16 %v533, %v530
        %v627 = vpack.c.b16 %v534, %v531
        %v628 = vpack.c.b16 %v535, %v532
        %v629 = vpack.c.b16 %v539, %v536
        %v630 = vpack.c.b16 %v540, %v537
        %v631 = vpack.c.b16 %v541, %v538
        %v632 = vpack.c.b16 %v545, %v542
        %v633 = vpack.c.b16 %v546, %v543
        %v634 = vpack.c.b16 %v547, %v544
        %v635 = vpack.c.b16 %v551, %v548
        %v636 = vpack.c.b16 %v552, %v549
        %v637 = vpack.c.b16 %v553, %v550
        %v638 = vpack.c.b16 %v557, %v554
        %v639 = vpack.c.b16 %v558, %v555
        %v640 = vpack.c.b16 %v559, %v556
        %v641 = vpack.c.b16 %v563, %v560
        %v642 = vpack.c.b16 %v564, %v561
        %v643 = vpack.c.b16 %v565, %v562
        %v644 = vpack.c.b16 %v569, %v566
        %v645 = vpack.c.b16 %v570, %v567
        %v646 = vpack.c.b16 %v571, %v568
        %v647 = vpack.c.b16 %v575, %v572
        %v648 = vpack.c.b16 %v576, %v573
        %v649 = vpack.c.b16 %v577, %v574
        %v650 = vpack.c.b16 %v581, %v578
        %v651 = vpack.c.b16 %v582, %v579
        %v652 = vpack.c.b16 %v583, %v580
        %v653 = vpack.c.b16 %v587, %v584
        %v654 = vpack.c.b16 %v588, %v585
        %v655 = vpack.c.b16 %v589, %v586
        %v656 = vpack.c.b16 %v593, %v590
        %v657 = vpack.c.b16 %v594, %v591
        %v658 = vpack.c.b16 %v595, %v592
        %v659 = vpack.c.b16 %v599, %v596
        %v660 = vpack.c.b16 %v600, %v597
        %v661 = vpack.c.b16 %v601, %v598
        %v662 = vpack.c.b16 %v605, %v602
        %v663 = vpack.c.b16 %v606, %v603
        %v664 = vpack.c.b16 %v607, %v604
        %v665 = vpack.c.b16 %v611, %v608
        %v666 = vpack.c.b16 %v612, %v609
        %v667 = vpack.c.b16 %v613, %v610
        %v668 = vpack.c.b16 %v617, %v614
        %v669 = vpack.c.b16 %v618, %v615
        %v670 = vpack.c.b16 %v619, %v616
        %v671 = vpack.c.b16 %v623, %v620
        %v672 = vpack.c.b16 %v624, %v621
        %v673 = vpack.c.b16 %v625, %v622
        %v770 = vunpack.c.l.b16 %v418
        %v771 = vunpack.c.l.b16 %v419
        %v772 = vunpack.c.l.b16 %v420
        %v773 = vunpack.c.l.b16 %v421
        %v774 = vunpack.c.l.b16 %v422
        %v775 = vunpack.c.l.b16 %v423
        %v776 = vunpack.c.l.b16 %v424
        %v777 = vunpack.c.l.b16 %v425
        %v778 = vunpack.c.l.b16 %v426
        %v779 = vunpack.c.l.b16 %v427
        %v780 = vunpack.c.l.b16 %v428
        %v781 = vunpack.c.l.b16 %v429
        %v782 = vunpack.c.l.b16 %v430
        %v783 = vunpack.c.l.b16 %v431
        %v784 = vunpack.c.l.b16 %v432
        %v785 = vunpack.c.l.b16 %v433
        %v786 = vunpack.c.l.b16 %v434
        %v787 = vunpack.c.l.b16 %v435
        %v788 = vunpack.c.l.b16 %v436
        %v789 = vunpack.c.l.b16 %v437
        %v790 = vunpack.c.l.b16 %v438
        %v791 = vunpack.c.l.b16 %v439
        %v792 = vunpack.c.l.b16 %v440
        %v793 = vunpack.c.l.b16 %v441
        %v794 = vunpack.c.l.b16 %v442
        %v795 = vunpack.c.l.b16 %v443
        %v796 = vunpack.c.l.b16 %v444
        %v797 = vunpack.c.l.b16 %v445
        %v798 = vunpack.c.l.b16 %v446
        %v799 = vunpack.c.l.b16 %v447
        %v800 = vunpack.c.l.b16 %v448
        %v801 = vunpack.c.l.b16 %v449
        %v802 = vunpack.c.l.b16 %v450
        %v803 = vunpack.c.l.b16 %v451
        %v804 = vunpack.c.l.b16 %v452
        %v805 = vunpack.c.l.b16 %v453
        %v806 = vunpack.c.l.b16 %v454
        %v807 = vunpack.c.l.b16 %v455
        %v808 = vunpack.c.l.b16 %v456
        %v809 = vunpack.c.l.b16 %v457
        %v810 = vunpack.c.l.b16 %v458
        %v811 = vunpack.c.l.b16 %v459
        %v812 = vunpack.c.l.b16 %v460
        %v813 = vunpack.c.l.b16 %v461
        %v814 = vunpack.c.l.b16 %v462
        %v815 = vunpack.c.l.b16 %v463
        %v816 = vunpack.c.l.b16 %v464
        %v817 = vunpack.c.l.b16 %v465
        %v818 = vpack.c.b16 %v771, %v770
        %v819 = vpack.c.b16 %v773, %v772
        %v820 = vpack.c.b16 %v775, %v774
        %v821 = vpack.c.b16 %v777, %v776
        %v822 = vpack.c.b16 %v779, %v778
        %v823 = vpack.c.b16 %v781, %v780
        %v824 = vpack.c.b16 %v783, %v782
        %v825 = vpack.c.b16 %v785, %v784
        %v826 = vpack.c.b16 %v787, %v786
        %v827 = vpack.c.b16 %v789, %v788
        %v828 = vpack.c.b16 %v791, %v790
        %v829 = vpack.c.b16 %v793, %v792
        %v830 = vpack.c.b16 %v795, %v794
        %v831 = vpack.c.b16 %v797, %v796
        %v832 = vpack.c.b16 %v799, %v798
        %v833 = vpack.c.b16 %v801, %v800
        %v834 = vpack.c.b16 %v803, %v802
        %v835 = vpack.c.b16 %v805, %v804
        %v836 = vpack.c.b16 %v807, %v806
        %v837 = vpack.c.b16 %v809, %v808
        %v838 = vpack.c.b16 %v811, %v810
        %v839 = vpack.c.b16 %v813, %v812
        %v840 = vpack.c.b16 %v815, %v814
        %v841 = vpack.c.b16 %v817, %v816
        %866 = vmatprep.subr.bf16.mxu0 0
        %867 = vmatpush1.bf16.msra.mxu0 %v818
        %868 = vmatprep.subr.bf16.mxu0 0
        %869 = vmatpush1.bf16.msra.mxu0 %v819
        %870 = vmatprep.subr.bf16.mxu0 0
        %871 = vmatpush1.bf16.msra.mxu0 %v820
        %872 = vmatprep.subr.bf16.mxu0 0
        %873 = vmatpush1.bf16.msra.mxu0 %v821
        %874 = vmatprep.subr.bf16.mxu0 0
        %875 = vmatpush1.bf16.msra.mxu0 %v822
        %876 = vmatprep.subr.bf16.mxu0 0
        %877 = vmatpush1.bf16.msra.mxu0 %v823
        %878 = vmatprep.subr.bf16.mxu0 0
        %879 = vmatpush1.bf16.msra.mxu0 %v824
        %880 = vmatprep.subr.bf16.mxu0 0
        %881 = vmatpush1.bf16.msra.mxu0 %v825
        %882 = vmatprep.subr.bf16.mxu0 0
        %883 = vmatpush1.bf16.msra.mxu0 %v826
        %884 = vmatprep.subr.bf16.mxu0 0
        %885 = vmatpush1.bf16.msra.mxu0 %v827
        %886 = vmatprep.subr.bf16.mxu0 0
        %887 = vmatpush1.bf16.msra.mxu0 %v828
        %888 = vmatprep.subr.bf16.mxu0 0
        %889 = vmatpush1.bf16.msra.mxu0 %v829
        %890 = vmatprep.subr.bf16.mxu0 0
        %891 = vmatpush1.bf16.msra.mxu0 %v830
        %892 = vmatprep.subr.bf16.mxu0 0
        %893 = vmatpush1.bf16.msra.mxu0 %v831
        %894 = vmatprep.subr.bf16.mxu0 0
        %895 = vmatpush1.bf16.msra.mxu0 %v832
        %896 = vmatprep.subr.bf16.mxu0 0
        %897 = vmatpush1.bf16.msra.mxu0 %v833
        %898 = vmatprep.mubr.bf16.mxu0 %v627
        %899 = vmatmul.mubr.bf16.gmra.mrb[0].mxu0 %v626
        %v900 = vpop.f32.mrb[0].mxu0
        %v901 = vadd.f32 0.0, %v900
        %v902 = vpop.f32.mrb[0].mxu0
        %v903 = vpop.f32.mrb[0].mxu0
        %v904 = vadd.f32 0.0, %v903
        %v905 = vpop.f32.mrb[0].mxu0
        %906 = vmatprep.mubr.bf16.mxu0 %v630
        %907 = vmatmul.mubr.bf16.gmra.mrb[0].mxu0 %v629
        %v908 = vpop.f32.mrb[0].mxu0
        %v909 = vadd.f32 0.0, %v908
        %v910 = vpop.f32.mrb[0].mxu0
        %v911 = vpop.f32.mrb[0].mxu0
        %v912 = vadd.f32 0.0, %v911
        %v913 = vpop.f32.mrb[0].mxu0
        %914 = vmatprep.mubr.bf16.mxu0 %v633
        %915 = vmatmul.mubr.bf16.gmra.mrb[0].mxu0 %v632
        %v916 = vpop.f32.mrb[0].mxu0
        %v917 = vadd.f32 0.0, %v916
        %v918 = vpop.f32.mrb[0].mxu0
        %v919 = vpop.f32.mrb[0].mxu0
        %v920 = vadd.f32 0.0, %v919
        %v921 = vpop.f32.mrb[0].mxu0
        %922 = vmatprep.mubr.bf16.mxu0 %v636
        %923 = vmatmul.mubr.bf16.gmra.mrb[0].mxu0 %v635
        %v924 = vpop.f32.mrb[0].mxu0
        %v925 = vadd.f32 0.0, %v924
        %v926 = vpop.f32.mrb[0].mxu0
        %v927 = vpop.f32.mrb[0].mxu0
        %v928 = vadd.f32 0.0, %v927
        %v929 = vpop.f32.mrb[0].mxu0
        %930 = vmatprep.mubr.bf16.mxu0 %v639
        %931 = vmatmul.mubr.bf16.gmra.mrb[0].mxu0 %v638
        %v932 = vpop.f32.mrb[0].mxu0
        %v933 = vadd.f32 0.0, %v932
        %v934 = vpop.f32.mrb[0].mxu0
        %v935 = vpop.f32.mrb[0].mxu0
        %v936 = vadd.f32 0.0, %v935
        %v937 = vpop.f32.mrb[0].mxu0
        %938 = vmatprep.mubr.bf16.mxu0 %v642
        %939 = vmatmul.mubr.bf16.gmra.mrb[0].mxu0 %v641
        %v940 = vpop.f32.mrb[0].mxu0
        %v941 = vadd.f32 0.0, %v940
        %v942 = vpop.f32.mrb[0].mxu0
        %v943 = vpop.f32.mrb[0].mxu0
        %v944 = vadd.f32 0.0, %v943
        %v945 = vpop.f32.mrb[0].mxu0
        %946 = vmatprep.mubr.bf16.mxu0 %v645
        %947 = vmatmul.mubr.bf16.gmra.mrb[0].mxu0 %v644
        %v948 = vpop.f32.mrb[0].mxu0
        %v949 = vadd.f32 0.0, %v948
        %v950 = vpop.f32.mrb[0].mxu0
        %v951 = vpop.f32.mrb[0].mxu0
        %v952 = vadd.f32 0.0, %v951
        %v953 = vpop.f32.mrb[0].mxu0
        %954 = vmatprep.mubr.bf16.mxu0 %v648
        %955 = vmatmul.mubr.bf16.gmra.mrb[0].mxu0 %v647
        %v956 = vpop.f32.mrb[0].mxu0
        %v957 = vadd.f32 0.0, %v956
        %v958 = vpop.f32.mrb[0].mxu0
        %v959 = vpop.f32.mrb[0].mxu0
        %v960 = vadd.f32 0.0, %v959
        %v961 = vpop.f32.mrb[0].mxu0
        %962 = vmatprep.mubr.bf16.mxu0 %v651
        %963 = vmatmul.mubr.bf16.gmra.mrb[0].mxu0 %v650
        %v964 = vpop.f32.mrb[0].mxu0
        %v965 = vadd.f32 0.0, %v964
        %v966 = vpop.f32.mrb[0].mxu0
        %v967 = vpop.f32.mrb[0].mxu0
        %v968 = vadd.f32 0.0, %v967
        %v969 = vpop.f32.mrb[0].mxu0
        %970 = vmatprep.mubr.bf16.mxu0 %v654
        %971 = vmatmul.mubr.bf16.gmra.mrb[0].mxu0 %v653
        %v972 = vpop.f32.mrb[0].mxu0
        %v973 = vadd.f32 0.0, %v972
        %v974 = vpop.f32.mrb[0].mxu0
        %v975 = vpop.f32.mrb[0].mxu0
        %v976 = vadd.f32 0.0, %v975
        %v977 = vpop.f32.mrb[0].mxu0
        %978 = vmatprep.mubr.bf16.mxu0 %v657
        %979 = vmatmul.mubr.bf16.gmra.mrb[0].mxu0 %v656
        %v980 = vpop.f32.mrb[0].mxu0
        %v981 = vadd.f32 0.0, %v980
        %v982 = vpop.f32.mrb[0].mxu0
        %v983 = vpop.f32.mrb[0].mxu0
        %v984 = vadd.f32 0.0, %v983
        %v985 = vpop.f32.mrb[0].mxu0
        %986 = vmatprep.mubr.bf16.mxu0 %v660
        %987 = vmatmul.mubr.bf16.gmra.mrb[0].mxu0 %v659
        %v988 = vpop.f32.mrb[0].mxu0
        %v989 = vadd.f32 0.0, %v988
        %v990 = vpop.f32.mrb[0].mxu0
        %v991 = vpop.f32.mrb[0].mxu0
        %v992 = vadd.f32 0.0, %v991
        %v993 = vpop.f32.mrb[0].mxu0
        %994 = vmatprep.mubr.bf16.mxu0 %v663
        %995 = vmatmul.mubr.bf16.gmra.mrb[0].mxu0 %v662
        %v996 = vpop.f32.mrb[0].mxu0
        %v997 = vadd.f32 0.0, %v996
        %v998 = vpop.f32.mrb[0].mxu0
        %v999 = vpop.f32.mrb[0].mxu0
        %v1000 = vadd.f32 0.0, %v999
        %v1001 = vpop.f32.mrb[0].mxu0
        %1002 = vmatprep.mubr.bf16.mxu0 %v666
        %1003 = vmatmul.mubr.bf16.gmra.mrb[0].mxu0 %v665
        %v1004 = vpop.f32.mrb[0].mxu0
        %v1005 = vadd.f32 0.0, %v1004
        %v1006 = vpop.f32.mrb[0].mxu0
        %v1007 = vpop.f32.mrb[0].mxu0
        %v1008 = vadd.f32 0.0, %v1007
        %v1009 = vpop.f32.mrb[0].mxu0
        %1010 = vmatprep.mubr.bf16.mxu0 %v669
        %1011 = vmatmul.mubr.bf16.gmra.mrb[0].mxu0 %v668
        %v1012 = vpop.f32.mrb[0].mxu0
        %v1013 = vadd.f32 0.0, %v1012
        %v1014 = vpop.f32.mrb[0].mxu0
        %v1015 = vpop.f32.mrb[0].mxu0
        %v1016 = vadd.f32 0.0, %v1015
        %v1017 = vpop.f32.mrb[0].mxu0
        %1018 = vmatprep.mubr.bf16.mxu0 %v672
        %1019 = vmatmul.mubr.bf16.gmra.mrb[0].mxu0 %v671
        %v1020 = vpop.f32.mrb[0].mxu0
        %v1021 = vadd.f32 0.0, %v1020
        %v1022 = vpop.f32.mrb[0].mxu0
        %v1023 = vpop.f32.mrb[0].mxu0
        %v1024 = vadd.f32 0.0, %v1023
        %v1025 = vpop.f32.mrb[0].mxu0
        %1026 = vdwg.mxu0
        %1027 = vmatprep.subr.bf16.mxu0 0
        %1028 = vmatpush1.bf16.msra.mxu0 %v834
        %1029 = vmatprep.subr.bf16.mxu0 0
        %1030 = vmatpush1.bf16.msra.mxu0 %v835
        %1031 = vmatprep.subr.bf16.mxu0 0
        %1032 = vmatpush1.bf16.msra.mxu0 %v836
        %1033 = vmatprep.subr.bf16.mxu0 0
        %1034 = vmatpush1.bf16.msra.mxu0 %v837
        %1035 = vmatprep.subr.bf16.mxu0 0
        %1036 = vmatpush1.bf16.msra.mxu0 %v838
        %1037 = vmatprep.subr.bf16.mxu0 0
        %1038 = vmatpush1.bf16.msra.mxu0 %v839
        %1039 = vmatprep.subr.bf16.mxu0 0
        %1040 = vmatpush1.bf16.msra.mxu0 %v840
        %1041 = vmatprep.subr.bf16.mxu0 0
        %1042 = vmatpush1.bf16.msra.mxu0 %v841
        %1043 = vmatprep.subr.bf16.mxu0 0
        %1044 = vmatpush1.bf16.msra.mxu0 0
        %1045 = vmatprep.subr.bf16.mxu0 0
        %1046 = vmatpush1.bf16.msra.mxu0 0
        %1047 = vmatprep.subr.bf16.mxu0 0
        %1048 = vmatpush1.bf16.msra.mxu0 0
        %1049 = vmatprep.subr.bf16.mxu0 0
        %1050 = vmatpush1.bf16.msra.mxu0 0
        %1051 = vmatprep.subr.bf16.mxu0 0
        %1052 = vmatpush1.bf16.msra.mxu0 0
        %1053 = vmatprep.subr.bf16.mxu0 0
        %1054 = vmatpush1.bf16.msra.mxu0 0
        %1055 = vmatprep.subr.bf16.mxu0 0
        %1056 = vmatpush1.bf16.msra.mxu0 0
        %1057 = vmatprep.subr.bf16.mxu0 0
        %1058 = vmatpush1.bf16.msra.mxu0 0
        %1059 = vmatprep.mubr.bf16.mxu0 0
        %1060 = vmatmul.mubr.bf16.gmra.mrb[0].mxu0 %v628
        %v1061 = vpop.f32.mrb[0].mxu0
        %v1062 = vadd.f32 %v901, %v1061
        %v1063 = vpop.f32.mrb[0].mxu0
        %v1064 = vpop.f32.mrb[0].mxu0
        %v1065 = vadd.f32 %v904, %v1064
        %v1066 = vpop.f32.mrb[0].mxu0
        %1067 = vmatprep.mubr.bf16.mxu0 0
        %1068 = vmatmul.mubr.bf16.gmra.mrb[0].mxu0 %v631
        %v1069 = vpop.f32.mrb[0].mxu0
        %v1070 = vadd.f32 %v909, %v1069
        %v1071 = vpop.f32.mrb[0].mxu0
        %v1072 = vpop.f32.mrb[0].mxu0
        %v1073 = vadd.f32 %v912, %v1072
        %v1074 = vpop.f32.mrb[0].mxu0
        %1075 = vmatprep.mubr.bf16.mxu0 0
        %1076 = vmatmul.mubr.bf16.gmra.mrb[0].mxu0 %v634
        %v1077 = vpop.f32.mrb[0].mxu0
        %v1078 = vadd.f32 %v917, %v1077
        %v1079 = vpop.f32.mrb[0].mxu0
        %v1080 = vpop.f32.mrb[0].mxu0
        %v1081 = vadd.f32 %v920, %v1080
        %v1082 = vpop.f32.mrb[0].mxu0
        %1083 = vmatprep.mubr.bf16.mxu0 0
        %1084 = vmatmul.mubr.bf16.gmra.mrb[0].mxu0 %v637
        %v1085 = vpop.f32.mrb[0].mxu0
        %v1086 = vadd.f32 %v925, %v1085
        %v1087 = vpop.f32.mrb[0].mxu0
        %v1088 = vpop.f32.mrb[0].mxu0
        %v1089 = vadd.f32 %v928, %v1088
        %v1090 = vpop.f32.mrb[0].mxu0
        %1091 = vmatprep.mubr.bf16.mxu0 0
        %1092 = vmatmul.mubr.bf16.gmra.mrb[0].mxu0 %v640
        %v1093 = vpop.f32.mrb[0].mxu0
        %v1094 = vadd.f32 %v933, %v1093
        %v1095 = vpop.f32.mrb[0].mxu0
        %v1096 = vpop.f32.mrb[0].mxu0
        %v1097 = vadd.f32 %v936, %v1096
        %v1098 = vpop.f32.mrb[0].mxu0
        %1099 = vmatprep.mubr.bf16.mxu0 0
        %1100 = vmatmul.mubr.bf16.gmra.mrb[0].mxu0 %v643
        %v1101 = vpop.f32.mrb[0].mxu0
        %v1102 = vadd.f32 %v941, %v1101
        %v1103 = vpop.f32.mrb[0].mxu0
        %v1104 = vpop.f32.mrb[0].mxu0
        %v1105 = vadd.f32 %v944, %v1104
        %v1106 = vpop.f32.mrb[0].mxu0
        %1107 = vmatprep.mubr.bf16.mxu0 0
        %1108 = vmatmul.mubr.bf16.gmra.mrb[0].mxu0 %v646
        %v1109 = vpop.f32.mrb[0].mxu0
        %v1110 = vadd.f32 %v949, %v1109
        %v1111 = vpop.f32.mrb[0].mxu0
        %v1112 = vpop.f32.mrb[0].mxu0
        %v1113 = vadd.f32 %v952, %v1112
        %v1114 = vpop.f32.mrb[0].mxu0
        %1115 = vmatprep.mubr.bf16.mxu0 0
        %1116 = vmatmul.mubr.bf16.gmra.mrb[0].mxu0 %v649
        %v1117 = vpop.f32.mrb[0].mxu0
        %v1118 = vadd.f32 %v957, %v1117
        %v1119 = vpop.f32.mrb[0].mxu0
        %v1120 = vpop.f32.mrb[0].mxu0
        %v1121 = vadd.f32 %v960, %v1120
        %v1122 = vpop.f32.mrb[0].mxu0
        %1123 = vmatprep.mubr.bf16.mxu0 0
        %1124 = vmatmul.mubr.bf16.gmra.mrb[0].mxu0 %v652
        %v1125 = vpop.f32.mrb[0].mxu0
        %v1126 = vadd.f32 %v965, %v1125
        %v1127 = vpop.f32.mrb[0].mxu0
        %v1128 = vpop.f32.mrb[0].mxu0
        %v1129 = vadd.f32 %v968, %v1128
        %v1130 = vpop.f32.mrb[0].mxu0
        %1131 = vmatprep.mubr.bf16.mxu0 0
        %1132 = vmatmul.mubr.bf16.gmra.mrb[0].mxu0 %v655
        %v1133 = vpop.f32.mrb[0].mxu0
        %v1134 = vadd.f32 %v973, %v1133
        %v1135 = vpop.f32.mrb[0].mxu0
        %v1136 = vpop.f32.mrb[0].mxu0
        %v1137 = vadd.f32 %v976, %v1136
        %v1138 = vpop.f32.mrb[0].mxu0
        %1139 = vmatprep.mubr.bf16.mxu0 0
        %1140 = vmatmul.mubr.bf16.gmra.mrb[0].mxu0 %v658
        %v1141 = vpop.f32.mrb[0].mxu0
        %v1142 = vadd.f32 %v981, %v1141
        %v1143 = vpop.f32.mrb[0].mxu0
        %v1144 = vpop.f32.mrb[0].mxu0
        %v1145 = vadd.f32 %v984, %v1144
        %v1146 = vpop.f32.mrb[0].mxu0
        %1147 = vmatprep.mubr.bf16.mxu0 0
        %1148 = vmatmul.mubr.bf16.gmra.mrb[0].mxu0 %v661
        %v1149 = vpop.f32.mrb[0].mxu0
        %v1150 = vadd.f32 %v989, %v1149
        %v1151 = vpop.f32.mrb[0].mxu0
        %v1152 = vpop.f32.mrb[0].mxu0
        %v1153 = vadd.f32 %v992, %v1152
        %v1154 = vpop.f32.mrb[0].mxu0
        %1155 = vmatprep.mubr.bf16.mxu0 0
        %1156 = vmatmul.mubr.bf16.gmra.mrb[0].mxu0 %v664
        %v1157 = vpop.f32.mrb[0].mxu0
        %v1158 = vadd.f32 %v997, %v1157
        %v1159 = vpop.f32.mrb[0].mxu0
        %v1160 = vpop.f32.mrb[0].mxu0
        %v1161 = vadd.f32 %v1000, %v1160
        %v1162 = vpop.f32.mrb[0].mxu0
        %1163 = vmatprep.mubr.bf16.mxu0 0
        %1164 = vmatmul.mubr.bf16.gmra.mrb[0].mxu0 %v667
        %v1165 = vpop.f32.mrb[0].mxu0
        %v1166 = vadd.f32 %v1005, %v1165
        %v1167 = vpop.f32.mrb[0].mxu0
        %v1168 = vpop.f32.mrb[0].mxu0
        %v1169 = vadd.f32 %v1008, %v1168
        %v1170 = vpop.f32.mrb[0].mxu0
        %1171 = vmatprep.mubr.bf16.mxu0 0
        %1172 = vmatmul.mubr.bf16.gmra.mrb[0].mxu0 %v670
        %v1173 = vpop.f32.mrb[0].mxu0
        %v1174 = vadd.f32 %v1013, %v1173
        %v1175 = vpop.f32.mrb[0].mxu0
        %v1176 = vpop.f32.mrb[0].mxu0
        %v1177 = vadd.f32 %v1016, %v1176
        %v1178 = vpop.f32.mrb[0].mxu0
        %1179 = vmatprep.mubr.bf16.mxu0 0
        %1180 = vmatmul.mubr.bf16.gmra.mrb[0].mxu0 %v673
        %v1181 = vpop.f32.mrb[0].mxu0
        %v1182 = vadd.f32 %v1021, %v1181
        %v1183 = vpop.f32.mrb[0].mxu0
        %v1184 = vpop.f32.mrb[0].mxu0
        %v1185 = vadd.f32 %v1024, %v1184
        %v1186 = vpop.f32.mrb[0].mxu0
        %1187 = vdwg.mxu0
        %v1188 = vadd.f32 %v322, %v1062
        %v1189 = vadd.f32 %v323, %v1065
        %v1190 = vadd.f32 %v324, %v1070
        %v1191 = vadd.f32 %v325, %v1073
        %v1192 = vadd.f32 %v326, %v1078
        %v1193 = vadd.f32 %v327, %v1081
        %v1194 = vadd.f32 %v328, %v1086
        %v1195 = vadd.f32 %v329, %v1089
        %v1196 = vadd.f32 %v330, %v1094
        %v1197 = vadd.f32 %v331, %v1097
        %v1198 = vadd.f32 %v332, %v1102
        %v1199 = vadd.f32 %v333, %v1105
        %v1200 = vadd.f32 %v334, %v1110
        %v1201 = vadd.f32 %v335, %v1113
        %v1202 = vadd.f32 %v336, %v1118
        %v1203 = vadd.f32 %v337, %v1121
        %v1204 = vadd.f32 %v338, %v1126
        %v1205 = vadd.f32 %v339, %v1129
        %v1206 = vadd.f32 %v340, %v1134
        %v1207 = vadd.f32 %v341, %v1137
        %v1208 = vadd.f32 %v342, %v1142
        %v1209 = vadd.f32 %v343, %v1145
        %v1210 = vadd.f32 %v344, %v1150
        %v1211 = vadd.f32 %v345, %v1153
        %v1212 = vadd.f32 %v346, %v1158
        %v1213 = vadd.f32 %v347, %v1161
        %v1214 = vadd.f32 %v348, %v1166
        %v1215 = vadd.f32 %v349, %v1169
        %v1216 = vadd.f32 %v350, %v1174
        %v1217 = vadd.f32 %v351, %v1177
        %v1218 = vadd.f32 %v352, %v1182
        %v1219 = vadd.f32 %v353, %v1185
        %vm1220 = vcmask 523264
        %1221 = vst.msk [vmem:[#allocation2] sm:$0xff] %vm1220, %v1188
        %1222 = vst.msk [vmem:[#allocation2 + $0x8] sm:$0xff] %vm1220, %v1189
        %1223 = vst.msk [vmem:[#allocation2 + $0x10] sm:$0xff] %vm1220, %v1190
        %1224 = vst.msk [vmem:[#allocation2 + $0x18] sm:$0xff] %vm1220, %v1191
        %1225 = vst.msk [vmem:[#allocation2 + $0x20] sm:$0xff] %vm1220, %v1192
        %1226 = vst.msk [vmem:[#allocation2 + $0x28] sm:$0xff] %vm1220, %v1193
        %1227 = vst.msk [vmem:[#allocation2 + $0x30] sm:$0xff] %vm1220, %v1194
        %1228 = vst.msk [vmem:[#allocation2 + $0x38] sm:$0xff] %vm1220, %v1195
        %1229 = vst.msk [vmem:[#allocation2 + $0x40] sm:$0xff] %vm1220, %v1196
        %1230 = vst.msk [vmem:[#allocation2 + $0x48] sm:$0xff] %vm1220, %v1197
        %1231 = vst.msk [vmem:[#allocation2 + $0x50] sm:$0xff] %vm1220, %v1198
        %1232 = vst.msk [vmem:[#allocation2 + $0x58] sm:$0xff] %vm1220, %v1199
        %1233 = vst.msk [vmem:[#allocation2 + $0x60] sm:$0xff] %vm1220, %v1200
        %1234 = vst.msk [vmem:[#allocation2 + $0x68] sm:$0xff] %vm1220, %v1201
        %1235 = vst.msk [vmem:[#allocation2 + $0x70] sm:$0xff] %vm1220, %v1202
        %1236 = vst.msk [vmem:[#allocation2 + $0x78] sm:$0xff] %vm1220, %v1203
        %1237 = vst.msk [vmem:[#allocation2 + $0x80] sm:$0xff] %vm1220, %v1204
        %1238 = vst.msk [vmem:[#allocation2 + $0x88] sm:$0xff] %vm1220, %v1205
        %1239 = vst.msk [vmem:[#allocation2 + $0x90] sm:$0xff] %vm1220, %v1206
        %1240 = vst.msk [vmem:[#allocation2 + $0x98] sm:$0xff] %vm1220, %v1207
        %1241 = vst.msk [vmem:[#allocation2 + $0xa0] sm:$0xff] %vm1220, %v1208
        %1242 = vst.msk [vmem:[#allocation2 + $0xa8] sm:$0xff] %vm1220, %v1209
        %1243 = vst.msk [vmem:[#allocation2 + $0xb0] sm:$0xff] %vm1220, %v1210
        %1244 = vst.msk [vmem:[#allocation2 + $0xb8] sm:$0xff] %vm1220, %v1211
        %1245 = vst.msk [vmem:[#allocation2 + $0xc0] sm:$0xff] %vm1220, %v1212
        %1246 = vst.msk [vmem:[#allocation2 + $0xc8] sm:$0xff] %vm1220, %v1213
        %1247 = vst.msk [vmem:[#allocation2 + $0xd0] sm:$0xff] %vm1220, %v1214
        %1248 = vst.msk [vmem:[#allocation2 + $0xd8] sm:$0xff] %vm1220, %v1215
        %1249 = vst.msk [vmem:[#allocation2 + $0xe0] sm:$0xff] %vm1220, %v1216
        %1250 = vst.msk [vmem:[#allocation2 + $0xe8] sm:$0xff] %vm1220, %v1217
        %1251 = vst.msk [vmem:[#allocation2 + $0xf0] sm:$0xff] %vm1220, %v1218
        %1252 = vst.msk [vmem:[#allocation2 + $0xf8] sm:$0xff] %vm1220, %v1219
        // Predicated region
        $region37: #{forward.21} parent=31 // pred_check
          %p1253 = pneg %p285
        $region38: #{forward.21} parent=31 // pred_check_branch
          %1255 = sbr.rel (%p1253) target = $region40
        $region39: #{forward.21} parent=31 // pred_region
          %v1256 = vld [vmem:[#allocation2] sm:$0xff]
          %v1257 = vld [vmem:[#allocation2 + $0x8] sm:$0xff]
          %v1258 = vld [vmem:[#allocation2 + $0x10] sm:$0xff]
          %v1259 = vld [vmem:[#allocation2 + $0x18] sm:$0xff]
          %v1260 = vld [vmem:[#allocation2 + $0x20] sm:$0xff]
          %v1261 = vld [vmem:[#allocation2 + $0x28] sm:$0xff]
          %v1262 = vld [vmem:[#allocation2 + $0x30] sm:$0xff]
          %v1263 = vld [vmem:[#allocation2 + $0x38] sm:$0xff]
          %v1264 = vld [vmem:[#allocation2 + $0x40] sm:$0xff]
          %v1265 = vld [vmem:[#allocation2 + $0x48] sm:$0xff]
          %v1266 = vld [vmem:[#allocation2 + $0x50] sm:$0xff]
          %v1267 = vld [vmem:[#allocation2 + $0x58] sm:$0xff]
          %v1268 = vld [vmem:[#allocation2 + $0x60] sm:$0xff]
          %v1269 = vld [vmem:[#allocation2 + $0x68] sm:$0xff]
          %v1270 = vld [vmem:[#allocation2 + $0x70] sm:$0xff]
          %v1271 = vld [vmem:[#allocation2 + $0x78] sm:$0xff]
          %v1272 = vld [vmem:[#allocation2 + $0x80] sm:$0xff]
          %v1273 = vld [vmem:[#allocation2 + $0x88] sm:$0xff]
          %v1274 = vld [vmem:[#allocation2 + $0x90] sm:$0xff]
          %v1275 = vld [vmem:[#allocation2 + $0x98] sm:$0xff]
          %v1276 = vld [vmem:[#allocation2 + $0xa0] sm:$0xff]
          %v1277 = vld [vmem:[#allocation2 + $0xa8] sm:$0xff]
          %v1278 = vld [vmem:[#allocation2 + $0xb0] sm:$0xff]
          %v1279 = vld [vmem:[#allocation2 + $0xb8] sm:$0xff]
          %v1280 = vld [vmem:[#allocation2 + $0xc0] sm:$0xff]
          %v1281 = vld [vmem:[#allocation2 + $0xc8] sm:$0xff]
          %v1282 = vld [vmem:[#allocation2 + $0xd0] sm:$0xff]
          %v1283 = vld [vmem:[#allocation2 + $0xd8] sm:$0xff]
          %v1284 = vld [vmem:[#allocation2 + $0xe0] sm:$0xff]
          %v1285 = vld [vmem:[#allocation2 + $0xe8] sm:$0xff]
          %v1286 = vld [vmem:[#allocation2 + $0xf0] sm:$0xff]
          %v1287 = vld [vmem:[#allocation2 + $0xf8] sm:$0xff]
          %v1288 = vld [vmem:[%s278] sm:$0x1]
          %v1290 = vlaneseq
          %v1291 = vshrl.u32 %v1290, 7
          %v1292 = vsub.s32 0, %v1291
          %v1293 = vrot.slane %v1288, %v1292
          %v1295 = vadd.f32 %v1256, %v1293
          %v1296 = vadd.f32 %v1257, %v1293
          %v1297 = vadd.f32 %v1258, %v1293
          %v1298 = vadd.f32 %v1259, %v1293
          %v1299 = vadd.f32 %v1260, %v1293
          %v1300 = vadd.f32 %v1261, %v1293
          %v1301 = vadd.f32 %v1262, %v1293
          %v1302 = vadd.f32 %v1263, %v1293
          %v1303 = vadd.f32 %v1264, %v1293
          %v1304 = vadd.f32 %v1265, %v1293
          %v1305 = vadd.f32 %v1266, %v1293
          %v1306 = vadd.f32 %v1267, %v1293
          %v1307 = vadd.f32 %v1268, %v1293
          %v1308 = vadd.f32 %v1269, %v1293
          %v1309 = vadd.f32 %v1270, %v1293
          %v1310 = vadd.f32 %v1271, %v1293
          %v1311 = vadd.f32 %v1272, %v1293
          %v1312 = vadd.f32 %v1273, %v1293
          %v1313 = vadd.f32 %v1274, %v1293
          %v1314 = vadd.f32 %v1275, %v1293
          %v1315 = vadd.f32 %v1276, %v1293
          %v1316 = vadd.f32 %v1277, %v1293
          %v1317 = vadd.f32 %v1278, %v1293
          %v1318 = vadd.f32 %v1279, %v1293
          %v1319 = vadd.f32 %v1280, %v1293
          %v1320 = vadd.f32 %v1281, %v1293
          %v1321 = vadd.f32 %v1282, %v1293
          %v1322 = vadd.f32 %v1283, %v1293
          %v1323 = vadd.f32 %v1284, %v1293
          %v1324 = vadd.f32 %v1285, %v1293
          %v1325 = vadd.f32 %v1286, %v1293
          %v1326 = vadd.f32 %v1287, %v1293
          %v1327 = vmax.f32 %v1295, 0.0
          %v1328 = vmax.f32 %v1296, 0.0
          %v1329 = vmax.f32 %v1297, 0.0
          %v1330 = vmax.f32 %v1298, 0.0
          %v1331 = vmax.f32 %v1299, 0.0
          %v1332 = vmax.f32 %v1300, 0.0
          %v1333 = vmax.f32 %v1301, 0.0
          %v1334 = vmax.f32 %v1302, 0.0
          %v1335 = vmax.f32 %v1303, 0.0
          %v1336 = vmax.f32 %v1304, 0.0
          %v1337 = vmax.f32 %v1305, 0.0
          %v1338 = vmax.f32 %v1306, 0.0
          %v1339 = vmax.f32 %v1307, 0.0
          %v1340 = vmax.f32 %v1308, 0.0
          %v1341 = vmax.f32 %v1309, 0.0
          %v1342 = vmax.f32 %v1310, 0.0
          %v1343 = vmax.f32 %v1311, 0.0
          %v1344 = vmax.f32 %v1312, 0.0
          %v1345 = vmax.f32 %v1313, 0.0
          %v1346 = vmax.f32 %v1314, 0.0
          %v1347 = vmax.f32 %v1315, 0.0
          %v1348 = vmax.f32 %v1316, 0.0
          %v1349 = vmax.f32 %v1317, 0.0
          %v1350 = vmax.f32 %v1318, 0.0
          %v1351 = vmax.f32 %v1319, 0.0
          %v1352 = vmax.f32 %v1320, 0.0
          %v1353 = vmax.f32 %v1321, 0.0
          %v1354 = vmax.f32 %v1322, 0.0
          %v1355 = vmax.f32 %v1323, 0.0
          %v1356 = vmax.f32 %v1324, 0.0
          %v1357 = vmax.f32 %v1325, 0.0
          %v1358 = vmax.f32 %v1326, 0.0
          %v1359 = vpack.c.bf16 %v1328, %v1327
          %v1360 = vpack.c.bf16 %v1330, %v1329
          %v1361 = vpack.c.bf16 %v1332, %v1331
          %v1362 = vpack.c.bf16 %v1334, %v1333
          %v1363 = vpack.c.bf16 %v1336, %v1335
          %v1364 = vpack.c.bf16 %v1338, %v1337
          %v1365 = vpack.c.bf16 %v1340, %v1339
          %v1366 = vpack.c.bf16 %v1342, %v1341
          %v1367 = vpack.c.bf16 %v1344, %v1343
          %v1368 = vpack.c.bf16 %v1346, %v1345
          %v1369 = vpack.c.bf16 %v1348, %v1347
          %v1370 = vpack.c.bf16 %v1350, %v1349
          %v1371 = vpack.c.bf16 %v1352, %v1351
          %v1372 = vpack.c.bf16 %v1354, %v1353
          %v1373 = vpack.c.bf16 %v1356, %v1355
          %v1374 = vpack.c.bf16 %v1358, %v1357
          %v1391 = vunpack.c.l.b16 %v1359
          %v1392 = vunpack.c.h.b16 %v1359
          %v1393 = vunpack.c.l.b16 %v1360
          %v1394 = vunpack.c.h.b16 %v1360
          %v1395 = vunpack.c.l.b16 %v1361
          %v1396 = vunpack.c.h.b16 %v1361
          %v1397 = vunpack.c.l.b16 %v1362
          %v1398 = vunpack.c.h.b16 %v1362
          %v1399 = vunpack.c.l.b16 %v1363
          %v1400 = vunpack.c.h.b16 %v1363
          %v1401 = vunpack.c.l.b16 %v1364
          %v1402 = vunpack.c.h.b16 %v1364
          %v1403 = vunpack.c.l.b16 %v1365
          %v1404 = vunpack.c.h.b16 %v1365
          %v1405 = vunpack.c.l.b16 %v1366
          %v1406 = vunpack.c.h.b16 %v1366
          %v1407 = vunpack.c.l.b16 %v1367
          %v1408 = vunpack.c.h.b16 %v1367
          %v1409 = vunpack.c.l.b16 %v1368
          %v1410 = vunpack.c.h.b16 %v1368
          %v1411 = vunpack.c.l.b16 %v1369
          %v1412 = vunpack.c.h.b16 %v1369
          %v1413 = vunpack.c.l.b16 %v1370
          %v1414 = vunpack.c.h.b16 %v1370
          %v1415 = vunpack.c.l.b16 %v1371
          %v1416 = vunpack.c.h.b16 %v1371
          %v1417 = vunpack.c.l.b16 %v1372
          %v1418 = vunpack.c.h.b16 %v1372
          %v1419 = vunpack.c.l.b16 %v1373
          %v1420 = vunpack.c.h.b16 %v1373
          %v1421 = vunpack.c.l.b16 %v1374
          %v1422 = vunpack.c.h.b16 %v1374
          %v1423 = vpack.c.b16 %v1391, %v1391
          %v1424 = vpack.c.b16 %v1392, %v1392
          %v1425 = vpack.c.b16 %v1393, %v1393
          %v1426 = vpack.c.b16 %v1394, %v1394
          %v1427 = vpack.c.b16 %v1395, %v1395
          %v1428 = vpack.c.b16 %v1396, %v1396
          %v1429 = vpack.c.b16 %v1397, %v1397
          %v1430 = vpack.c.b16 %v1398, %v1398
          %v1431 = vpack.c.b16 %v1399, %v1399
          %v1432 = vpack.c.b16 %v1400, %v1400
          %v1433 = vpack.c.b16 %v1401, %v1401
          %v1434 = vpack.c.b16 %v1402, %v1402
          %v1435 = vpack.c.b16 %v1403, %v1403
          %v1436 = vpack.c.b16 %v1404, %v1404
          %v1437 = vpack.c.b16 %v1405, %v1405
          %v1438 = vpack.c.b16 %v1406, %v1406
          %v1439 = vpack.c.b16 %v1407, %v1407
          %v1440 = vpack.c.b16 %v1408, %v1408
          %v1441 = vpack.c.b16 %v1409, %v1409
          %v1442 = vpack.c.b16 %v1410, %v1410
          %v1443 = vpack.c.b16 %v1411, %v1411
          %v1444 = vpack.c.b16 %v1412, %v1412
          %v1445 = vpack.c.b16 %v1413, %v1413
          %v1446 = vpack.c.b16 %v1414, %v1414
          %v1447 = vpack.c.b16 %v1415, %v1415
          %v1448 = vpack.c.b16 %v1416, %v1416
          %v1449 = vpack.c.b16 %v1417, %v1417
          %v1450 = vpack.c.b16 %v1418, %v1418
          %v1451 = vpack.c.b16 %v1419, %v1419
          %v1452 = vpack.c.b16 %v1420, %v1420
          %v1453 = vpack.c.b16 %v1421, %v1421
          %v1454 = vpack.c.b16 %v1422, %v1422
          %vm1487 = vcmask 519168
          %1488 = vst.msk [vmem:[%s244] sm:$0xf] %vm1487, %v1423
          %1489 = vst.msk [vmem:[%s244 + $0x4] sm:$0xf] %vm1487, %v1424
          %1490 = vst.msk [vmem:[%s244 + $0x8] sm:$0xf] %vm1487, %v1425
          %1491 = vst.msk [vmem:[%s244 + $0xc] sm:$0xf] %vm1487, %v1426
          %1492 = vst.msk [vmem:[%s244 + $0x10] sm:$0xf] %vm1487, %v1427
          %1493 = vst.msk [vmem:[%s244 + $0x14] sm:$0xf] %vm1487, %v1428
          %1494 = vst.msk [vmem:[%s244 + $0x18] sm:$0xf] %vm1487, %v1429
          %1495 = vst.msk [vmem:[%s244 + $0x1c] sm:$0xf] %vm1487, %v1430
          %1496 = vst.msk [vmem:[%s244 + $0x20] sm:$0xf] %vm1487, %v1431
          %1497 = vst.msk [vmem:[%s244 + $0x24] sm:$0xf] %vm1487, %v1432
          %1498 = vst.msk [vmem:[%s244 + $0x28] sm:$0xf] %vm1487, %v1433
          %1499 = vst.msk [vmem:[%s244 + $0x2c] sm:$0xf] %vm1487, %v1434
          %1500 = vst.msk [vmem:[%s244 + $0x30] sm:$0xf] %vm1487, %v1435
          %1501 = vst.msk [vmem:[%s244 + $0x34] sm:$0xf] %vm1487, %v1436
          %1502 = vst.msk [vmem:[%s244 + $0x38] sm:$0xf] %vm1487, %v1437
          %1503 = vst.msk [vmem:[%s244 + $0x3c] sm:$0xf] %vm1487, %v1438
          %1504 = vst.msk [vmem:[%s244 + $0x40] sm:$0xf] %vm1487, %v1439
          %1505 = vst.msk [vmem:[%s244 + $0x44] sm:$0xf] %vm1487, %v1440
          %1506 = vst.msk [vmem:[%s244 + $0x48] sm:$0xf] %vm1487, %v1441
          %1507 = vst.msk [vmem:[%s244 + $0x4c] sm:$0xf] %vm1487, %v1442
          %1508 = vst.msk [vmem:[%s244 + $0x50] sm:$0xf] %vm1487, %v1443
          %1509 = vst.msk [vmem:[%s244 + $0x54] sm:$0xf] %vm1487, %v1444
          %1510 = vst.msk [vmem:[%s244 + $0x58] sm:$0xf] %vm1487, %v1445
          %1511 = vst.msk [vmem:[%s244 + $0x5c] sm:$0xf] %vm1487, %v1446
          %1512 = vst.msk [vmem:[%s244 + $0x60] sm:$0xf] %vm1487, %v1447
          %1513 = vst.msk [vmem:[%s244 + $0x64] sm:$0xf] %vm1487, %v1448
          %1514 = vst.msk [vmem:[%s244 + $0x68] sm:$0xf] %vm1487, %v1449
          %1515 = vst.msk [vmem:[%s244 + $0x6c] sm:$0xf] %vm1487, %v1450
          %1516 = vst.msk [vmem:[%s244 + $0x70] sm:$0xf] %vm1487, %v1451
          %1517 = vst.msk [vmem:[%s244 + $0x74] sm:$0xf] %vm1487, %v1452
          %1518 = vst.msk [vmem:[%s244 + $0x78] sm:$0xf] %vm1487, %v1453
          %1519 = vst.msk [vmem:[%s244 + $0x7c] sm:$0xf] %vm1487, %v1454
        $region40: #{forward.21} parent=31 // pred_fallthru
          _
        %s1520 = sand.u32 %s125, 1
        %s1521 = sand.u32 %s125, 1
        %s1522 = smul.addr %s1521, 128
        %s1523 = scalar_lea.vmem [#allocation3], %s1522
        // Predicated region
        $region41: #{forward.21} parent=31 // pred_check
          %p1524 = pneg %p135
        $region42: #{forward.21} parent=31 // pred_check_branch
          %1526 = sbr.rel (%p1524) target = $region44
        $region43: #{forward.21} parent=31 // pred_region
          %s1527 = smul.u32 32, %s19
          %s1528 = ssub.s32 124, %s1527
          %p1529 = scmp.lt.s32.totalorder %s1528, 32
          %s1530 = scalar_select %p1529, %s1528, 32
          %s1531 = smul.u32 64, %s1530
          %p1532 = scmp.ne.s32.totalorder 0, %s1531
          %s1533 = sadd.s32 %s20, %s1527
          %s1534 = smul.addr %s1533, 4
          %s1535 = scalar_lea.vmem %s3, %s1534
          // Predicated region
          $region45: #{forward.21} parent=43 // pred_check
            %p1536 = pneg %p1532
          $region46: #{forward.21} parent=43 // pred_check_branch
            %1538 = sbr.rel (%p1536) target = $region48
          $region47: #{forward.21} parent=43 // pred_region
            // Predicated region
            $region49: #{forward.21} parent=47 // pred_check
              _
            $region50: #{forward.21} parent=47 // pred_check_branch
              %1540 = sbr.rel target = $region52
            $region51: #{forward.21} parent=47 // pred_region
              // Predicated region
              $region71: #{forward.21} parent=51 // pred_check
                _
              $region72: #{forward.21} parent=51 // pred_check_branch
                %1651 = sbr.rel (0) target = $region74
              $region73: #{forward.21} parent=51 // pred_region
                %s1653 = sshrl.u32 %s1530, 5
                // While loop
                $region75: #{forward.21} parent=73 // loop_pre_header
                  _
                $region76: #{forward.21} parent=73 // loop_header
                  %s1655 = sphi 0, %s1657
                  %p1656 = scmp.ge.s32.totalorder %s1655, %s1653
                  %s1660 = sphi 0, %s1729
                  %s1661 = sphi %s1523, %s1732
                  %s1662 = sphi %s1535, %s1733
                $region77: #{forward.21} parent=73 // loop_header_branch
                  %1659 = sbr.rel (%p1656) target = $region81
                $region78: #{forward.21} parent=73 // loop_body
                  %v1663 = vld [vmem:[%s1661] sm:$0xf]
                  %1664 = vst [vmem:[%s1662] sm:$0xf] %v1663
                  %v1665 = vld [vmem:[%s1661 + $0x4] sm:$0xf]
                  %1666 = vst [vmem:[%s1662 + $0x4] sm:$0xf] %v1665
                  %v1667 = vld [vmem:[%s1661 + $0x8] sm:$0xf]
                  %1668 = vst [vmem:[%s1662 + $0x8] sm:$0xf] %v1667
                  %v1669 = vld [vmem:[%s1661 + $0xc] sm:$0xf]
                  %1670 = vst [vmem:[%s1662 + $0xc] sm:$0xf] %v1669
                  %v1671 = vld [vmem:[%s1661 + $0x10] sm:$0xf]
                  %1672 = vst [vmem:[%s1662 + $0x10] sm:$0xf] %v1671
                  %v1673 = vld [vmem:[%s1661 + $0x14] sm:$0xf]
                  %1674 = vst [vmem:[%s1662 + $0x14] sm:$0xf] %v1673
                  %v1675 = vld [vmem:[%s1661 + $0x18] sm:$0xf]
                  %1676 = vst [vmem:[%s1662 + $0x18] sm:$0xf] %v1675
                  %v1677 = vld [vmem:[%s1661 + $0x1c] sm:$0xf]
                  %1678 = vst [vmem:[%s1662 + $0x1c] sm:$0xf] %v1677
                  %v1679 = vld [vmem:[%s1661 + $0x20] sm:$0xf]
                  %1680 = vst [vmem:[%s1662 + $0x20] sm:$0xf] %v1679
                  %v1681 = vld [vmem:[%s1661 + $0x24] sm:$0xf]
                  %1682 = vst [vmem:[%s1662 + $0x24] sm:$0xf] %v1681
                  %v1683 = vld [vmem:[%s1661 + $0x28] sm:$0xf]
                  %1684 = vst [vmem:[%s1662 + $0x28] sm:$0xf] %v1683
                  %v1685 = vld [vmem:[%s1661 + $0x2c] sm:$0xf]
                  %1686 = vst [vmem:[%s1662 + $0x2c] sm:$0xf] %v1685
                  %v1687 = vld [vmem:[%s1661 + $0x30] sm:$0xf]
                  %1688 = vst [vmem:[%s1662 + $0x30] sm:$0xf] %v1687
                  %v1689 = vld [vmem:[%s1661 + $0x34] sm:$0xf]
                  %1690 = vst [vmem:[%s1662 + $0x34] sm:$0xf] %v1689
                  %v1691 = vld [vmem:[%s1661 + $0x38] sm:$0xf]
                  %1692 = vst [vmem:[%s1662 + $0x38] sm:$0xf] %v1691
                  %v1693 = vld [vmem:[%s1661 + $0x3c] sm:$0xf]
                  %1694 = vst [vmem:[%s1662 + $0x3c] sm:$0xf] %v1693
                  %v1695 = vld [vmem:[%s1661 + $0x40] sm:$0xf]
                  %1696 = vst [vmem:[%s1662 + $0x40] sm:$0xf] %v1695
                  %v1697 = vld [vmem:[%s1661 + $0x44] sm:$0xf]
                  %1698 = vst [vmem:[%s1662 + $0x44] sm:$0xf] %v1697
                  %v1699 = vld [vmem:[%s1661 + $0x48] sm:$0xf]
                  %1700 = vst [vmem:[%s1662 + $0x48] sm:$0xf] %v1699
                  %v1701 = vld [vmem:[%s1661 + $0x4c] sm:$0xf]
                  %1702 = vst [vmem:[%s1662 + $0x4c] sm:$0xf] %v1701
                  %v1703 = vld [vmem:[%s1661 + $0x50] sm:$0xf]
                  %1704 = vst [vmem:[%s1662 + $0x50] sm:$0xf] %v1703
                  %v1705 = vld [vmem:[%s1661 + $0x54] sm:$0xf]
                  %1706 = vst [vmem:[%s1662 + $0x54] sm:$0xf] %v1705
                  %v1707 = vld [vmem:[%s1661 + $0x58] sm:$0xf]
                  %1708 = vst [vmem:[%s1662 + $0x58] sm:$0xf] %v1707
                  %v1709 = vld [vmem:[%s1661 + $0x5c] sm:$0xf]
                  %1710 = vst [vmem:[%s1662 + $0x5c] sm:$0xf] %v1709
                  %v1711 = vld [vmem:[%s1661 + $0x60] sm:$0xf]
                  %1712 = vst [vmem:[%s1662 + $0x60] sm:$0xf] %v1711
                  %v1713 = vld [vmem:[%s1661 + $0x64] sm:$0xf]
                  %1714 = vst [vmem:[%s1662 + $0x64] sm:$0xf] %v1713
                  %v1715 = vld [vmem:[%s1661 + $0x68] sm:$0xf]
                  %1716 = vst [vmem:[%s1662 + $0x68] sm:$0xf] %v1715
                  %v1717 = vld [vmem:[%s1661 + $0x6c] sm:$0xf]
                  %1718 = vst [vmem:[%s1662 + $0x6c] sm:$0xf] %v1717
                  %v1719 = vld [vmem:[%s1661 + $0x70] sm:$0xf]
                  %1720 = vst [vmem:[%s1662 + $0x70] sm:$0xf] %v1719
                  %v1721 = vld [vmem:[%s1661 + $0x74] sm:$0xf]
                  %1722 = vst [vmem:[%s1662 + $0x74] sm:$0xf] %v1721
                  %v1723 = vld [vmem:[%s1661 + $0x78] sm:$0xf]
                  %1724 = vst [vmem:[%s1662 + $0x78] sm:$0xf] %v1723
                  %v1725 = vld [vmem:[%s1661 + $0x7c] sm:$0xf]
                  %1726 = vst [vmem:[%s1662 + $0x7c] sm:$0xf] %v1725
                  %s1727 = sadd.s32 1, %s1660
                  %p1728 = scmp.ge.s32.totalorder %s1727, %s1653
                  %s1729 = scalar_select %p1728, 0, %s1727
                  %s1730 = smul.u32 %s1729, 128
                  %s1731 = smul.u32 %s1729, 128
                  %s1732 = scalar_lea.vmem %s1523, %s1730 [#allocation3]
                  %s1733 = scalar_lea.vmem %s1535, %s1731
                $region79: #{forward.21} parent=73 // loop_footer
                  %s1657 = sadd.s32 %s1655, 1
                $region80: #{forward.21} parent=73 // loop_footer_branch
                  %1654 = sbr.rel target = $region76
                $region81: #{forward.21} parent=73 // loop_exit
                  _
                %s1734 = sshrl.u32 %s1530, 5
                %s1735 = sand.u32 %s1530, 31
                %s1736 = smul.u32 %s1734, 32
                %s1737 = smul.u32 4, %s1736
                %s1738 = scalar_lea.vmem %s1523, %s1737 [#allocation3]
                %s1739 = smul.u32 4, %s1736
                %s1740 = scalar_lea.vmem %s1535, %s1739
                // While loop
                $region82: #{forward.21} parent=73 // loop_pre_header
                  _
                $region83: #{forward.21} parent=73 // loop_header
                  %s1742 = sphi 0, %s1744
                  %p1743 = scmp.ge.s32.totalorder %s1742, %s1735
                  %s1747 = sphi 0, %s1754
                  %s1748 = sphi %s1738, %s1757
                  %s1749 = sphi %s1740, %s1758
                $region84: #{forward.21} parent=73 // loop_header_branch
                  %1746 = sbr.rel (%p1743) target = $region88
                $region85: #{forward.21} parent=73 // loop_body
                  %v1750 = vld [vmem:[%s1748] sm:$0xf]
                  %1751 = vst [vmem:[%s1749] sm:$0xf] %v1750
                  %s1752 = sadd.s32 1, %s1747
                  %p1753 = scmp.ge.s32.totalorder %s1752, %s1735
                  %s1754 = scalar_select %p1753, 0, %s1752
                  %s1755 = smul.u32 %s1754, 4
                  %s1756 = smul.u32 %s1754, 4
                  %s1757 = scalar_lea.vmem %s1738, %s1755 [#allocation3]
                  %s1758 = scalar_lea.vmem %s1740, %s1756
                $region86: #{forward.21} parent=73 // loop_footer
                  %s1744 = sadd.s32 %s1742, 1
                $region87: #{forward.21} parent=73 // loop_footer_branch
                  %1741 = sbr.rel target = $region83
                $region88: #{forward.21} parent=73 // loop_exit
                  _
              $region74: #{forward.21} parent=51 // pred_fallthru
                _
            $region52: #{forward.21} parent=47 // pred_fallthru
              _
            // Predicated region
            $region53: #{forward.21} parent=47 // pred_check
              _
            $region54: #{forward.21} parent=47 // pred_check_branch
              %1542 = sbr.rel (0) target = $region56
            $region55: #{forward.21} parent=47 // pred_region
              %s1544 = sshrl.u32 %s1530, 5
              // While loop
              $region57: #{forward.21} parent=55 // loop_pre_header
                _
              $region58: #{forward.21} parent=55 // loop_header
                %s1546 = sphi 0, %s1548
                %p1547 = scmp.ge.s32.totalorder %s1546, %s1544
                %s1551 = sphi 0, %s1620
                %s1552 = sphi %s1523, %s1623
                %s1553 = sphi %s1535, %s1624
              $region59: #{forward.21} parent=55 // loop_header_branch
                %1550 = sbr.rel (%p1547) target = $region63
              $region60: #{forward.21} parent=55 // loop_body
                %v1554 = vld [vmem:[%s1552] sm:$0xf]
                %1555 = vst [vmem:[%s1553] sm:$0xf] %v1554
                %v1556 = vld [vmem:[%s1552 + $0x4] sm:$0xf]
                %1557 = vst [vmem:[%s1553 + $0x4] sm:$0xf] %v1556
                %v1558 = vld [vmem:[%s1552 + $0x8] sm:$0xf]
                %1559 = vst [vmem:[%s1553 + $0x8] sm:$0xf] %v1558
                %v1560 = vld [vmem:[%s1552 + $0xc] sm:$0xf]
                %1561 = vst [vmem:[%s1553 + $0xc] sm:$0xf] %v1560
                %v1562 = vld [vmem:[%s1552 + $0x10] sm:$0xf]
                %1563 = vst [vmem:[%s1553 + $0x10] sm:$0xf] %v1562
                %v1564 = vld [vmem:[%s1552 + $0x14] sm:$0xf]
                %1565 = vst [vmem:[%s1553 + $0x14] sm:$0xf] %v1564
                %v1566 = vld [vmem:[%s1552 + $0x18] sm:$0xf]
                %1567 = vst [vmem:[%s1553 + $0x18] sm:$0xf] %v1566
                %v1568 = vld [vmem:[%s1552 + $0x1c] sm:$0xf]
                %1569 = vst [vmem:[%s1553 + $0x1c] sm:$0xf] %v1568
                %v1570 = vld [vmem:[%s1552 + $0x20] sm:$0xf]
                %1571 = vst [vmem:[%s1553 + $0x20] sm:$0xf] %v1570
                %v1572 = vld [vmem:[%s1552 + $0x24] sm:$0xf]
                %1573 = vst [vmem:[%s1553 + $0x24] sm:$0xf] %v1572
                %v1574 = vld [vmem:[%s1552 + $0x28] sm:$0xf]
                %1575 = vst [vmem:[%s1553 + $0x28] sm:$0xf] %v1574
                %v1576 = vld [vmem:[%s1552 + $0x2c] sm:$0xf]
                %1577 = vst [vmem:[%s1553 + $0x2c] sm:$0xf] %v1576
                %v1578 = vld [vmem:[%s1552 + $0x30] sm:$0xf]
                %1579 = vst [vmem:[%s1553 + $0x30] sm:$0xf] %v1578
                %v1580 = vld [vmem:[%s1552 + $0x34] sm:$0xf]
                %1581 = vst [vmem:[%s1553 + $0x34] sm:$0xf] %v1580
                %v1582 = vld [vmem:[%s1552 + $0x38] sm:$0xf]
                %1583 = vst [vmem:[%s1553 + $0x38] sm:$0xf] %v1582
                %v1584 = vld [vmem:[%s1552 + $0x3c] sm:$0xf]
                %1585 = vst [vmem:[%s1553 + $0x3c] sm:$0xf] %v1584
                %v1586 = vld [vmem:[%s1552 + $0x40] sm:$0xf]
                %1587 = vst [vmem:[%s1553 + $0x40] sm:$0xf] %v1586
                %v1588 = vld [vmem:[%s1552 + $0x44] sm:$0xf]
                %1589 = vst [vmem:[%s1553 + $0x44] sm:$0xf] %v1588
                %v1590 = vld [vmem:[%s1552 + $0x48] sm:$0xf]
                %1591 = vst [vmem:[%s1553 + $0x48] sm:$0xf] %v1590
                %v1592 = vld [vmem:[%s1552 + $0x4c] sm:$0xf]
                %1593 = vst [vmem:[%s1553 + $0x4c] sm:$0xf] %v1592
                %v1594 = vld [vmem:[%s1552 + $0x50] sm:$0xf]
                %1595 = vst [vmem:[%s1553 + $0x50] sm:$0xf] %v1594
                %v1596 = vld [vmem:[%s1552 + $0x54] sm:$0xf]
                %1597 = vst [vmem:[%s1553 + $0x54] sm:$0xf] %v1596
                %v1598 = vld [vmem:[%s1552 + $0x58] sm:$0xf]
                %1599 = vst [vmem:[%s1553 + $0x58] sm:$0xf] %v1598
                %v1600 = vld [vmem:[%s1552 + $0x5c] sm:$0xf]
                %1601 = vst [vmem:[%s1553 + $0x5c] sm:$0xf] %v1600
                %v1602 = vld [vmem:[%s1552 + $0x60] sm:$0xf]
                %1603 = vst [vmem:[%s1553 + $0x60] sm:$0xf] %v1602
                %v1604 = vld [vmem:[%s1552 + $0x64] sm:$0xf]
                %1605 = vst [vmem:[%s1553 + $0x64] sm:$0xf] %v1604
                %v1606 = vld [vmem:[%s1552 + $0x68] sm:$0xf]
                %1607 = vst [vmem:[%s1553 + $0x68] sm:$0xf] %v1606
                %v1608 = vld [vmem:[%s1552 + $0x6c] sm:$0xf]
                %1609 = vst [vmem:[%s1553 + $0x6c] sm:$0xf] %v1608
                %v1610 = vld [vmem:[%s1552 + $0x70] sm:$0xf]
                %1611 = vst [vmem:[%s1553 + $0x70] sm:$0xf] %v1610
                %v1612 = vld [vmem:[%s1552 + $0x74] sm:$0xf]
                %1613 = vst [vmem:[%s1553 + $0x74] sm:$0xf] %v1612
                %v1614 = vld [vmem:[%s1552 + $0x78] sm:$0xf]
                %1615 = vst [vmem:[%s1553 + $0x78] sm:$0xf] %v1614
                %v1616 = vld [vmem:[%s1552 + $0x7c] sm:$0xf]
                %1617 = vst [vmem:[%s1553 + $0x7c] sm:$0xf] %v1616
                %s1618 = sadd.s32 1, %s1551
                %p1619 = scmp.ge.s32.totalorder %s1618, %s1544
                %s1620 = scalar_select %p1619, 0, %s1618
                %s1621 = smul.u32 %s1620, 128
                %s1622 = smul.u32 %s1620, 128
                %s1623 = scalar_lea.vmem %s1523, %s1621 [#allocation3]
                %s1624 = scalar_lea.vmem %s1535, %s1622
              $region61: #{forward.21} parent=55 // loop_footer
                %s1548 = sadd.s32 %s1546, 1
              $region62: #{forward.21} parent=55 // loop_footer_branch
                %1545 = sbr.rel target = $region58
              $region63: #{forward.21} parent=55 // loop_exit
                _
              %s1625 = sshrl.u32 %s1530, 5
              %s1626 = sand.u32 %s1530, 31
              %s1627 = smul.u32 %s1625, 32
              %s1628 = smul.u32 4, %s1627
              %s1629 = scalar_lea.vmem %s1523, %s1628 [#allocation3]
              %s1630 = smul.u32 4, %s1627
              %s1631 = scalar_lea.vmem %s1535, %s1630
              // While loop
              $region64: #{forward.21} parent=55 // loop_pre_header
                _
              $region65: #{forward.21} parent=55 // loop_header
                %s1633 = sphi 0, %s1635
                %p1634 = scmp.ge.s32.totalorder %s1633, %s1626
                %s1638 = sphi 0, %s1645
                %s1639 = sphi %s1629, %s1648
                %s1640 = sphi %s1631, %s1649
              $region66: #{forward.21} parent=55 // loop_header_branch
                %1637 = sbr.rel (%p1634) target = $region70
              $region67: #{forward.21} parent=55 // loop_body
                %v1641 = vld [vmem:[%s1639] sm:$0xf]
                %1642 = vst [vmem:[%s1640] sm:$0xf] %v1641
                %s1643 = sadd.s32 1, %s1638
                %p1644 = scmp.ge.s32.totalorder %s1643, %s1626
                %s1645 = scalar_select %p1644, 0, %s1643
                %s1646 = smul.u32 %s1645, 4
                %s1647 = smul.u32 %s1645, 4
                %s1648 = scalar_lea.vmem %s1629, %s1646 [#allocation3]
                %s1649 = scalar_lea.vmem %s1631, %s1647
              $region68: #{forward.21} parent=55 // loop_footer
                %s1635 = sadd.s32 %s1633, 1
              $region69: #{forward.21} parent=55 // loop_footer_branch
                %1632 = sbr.rel target = $region65
              $region70: #{forward.21} parent=55 // loop_exit
                _
            $region56: #{forward.21} parent=47 // pred_fallthru
              _
          $region48: #{forward.21} parent=43 // pred_fallthru
            _
          %1759 = vnop
        $region44: #{forward.21} parent=31 // pred_fallthru
          _
      $region32: #{forward.21} parent=5 // pred_fallthru
        _
      %p1760 = scmp.le.s32.totalorder 2, %s9
      // Predicated region
      $region89: #{forward.21} parent=5 // pred_check
        %p1761 = pneg %p1760
      $region90: #{forward.21} parent=5 // pred_check_branch
        %1763 = sbr.rel (%p1761) target = $region92
      $region91: #{forward.21} parent=5 // pred_region
        %s1764 = ssub.s32 %s9, 2
        // Predicated region
        $region93: #{forward.21} parent=91 // pred_check
          %p1765 = pneg %p141
        $region94: #{forward.21} parent=91 // pred_check_branch
          %1767 = sbr.rel (%p1765) target = $region96
        $region95: #{forward.21} parent=91 // pred_region
          %s1768 = sand.u32 %s126, 1
          %s1769 = sand.u32 %s126, 1
          %s1770 = smul.addr %s1769, 128
          %s1771 = scalar_lea.vmem [#allocation3], %s1770
        $region96: #{forward.21} parent=91 // pred_fallthru
          _
      $region92: #{forward.21} parent=5 // pred_fallthru
        _
    $region6: #{forward.21} parent=1 // loop_footer
      %s13 = sadd.s32 1, %s9
    $region7: #{forward.21} parent=1 // loop_footer_branch
      %8 = sbr.rel target = $region3
    $region8: #{forward.21} parent=1 // loop_exit
      _

// kernel: forward.22
$region0: #{forward.22}
  #allocation0 [shape = 'u32[]', space=smem, size = 0x4, offset = 0x4, fixed_abs, tag = 'smem constant byte address 0x4 - core index']
  #allocation1 [shape = 'u32[144,128]{1,0:T(1,128)}', space=vmem, size = 0x12000, scoped, tag = 'internal scratch']
  #allocation2 [shape = 'f32[170,64]{1,0:T(8,128)}', space=vmem, size = 0x16000, scoped, tag = 'scratch operand']
  %s0 = inlined_call_operand.vmem [shape: bf16[170,768], index: 0, kind: input, shape index: {}]
  %s1 = inlined_call_operand.vmem [shape: bf16[768,64], index: 1, kind: input, shape index: {}]
  %s2 = inlined_call_operand.vmem [shape: f32[1,64], index: 2, kind: input, shape index: {}]
  %s3 = inlined_call_operand.vmem [shape: bf16[170,64], index: 3, kind: output, shape index: {}]
  %s4 = sld [smem:[#allocation0]]
  $region30: #{forward.22} parent=0
    _
  %s6 = ssub.s32 1, %s4
  %s7 = scalar_select 0, %s6, %s4
  // Predicated region
  $region2: #{forward.22} parent=0 // pred_check
    _
  $region3: #{forward.22} parent=0 // pred_check_branch
    %9 = sbr.rel (0) target = $region5
  $region4: #{forward.22} parent=0 // pred_region
    _
  $region5: #{forward.22} parent=0 // pred_fallthru
    _
  // Predicated region
  $region6: #{forward.22} parent=0 // pred_check
    _
  $region7: #{forward.22} parent=0 // pred_check_branch
    %11 = sbr.rel (0) target = $region9
  $region8: #{forward.22} parent=0 // pred_region
    _
  $region9: #{forward.22} parent=0 // pred_fallthru
    _
  // Predicated region
  $region10: #{forward.22} parent=0 // pred_check
    _
  $region11: #{forward.22} parent=0 // pred_check_branch
    %13 = sbr.rel (0) target = $region13
  $region12: #{forward.22} parent=0 // pred_region
    _
  $region13: #{forward.22} parent=0 // pred_fallthru
    _
  %p15 = scmp.eq.s32.totalorder 0, 0
  // Predicated region
  $region14: #{forward.22} parent=0 // pred_check
    %p16 = pneg %p15
  $region15: #{forward.22} parent=0 // pred_check_branch
    %18 = sbr.rel (%p16) target = $region17
  $region16: #{forward.22} parent=0 // pred_region
    %vm19 = vcmask 523264
    %20 = vst.msk [vmem:[#allocation2] sm:$0xff] %vm19, 0.0
    %21 = vst.msk [vmem:[#allocation2 + $0x8] sm:$0xff] %vm19, 0.0
    %22 = vst.msk [vmem:[#allocation2 + $0x10] sm:$0xff] %vm19, 0.0
    %23 = vst.msk [vmem:[#allocation2 + $0x18] sm:$0xff] %vm19, 0.0
    %24 = vst.msk [vmem:[#allocation2 + $0x20] sm:$0xff] %vm19, 0.0
    %25 = vst.msk [vmem:[#allocation2 + $0x28] sm:$0xff] %vm19, 0.0
    %26 = vst.msk [vmem:[#allocation2 + $0x30] sm:$0xff] %vm19, 0.0
    %27 = vst.msk [vmem:[#allocation2 + $0x38] sm:$0xff] %vm19, 0.0
    %28 = vst.msk [vmem:[#allocation2 + $0x40] sm:$0xff] %vm19, 0.0
    %29 = vst.msk [vmem:[#allocation2 + $0x48] sm:$0xff] %vm19, 0.0
    %30 = vst.msk [vmem:[#allocation2 + $0x50] sm:$0xff] %vm19, 0.0
    %31 = vst.msk [vmem:[#allocation2 + $0x58] sm:$0xff] %vm19, 0.0
    %32 = vst.msk [vmem:[#allocation2 + $0x60] sm:$0xff] %vm19, 0.0
    %33 = vst.msk [vmem:[#allocation2 + $0x68] sm:$0xff] %vm19, 0.0
    %34 = vst.msk [vmem:[#allocation2 + $0x70] sm:$0xff] %vm19, 0.0
    %35 = vst.msk [vmem:[#allocation2 + $0x78] sm:$0xff] %vm19, 0.0
    %36 = vst.msk [vmem:[#allocation2 + $0x80] sm:$0xff] %vm19, 0.0
    %37 = vst.msk [vmem:[#allocation2 + $0x88] sm:$0xff] %vm19, 0.0
    %38 = vst.msk [vmem:[#allocation2 + $0x90] sm:$0xff] %vm19, 0.0
    %39 = vst.msk [vmem:[#allocation2 + $0x98] sm:$0xff] %vm19, 0.0
    %40 = vst.msk [vmem:[#allocation2 + $0xa0] sm:$0xff] %vm19, 0.0
    %vm41 = vcmask 517120
    %42 = vst.msk [vmem:[#allocation2 + $0xa8] sm:$0x3] %vm41, 0.0
  $region17: #{forward.22} parent=0 // pred_fallthru
    _
  %v43 = vld [vmem:[#allocation2] sm:$0xff]
  %v44 = vld [vmem:[#allocation2 + $0x8] sm:$0xff]
  %v45 = vld [vmem:[#allocation2 + $0x10] sm:$0xff]
  %v46 = vld [vmem:[#allocation2 + $0x18] sm:$0xff]
  %v47 = vld [vmem:[#allocation2 + $0x20] sm:$0xff]
  %v48 = vld [vmem:[#allocation2 + $0x28] sm:$0xff]
  %v49 = vld [vmem:[#allocation2 + $0x30] sm:$0xff]
  %v50 = vld [vmem:[#allocation2 + $0x38] sm:$0xff]
  %v51 = vld [vmem:[#allocation2 + $0x40] sm:$0xff]
  %v52 = vld [vmem:[#allocation2 + $0x48] sm:$0xff]
  %v53 = vld [vmem:[#allocation2 + $0x50] sm:$0xff]
  %v54 = vld [vmem:[#allocation2 + $0x58] sm:$0xff]
  %v55 = vld [vmem:[#allocation2 + $0x60] sm:$0xff]
  %v56 = vld [vmem:[#allocation2 + $0x68] sm:$0xff]
  %v57 = vld [vmem:[#allocation2 + $0x70] sm:$0xff]
  %v58 = vld [vmem:[#allocation2 + $0x78] sm:$0xff]
  %v59 = vld [vmem:[#allocation2 + $0x80] sm:$0xff]
  %v60 = vld [vmem:[#allocation2 + $0x88] sm:$0xff]
  %v61 = vld [vmem:[#allocation2 + $0x90] sm:$0xff]
  %v62 = vld [vmem:[#allocation2 + $0x98] sm:$0xff]
  %v63 = vld [vmem:[#allocation2 + $0xa0] sm:$0xff]
  %v64 = vld [vmem:[#allocation2 + $0xa8] sm:$0x3]
  %v65 = vld [vmem:[%s0] sm:$0xff]
  %v66 = vld [vmem:[%s0 + $0x8] sm:$0xff]
  %v67 = vld [vmem:[%s0 + $0x10] sm:$0xff]
  %v68 = vld [vmem:[%s0 + $0x18] sm:$0xff]
  %v69 = vld [vmem:[%s0 + $0x20] sm:$0xff]
  %v70 = vld [vmem:[%s0 + $0x28] sm:$0xff]
  %v71 = vld [vmem:[%s0 + $0x30] sm:$0xff]
  %v72 = vld [vmem:[%s0 + $0x38] sm:$0xff]
  %v73 = vld [vmem:[%s0 + $0x40] sm:$0xff]
  %v74 = vld [vmem:[%s0 + $0x48] sm:$0xff]
  %v75 = vld [vmem:[%s0 + $0x50] sm:$0xff]
  %v76 = vld [vmem:[%s0 + $0x58] sm:$0xff]
  %v77 = vld [vmem:[%s0 + $0x60] sm:$0xff]
  %v78 = vld [vmem:[%s0 + $0x68] sm:$0xff]
  %v79 = vld [vmem:[%s0 + $0x70] sm:$0xff]
  %v80 = vld [vmem:[%s0 + $0x78] sm:$0xff]
  %v81 = vld [vmem:[%s0 + $0x80] sm:$0xff]
  %v82 = vld [vmem:[%s0 + $0x88] sm:$0xff]
  %v83 = vld [vmem:[%s0 + $0x90] sm:$0xff]
  %v84 = vld [vmem:[%s0 + $0x98] sm:$0xff]
  %v85 = vld [vmem:[%s0 + $0xa0] sm:$0xff]
  %v86 = vld [vmem:[%s0 + $0xa8] sm:$0xff]
  %v87 = vld [vmem:[%s0 + $0xb0] sm:$0xff]
  %v88 = vld [vmem:[%s0 + $0xb8] sm:$0xff]
  %v89 = vld [vmem:[%s0 + $0xc0] sm:$0xff]
  %v90 = vld [vmem:[%s0 + $0xc8] sm:$0xff]
  %v91 = vld [vmem:[%s0 + $0xd0] sm:$0xff]
  %v92 = vld [vmem:[%s0 + $0xd8] sm:$0xff]
  %v93 = vld [vmem:[%s0 + $0xe0] sm:$0xff]
  %v94 = vld [vmem:[%s0 + $0xe8] sm:$0xff]
  %v95 = vld [vmem:[%s0 + $0xf0] sm:$0xff]
  %v96 = vld [vmem:[%s0 + $0xf8] sm:$0xff]
  %v97 = vld [vmem:[%s0 + $0x100] sm:$0xff]
  %v98 = vld [vmem:[%s0 + $0x108] sm:$0xff]
  %v99 = vld [vmem:[%s0 + $0x110] sm:$0xff]
  %v100 = vld [vmem:[%s0 + $0x118] sm:$0xff]
  %v101 = vld [vmem:[%s0 + $0x120] sm:$0xff]
  %v102 = vld [vmem:[%s0 + $0x128] sm:$0xff]
  %v103 = vld [vmem:[%s0 + $0x130] sm:$0xff]
  %v104 = vld [vmem:[%s0 + $0x138] sm:$0xff]
  %v105 = vld [vmem:[%s0 + $0x140] sm:$0xff]
  %v106 = vld [vmem:[%s0 + $0x148] sm:$0xff]
  %v107 = vld [vmem:[%s0 + $0x150] sm:$0xff]
  %v108 = vld [vmem:[%s0 + $0x158] sm:$0xff]
  %v109 = vld [vmem:[%s0 + $0x160] sm:$0xff]
  %v110 = vld [vmem:[%s0 + $0x168] sm:$0xff]
  %v111 = vld [vmem:[%s0 + $0x170] sm:$0xff]
  %v112 = vld [vmem:[%s0 + $0x178] sm:$0xff]
  %v113 = vld [vmem:[%s0 + $0x180] sm:$0xff]
  %v114 = vld [vmem:[%s0 + $0x188] sm:$0xff]
  %v115 = vld [vmem:[%s0 + $0x190] sm:$0xff]
  %v116 = vld [vmem:[%s0 + $0x198] sm:$0xff]
  %v117 = vld [vmem:[%s0 + $0x1a0] sm:$0xff]
  %v118 = vld [vmem:[%s0 + $0x1a8] sm:$0xff]
  %v119 = vld [vmem:[%s0 + $0x1b0] sm:$0xff]
  %v120 = vld [vmem:[%s0 + $0x1b8] sm:$0xff]
  %v121 = vld [vmem:[%s0 + $0x1c0] sm:$0xff]
  %v122 = vld [vmem:[%s0 + $0x1c8] sm:$0xff]
  %v123 = vld [vmem:[%s0 + $0x1d0] sm:$0xff]
  %v124 = vld [vmem:[%s0 + $0x1d8] sm:$0xff]
  %v125 = vld [vmem:[%s0 + $0x1e0] sm:$0xff]
  %v126 = vld [vmem:[%s0 + $0x1e8] sm:$0xff]
  %v127 = vld [vmem:[%s0 + $0x1f0] sm:$0xff]
  %v128 = vld [vmem:[%s0 + $0x1f8] sm:$0x11]
  %v129 = vld [vmem:[%s0 + $0x200] sm:$0x11]
  %v130 = vld [vmem:[%s0 + $0x208] sm:$0x11]
  %v131 = vld [vmem:[%s1] sm:$0xf]
  %v132 = vld [vmem:[%s1 + $0x4] sm:$0xf]
  %v133 = vld [vmem:[%s1 + $0x8] sm:$0xf]
  %v134 = vld [vmem:[%s1 + $0xc] sm:$0xf]
  %v135 = vld [vmem:[%s1 + $0x10] sm:$0xf]
  %v136 = vld [vmem:[%s1 + $0x14] sm:$0xf]
  %v137 = vld [vmem:[%s1 + $0x18] sm:$0xf]
  %v138 = vld [vmem:[%s1 + $0x1c] sm:$0xf]
  %v139 = vld [vmem:[%s1 + $0x20] sm:$0xf]
  %v140 = vld [vmem:[%s1 + $0x24] sm:$0xf]
  %v141 = vld [vmem:[%s1 + $0x28] sm:$0xf]
  %v142 = vld [vmem:[%s1 + $0x2c] sm:$0xf]
  %v143 = vld [vmem:[%s1 + $0x30] sm:$0xf]
  %v144 = vld [vmem:[%s1 + $0x34] sm:$0xf]
  %v145 = vld [vmem:[%s1 + $0x38] sm:$0xf]
  %v146 = vld [vmem:[%s1 + $0x3c] sm:$0xf]
  %v147 = vld [vmem:[%s1 + $0x40] sm:$0xf]
  %v148 = vld [vmem:[%s1 + $0x44] sm:$0xf]
  %v149 = vld [vmem:[%s1 + $0x48] sm:$0xf]
  %v150 = vld [vmem:[%s1 + $0x4c] sm:$0xf]
  %v151 = vld [vmem:[%s1 + $0x50] sm:$0xf]
  %v152 = vld [vmem:[%s1 + $0x54] sm:$0xf]
  %v153 = vld [vmem:[%s1 + $0x58] sm:$0xf]
  %v154 = vld [vmem:[%s1 + $0x5c] sm:$0xf]
  %v155 = vld [vmem:[%s1 + $0x60] sm:$0xf]
  %v156 = vld [vmem:[%s1 + $0x64] sm:$0xf]
  %v157 = vld [vmem:[%s1 + $0x68] sm:$0xf]
  %v158 = vld [vmem:[%s1 + $0x6c] sm:$0xf]
  %v159 = vld [vmem:[%s1 + $0x70] sm:$0xf]
  %v160 = vld [vmem:[%s1 + $0x74] sm:$0xf]
  %v161 = vld [vmem:[%s1 + $0x78] sm:$0xf]
  %v162 = vld [vmem:[%s1 + $0x7c] sm:$0xf]
  %v163 = vld [vmem:[%s1 + $0x80] sm:$0xf]
  %v164 = vld [vmem:[%s1 + $0x84] sm:$0xf]
  %v165 = vld [vmem:[%s1 + $0x88] sm:$0xf]
  %v166 = vld [vmem:[%s1 + $0x8c] sm:$0xf]
  %v167 = vld [vmem:[%s1 + $0x90] sm:$0xf]
  %v168 = vld [vmem:[%s1 + $0x94] sm:$0xf]
  %v169 = vld [vmem:[%s1 + $0x98] sm:$0xf]
  %v170 = vld [vmem:[%s1 + $0x9c] sm:$0xf]
  %v171 = vld [vmem:[%s1 + $0xa0] sm:$0xf]
  %v172 = vld [vmem:[%s1 + $0xa4] sm:$0xf]
  %v173 = vld [vmem:[%s1 + $0xa8] sm:$0xf]
  %v174 = vld [vmem:[%s1 + $0xac] sm:$0xf]
  %v175 = vld [vmem:[%s1 + $0xb0] sm:$0xf]
  %v176 = vld [vmem:[%s1 + $0xb4] sm:$0xf]
  %v177 = vld [vmem:[%s1 + $0xb8] sm:$0xf]
  %v178 = vld [vmem:[%s1 + $0xbc] sm:$0xf]
  %v179 = vld [vmem:[%s1 + $0xc0] sm:$0xf]
  %v180 = vld [vmem:[%s1 + $0xc4] sm:$0xf]
  %v181 = vld [vmem:[%s1 + $0xc8] sm:$0xf]
  %v182 = vld [vmem:[%s1 + $0xcc] sm:$0xf]
  %v183 = vld [vmem:[%s1 + $0xd0] sm:$0xf]
  %v184 = vld [vmem:[%s1 + $0xd4] sm:$0xf]
  %v185 = vld [vmem:[%s1 + $0xd8] sm:$0xf]
  %v186 = vld [vmem:[%s1 + $0xdc] sm:$0xf]
  %v187 = vld [vmem:[%s1 + $0xe0] sm:$0xf]
  %v188 = vld [vmem:[%s1 + $0xe4] sm:$0xf]
  %v189 = vld [vmem:[%s1 + $0xe8] sm:$0xf]
  %v190 = vld [vmem:[%s1 + $0xec] sm:$0xf]
  %v191 = vld [vmem:[%s1 + $0xf0] sm:$0xf]
  %v192 = vld [vmem:[%s1 + $0xf4] sm:$0xf]
  %v193 = vld [vmem:[%s1 + $0xf8] sm:$0xf]
  %v194 = vld [vmem:[%s1 + $0xfc] sm:$0xf]
  %v195 = vld [vmem:[%s1 + $0x100] sm:$0xf]
  %v196 = vld [vmem:[%s1 + $0x104] sm:$0xf]
  %v197 = vld [vmem:[%s1 + $0x108] sm:$0xf]
  %v198 = vld [vmem:[%s1 + $0x10c] sm:$0xf]
  %v199 = vld [vmem:[%s1 + $0x110] sm:$0xf]
  %v200 = vld [vmem:[%s1 + $0x114] sm:$0xf]
  %v201 = vld [vmem:[%s1 + $0x118] sm:$0xf]
  %v202 = vld [vmem:[%s1 + $0x11c] sm:$0xf]
  %v203 = vld [vmem:[%s1 + $0x120] sm:$0xf]
  %v204 = vld [vmem:[%s1 + $0x124] sm:$0xf]
  %v205 = vld [vmem:[%s1 + $0x128] sm:$0xf]
  %v206 = vld [vmem:[%s1 + $0x12c] sm:$0xf]
  %v207 = vld [vmem:[%s1 + $0x130] sm:$0xf]
  %v208 = vld [vmem:[%s1 + $0x134] sm:$0xf]
  %v209 = vld [vmem:[%s1 + $0x138] sm:$0xf]
  %v210 = vld [vmem:[%s1 + $0x13c] sm:$0xf]
  %v211 = vld [vmem:[%s1 + $0x140] sm:$0xf]
  %v212 = vld [vmem:[%s1 + $0x144] sm:$0xf]
  %v213 = vld [vmem:[%s1 + $0x148] sm:$0xf]
  %v214 = vld [vmem:[%s1 + $0x14c] sm:$0xf]
  %v215 = vld [vmem:[%s1 + $0x150] sm:$0xf]
  %v216 = vld [vmem:[%s1 + $0x154] sm:$0xf]
  %v217 = vld [vmem:[%s1 + $0x158] sm:$0xf]
  %v218 = vld [vmem:[%s1 + $0x15c] sm:$0xf]
  %v219 = vld [vmem:[%s1 + $0x160] sm:$0xf]
  %v220 = vld [vmem:[%s1 + $0x164] sm:$0xf]
  %v221 = vld [vmem:[%s1 + $0x168] sm:$0xf]
  %v222 = vld [vmem:[%s1 + $0x16c] sm:$0xf]
  %v223 = vld [vmem:[%s1 + $0x170] sm:$0xf]
  %v224 = vld [vmem:[%s1 + $0x174] sm:$0xf]
  %v225 = vld [vmem:[%s1 + $0x178] sm:$0xf]
  %v226 = vld [vmem:[%s1 + $0x17c] sm:$0xf]
  %v293 = vunpack.c.l.b16 %v65
  %v294 = vunpack.c.h.b16 %v65
  %v295 = vunpack.c.l.b16 %v66
  %v296 = vunpack.c.h.b16 %v66
  %v297 = vunpack.c.l.b16 %v67
  %v298 = vunpack.c.h.b16 %v67
  %v299 = vunpack.c.l.b16 %v68
  %v300 = vunpack.c.h.b16 %v68
  %v301 = vunpack.c.l.b16 %v69
  %v302 = vunpack.c.h.b16 %v69
  %v303 = vunpack.c.l.b16 %v70
  %v304 = vunpack.c.h.b16 %v70
  %v305 = vunpack.c.l.b16 %v71
  %v306 = vunpack.c.h.b16 %v71
  %v307 = vunpack.c.l.b16 %v72
  %v308 = vunpack.c.h.b16 %v72
  %v309 = vunpack.c.l.b16 %v73
  %v310 = vunpack.c.h.b16 %v73
  %v311 = vunpack.c.l.b16 %v74
  %v312 = vunpack.c.h.b16 %v74
  %v313 = vunpack.c.l.b16 %v75
  %v314 = vunpack.c.h.b16 %v75
  %v315 = vunpack.c.l.b16 %v76
  %v316 = vunpack.c.h.b16 %v76
  %v317 = vunpack.c.l.b16 %v77
  %v318 = vunpack.c.h.b16 %v77
  %v319 = vunpack.c.l.b16 %v78
  %v320 = vunpack.c.h.b16 %v78
  %v321 = vunpack.c.l.b16 %v79
  %v322 = vunpack.c.h.b16 %v79
  %v323 = vunpack.c.l.b16 %v80
  %v324 = vunpack.c.h.b16 %v80
  %v325 = vunpack.c.l.b16 %v81
  %v326 = vunpack.c.h.b16 %v81
  %v327 = vunpack.c.l.b16 %v82
  %v328 = vunpack.c.h.b16 %v82
  %v329 = vunpack.c.l.b16 %v83
  %v330 = vunpack.c.h.b16 %v83
  %v331 = vunpack.c.l.b16 %v84
  %v332 = vunpack.c.h.b16 %v84
  %v333 = vunpack.c.l.b16 %v85
  %v334 = vunpack.c.h.b16 %v85
  %v335 = vunpack.c.l.b16 %v86
  %v336 = vunpack.c.h.b16 %v86
  %v337 = vunpack.c.l.b16 %v87
  %v338 = vunpack.c.h.b16 %v87
  %v339 = vunpack.c.l.b16 %v88
  %v340 = vunpack.c.h.b16 %v88
  %v341 = vunpack.c.l.b16 %v89
  %v342 = vunpack.c.h.b16 %v89
  %v343 = vunpack.c.l.b16 %v90
  %v344 = vunpack.c.h.b16 %v90
  %v345 = vunpack.c.l.b16 %v91
  %v346 = vunpack.c.h.b16 %v91
  %v347 = vunpack.c.l.b16 %v92
  %v348 = vunpack.c.h.b16 %v92
  %v349 = vunpack.c.l.b16 %v93
  %v350 = vunpack.c.h.b16 %v93
  %v351 = vunpack.c.l.b16 %v94
  %v352 = vunpack.c.h.b16 %v94
  %v353 = vunpack.c.l.b16 %v95
  %v354 = vunpack.c.h.b16 %v95
  %v355 = vunpack.c.l.b16 %v96
  %v356 = vunpack.c.h.b16 %v96
  %v357 = vunpack.c.l.b16 %v97
  %v358 = vunpack.c.h.b16 %v97
  %v359 = vunpack.c.l.b16 %v98
  %v360 = vunpack.c.h.b16 %v98
  %v361 = vunpack.c.l.b16 %v99
  %v362 = vunpack.c.h.b16 %v99
  %v363 = vunpack.c.l.b16 %v100
  %v364 = vunpack.c.h.b16 %v100
  %v365 = vunpack.c.l.b16 %v101
  %v366 = vunpack.c.h.b16 %v101
  %v367 = vunpack.c.l.b16 %v102
  %v368 = vunpack.c.h.b16 %v102
  %v369 = vunpack.c.l.b16 %v103
  %v370 = vunpack.c.h.b16 %v103
  %v371 = vunpack.c.l.b16 %v104
  %v372 = vunpack.c.h.b16 %v104
  %v373 = vunpack.c.l.b16 %v105
  %v374 = vunpack.c.h.b16 %v105
  %v375 = vunpack.c.l.b16 %v106
  %v376 = vunpack.c.h.b16 %v106
  %v377 = vunpack.c.l.b16 %v107
  %v378 = vunpack.c.h.b16 %v107
  %v379 = vunpack.c.l.b16 %v108
  %v380 = vunpack.c.h.b16 %v108
  %v381 = vunpack.c.l.b16 %v109
  %v382 = vunpack.c.h.b16 %v109
  %v383 = vunpack.c.l.b16 %v110
  %v384 = vunpack.c.h.b16 %v110
  %v385 = vunpack.c.l.b16 %v111
  %v386 = vunpack.c.h.b16 %v111
  %v387 = vunpack.c.l.b16 %v112
  %v388 = vunpack.c.h.b16 %v112
  %v389 = vunpack.c.l.b16 %v113
  %v390 = vunpack.c.h.b16 %v113
  %v391 = vunpack.c.l.b16 %v114
  %v392 = vunpack.c.h.b16 %v114
  %v393 = vunpack.c.l.b16 %v115
  %v394 = vunpack.c.h.b16 %v115
  %v395 = vunpack.c.l.b16 %v116
  %v396 = vunpack.c.h.b16 %v116
  %v397 = vunpack.c.l.b16 %v117
  %v398 = vunpack.c.h.b16 %v117
  %v399 = vunpack.c.l.b16 %v118
  %v400 = vunpack.c.h.b16 %v118
  %v401 = vunpack.c.l.b16 %v119
  %v402 = vunpack.c.h.b16 %v119
  %v403 = vunpack.c.l.b16 %v120
  %v404 = vunpack.c.h.b16 %v120
  %v405 = vunpack.c.l.b16 %v121
  %v406 = vunpack.c.h.b16 %v121
  %v407 = vunpack.c.l.b16 %v122
  %v408 = vunpack.c.h.b16 %v122
  %v409 = vunpack.c.l.b16 %v123
  %v410 = vunpack.c.h.b16 %v123
  %v411 = vunpack.c.l.b16 %v124
  %v412 = vunpack.c.h.b16 %v124
  %v413 = vunpack.c.l.b16 %v125
  %v414 = vunpack.c.h.b16 %v125
  %v415 = vunpack.c.l.b16 %v126
  %v416 = vunpack.c.h.b16 %v126
  %v417 = vunpack.c.l.b16 %v127
  %v418 = vunpack.c.h.b16 %v127
  %v419 = vunpack.c.l.b16 %v128
  %v420 = vunpack.c.h.b16 %v128
  %v421 = vunpack.c.l.b16 %v129
  %v422 = vunpack.c.h.b16 %v129
  %v423 = vunpack.c.l.b16 %v130
  %v424 = vunpack.c.h.b16 %v130
  %v425 = vpack.c.b16 %v299, %v293
  %v426 = vpack.c.b16 %v300, %v294
  %v427 = vpack.c.b16 %v301, %v295
  %v428 = vpack.c.b16 %v302, %v296
  %v429 = vpack.c.b16 %v303, %v297
  %v430 = vpack.c.b16 %v304, %v298
  %v431 = vpack.c.b16 %v311, %v305
  %v432 = vpack.c.b16 %v312, %v306
  %v433 = vpack.c.b16 %v313, %v307
  %v434 = vpack.c.b16 %v314, %v308
  %v435 = vpack.c.b16 %v315, %v309
  %v436 = vpack.c.b16 %v316, %v310
  %v437 = vpack.c.b16 %v323, %v317
  %v438 = vpack.c.b16 %v324, %v318
  %v439 = vpack.c.b16 %v325, %v319
  %v440 = vpack.c.b16 %v326, %v320
  %v441 = vpack.c.b16 %v327, %v321
  %v442 = vpack.c.b16 %v328, %v322
  %v443 = vpack.c.b16 %v335, %v329
  %v444 = vpack.c.b16 %v336, %v330
  %v445 = vpack.c.b16 %v337, %v331
  %v446 = vpack.c.b16 %v338, %v332
  %v447 = vpack.c.b16 %v339, %v333
  %v448 = vpack.c.b16 %v340, %v334
  %v449 = vpack.c.b16 %v347, %v341
  %v450 = vpack.c.b16 %v348, %v342
  %v451 = vpack.c.b16 %v349, %v343
  %v452 = vpack.c.b16 %v350, %v344
  %v453 = vpack.c.b16 %v351, %v345
  %v454 = vpack.c.b16 %v352, %v346
  %v455 = vpack.c.b16 %v359, %v353
  %v456 = vpack.c.b16 %v360, %v354
  %v457 = vpack.c.b16 %v361, %v355
  %v458 = vpack.c.b16 %v362, %v356
  %v459 = vpack.c.b16 %v363, %v357
  %v460 = vpack.c.b16 %v364, %v358
  %v461 = vpack.c.b16 %v371, %v365
  %v462 = vpack.c.b16 %v372, %v366
  %v463 = vpack.c.b16 %v373, %v367
  %v464 = vpack.c.b16 %v374, %v368
  %v465 = vpack.c.b16 %v375, %v369
  %v466 = vpack.c.b16 %v376, %v370
  %v467 = vpack.c.b16 %v383, %v377
  %v468 = vpack.c.b16 %v384, %v378
  %v469 = vpack.c.b16 %v385, %v379
  %v470 = vpack.c.b16 %v386, %v380
  %v471 = vpack.c.b16 %v387, %v381
  %v472 = vpack.c.b16 %v388, %v382
  %v473 = vpack.c.b16 %v395, %v389
  %v474 = vpack.c.b16 %v396, %v390
  %v475 = vpack.c.b16 %v397, %v391
  %v476 = vpack.c.b16 %v398, %v392
  %v477 = vpack.c.b16 %v399, %v393
  %v478 = vpack.c.b16 %v400, %v394
  %v479 = vpack.c.b16 %v407, %v401
  %v480 = vpack.c.b16 %v408, %v402
  %v481 = vpack.c.b16 %v409, %v403
  %v482 = vpack.c.b16 %v410, %v404
  %v483 = vpack.c.b16 %v411, %v405
  %v484 = vpack.c.b16 %v412, %v406
  %v485 = vpack.c.b16 %v419, %v413
  %v486 = vpack.c.b16 %v420, %v414
  %v487 = vpack.c.b16 %v421, %v415
  %v488 = vpack.c.b16 %v422, %v416
  %v489 = vpack.c.b16 %v423, %v417
  %v490 = vpack.c.b16 %v424, %v418
  %v653 = vunpack.c.l.b16 %v131
  %v654 = vunpack.c.l.b16 %v132
  %v655 = vunpack.c.l.b16 %v133
  %v656 = vunpack.c.l.b16 %v134
  %v657 = vunpack.c.l.b16 %v135
  %v658 = vunpack.c.l.b16 %v136
  %v659 = vunpack.c.l.b16 %v137
  %v660 = vunpack.c.l.b16 %v138
  %v661 = vunpack.c.l.b16 %v139
  %v662 = vunpack.c.l.b16 %v140
  %v663 = vunpack.c.l.b16 %v141
  %v664 = vunpack.c.l.b16 %v142
  %v665 = vunpack.c.l.b16 %v143
  %v666 = vunpack.c.l.b16 %v144
  %v667 = vunpack.c.l.b16 %v145
  %v668 = vunpack.c.l.b16 %v146
  %v669 = vunpack.c.l.b16 %v147
  %v670 = vunpack.c.l.b16 %v148
  %v671 = vunpack.c.l.b16 %v149
  %v672 = vunpack.c.l.b16 %v150
  %v673 = vunpack.c.l.b16 %v151
  %v674 = vunpack.c.l.b16 %v152
  %v675 = vunpack.c.l.b16 %v153
  %v676 = vunpack.c.l.b16 %v154
  %v677 = vunpack.c.l.b16 %v155
  %v678 = vunpack.c.l.b16 %v156
  %v679 = vunpack.c.l.b16 %v157
  %v680 = vunpack.c.l.b16 %v158
  %v681 = vunpack.c.l.b16 %v159
  %v682 = vunpack.c.l.b16 %v160
  %v683 = vunpack.c.l.b16 %v161
  %v684 = vunpack.c.l.b16 %v162
  %v685 = vunpack.c.l.b16 %v163
  %v686 = vunpack.c.l.b16 %v164
  %v687 = vunpack.c.l.b16 %v165
  %v688 = vunpack.c.l.b16 %v166
  %v689 = vunpack.c.l.b16 %v167
  %v690 = vunpack.c.l.b16 %v168
  %v691 = vunpack.c.l.b16 %v169
  %v692 = vunpack.c.l.b16 %v170
  %v693 = vunpack.c.l.b16 %v171
  %v694 = vunpack.c.l.b16 %v172
  %v695 = vunpack.c.l.b16 %v173
  %v696 = vunpack.c.l.b16 %v174
  %v697 = vunpack.c.l.b16 %v175
  %v698 = vunpack.c.l.b16 %v176
  %v699 = vunpack.c.l.b16 %v177
  %v700 = vunpack.c.l.b16 %v178
  %v701 = vunpack.c.l.b16 %v179
  %v702 = vunpack.c.l.b16 %v180
  %v703 = vunpack.c.l.b16 %v181
  %v704 = vunpack.c.l.b16 %v182
  %v705 = vunpack.c.l.b16 %v183
  %v706 = vunpack.c.l.b16 %v184
  %v707 = vunpack.c.l.b16 %v185
  %v708 = vunpack.c.l.b16 %v186
  %v709 = vunpack.c.l.b16 %v187
  %v710 = vunpack.c.l.b16 %v188
  %v711 = vunpack.c.l.b16 %v189
  %v712 = vunpack.c.l.b16 %v190
  %v713 = vunpack.c.l.b16 %v191
  %v714 = vunpack.c.l.b16 %v192
  %v715 = vunpack.c.l.b16 %v193
  %v716 = vunpack.c.l.b16 %v194
  %v717 = vunpack.c.l.b16 %v195
  %v718 = vunpack.c.l.b16 %v196
  %v719 = vunpack.c.l.b16 %v197
  %v720 = vunpack.c.l.b16 %v198
  %v721 = vunpack.c.l.b16 %v199
  %v722 = vunpack.c.l.b16 %v200
  %v723 = vunpack.c.l.b16 %v201
  %v724 = vunpack.c.l.b16 %v202
  %v725 = vunpack.c.l.b16 %v203
  %v726 = vunpack.c.l.b16 %v204
  %v727 = vunpack.c.l.b16 %v205
  %v728 = vunpack.c.l.b16 %v206
  %v729 = vunpack.c.l.b16 %v207
  %v730 = vunpack.c.l.b16 %v208
  %v731 = vunpack.c.l.b16 %v209
  %v732 = vunpack.c.l.b16 %v210
  %v733 = vunpack.c.l.b16 %v211
  %v734 = vunpack.c.l.b16 %v212
  %v735 = vunpack.c.l.b16 %v213
  %v736 = vunpack.c.l.b16 %v214
  %v737 = vunpack.c.l.b16 %v215
  %v738 = vunpack.c.l.b16 %v216
  %v739 = vunpack.c.l.b16 %v217
  %v740 = vunpack.c.l.b16 %v218
  %v741 = vunpack.c.l.b16 %v219
  %v742 = vunpack.c.l.b16 %v220
  %v743 = vunpack.c.l.b16 %v221
  %v744 = vunpack.c.l.b16 %v222
  %v745 = vunpack.c.l.b16 %v223
  %v746 = vunpack.c.l.b16 %v224
  %v747 = vunpack.c.l.b16 %v225
  %v748 = vunpack.c.l.b16 %v226
  %v749 = vpack.c.b16 %v654, %v653
  %v750 = vpack.c.b16 %v656, %v655
  %v751 = vpack.c.b16 %v658, %v657
  %v752 = vpack.c.b16 %v660, %v659
  %v753 = vpack.c.b16 %v662, %v661
  %v754 = vpack.c.b16 %v664, %v663
  %v755 = vpack.c.b16 %v666, %v665
  %v756 = vpack.c.b16 %v668, %v667
  %v757 = vpack.c.b16 %v670, %v669
  %v758 = vpack.c.b16 %v672, %v671
  %v759 = vpack.c.b16 %v674, %v673
  %v760 = vpack.c.b16 %v676, %v675
  %v761 = vpack.c.b16 %v678, %v677
  %v762 = vpack.c.b16 %v680, %v679
  %v763 = vpack.c.b16 %v682, %v681
  %v764 = vpack.c.b16 %v684, %v683
  %v765 = vpack.c.b16 %v686, %v685
  %v766 = vpack.c.b16 %v688, %v687
  %v767 = vpack.c.b16 %v690, %v689
  %v768 = vpack.c.b16 %v692, %v691
  %v769 = vpack.c.b16 %v694, %v693
  %v770 = vpack.c.b16 %v696, %v695
  %v771 = vpack.c.b16 %v698, %v697
  %v772 = vpack.c.b16 %v700, %v699
  %v773 = vpack.c.b16 %v702, %v701
  %v774 = vpack.c.b16 %v704, %v703
  %v775 = vpack.c.b16 %v706, %v705
  %v776 = vpack.c.b16 %v708, %v707
  %v777 = vpack.c.b16 %v710, %v709
  %v778 = vpack.c.b16 %v712, %v711
  %v779 = vpack.c.b16 %v714, %v713
  %v780 = vpack.c.b16 %v716, %v715
  %v781 = vpack.c.b16 %v718, %v717
  %v782 = vpack.c.b16 %v720, %v719
  %v783 = vpack.c.b16 %v722, %v721
  %v784 = vpack.c.b16 %v724, %v723
  %v785 = vpack.c.b16 %v726, %v725
  %v786 = vpack.c.b16 %v728, %v727
  %v787 = vpack.c.b16 %v730, %v729
  %v788 = vpack.c.b16 %v732, %v731
  %v789 = vpack.c.b16 %v734, %v733
  %v790 = vpack.c.b16 %v736, %v735
  %v791 = vpack.c.b16 %v738, %v737
  %v792 = vpack.c.b16 %v740, %v739
  %v793 = vpack.c.b16 %v742, %v741
  %v794 = vpack.c.b16 %v744, %v743
  %v795 = vpack.c.b16 %v746, %v745
  %v796 = vpack.c.b16 %v748, %v747
  %845 = vmatprep.subr.bf16.mxu0 0
  %846 = vmatpush1.bf16.msra.mxu0 %v749
  %847 = vmatprep.subr.bf16.mxu0 0
  %848 = vmatpush1.bf16.msra.mxu0 %v750
  %849 = vmatprep.subr.bf16.mxu0 0
  %850 = vmatpush1.bf16.msra.mxu0 %v751
  %851 = vmatprep.subr.bf16.mxu0 0
  %852 = vmatpush1.bf16.msra.mxu0 %v752
  %853 = vmatprep.subr.bf16.mxu0 0
  %854 = vmatpush1.bf16.msra.mxu0 %v753
  %855 = vmatprep.subr.bf16.mxu0 0
  %856 = vmatpush1.bf16.msra.mxu0 %v754
  %857 = vmatprep.subr.bf16.mxu0 0
  %858 = vmatpush1.bf16.msra.mxu0 %v755
  %859 = vmatprep.subr.bf16.mxu0 0
  %860 = vmatpush1.bf16.msra.mxu0 %v756
  %861 = vmatprep.subr.bf16.mxu0 0
  %862 = vmatpush1.bf16.msra.mxu0 %v757
  %863 = vmatprep.subr.bf16.mxu0 0
  %864 = vmatpush1.bf16.msra.mxu0 %v758
  %865 = vmatprep.subr.bf16.mxu0 0
  %866 = vmatpush1.bf16.msra.mxu0 %v759
  %867 = vmatprep.subr.bf16.mxu0 0
  %868 = vmatpush1.bf16.msra.mxu0 %v760
  %869 = vmatprep.subr.bf16.mxu0 0
  %870 = vmatpush1.bf16.msra.mxu0 %v761
  %871 = vmatprep.subr.bf16.mxu0 0
  %872 = vmatpush1.bf16.msra.mxu0 %v762
  %873 = vmatprep.subr.bf16.mxu0 0
  %874 = vmatpush1.bf16.msra.mxu0 %v763
  %875 = vmatprep.subr.bf16.mxu0 0
  %876 = vmatpush1.bf16.msra.mxu0 %v764
  %877 = vmatprep.mubr.bf16.mxu0 %v426
  %878 = vmatmul.mubr.bf16.gmra.mrb[0].mxu0 %v425
  %v879 = vpop.f32.mrb[0].mxu0
  %v880 = vadd.f32 0.0, %v879
  %v881 = vpop.f32.mrb[0].mxu0
  %v882 = vpop.f32.mrb[0].mxu0
  %v883 = vadd.f32 0.0, %v882
  %v884 = vpop.f32.mrb[0].mxu0
  %885 = vmatprep.mubr.bf16.mxu0 %v432
  %886 = vmatmul.mubr.bf16.gmra.mrb[0].mxu0 %v431
  %v887 = vpop.f32.mrb[0].mxu0
  %v888 = vadd.f32 0.0, %v887
  %v889 = vpop.f32.mrb[0].mxu0
  %v890 = vpop.f32.mrb[0].mxu0
  %v891 = vadd.f32 0.0, %v890
  %v892 = vpop.f32.mrb[0].mxu0
  %893 = vmatprep.mubr.bf16.mxu0 %v438
  %894 = vmatmul.mubr.bf16.gmra.mrb[0].mxu0 %v437
  %v895 = vpop.f32.mrb[0].mxu0
  %v896 = vadd.f32 0.0, %v895
  %v897 = vpop.f32.mrb[0].mxu0
  %v898 = vpop.f32.mrb[0].mxu0
  %v899 = vadd.f32 0.0, %v898
  %v900 = vpop.f32.mrb[0].mxu0
  %901 = vmatprep.mubr.bf16.mxu0 %v444
  %902 = vmatmul.mubr.bf16.gmra.mrb[0].mxu0 %v443
  %v903 = vpop.f32.mrb[0].mxu0
  %v904 = vadd.f32 0.0, %v903
  %v905 = vpop.f32.mrb[0].mxu0
  %v906 = vpop.f32.mrb[0].mxu0
  %v907 = vadd.f32 0.0, %v906
  %v908 = vpop.f32.mrb[0].mxu0
  %909 = vmatprep.mubr.bf16.mxu0 %v450
  %910 = vmatmul.mubr.bf16.gmra.mrb[0].mxu0 %v449
  %v911 = vpop.f32.mrb[0].mxu0
  %v912 = vadd.f32 0.0, %v911
  %v913 = vpop.f32.mrb[0].mxu0
  %v914 = vpop.f32.mrb[0].mxu0
  %v915 = vadd.f32 0.0, %v914
  %v916 = vpop.f32.mrb[0].mxu0
  %917 = vmatprep.mubr.bf16.mxu0 %v456
  %918 = vmatmul.mubr.bf16.gmra.mrb[0].mxu0 %v455
  %v919 = vpop.f32.mrb[0].mxu0
  %v920 = vadd.f32 0.0, %v919
  %v921 = vpop.f32.mrb[0].mxu0
  %v922 = vpop.f32.mrb[0].mxu0
  %v923 = vadd.f32 0.0, %v922
  %v924 = vpop.f32.mrb[0].mxu0
  %925 = vmatprep.mubr.bf16.mxu0 %v462
  %926 = vmatmul.mubr.bf16.gmra.mrb[0].mxu0 %v461
  %v927 = vpop.f32.mrb[0].mxu0
  %v928 = vadd.f32 0.0, %v927
  %v929 = vpop.f32.mrb[0].mxu0
  %v930 = vpop.f32.mrb[0].mxu0
  %v931 = vadd.f32 0.0, %v930
  %v932 = vpop.f32.mrb[0].mxu0
  %933 = vmatprep.mubr.bf16.mxu0 %v468
  %934 = vmatmul.mubr.bf16.gmra.mrb[0].mxu0 %v467
  %v935 = vpop.f32.mrb[0].mxu0
  %v936 = vadd.f32 0.0, %v935
  %v937 = vpop.f32.mrb[0].mxu0
  %v938 = vpop.f32.mrb[0].mxu0
  %v939 = vadd.f32 0.0, %v938
  %v940 = vpop.f32.mrb[0].mxu0
  %941 = vmatprep.mubr.bf16.mxu0 %v474
  %942 = vmatmul.mubr.bf16.gmra.mrb[0].mxu0 %v473
  %v943 = vpop.f32.mrb[0].mxu0
  %v944 = vadd.f32 0.0, %v943
  %v945 = vpop.f32.mrb[0].mxu0
  %v946 = vpop.f32.mrb[0].mxu0
  %v947 = vadd.f32 0.0, %v946
  %v948 = vpop.f32.mrb[0].mxu0
  %949 = vmatprep.mubr.bf16.mxu0 %v480
  %950 = vmatmul.mubr.bf16.gmra.mrb[0].mxu0 %v479
  %v951 = vpop.f32.mrb[0].mxu0
  %v952 = vadd.f32 0.0, %v951
  %v953 = vpop.f32.mrb[0].mxu0
  %v954 = vpop.f32.mrb[0].mxu0
  %v955 = vadd.f32 0.0, %v954
  %v956 = vpop.f32.mrb[0].mxu0
  %957 = vmatprep.mubr.bf16.mxu0 %v486
  %958 = vmatmul.mubr.bf16.gmra.mrb[0].mxu0 %v485
  %v959 = vpop.f32.mrb[0].mxu0
  %v960 = vadd.f32 0.0, %v959
  %v961 = vpop.f32.mrb[0].mxu0
  %v962 = vpop.f32.mrb[0].mxu0
  %v963 = vadd.f32 0.0, %v962
  %v964 = vpop.f32.mrb[0].mxu0
  %965 = vdwg.mxu0
  %966 = vmatprep.subr.bf16.mxu0 0
  %967 = vmatpush1.bf16.msra.mxu0 %v765
  %968 = vmatprep.subr.bf16.mxu0 0
  %969 = vmatpush1.bf16.msra.mxu0 %v766
  %970 = vmatprep.subr.bf16.mxu0 0
  %971 = vmatpush1.bf16.msra.mxu0 %v767
  %972 = vmatprep.subr.bf16.mxu0 0
  %973 = vmatpush1.bf16.msra.mxu0 %v768
  %974 = vmatprep.subr.bf16.mxu0 0
  %975 = vmatpush1.bf16.msra.mxu0 %v769
  %976 = vmatprep.subr.bf16.mxu0 0
  %977 = vmatpush1.bf16.msra.mxu0 %v770
  %978 = vmatprep.subr.bf16.mxu0 0
  %979 = vmatpush1.bf16.msra.mxu0 %v771
  %980 = vmatprep.subr.bf16.mxu0 0
  %981 = vmatpush1.bf16.msra.mxu0 %v772
  %982 = vmatprep.subr.bf16.mxu0 0
  %983 = vmatpush1.bf16.msra.mxu0 %v773
  %984 = vmatprep.subr.bf16.mxu0 0
  %985 = vmatpush1.bf16.msra.mxu0 %v774
  %986 = vmatprep.subr.bf16.mxu0 0
  %987 = vmatpush1.bf16.msra.mxu0 %v775
  %988 = vmatprep.subr.bf16.mxu0 0
  %989 = vmatpush1.bf16.msra.mxu0 %v776
  %990 = vmatprep.subr.bf16.mxu0 0
  %991 = vmatpush1.bf16.msra.mxu0 %v777
  %992 = vmatprep.subr.bf16.mxu0 0
  %993 = vmatpush1.bf16.msra.mxu0 %v778
  %994 = vmatprep.subr.bf16.mxu0 0
  %995 = vmatpush1.bf16.msra.mxu0 %v779
  %996 = vmatprep.subr.bf16.mxu0 0
  %997 = vmatpush1.bf16.msra.mxu0 %v780
  %998 = vmatprep.mubr.bf16.mxu0 %v428
  %999 = vmatmul.mubr.bf16.gmra.mrb[0].mxu0 %v427
  %v1000 = vpop.f32.mrb[0].mxu0
  %v1001 = vadd.f32 %v880, %v1000
  %v1002 = vpop.f32.mrb[0].mxu0
  %v1003 = vpop.f32.mrb[0].mxu0
  %v1004 = vadd.f32 %v883, %v1003
  %v1005 = vpop.f32.mrb[0].mxu0
  %1006 = vmatprep.mubr.bf16.mxu0 %v434
  %1007 = vmatmul.mubr.bf16.gmra.mrb[0].mxu0 %v433
  %v1008 = vpop.f32.mrb[0].mxu0
  %v1009 = vadd.f32 %v888, %v1008
  %v1010 = vpop.f32.mrb[0].mxu0
  %v1011 = vpop.f32.mrb[0].mxu0
  %v1012 = vadd.f32 %v891, %v1011
  %v1013 = vpop.f32.mrb[0].mxu0
  %1014 = vmatprep.mubr.bf16.mxu0 %v440
  %1015 = vmatmul.mubr.bf16.gmra.mrb[0].mxu0 %v439
  %v1016 = vpop.f32.mrb[0].mxu0
  %v1017 = vadd.f32 %v896, %v1016
  %v1018 = vpop.f32.mrb[0].mxu0
  %v1019 = vpop.f32.mrb[0].mxu0
  %v1020 = vadd.f32 %v899, %v1019
  %v1021 = vpop.f32.mrb[0].mxu0
  %1022 = vmatprep.mubr.bf16.mxu0 %v446
  %1023 = vmatmul.mubr.bf16.gmra.mrb[0].mxu0 %v445
  %v1024 = vpop.f32.mrb[0].mxu0
  %v1025 = vadd.f32 %v904, %v1024
  %v1026 = vpop.f32.mrb[0].mxu0
  %v1027 = vpop.f32.mrb[0].mxu0
  %v1028 = vadd.f32 %v907, %v1027
  %v1029 = vpop.f32.mrb[0].mxu0
  %1030 = vmatprep.mubr.bf16.mxu0 %v452
  %1031 = vmatmul.mubr.bf16.gmra.mrb[0].mxu0 %v451
  %v1032 = vpop.f32.mrb[0].mxu0
  %v1033 = vadd.f32 %v912, %v1032
  %v1034 = vpop.f32.mrb[0].mxu0
  %v1035 = vpop.f32.mrb[0].mxu0
  %v1036 = vadd.f32 %v915, %v1035
  %v1037 = vpop.f32.mrb[0].mxu0
  %1038 = vmatprep.mubr.bf16.mxu0 %v458
  %1039 = vmatmul.mubr.bf16.gmra.mrb[0].mxu0 %v457
  %v1040 = vpop.f32.mrb[0].mxu0
  %v1041 = vadd.f32 %v920, %v1040
  %v1042 = vpop.f32.mrb[0].mxu0
  %v1043 = vpop.f32.mrb[0].mxu0
  %v1044 = vadd.f32 %v923, %v1043
  %v1045 = vpop.f32.mrb[0].mxu0
  %1046 = vmatprep.mubr.bf16.mxu0 %v464
  %1047 = vmatmul.mubr.bf16.gmra.mrb[0].mxu0 %v463
  %v1048 = vpop.f32.mrb[0].mxu0
  %v1049 = vadd.f32 %v928, %v1048
  %v1050 = vpop.f32.mrb[0].mxu0
  %v1051 = vpop.f32.mrb[0].mxu0
  %v1052 = vadd.f32 %v931, %v1051
  %v1053 = vpop.f32.mrb[0].mxu0
  %1054 = vmatprep.mubr.bf16.mxu0 %v470
  %1055 = vmatmul.mubr.bf16.gmra.mrb[0].mxu0 %v469
  %v1056 = vpop.f32.mrb[0].mxu0
  %v1057 = vadd.f32 %v936, %v1056
  %v1058 = vpop.f32.mrb[0].mxu0
  %v1059 = vpop.f32.mrb[0].mxu0
  %v1060 = vadd.f32 %v939, %v1059
  %v1061 = vpop.f32.mrb[0].mxu0
  %1062 = vmatprep.mubr.bf16.mxu0 %v476
  %1063 = vmatmul.mubr.bf16.gmra.mrb[0].mxu0 %v475
  %v1064 = vpop.f32.mrb[0].mxu0
  %v1065 = vadd.f32 %v944, %v1064
  %v1066 = vpop.f32.mrb[0].mxu0
  %v1067 = vpop.f32.mrb[0].mxu0
  %v1068 = vadd.f32 %v947, %v1067
  %v1069 = vpop.f32.mrb[0].mxu0
  %1070 = vmatprep.mubr.bf16.mxu0 %v482
  %1071 = vmatmul.mubr.bf16.gmra.mrb[0].mxu0 %v481
  %v1072 = vpop.f32.mrb[0].mxu0
  %v1073 = vadd.f32 %v952, %v1072
  %v1074 = vpop.f32.mrb[0].mxu0
  %v1075 = vpop.f32.mrb[0].mxu0
  %v1076 = vadd.f32 %v955, %v1075
  %v1077 = vpop.f32.mrb[0].mxu0
  %1078 = vmatprep.mubr.bf16.mxu0 %v488
  %1079 = vmatmul.mubr.bf16.gmra.mrb[0].mxu0 %v487
  %v1080 = vpop.f32.mrb[0].mxu0
  %v1081 = vadd.f32 %v960, %v1080
  %v1082 = vpop.f32.mrb[0].mxu0
  %v1083 = vpop.f32.mrb[0].mxu0
  %v1084 = vadd.f32 %v963, %v1083
  %v1085 = vpop.f32.mrb[0].mxu0
  %1086 = vdwg.mxu0
  %1087 = vmatprep.subr.bf16.mxu0 0
  %1088 = vmatpush1.bf16.msra.mxu0 %v781
  %1089 = vmatprep.subr.bf16.mxu0 0
  %1090 = vmatpush1.bf16.msra.mxu0 %v782
  %1091 = vmatprep.subr.bf16.mxu0 0
  %1092 = vmatpush1.bf16.msra.mxu0 %v783
  %1093 = vmatprep.subr.bf16.mxu0 0
  %1094 = vmatpush1.bf16.msra.mxu0 %v784
  %1095 = vmatprep.subr.bf16.mxu0 0
  %1096 = vmatpush1.bf16.msra.mxu0 %v785
  %1097 = vmatprep.subr.bf16.mxu0 0
  %1098 = vmatpush1.bf16.msra.mxu0 %v786
  %1099 = vmatprep.subr.bf16.mxu0 0
  %1100 = vmatpush1.bf16.msra.mxu0 %v787
  %1101 = vmatprep.subr.bf16.mxu0 0
  %1102 = vmatpush1.bf16.msra.mxu0 %v788
  %1103 = vmatprep.subr.bf16.mxu0 0
  %1104 = vmatpush1.bf16.msra.mxu0 %v789
  %1105 = vmatprep.subr.bf16.mxu0 0
  %1106 = vmatpush1.bf16.msra.mxu0 %v790
  %1107 = vmatprep.subr.bf16.mxu0 0
  %1108 = vmatpush1.bf16.msra.mxu0 %v791
  %1109 = vmatprep.subr.bf16.mxu0 0
  %1110 = vmatpush1.bf16.msra.mxu0 %v792
  %1111 = vmatprep.subr.bf16.mxu0 0
  %1112 = vmatpush1.bf16.msra.mxu0 %v793
  %1113 = vmatprep.subr.bf16.mxu0 0
  %1114 = vmatpush1.bf16.msra.mxu0 %v794
  %1115 = vmatprep.subr.bf16.mxu0 0
  %1116 = vmatpush1.bf16.msra.mxu0 %v795
  %1117 = vmatprep.subr.bf16.mxu0 0
  %1118 = vmatpush1.bf16.msra.mxu0 %v796
  %1119 = vmatprep.mubr.bf16.mxu0 %v430
  %1120 = vmatmul.mubr.bf16.gmra.mrb[0].mxu0 %v429
  %v1121 = vpop.f32.mrb[0].mxu0
  %v1122 = vadd.f32 %v1001, %v1121
  %v1123 = vpop.f32.mrb[0].mxu0
  %v1124 = vpop.f32.mrb[0].mxu0
  %v1125 = vadd.f32 %v1004, %v1124
  %v1126 = vpop.f32.mrb[0].mxu0
  %1127 = vmatprep.mubr.bf16.mxu0 %v436
  %1128 = vmatmul.mubr.bf16.gmra.mrb[0].mxu0 %v435
  %v1129 = vpop.f32.mrb[0].mxu0
  %v1130 = vadd.f32 %v1009, %v1129
  %v1131 = vpop.f32.mrb[0].mxu0
  %v1132 = vpop.f32.mrb[0].mxu0
  %v1133 = vadd.f32 %v1012, %v1132
  %v1134 = vpop.f32.mrb[0].mxu0
  %1135 = vmatprep.mubr.bf16.mxu0 %v442
  %1136 = vmatmul.mubr.bf16.gmra.mrb[0].mxu0 %v441
  %v1137 = vpop.f32.mrb[0].mxu0
  %v1138 = vadd.f32 %v1017, %v1137
  %v1139 = vpop.f32.mrb[0].mxu0
  %v1140 = vpop.f32.mrb[0].mxu0
  %v1141 = vadd.f32 %v1020, %v1140
  %v1142 = vpop.f32.mrb[0].mxu0
  %1143 = vmatprep.mubr.bf16.mxu0 %v448
  %1144 = vmatmul.mubr.bf16.gmra.mrb[0].mxu0 %v447
  %v1145 = vpop.f32.mrb[0].mxu0
  %v1146 = vadd.f32 %v1025, %v1145
  %v1147 = vpop.f32.mrb[0].mxu0
  %v1148 = vpop.f32.mrb[0].mxu0
  %v1149 = vadd.f32 %v1028, %v1148
  %v1150 = vpop.f32.mrb[0].mxu0
  %1151 = vmatprep.mubr.bf16.mxu0 %v454
  %1152 = vmatmul.mubr.bf16.gmra.mrb[0].mxu0 %v453
  %v1153 = vpop.f32.mrb[0].mxu0
  %v1154 = vadd.f32 %v1033, %v1153
  %v1155 = vpop.f32.mrb[0].mxu0
  %v1156 = vpop.f32.mrb[0].mxu0
  %v1157 = vadd.f32 %v1036, %v1156
  %v1158 = vpop.f32.mrb[0].mxu0
  %1159 = vmatprep.mubr.bf16.mxu0 %v460
  %1160 = vmatmul.mubr.bf16.gmra.mrb[0].mxu0 %v459
  %v1161 = vpop.f32.mrb[0].mxu0
  %v1162 = vadd.f32 %v1041, %v1161
  %v1163 = vpop.f32.mrb[0].mxu0
  %v1164 = vpop.f32.mrb[0].mxu0
  %v1165 = vadd.f32 %v1044, %v1164
  %v1166 = vpop.f32.mrb[0].mxu0
  %1167 = vmatprep.mubr.bf16.mxu0 %v466
  %1168 = vmatmul.mubr.bf16.gmra.mrb[0].mxu0 %v465
  %v1169 = vpop.f32.mrb[0].mxu0
  %v1170 = vadd.f32 %v1049, %v1169
  %v1171 = vpop.f32.mrb[0].mxu0
  %v1172 = vpop.f32.mrb[0].mxu0
  %v1173 = vadd.f32 %v1052, %v1172
  %v1174 = vpop.f32.mrb[0].mxu0
  %1175 = vmatprep.mubr.bf16.mxu0 %v472
  %1176 = vmatmul.mubr.bf16.gmra.mrb[0].mxu0 %v471
  %v1177 = vpop.f32.mrb[0].mxu0
  %v1178 = vadd.f32 %v1057, %v1177
  %v1179 = vpop.f32.mrb[0].mxu0
  %v1180 = vpop.f32.mrb[0].mxu0
  %v1181 = vadd.f32 %v1060, %v1180
  %v1182 = vpop.f32.mrb[0].mxu0
  %1183 = vmatprep.mubr.bf16.mxu0 %v478
  %1184 = vmatmul.mubr.bf16.gmra.mrb[0].mxu0 %v477
  %v1185 = vpop.f32.mrb[0].mxu0
  %v1186 = vadd.f32 %v1065, %v1185
  %v1187 = vpop.f32.mrb[0].mxu0
  %v1188 = vpop.f32.mrb[0].mxu0
  %v1189 = vadd.f32 %v1068, %v1188
  %v1190 = vpop.f32.mrb[0].mxu0
  %1191 = vmatprep.mubr.bf16.mxu0 %v484
  %1192 = vmatmul.mubr.bf16.gmra.mrb[0].mxu0 %v483
  %v1193 = vpop.f32.mrb[0].mxu0
  %v1194 = vadd.f32 %v1073, %v1193
  %v1195 = vpop.f32.mrb[0].mxu0
  %v1196 = vpop.f32.mrb[0].mxu0
  %v1197 = vadd.f32 %v1076, %v1196
  %v1198 = vpop.f32.mrb[0].mxu0
  %1199 = vmatprep.mubr.bf16.mxu0 %v490
  %1200 = vmatmul.mubr.bf16.gmra.mrb[0].mxu0 %v489
  %v1201 = vpop.f32.mrb[0].mxu0
  %v1202 = vadd.f32 %v1081, %v1201
  %v1203 = vpop.f32.mrb[0].mxu0
  %v1204 = vpop.f32.mrb[0].mxu0
  %v1205 = vadd.f32 %v1084, %v1204
  %v1206 = vpop.f32.mrb[0].mxu0
  %1207 = vdwg.mxu0
  %v1208 = vadd.f32 %v43, %v1122
  %v1209 = vadd.f32 %v44, %v1125
  %v1210 = vadd.f32 %v45, %v1130
  %v1211 = vadd.f32 %v46, %v1133
  %v1212 = vadd.f32 %v47, %v1138
  %v1213 = vadd.f32 %v48, %v1141
  %v1214 = vadd.f32 %v49, %v1146
  %v1215 = vadd.f32 %v50, %v1149
  %v1216 = vadd.f32 %v51, %v1154
  %v1217 = vadd.f32 %v52, %v1157
  %v1218 = vadd.f32 %v53, %v1162
  %v1219 = vadd.f32 %v54, %v1165
  %v1220 = vadd.f32 %v55, %v1170
  %v1221 = vadd.f32 %v56, %v1173
  %v1222 = vadd.f32 %v57, %v1178
  %v1223 = vadd.f32 %v58, %v1181
  %v1224 = vadd.f32 %v59, %v1186
  %v1225 = vadd.f32 %v60, %v1189
  %v1226 = vadd.f32 %v61, %v1194
  %v1227 = vadd.f32 %v62, %v1197
  %v1228 = vadd.f32 %v63, %v1202
  %v1229 = vadd.f32 %v64, %v1205
  %vm1230 = vcmask 523264
  %1231 = vst.msk [vmem:[#allocation2] sm:$0xff] %vm1230, %v1208
  %1232 = vst.msk [vmem:[#allocation2 + $0x8] sm:$0xff] %vm1230, %v1209
  %1233 = vst.msk [vmem:[#allocation2 + $0x10] sm:$0xff] %vm1230, %v1210
  %1234 = vst.msk [vmem:[#allocation2 + $0x18] sm:$0xff] %vm1230, %v1211
  %1235 = vst.msk [vmem:[#allocation2 + $0x20] sm:$0xff] %vm1230, %v1212
  %1236 = vst.msk [vmem:[#allocation2 + $0x28] sm:$0xff] %vm1230, %v1213
  %1237 = vst.msk [vmem:[#allocation2 + $0x30] sm:$0xff] %vm1230, %v1214
  %1238 = vst.msk [vmem:[#allocation2 + $0x38] sm:$0xff] %vm1230, %v1215
  %1239 = vst.msk [vmem:[#allocation2 + $0x40] sm:$0xff] %vm1230, %v1216
  %1240 = vst.msk [vmem:[#allocation2 + $0x48] sm:$0xff] %vm1230, %v1217
  %1241 = vst.msk [vmem:[#allocation2 + $0x50] sm:$0xff] %vm1230, %v1218
  %1242 = vst.msk [vmem:[#allocation2 + $0x58] sm:$0xff] %vm1230, %v1219
  %1243 = vst.msk [vmem:[#allocation2 + $0x60] sm:$0xff] %vm1230, %v1220
  %1244 = vst.msk [vmem:[#allocation2 + $0x68] sm:$0xff] %vm1230, %v1221
  %1245 = vst.msk [vmem:[#allocation2 + $0x70] sm:$0xff] %vm1230, %v1222
  %1246 = vst.msk [vmem:[#allocation2 + $0x78] sm:$0xff] %vm1230, %v1223
  %1247 = vst.msk [vmem:[#allocation2 + $0x80] sm:$0xff] %vm1230, %v1224
  %1248 = vst.msk [vmem:[#allocation2 + $0x88] sm:$0xff] %vm1230, %v1225
  %1249 = vst.msk [vmem:[#allocation2 + $0x90] sm:$0xff] %vm1230, %v1226
  %1250 = vst.msk [vmem:[#allocation2 + $0x98] sm:$0xff] %vm1230, %v1227
  %1251 = vst.msk [vmem:[#allocation2 + $0xa0] sm:$0xff] %vm1230, %v1228
  %vm1252 = vcmask 517120
  %1253 = vst.msk [vmem:[#allocation2 + $0xa8] sm:$0x3] %vm1252, %v1229
  // Predicated region
  $region18: #{forward.22} parent=0 // pred_check
    %p1254 = pneg %p15
  $region19: #{forward.22} parent=0 // pred_check_branch
    %1256 = sbr.rel (%p1254) target = $region21
  $region20: #{forward.22} parent=0 // pred_region
    %v1257 = vld [vmem:[#allocation2] sm:$0xff]
    %v1258 = vld [vmem:[#allocation2 + $0x8] sm:$0xff]
    %v1259 = vld [vmem:[#allocation2 + $0x10] sm:$0xff]
    %v1260 = vld [vmem:[#allocation2 + $0x18] sm:$0xff]
    %v1261 = vld [vmem:[#allocation2 + $0x20] sm:$0xff]
    %v1262 = vld [vmem:[#allocation2 + $0x28] sm:$0xff]
    %v1263 = vld [vmem:[#allocation2 + $0x30] sm:$0xff]
    %v1264 = vld [vmem:[#allocation2 + $0x38] sm:$0xff]
    %v1265 = vld [vmem:[#allocation2 + $0x40] sm:$0xff]
    %v1266 = vld [vmem:[#allocation2 + $0x48] sm:$0xff]
    %v1267 = vld [vmem:[#allocation2 + $0x50] sm:$0xff]
    %v1268 = vld [vmem:[#allocation2 + $0x58] sm:$0xff]
    %v1269 = vld [vmem:[#allocation2 + $0x60] sm:$0xff]
    %v1270 = vld [vmem:[#allocation2 + $0x68] sm:$0xff]
    %v1271 = vld [vmem:[#allocation2 + $0x70] sm:$0xff]
    %v1272 = vld [vmem:[#allocation2 + $0x78] sm:$0xff]
    %v1273 = vld [vmem:[#allocation2 + $0x80] sm:$0xff]
    %v1274 = vld [vmem:[#allocation2 + $0x88] sm:$0xff]
    %v1275 = vld [vmem:[#allocation2 + $0x90] sm:$0xff]
    %v1276 = vld [vmem:[#allocation2 + $0x98] sm:$0xff]
    %v1277 = vld [vmem:[#allocation2 + $0xa0] sm:$0xff]
    %v1278 = vld [vmem:[#allocation2 + $0xa8] sm:$0x3]
    %v1279 = vld [vmem:[%s2] sm:$0x1]
    %v1281 = vlaneseq
    %v1282 = vshrl.u32 %v1281, 7
    %v1283 = vsub.s32 0, %v1282
    %v1284 = vrot.slane %v1279, %v1283
    %v1286 = vadd.f32 %v1257, %v1284
    %v1287 = vadd.f32 %v1258, %v1284
    %v1288 = vadd.f32 %v1259, %v1284
    %v1289 = vadd.f32 %v1260, %v1284
    %v1290 = vadd.f32 %v1261, %v1284
    %v1291 = vadd.f32 %v1262, %v1284
    %v1292 = vadd.f32 %v1263, %v1284
    %v1293 = vadd.f32 %v1264, %v1284
    %v1294 = vadd.f32 %v1265, %v1284
    %v1295 = vadd.f32 %v1266, %v1284
    %v1296 = vadd.f32 %v1267, %v1284
    %v1297 = vadd.f32 %v1268, %v1284
    %v1298 = vadd.f32 %v1269, %v1284
    %v1299 = vadd.f32 %v1270, %v1284
    %v1300 = vadd.f32 %v1271, %v1284
    %v1301 = vadd.f32 %v1272, %v1284
    %v1302 = vadd.f32 %v1273, %v1284
    %v1303 = vadd.f32 %v1274, %v1284
    %v1304 = vadd.f32 %v1275, %v1284
    %v1305 = vadd.f32 %v1276, %v1284
    %v1306 = vadd.f32 %v1277, %v1284
    %v1307 = vadd.f32 %v1278, %v1284
    %v1308 = vmax.f32 %v1286, 0.0
    %v1309 = vmax.f32 %v1287, 0.0
    %v1310 = vmax.f32 %v1288, 0.0
    %v1311 = vmax.f32 %v1289, 0.0
    %v1312 = vmax.f32 %v1290, 0.0
    %v1313 = vmax.f32 %v1291, 0.0
    %v1314 = vmax.f32 %v1292, 0.0
    %v1315 = vmax.f32 %v1293, 0.0
    %v1316 = vmax.f32 %v1294, 0.0
    %v1317 = vmax.f32 %v1295, 0.0
    %v1318 = vmax.f32 %v1296, 0.0
    %v1319 = vmax.f32 %v1297, 0.0
    %v1320 = vmax.f32 %v1298, 0.0
    %v1321 = vmax.f32 %v1299, 0.0
    %v1322 = vmax.f32 %v1300, 0.0
    %v1323 = vmax.f32 %v1301, 0.0
    %v1324 = vmax.f32 %v1302, 0.0
    %v1325 = vmax.f32 %v1303, 0.0
    %v1326 = vmax.f32 %v1304, 0.0
    %v1327 = vmax.f32 %v1305, 0.0
    %v1328 = vmax.f32 %v1306, 0.0
    %v1329 = vmax.f32 %v1307, 0.0
    %v1330 = vpack.c.bf16 %v1309, %v1308
    %v1331 = vpack.c.bf16 %v1311, %v1310
    %v1332 = vpack.c.bf16 %v1313, %v1312
    %v1333 = vpack.c.bf16 %v1315, %v1314
    %v1334 = vpack.c.bf16 %v1317, %v1316
    %v1335 = vpack.c.bf16 %v1319, %v1318
    %v1336 = vpack.c.bf16 %v1321, %v1320
    %v1337 = vpack.c.bf16 %v1323, %v1322
    %v1338 = vpack.c.bf16 %v1325, %v1324
    %v1339 = vpack.c.bf16 %v1327, %v1326
    %v1340 = vpack.c.bf16 %v1329, %v1328
    %v1352 = vunpack.c.l.b16 %v1330
    %v1353 = vunpack.c.h.b16 %v1330
    %v1354 = vunpack.c.l.b16 %v1331
    %v1355 = vunpack.c.h.b16 %v1331
    %v1356 = vunpack.c.l.b16 %v1332
    %v1357 = vunpack.c.h.b16 %v1332
    %v1358 = vunpack.c.l.b16 %v1333
    %v1359 = vunpack.c.h.b16 %v1333
    %v1360 = vunpack.c.l.b16 %v1334
    %v1361 = vunpack.c.h.b16 %v1334
    %v1362 = vunpack.c.l.b16 %v1335
    %v1363 = vunpack.c.h.b16 %v1335
    %v1364 = vunpack.c.l.b16 %v1336
    %v1365 = vunpack.c.h.b16 %v1336
    %v1366 = vunpack.c.l.b16 %v1337
    %v1367 = vunpack.c.h.b16 %v1337
    %v1368 = vunpack.c.l.b16 %v1338
    %v1369 = vunpack.c.h.b16 %v1338
    %v1370 = vunpack.c.l.b16 %v1339
    %v1371 = vunpack.c.h.b16 %v1339
    %v1372 = vunpack.c.l.b16 %v1340
    %v1373 = vunpack.c.h.b16 %v1340
    %v1374 = vpack.c.b16 %v1352, %v1352
    %v1375 = vpack.c.b16 %v1353, %v1353
    %v1376 = vpack.c.b16 %v1354, %v1354
    %v1377 = vpack.c.b16 %v1355, %v1355
    %v1378 = vpack.c.b16 %v1356, %v1356
    %v1379 = vpack.c.b16 %v1357, %v1357
    %v1380 = vpack.c.b16 %v1358, %v1358
    %v1381 = vpack.c.b16 %v1359, %v1359
    %v1382 = vpack.c.b16 %v1360, %v1360
    %v1383 = vpack.c.b16 %v1361, %v1361
    %v1384 = vpack.c.b16 %v1362, %v1362
    %v1385 = vpack.c.b16 %v1363, %v1363
    %v1386 = vpack.c.b16 %v1364, %v1364
    %v1387 = vpack.c.b16 %v1365, %v1365
    %v1388 = vpack.c.b16 %v1366, %v1366
    %v1389 = vpack.c.b16 %v1367, %v1367
    %v1390 = vpack.c.b16 %v1368, %v1368
    %v1391 = vpack.c.b16 %v1369, %v1369
    %v1392 = vpack.c.b16 %v1370, %v1370
    %v1393 = vpack.c.b16 %v1371, %v1371
    %v1394 = vpack.c.b16 %v1372, %v1372
    %v1395 = vpack.c.b16 %v1373, %v1373
    %vm1418 = vcmask 519168
    %1419 = vst.msk [vmem:[%s3] sm:$0xf] %vm1418, %v1374
    %1420 = vst.msk [vmem:[%s3 + $0x4] sm:$0xf] %vm1418, %v1375
    %1421 = vst.msk [vmem:[%s3 + $0x8] sm:$0xf] %vm1418, %v1376
    %1422 = vst.msk [vmem:[%s3 + $0xc] sm:$0xf] %vm1418, %v1377
    %1423 = vst.msk [vmem:[%s3 + $0x10] sm:$0xf] %vm1418, %v1378
    %1424 = vst.msk [vmem:[%s3 + $0x14] sm:$0xf] %vm1418, %v1379
    %1425 = vst.msk [vmem:[%s3 + $0x18] sm:$0xf] %vm1418, %v1380
    %1426 = vst.msk [vmem:[%s3 + $0x1c] sm:$0xf] %vm1418, %v1381
    %1427 = vst.msk [vmem:[%s3 + $0x20] sm:$0xf] %vm1418, %v1382
    %1428 = vst.msk [vmem:[%s3 + $0x24] sm:$0xf] %vm1418, %v1383
    %1429 = vst.msk [vmem:[%s3 + $0x28] sm:$0xf] %vm1418, %v1384
    %1430 = vst.msk [vmem:[%s3 + $0x2c] sm:$0xf] %vm1418, %v1385
    %1431 = vst.msk [vmem:[%s3 + $0x30] sm:$0xf] %vm1418, %v1386
    %1432 = vst.msk [vmem:[%s3 + $0x34] sm:$0xf] %vm1418, %v1387
    %1433 = vst.msk [vmem:[%s3 + $0x38] sm:$0xf] %vm1418, %v1388
    %1434 = vst.msk [vmem:[%s3 + $0x3c] sm:$0xf] %vm1418, %v1389
    %1435 = vst.msk [vmem:[%s3 + $0x40] sm:$0xf] %vm1418, %v1390
    %1436 = vst.msk [vmem:[%s3 + $0x44] sm:$0xf] %vm1418, %v1391
    %1437 = vst.msk [vmem:[%s3 + $0x48] sm:$0xf] %vm1418, %v1392
    %1438 = vst.msk [vmem:[%s3 + $0x4c] sm:$0xf] %vm1418, %v1393
    %1439 = vst.msk [vmem:[%s3 + $0x50] sm:$0xf] %vm1418, %v1394
    %vm1440 = vcmask 516096
    %1441 = vst.msk [vmem:[%s3 + $0x54] sm:$0x1] %vm1440, %v1395
  $region21: #{forward.22} parent=0 // pred_fallthru
    _
  // Predicated region
  $region22: #{forward.22} parent=0 // pred_check
    _
  $region23: #{forward.22} parent=0 // pred_check_branch
    %1443 = sbr.rel (0) target = $region25
  $region24: #{forward.22} parent=0 // pred_region
    _
  $region25: #{forward.22} parent=0 // pred_fallthru
    _
  // Predicated region
  $region26: #{forward.22} parent=0 // pred_check
    _
  $region27: #{forward.22} parent=0 // pred_check_branch
    %1445 = sbr.rel (0) target = $region29
  $region28: #{forward.22} parent=0 // pred_region
    _
  $region29: #{forward.22} parent=0 // pred_fallthru
    _

// kernel: forward.24
$region0: #{forward.24}
  #allocation0 [shape = 'u32[]', space=smem, size = 0x4, offset = 0x4, fixed_abs, tag = 'smem constant byte address 0x4 - core index']
  #allocation1 [shape = 'u32[144,128]{1,0:T(1,128)}', space=vmem, size = 0x12000, scoped, tag = 'internal scratch']
  #allocation2 [shape = 'f32[32,192]{1,0:T(8,128)}', space=vmem, size = 0x8000, scoped, tag = 'scratch operand']
  %s0 = inlined_call_operand.vmem [shape: bf16[32,64], index: 0, kind: input, shape index: {}]
  %s1 = inlined_call_operand.vmem [shape: bf16[64,192], index: 1, kind: input, shape index: {}]
  %s2 = inlined_call_operand.vmem [shape: f32[1,192], index: 2, kind: input, shape index: {}]
  %s3 = inlined_call_operand.vmem [shape: bf16[32,192], index: 3, kind: output, shape index: {}]
  %s4 = sld [smem:[#allocation0]]
  $region30: #{forward.24} parent=0
    _
  %s6 = ssub.s32 1, %s4
  %s7 = scalar_select 0, %s6, %s4
  // Predicated region
  $region2: #{forward.24} parent=0 // pred_check
    _
  $region3: #{forward.24} parent=0 // pred_check_branch
    %9 = sbr.rel (0) target = $region5
  $region4: #{forward.24} parent=0 // pred_region
    _
  $region5: #{forward.24} parent=0 // pred_fallthru
    _
  // Predicated region
  $region6: #{forward.24} parent=0 // pred_check
    _
  $region7: #{forward.24} parent=0 // pred_check_branch
    %11 = sbr.rel (0) target = $region9
  $region8: #{forward.24} parent=0 // pred_region
    _
  $region9: #{forward.24} parent=0 // pred_fallthru
    _
  // Predicated region
  $region10: #{forward.24} parent=0 // pred_check
    _
  $region11: #{forward.24} parent=0 // pred_check_branch
    %13 = sbr.rel (0) target = $region13
  $region12: #{forward.24} parent=0 // pred_region
    _
  $region13: #{forward.24} parent=0 // pred_fallthru
    _
  %p15 = scmp.eq.s32.totalorder 0, 0
  // Predicated region
  $region14: #{forward.24} parent=0 // pred_check
    %p16 = pneg %p15
  $region15: #{forward.24} parent=0 // pred_check_branch
    %18 = sbr.rel (%p16) target = $region17
  $region16: #{forward.24} parent=0 // pred_region
    %19 = vst [vmem:[#allocation2] sm:$0xff] 0.0
    %vm20 = vcmask 523264
    %21 = vst.msk [vmem:[#allocation2 + $0x8] sm:$0xff] %vm20, 0.0
    %22 = vst [vmem:[#allocation2 + $0x10] sm:$0xff] 0.0
    %23 = vst.msk [vmem:[#allocation2 + $0x18] sm:$0xff] %vm20, 0.0
    %24 = vst [vmem:[#allocation2 + $0x20] sm:$0xff] 0.0
    %25 = vst.msk [vmem:[#allocation2 + $0x28] sm:$0xff] %vm20, 0.0
    %26 = vst [vmem:[#allocation2 + $0x30] sm:$0xff] 0.0
    %27 = vst.msk [vmem:[#allocation2 + $0x38] sm:$0xff] %vm20, 0.0
  $region17: #{forward.24} parent=0 // pred_fallthru
    _
  %v28 = vld [vmem:[#allocation2] sm:$0xff]
  %v29 = vld [vmem:[#allocation2 + $0x8] sm:$0xff]
  %v30 = vld [vmem:[#allocation2 + $0x10] sm:$0xff]
  %v31 = vld [vmem:[#allocation2 + $0x18] sm:$0xff]
  %v32 = vld [vmem:[#allocation2 + $0x20] sm:$0xff]
  %v33 = vld [vmem:[#allocation2 + $0x28] sm:$0xff]
  %v34 = vld [vmem:[#allocation2 + $0x30] sm:$0xff]
  %v35 = vld [vmem:[#allocation2 + $0x38] sm:$0xff]
  %v36 = vld [vmem:[%s0] sm:$0xf]
  %v37 = vld [vmem:[%s0 + $0x4] sm:$0xf]
  %v38 = vld [vmem:[%s0 + $0x8] sm:$0xf]
  %v39 = vld [vmem:[%s0 + $0xc] sm:$0xf]
  %v40 = vld [vmem:[%s1] sm:$0xff]
  %v41 = vld [vmem:[%s1 + $0x8] sm:$0xff]
  %v42 = vld [vmem:[%s1 + $0x10] sm:$0xff]
  %v43 = vld [vmem:[%s1 + $0x18] sm:$0xff]
  %v44 = vld [vmem:[%s1 + $0x20] sm:$0xff]
  %v45 = vld [vmem:[%s1 + $0x28] sm:$0xff]
  %v46 = vld [vmem:[%s1 + $0x30] sm:$0xff]
  %v47 = vld [vmem:[%s1 + $0x38] sm:$0xff]
  %v52 = vunpack.c.l.b16 %v36
  %v53 = vunpack.c.l.b16 %v37
  %v54 = vunpack.c.l.b16 %v38
  %v55 = vunpack.c.l.b16 %v39
  %v56 = vpack.c.b16 %v53, %v52
  %v57 = vpack.c.b16 %v55, %v54
  %v66 = vunpack.c.l.b16 %v40
  %v67 = vunpack.c.h.b16 %v40
  %v68 = vunpack.c.l.b16 %v41
  %v69 = vunpack.c.h.b16 %v41
  %v70 = vunpack.c.l.b16 %v42
  %v71 = vunpack.c.h.b16 %v42
  %v72 = vunpack.c.l.b16 %v43
  %v73 = vunpack.c.h.b16 %v43
  %v74 = vunpack.c.l.b16 %v44
  %v75 = vunpack.c.h.b16 %v44
  %v76 = vunpack.c.l.b16 %v45
  %v77 = vunpack.c.h.b16 %v45
  %v78 = vunpack.c.l.b16 %v46
  %v79 = vunpack.c.h.b16 %v46
  %v80 = vunpack.c.l.b16 %v47
  %v81 = vunpack.c.h.b16 %v47
  %v82 = vpack.c.b16 %v68, %v66
  %v83 = vpack.c.b16 %v69, %v67
  %v84 = vpack.c.b16 %v72, %v70
  %v85 = vpack.c.b16 %v73, %v71
  %v86 = vpack.c.b16 %v76, %v74
  %v87 = vpack.c.b16 %v77, %v75
  %v88 = vpack.c.b16 %v80, %v78
  %v89 = vpack.c.b16 %v81, %v79
  %vm98 = vcmask 523264
  %v100 = vsel %vm98, %v56, 0
  %v103 = vsel %vm98, %v57, 0
  %105 = vmatprep.subr.bf16.mxu0 %v83
  %106 = vmatpush1.bf16.msra.mxu0 %v82
  %107 = vmatprep.subr.bf16.mxu0 %v85
  %108 = vmatpush1.bf16.msra.mxu0 %v84
  %109 = vmatprep.subr.bf16.mxu0 %v87
  %110 = vmatpush1.bf16.msra.mxu0 %v86
  %111 = vmatprep.subr.bf16.mxu0 %v89
  %112 = vmatpush1.bf16.msra.mxu0 %v88
  %113 = vmatprep.subr.bf16.mxu0 0
  %114 = vmatpush1.bf16.msra.mxu0 0
  %115 = vmatprep.subr.bf16.mxu0 0
  %116 = vmatpush1.bf16.msra.mxu0 0
  %117 = vmatprep.subr.bf16.mxu0 0
  %118 = vmatpush1.bf16.msra.mxu0 0
  %119 = vmatprep.subr.bf16.mxu0 0
  %120 = vmatpush1.bf16.msra.mxu0 0
  %121 = vmatprep.subr.bf16.mxu0 0
  %122 = vmatpush1.bf16.msra.mxu0 0
  %123 = vmatprep.subr.bf16.mxu0 0
  %124 = vmatpush1.bf16.msra.mxu0 0
  %125 = vmatprep.subr.bf16.mxu0 0
  %126 = vmatpush1.bf16.msra.mxu0 0
  %127 = vmatprep.subr.bf16.mxu0 0
  %128 = vmatpush1.bf16.msra.mxu0 0
  %129 = vmatprep.subr.bf16.mxu0 0
  %130 = vmatpush1.bf16.msra.mxu0 0
  %131 = vmatprep.subr.bf16.mxu0 0
  %132 = vmatpush1.bf16.msra.mxu0 0
  %133 = vmatprep.subr.bf16.mxu0 0
  %134 = vmatpush1.bf16.msra.mxu0 0
  %135 = vmatprep.subr.bf16.mxu0 0
  %136 = vmatpush1.bf16.msra.mxu0 0
  %137 = vmatprep.mubr.bf16.mxu0 0
  %138 = vmatmul.mubr.bf16.gmra.mrb[0].mxu0 %v100
  %v139 = vpop.f32.mrb[0].mxu0
  %v140 = vadd.f32 0.0, %v139
  %v141 = vpop.f32.mrb[0].mxu0
  %v142 = vadd.f32 0.0, %v141
  %v143 = vpop.f32.mrb[0].mxu0
  %v144 = vadd.f32 0.0, %v143
  %v145 = vpop.f32.mrb[0].mxu0
  %v146 = vadd.f32 0.0, %v145
  %147 = vmatprep.mubr.bf16.mxu0 0
  %148 = vmatmul.mubr.bf16.gmra.mrb[0].mxu0 %v103
  %v149 = vpop.f32.mrb[0].mxu0
  %v150 = vadd.f32 0.0, %v149
  %v151 = vpop.f32.mrb[0].mxu0
  %v152 = vadd.f32 0.0, %v151
  %v153 = vpop.f32.mrb[0].mxu0
  %v154 = vadd.f32 0.0, %v153
  %v155 = vpop.f32.mrb[0].mxu0
  %v156 = vadd.f32 0.0, %v155
  %157 = vdwg.mxu0
  %v158 = vadd.f32 %v28, %v140
  %v159 = vadd.f32 %v29, %v142
  %v160 = vadd.f32 %v30, %v144
  %v161 = vadd.f32 %v31, %v146
  %v162 = vadd.f32 %v32, %v150
  %v163 = vadd.f32 %v33, %v152
  %v164 = vadd.f32 %v34, %v154
  %v165 = vadd.f32 %v35, %v156
  %166 = vst [vmem:[#allocation2] sm:$0xff] %v158
  %167 = vst.msk [vmem:[#allocation2 + $0x8] sm:$0xff] %vm98, %v159
  %168 = vst [vmem:[#allocation2 + $0x10] sm:$0xff] %v160
  %169 = vst.msk [vmem:[#allocation2 + $0x18] sm:$0xff] %vm98, %v161
  %170 = vst [vmem:[#allocation2 + $0x20] sm:$0xff] %v162
  %171 = vst.msk [vmem:[#allocation2 + $0x28] sm:$0xff] %vm98, %v163
  %172 = vst [vmem:[#allocation2 + $0x30] sm:$0xff] %v164
  %173 = vst.msk [vmem:[#allocation2 + $0x38] sm:$0xff] %vm98, %v165
  // Predicated region
  $region18: #{forward.24} parent=0 // pred_check
    %p174 = pneg %p15
  $region19: #{forward.24} parent=0 // pred_check_branch
    %176 = sbr.rel (%p174) target = $region21
  $region20: #{forward.24} parent=0 // pred_region
    %v177 = vld [vmem:[#allocation2] sm:$0xff]
    %v178 = vld [vmem:[#allocation2 + $0x8] sm:$0xff]
    %v179 = vld [vmem:[#allocation2 + $0x10] sm:$0xff]
    %v180 = vld [vmem:[#allocation2 + $0x18] sm:$0xff]
    %v181 = vld [vmem:[#allocation2 + $0x20] sm:$0xff]
    %v182 = vld [vmem:[#allocation2 + $0x28] sm:$0xff]
    %v183 = vld [vmem:[#allocation2 + $0x30] sm:$0xff]
    %v184 = vld [vmem:[#allocation2 + $0x38] sm:$0xff]
    %v185 = vld [vmem:[%s2] sm:$0x3]
    %v187 = vlaneseq
    %v188 = vshrl.u32 %v187, 7
    %v189 = vsub.s32 0, %v188
    %v190 = vrot.slane %v185, %v189
    %v191 = vlaneseq
    %v192 = vshrl.u32 %v191, 7
    %v193 = vsub.s32 1, %v192
    %v194 = vrot.slane %v185, %v193
    %v197 = vadd.f32 %v177, %v190
    %v198 = vadd.f32 %v178, %v194
    %v199 = vadd.f32 %v179, %v190
    %v200 = vadd.f32 %v180, %v194
    %v201 = vadd.f32 %v181, %v190
    %v202 = vadd.f32 %v182, %v194
    %v203 = vadd.f32 %v183, %v190
    %v204 = vadd.f32 %v184, %v194
    %v205 = vpack.c.bf16 %v199, %v197
    %v206 = vpack.c.bf16 %v200, %v198
    %v207 = vpack.c.bf16 %v203, %v201
    %v208 = vpack.c.bf16 %v204, %v202
    %v213 = vunpack.c.l.b16 %v205
    %v214 = vunpack.c.l.b16 %v206
    %v215 = vunpack.c.h.b16 %v205
    %v216 = vunpack.c.h.b16 %v206
    %v217 = vunpack.c.l.b16 %v207
    %v218 = vunpack.c.l.b16 %v208
    %v219 = vunpack.c.h.b16 %v207
    %v220 = vunpack.c.h.b16 %v208
    %v221 = vpack.c.b16 %v214, %v213
    %v222 = vpack.c.b16 %v216, %v215
    %v223 = vpack.c.b16 %v218, %v217
    %v224 = vpack.c.b16 %v220, %v219
    %vm229 = vcmask 1043456
    %vm230 = vcmask 523268
    %vm231 = vmor %vm230, %vm229
    %232 = vst.msk [vmem:[%s3] sm:$0xff] %vm231, %v221
    %233 = vst.msk [vmem:[%s3 + $0x8] sm:$0xff] %vm231, %v222
    %234 = vst.msk [vmem:[%s3 + $0x10] sm:$0xff] %vm231, %v223
    %235 = vst.msk [vmem:[%s3 + $0x18] sm:$0xff] %vm231, %v224
  $region21: #{forward.24} parent=0 // pred_fallthru
    _
  // Predicated region
  $region22: #{forward.24} parent=0 // pred_check
    _
  $region23: #{forward.24} parent=0 // pred_check_branch
    %237 = sbr.rel (0) target = $region25
  $region24: #{forward.24} parent=0 // pred_region
    _
  $region25: #{forward.24} parent=0 // pred_fallthru
    _
  // Predicated region
  $region26: #{forward.24} parent=0 // pred_check
    _
  $region27: #{forward.24} parent=0 // pred_check_branch
    %239 = sbr.rel (0) target = $region29
  $region28: #{forward.24} parent=0 // pred_region
    _
  $region29: #{forward.24} parent=0 // pred_fallthru
    _

// kernel: forward.25
$region0: #{forward.25}
  #allocation0 [shape = 'u32[]', space=smem, size = 0x4, offset = 0x4, fixed_abs, tag = 'smem constant byte address 0x4 - core index']
  #allocation1 [shape = 'u32[144,128]{1,0:T(1,128)}', space=vmem, size = 0x12000, scoped, tag = 'internal scratch']
  %s0 = inlined_call_operand.vmem [shape: bf16[2,16,192], index: 0, kind: input, shape index: {}]
  %s1 = inlined_call_operand.vmem [shape: bf16[2,16,64], index: 1, kind: output, shape index: {}]
  %s2 = sld [smem:[#allocation0]]
  $region37: #{forward.25} parent=0
    _
  %s4 = ssub.s32 1, %s2
  %s5 = scalar_select 0, %s4, %s2
  loop: start=0, step=1, limit=4
  $region2: #{forward.25} parent=0 // loop_pre_header
    _
  $region3: #{forward.25} parent=0 // loop_header
    %s7 = sphi 0, %s11
    %p8 = scmp.ge.s32.totalorder %s7, 4
    %s17 = sphi 0, %s19
    %s20 = sphi 0, %s17
    %s21 = sphi 0, %s20
    %s37 = sphi 0, %s21
    %s43 = sphi 0, %s45
    %s46 = sphi 0, %s43
    %s47 = sphi 0, %s46
    %s63 = sphi 0, %s47
  $region4: #{forward.25} parent=0 // loop_header_branch
    %10 = sbr.rel (%p8) target = $region8
  $region5: #{forward.25} parent=0 // loop_body
    %s12 = ssub.s32 %s7, 1
    %s13 = ssub.s32 %s7, 2
    %s14 = sadd.s32 %s7, 1
    %s15 = ssub.s32 %s7, %s14
    %p16 = scmp.eq.s32.totalorder %s15, 0
    %s18 = sadd.s32 %s17, 1
    %s19 = scalar_select %p16, %s17, %s18
    %p22 = pneg %p16
    %p23 = scmp.eq.s32.totalorder %s7, 1
    %p24 = por %p22, %p23
    %p25 = scmp.ne.s32.totalorder %s17, %s20
    %p26 = scmp.eq.s32.totalorder %s7, 0
    %p27 = por %p25, %p26
    %p28 = scmp.ne.s32.totalorder %s17, %s20
    %p29 = scmp.eq.s32.totalorder %s12, 1
    %p30 = por %p28, %p29
    %p31 = scmp.ne.s32.totalorder %s20, %s21
    %p32 = scmp.eq.s32.totalorder %s12, 0
    %p33 = por %p31, %p32
    %p34 = scmp.ne.s32.totalorder %s20, %s21
    %p35 = scmp.eq.s32.totalorder %s13, 1
    %p36 = por %p34, %p35
    %p38 = scmp.ne.s32.totalorder %s21, %s37
    %p39 = scmp.eq.s32.totalorder %s13, 0
    %p40 = por %p38, %p39
    %s41 = ssub.s32 %s7, %s14
    %p42 = scmp.eq.s32.totalorder %s41, 0
    %s44 = sadd.s32 %s43, 1
    %s45 = scalar_select %p42, %s43, %s44
    %p48 = pneg %p42
    %p49 = scmp.eq.s32.totalorder %s7, 1
    %p50 = por %p48, %p49
    %p51 = scmp.ne.s32.totalorder %s43, %s46
    %p52 = scmp.eq.s32.totalorder %s7, 0
    %p53 = por %p51, %p52
    %p54 = scmp.ne.s32.totalorder %s43, %s46
    %p55 = scmp.eq.s32.totalorder %s12, 1
    %p56 = por %p54, %p55
    %p57 = scmp.ne.s32.totalorder %s46, %s47
    %p58 = scmp.eq.s32.totalorder %s12, 0
    %p59 = por %p57, %p58
    %p60 = scmp.ne.s32.totalorder %s46, %s47
    %p61 = scmp.eq.s32.totalorder %s13, 1
    %p62 = por %p60, %p61
    %p64 = scmp.ne.s32.totalorder %s47, %s63
    %p65 = scmp.eq.s32.totalorder %s13, 0
    %p66 = por %p64, %p65
    %p67 = scmp.le.s32.totalorder 1, %s7
    %p68 = scmp.lt.s32.totalorder %s7, 3
    %p69 = pnand %p67, %p68
    %p70 = pneg %p69
    // Predicated region
    $region9: #{forward.25} parent=5 // pred_check
      _
    $region10: #{forward.25} parent=5 // pred_check_branch
      %72 = sbr.rel (%p69) target = $region12
    $region11: #{forward.25} parent=5 // pred_region
      %s73 = ssub.s32 %s7, 1
    $region12: #{forward.25} parent=5 // pred_fallthru
      _
    %p74 = scmp.lt.s32.totalorder %s7, 2
    // Predicated region
    $region13: #{forward.25} parent=5 // pred_check
      %p75 = pneg %p74
    $region14: #{forward.25} parent=5 // pred_check_branch
      %77 = sbr.rel (%p75) target = $region16
    $region15: #{forward.25} parent=5 // pred_region
      // Predicated region
      $region17: #{forward.25} parent=15 // pred_check
        %p78 = pneg %p27
      $region18: #{forward.25} parent=15 // pred_check_branch
        %80 = sbr.rel (%p78) target = $region20
      $region19: #{forward.25} parent=15 // pred_region
        %p81 = scmp.lt.s32.totalorder %s7, 1
        %s82 = scalar_select %p81, %s7, 1
        %s83 = smul.addr %s82, 4
        %s84 = smul.addr %s83, 4
        %s85 = scalar_lea.vmem %s0, %s84
      $region20: #{forward.25} parent=15 // pred_fallthru
        _
    $region16: #{forward.25} parent=5 // pred_fallthru
      _
    %p86 = scmp.le.s32.totalorder 1, %s7
    %p87 = scmp.lt.s32.totalorder %s7, 3
    %p88 = pnand %p86, %p87
    %p89 = pneg %p88
    // Predicated region
    $region21: #{forward.25} parent=5 // pred_check
      _
    $region22: #{forward.25} parent=5 // pred_check_branch
      %91 = sbr.rel (%p88) target = $region24
    $region23: #{forward.25} parent=5 // pred_region
      %s92 = ssub.s32 %s7, 1
      %p93 = scmp.lt.s32.totalorder %s12, 1
      %s94 = scalar_select %p93, %s12, 1
      %s95 = smul.addr %s94, 4
      %s96 = smul.addr %s95, 4
      %s97 = scalar_lea.vmem %s0, %s96
      %p98 = pneg %p33
      %p99 = pneg %p30
      %p100 = pneg %p59
      %p101 = pneg %p56
      %p102 = scmp.lt.s32.totalorder %s12, 1
      %s103 = scalar_select %p102, %s12, 1
      %s104 = smul.addr %s103, 2
      %s105 = smul.addr %s104, 4
      %s106 = scalar_lea.vmem %s1, %s105
      %p107 = scmp.lt.s32.totalorder %s12, 1
      %s108 = scalar_select %p107, %s12, 1
      %s109 = smul.addr %s108, 4
      %s110 = smul.addr %s109, 4
      %s111 = scalar_lea.vmem %s0, %s110
      %p112 = scmp.lt.s32.totalorder %s12, 1
      %s113 = scalar_select %p112, %s12, 1
      %s114 = smul.addr %s113, 2
      %s115 = smul.addr %s114, 4
      %s116 = scalar_lea.vmem %s1, %s115
      %v118 = vld [vmem:[%s111] sm:$0xff]
      %v119 = vld [vmem:[%s111 + $0x8] sm:$0xff]
      %v122 = vunpack.c.l.b16 %v118
      %v123 = vunpack.c.l.b16 %v119
      %v124 = vpack.c.b16 %v123, %v122
      %125 = vrot.lane.b32.xlu0 %v124, 64
      %v126 = vpop.permute.xlu0 %125
      %vm127 = vcmask 261120
      %v129 = vsel %vm127, %v124, 0
      %v132 = vsel %vm127, %v126, 0
      %134 = vmatprep.subr.bf16.mxu0 0
      %135 = vmatpush1.bf16.xpose.msra.mxu0 %v132
      %136 = vmatprep.subr.bf16.mxu0 0
      %137 = vmatpush1.bf16.xpose.msra.mxu0 0
      %138 = vmatprep.subr.bf16.mxu0 0
      %139 = vmatpush1.bf16.xpose.msra.mxu0 0
      %140 = vmatprep.subr.bf16.mxu0 0
      %141 = vmatpush1.bf16.xpose.msra.mxu0 0
      %142 = vmatprep.subr.bf16.mxu0 0
      %143 = vmatpush1.bf16.xpose.msra.mxu0 0
      %144 = vmatprep.subr.bf16.mxu0 0
      %145 = vmatpush1.bf16.xpose.msra.mxu0 0
      %146 = vmatprep.subr.bf16.mxu0 0
      %147 = vmatpush1.bf16.xpose.msra.mxu0 0
      %148 = vmatprep.subr.bf16.mxu0 0
      %149 = vmatpush1.bf16.xpose.msra.mxu0 0
      %150 = vmatprep.subr.bf16.mxu0 0
      %151 = vmatpush1.bf16.xpose.msra.mxu0 0
      %152 = vmatprep.subr.bf16.mxu0 0
      %153 = vmatpush1.bf16.xpose.msra.mxu0 0
      %154 = vmatprep.subr.bf16.mxu0 0
      %155 = vmatpush1.bf16.xpose.msra.mxu0 0
      %156 = vmatprep.subr.bf16.mxu0 0
      %157 = vmatpush1.bf16.xpose.msra.mxu0 0
      %158 = vmatprep.subr.bf16.mxu0 0
      %159 = vmatpush1.bf16.xpose.msra.mxu0 0
      %160 = vmatprep.subr.bf16.mxu0 0
      %161 = vmatpush1.bf16.xpose.msra.mxu0 0
      %162 = vmatprep.subr.bf16.mxu0 0
      %163 = vmatpush1.bf16.xpose.msra.mxu0 0
      %164 = vmatprep.subr.bf16.mxu0 0
      %165 = vmatpush1.bf16.xpose.msra.mxu0 0
      %166 = vmatprep.mubr.bf16.mxu0 0
      %167 = vmatmul.mubr.bf16.gmra.mrb[0].mxu0 %v129
      %v168 = vpop.f32.mrb[0].mxu0
      %v169 = vadd.f32 0.0, %v168
      %v170 = vpop.f32.mrb[0].mxu0
      %v171 = vpop.f32.mrb[0].mxu0
      %v172 = vadd.f32 0.0, %v171
      %v173 = vpop.f32.mrb[0].mxu0
      %174 = vdwg.mxu0
      %v175 = vmul.f32 %v169, 0.17677669
      %v176 = vmul.f32 %v172, 0.17677669
      %vm177 = vcmask 130048
      %v178 = vsel %vm177, %v175, -inf
      %179 = vmax.xlane.f32.xlu0 %v178
      %v180 = vpop.xlane.xlu0 %179
      %v181 = vsel %vm177, %v176, -inf
      %182 = vmax.xlane.f32.xlu0 %v181
      %v183 = vpop.xlane.xlu0 %182
      %v184 = vsub.f32 %v175, %v180
      %v185 = vsub.f32 %v176, %v183
      %v186 = vmul.f32 %v184, 1.442695
      %v187 = vpow.pop %v186
      %v188 = vmul.f32 %v185, 1.442695
      %v189 = vpow.pop %v188
      %v190 = vsel %vm177, %v187, 0.0
      %191 = vadd.xlane.f32.xlu0 %v190
      %v192 = vpop.xlane.xlu0 %191
      %v193 = vsel %vm177, %v189, 0.0
      %194 = vadd.xlane.f32.xlu0 %v193
      %v195 = vpop.xlane.xlu0 %194
      %v196 = vrcp.pop %v192
      %v197 = vrcp.pop %v195
      %v198 = vmul.f32 %v187, %v196
      %v199 = vmul.f32 %v189, %v197
      %v200 = vpack.c.bf16 %v199, %v198
      %v201 = vunpack.c.h.b16 %v118
      %v202 = vunpack.c.h.b16 %v119
      %v203 = vpack.c.b16 %v202, %v201
      %v206 = vsel %vm177, %v200, 0
      %208 = vmatprep.subr.bf16.mxu0 0
      %209 = vmatpush1.bf16.msra.mxu0 %v203
      %210 = vmatprep.subr.bf16.mxu0 0
      %211 = vmatpush1.bf16.msra.mxu0 0
      %212 = vmatprep.subr.bf16.mxu0 0
      %213 = vmatpush1.bf16.msra.mxu0 0
      %214 = vmatprep.subr.bf16.mxu0 0
      %215 = vmatpush1.bf16.msra.mxu0 0
      %216 = vmatprep.subr.bf16.mxu0 0
      %217 = vmatpush1.bf16.msra.mxu0 0
      %218 = vmatprep.subr.bf16.mxu0 0
      %219 = vmatpush1.bf16.msra.mxu0 0
      %220 = vmatprep.subr.bf16.mxu0 0
      %221 = vmatpush1.bf16.msra.mxu0 0
      %222 = vmatprep.subr.bf16.mxu0 0
      %223 = vmatpush1.bf16.msra.mxu0 0
      %224 = vmatprep.subr.bf16.mxu0 0
      %225 = vmatpush1.bf16.msra.mxu0 0
      %226 = vmatprep.subr.bf16.mxu0 0
      %227 = vmatpush1.bf16.msra.mxu0 0
      %228 = vmatprep.subr.bf16.mxu0 0
      %229 = vmatpush1.bf16.msra.mxu0 0
      %230 = vmatprep.subr.bf16.mxu0 0
      %231 = vmatpush1.bf16.msra.mxu0 0
      %232 = vmatprep.subr.bf16.mxu0 0
      %233 = vmatpush1.bf16.msra.mxu0 0
      %234 = vmatprep.subr.bf16.mxu0 0
      %235 = vmatpush1.bf16.msra.mxu0 0
      %236 = vmatprep.subr.bf16.mxu0 0
      %237 = vmatpush1.bf16.msra.mxu0 0
      %238 = vmatprep.subr.bf16.mxu0 0
      %239 = vmatpush1.bf16.msra.mxu0 0
      %240 = vmatprep.mubr.bf16.mxu0 0
      %241 = vmatmul.mubr.bf16.gmra.mrb[0].mxu0 %v206
      %v242 = vpop.f32.mrb[0].mxu0
      %v243 = vadd.f32 0.0, %v242
      %v244 = vpop.f32.mrb[0].mxu0
      %v245 = vpop.f32.mrb[0].mxu0
      %v246 = vadd.f32 0.0, %v245
      %v247 = vpop.f32.mrb[0].mxu0
      %248 = vdwg.mxu0
      %249 = vrot.lane.b32.xlu0 %v124, 96
      %v250 = vpop.permute.xlu0 %249
      %251 = vrot.lane.b32.xlu0 %v124, 32
      %v252 = vpop.permute.xlu0 %251
      %v254 = vsel %vm127, %v250, 0
      %v257 = vsel %vm127, %v252, 0
      %259 = vmatprep.subr.bf16.mxu0 0
      %260 = vmatpush1.bf16.xpose.msra.mxu0 %v257
      %261 = vmatprep.subr.bf16.mxu0 0
      %262 = vmatpush1.bf16.xpose.msra.mxu0 0
      %263 = vmatprep.subr.bf16.mxu0 0
      %264 = vmatpush1.bf16.xpose.msra.mxu0 0
      %265 = vmatprep.subr.bf16.mxu0 0
      %266 = vmatpush1.bf16.xpose.msra.mxu0 0
      %267 = vmatprep.subr.bf16.mxu0 0
      %268 = vmatpush1.bf16.xpose.msra.mxu0 0
      %269 = vmatprep.subr.bf16.mxu0 0
      %270 = vmatpush1.bf16.xpose.msra.mxu0 0
      %271 = vmatprep.subr.bf16.mxu0 0
      %272 = vmatpush1.bf16.xpose.msra.mxu0 0
      %273 = vmatprep.subr.bf16.mxu0 0
      %274 = vmatpush1.bf16.xpose.msra.mxu0 0
      %275 = vmatprep.subr.bf16.mxu0 0
      %276 = vmatpush1.bf16.xpose.msra.mxu0 0
      %277 = vmatprep.subr.bf16.mxu0 0
      %278 = vmatpush1.bf16.xpose.msra.mxu0 0
      %279 = vmatprep.subr.bf16.mxu0 0
      %280 = vmatpush1.bf16.xpose.msra.mxu0 0
      %281 = vmatprep.subr.bf16.mxu0 0
      %282 = vmatpush1.bf16.xpose.msra.mxu0 0
      %283 = vmatprep.subr.bf16.mxu0 0
      %284 = vmatpush1.bf16.xpose.msra.mxu0 0
      %285 = vmatprep.subr.bf16.mxu0 0
      %286 = vmatpush1.bf16.xpose.msra.mxu0 0
      %287 = vmatprep.subr.bf16.mxu0 0
      %288 = vmatpush1.bf16.xpose.msra.mxu0 0
      %289 = vmatprep.subr.bf16.mxu0 0
      %290 = vmatpush1.bf16.xpose.msra.mxu0 0
      %291 = vmatprep.mubr.bf16.mxu0 0
      %292 = vmatmul.mubr.bf16.gmra.mrb[0].mxu0 %v254
      %v293 = vpop.f32.mrb[0].mxu0
      %v294 = vadd.f32 0.0, %v293
      %v295 = vpop.f32.mrb[0].mxu0
      %v296 = vpop.f32.mrb[0].mxu0
      %v297 = vadd.f32 0.0, %v296
      %v298 = vpop.f32.mrb[0].mxu0
      %299 = vdwg.mxu0
      %v300 = vmul.f32 %v294, 0.17677669
      %v301 = vmul.f32 %v297, 0.17677669
      %v302 = vsel %vm177, %v300, -inf
      %303 = vmax.xlane.f32.xlu0 %v302
      %v304 = vpop.xlane.xlu0 %303
      %v305 = vsel %vm177, %v301, -inf
      %306 = vmax.xlane.f32.xlu0 %v305
      %v307 = vpop.xlane.xlu0 %306
      %v308 = vsub.f32 %v300, %v304
      %v309 = vsub.f32 %v301, %v307
      %v310 = vmul.f32 %v308, 1.442695
      %v311 = vpow.pop %v310
      %v312 = vmul.f32 %v309, 1.442695
      %v313 = vpow.pop %v312
      %v314 = vsel %vm177, %v311, 0.0
      %315 = vadd.xlane.f32.xlu0 %v314
      %v316 = vpop.xlane.xlu0 %315
      %v317 = vsel %vm177, %v313, 0.0
      %318 = vadd.xlane.f32.xlu0 %v317
      %v319 = vpop.xlane.xlu0 %318
      %v320 = vrcp.pop %v316
      %v321 = vrcp.pop %v319
      %v322 = vmul.f32 %v311, %v320
      %v323 = vmul.f32 %v313, %v321
      %v324 = vpack.c.bf16 %v323, %v322
      %325 = vrot.lane.b32.xlu0 %v203, 96
      %v326 = vpop.permute.xlu0 %325
      %v329 = vsel %vm177, %v324, 0
      %331 = vmatprep.subr.bf16.mxu0 0
      %332 = vmatpush1.bf16.msra.mxu0 %v326
      %333 = vmatprep.subr.bf16.mxu0 0
      %334 = vmatpush1.bf16.msra.mxu0 0
      %335 = vmatprep.subr.bf16.mxu0 0
      %336 = vmatpush1.bf16.msra.mxu0 0
      %337 = vmatprep.subr.bf16.mxu0 0
      %338 = vmatpush1.bf16.msra.mxu0 0
      %339 = vmatprep.subr.bf16.mxu0 0
      %340 = vmatpush1.bf16.msra.mxu0 0
      %341 = vmatprep.subr.bf16.mxu0 0
      %342 = vmatpush1.bf16.msra.mxu0 0
      %343 = vmatprep.subr.bf16.mxu0 0
      %344 = vmatpush1.bf16.msra.mxu0 0
      %345 = vmatprep.subr.bf16.mxu0 0
      %346 = vmatpush1.bf16.msra.mxu0 0
      %347 = vmatprep.subr.bf16.mxu0 0
      %348 = vmatpush1.bf16.msra.mxu0 0
      %349 = vmatprep.subr.bf16.mxu0 0
      %350 = vmatpush1.bf16.msra.mxu0 0
      %351 = vmatprep.subr.bf16.mxu0 0
      %352 = vmatpush1.bf16.msra.mxu0 0
      %353 = vmatprep.subr.bf16.mxu0 0
      %354 = vmatpush1.bf16.msra.mxu0 0
      %355 = vmatprep.subr.bf16.mxu0 0
      %356 = vmatpush1.bf16.msra.mxu0 0
      %357 = vmatprep.subr.bf16.mxu0 0
      %358 = vmatpush1.bf16.msra.mxu0 0
      %359 = vmatprep.subr.bf16.mxu0 0
      %360 = vmatpush1.bf16.msra.mxu0 0
      %361 = vmatprep.subr.bf16.mxu0 0
      %362 = vmatpush1.bf16.msra.mxu0 0
      %363 = vmatprep.mubr.bf16.mxu0 0
      %364 = vmatmul.mubr.bf16.gmra.mrb[0].mxu0 %v329
      %v365 = vpop.f32.mrb[0].mxu0
      %v366 = vadd.f32 0.0, %v365
      %v367 = vpop.f32.mrb[0].mxu0
      %v368 = vpop.f32.mrb[0].mxu0
      %v369 = vadd.f32 0.0, %v368
      %v370 = vpop.f32.mrb[0].mxu0
      %371 = vdwg.mxu0
      %374 = vrot.lane.b32.xlu0 %v366, 32
      %v375 = vpop.permute.xlu0 %374
      %376 = vrot.lane.b32.xlu0 %v369, 32
      %v377 = vpop.permute.xlu0 %376
      %v380 = vsel %vm127, %v243, %v375
      %v381 = vsel %vm127, %v246, %v377
      %v382 = vpack.c.bf16 %v381, %v380
      %v384 = vunpack.c.l.b16 %v382
      %v385 = vunpack.c.h.b16 %v382
      %v386 = vpack.c.b16 %v384, %v384
      %v387 = vpack.c.b16 %v385, %v385
      %vm390 = vcmask 519168
      %391 = vst.msk [vmem:[%s116] sm:$0xf] %vm390, %v386
      %392 = vst.msk [vmem:[%s116 + $0x4] sm:$0xf] %vm390, %v387
      %p393 = scmp.lt.s32.totalorder %s12, 1
      %s394 = scalar_select %p393, %s12, 1
      %s395 = smul.addr %s394, 2
      %s396 = smul.addr %s395, 4
      %s397 = scalar_lea.vmem %s1, %s396
      // Predicated region
      $region25: #{forward.25} parent=23 // pred_check
        %p398 = pneg %p56
      $region26: #{forward.25} parent=23 // pred_check_branch
        %400 = sbr.rel (%p398) target = $region28
      $region27: #{forward.25} parent=23 // pred_region
        _
      $region28: #{forward.25} parent=23 // pred_fallthru
        _
    $region24: #{forward.25} parent=5 // pred_fallthru
      _
    %p401 = scmp.le.s32.totalorder 2, %s7
    // Predicated region
    $region29: #{forward.25} parent=5 // pred_check
      %p402 = pneg %p401
    $region30: #{forward.25} parent=5 // pred_check_branch
      %404 = sbr.rel (%p402) target = $region32
    $region31: #{forward.25} parent=5 // pred_region
      %s405 = ssub.s32 %s7, 2
      // Predicated region
      $region33: #{forward.25} parent=31 // pred_check
        %p406 = pneg %p62
      $region34: #{forward.25} parent=31 // pred_check_branch
        %408 = sbr.rel (%p406) target = $region36
      $region35: #{forward.25} parent=31 // pred_region
        %p409 = scmp.lt.s32.totalorder %s13, 1
        %s410 = scalar_select %p409, %s13, 1
        %s411 = smul.addr %s410, 2
        %s412 = smul.addr %s411, 4
        %s413 = scalar_lea.vmem %s1, %s412
      $region36: #{forward.25} parent=31 // pred_fallthru
        _
    $region32: #{forward.25} parent=5 // pred_fallthru
      _
  $region6: #{forward.25} parent=0 // loop_footer
    %s11 = sadd.s32 1, %s7
  $region7: #{forward.25} parent=0 // loop_footer_branch
    %6 = sbr.rel target = $region3
  $region8: #{forward.25} parent=0 // loop_exit
    _

// kernel: forward.23
$region0: #{forward.23}
  #allocation0 [shape = 'u32[]', space=smem, size = 0x4, offset = 0x4, fixed_abs, tag = 'smem constant byte address 0x4 - core index']
  #allocation1 [shape = 'u32[144,128]{1,0:T(1,128)}', space=vmem, size = 0x12000, scoped, tag = 'internal scratch']
  %s0 = inlined_call_operand.vmem [shape: f32[32,64], index: 0, kind: input, shape index: {}]
  %s1 = inlined_call_operand.vmem [shape: f32[1,64], index: 1, kind: input, shape index: {}]
  %s2 = inlined_call_operand.vmem [shape: f32[1,64], index: 2, kind: input, shape index: {}]
  %s3 = inlined_call_operand.vmem [shape: f32[32,64], index: 3, kind: output, shape index: {}]
  %s4 = sld [smem:[#allocation0]]
  $region22: #{forward.23} parent=0
    _
  %s6 = ssub.s32 1, %s4
  %s7 = scalar_select 0, %s6, %s4
  // Predicated region
  $region2: #{forward.23} parent=0 // pred_check
    _
  $region3: #{forward.23} parent=0 // pred_check_branch
    %9 = sbr.rel (0) target = $region5
  $region4: #{forward.23} parent=0 // pred_region
    _
  $region5: #{forward.23} parent=0 // pred_fallthru
    _
  // Predicated region
  $region6: #{forward.23} parent=0 // pred_check
    _
  $region7: #{forward.23} parent=0 // pred_check_branch
    %11 = sbr.rel (0) target = $region9
  $region8: #{forward.23} parent=0 // pred_region
    _
  $region9: #{forward.23} parent=0 // pred_fallthru
    _
  // Predicated region
  $region10: #{forward.23} parent=0 // pred_check
    _
  $region11: #{forward.23} parent=0 // pred_check_branch
    %13 = sbr.rel (0) target = $region13
  $region12: #{forward.23} parent=0 // pred_region
    _
  $region13: #{forward.23} parent=0 // pred_fallthru
    _
  %v14 = vld [vmem:[%s0] sm:$0xff]
  %v15 = vld [vmem:[%s0 + $0x8] sm:$0xff]
  %v16 = vld [vmem:[%s0 + $0x10] sm:$0xff]
  %v17 = vld [vmem:[%s0 + $0x18] sm:$0xff]
  %vm18 = vcmask 523264
  %v19 = vsel %vm18, %v14, 0.0
  %20 = vadd.xlane.f32.xlu0 %v19
  %v21 = vpop.xlane.xlu0 %20
  %v22 = vsel %vm18, %v15, 0.0
  %23 = vadd.xlane.f32.xlu0 %v22
  %v24 = vpop.xlane.xlu0 %23
  %v25 = vsel %vm18, %v16, 0.0
  %26 = vadd.xlane.f32.xlu0 %v25
  %v27 = vpop.xlane.xlu0 %26
  %v28 = vsel %vm18, %v17, 0.0
  %29 = vadd.xlane.f32.xlu0 %v28
  %v30 = vpop.xlane.xlu0 %29
  %v31 = vrcp.pop 64.0
  %v32 = vmul.f32 %v21, %v31
  %v33 = vmul.f32 %v24, %v31
  %v34 = vmul.f32 %v27, %v31
  %v35 = vmul.f32 %v30, %v31
  %v36 = vsub.f32 %v14, %v32
  %v37 = vsub.f32 %v15, %v33
  %v38 = vsub.f32 %v16, %v34
  %v39 = vsub.f32 %v17, %v35
  %v40 = vmul.f32 %v36, %v36
  %v41 = vmul.f32 %v37, %v37
  %v42 = vmul.f32 %v38, %v38
  %v43 = vmul.f32 %v39, %v39
  %v44 = vsel %vm18, %v40, 0.0
  %45 = vadd.xlane.f32.xlu0 %v44
  %v46 = vpop.xlane.xlu0 %45
  %v47 = vsel %vm18, %v41, 0.0
  %48 = vadd.xlane.f32.xlu0 %v47
  %v49 = vpop.xlane.xlu0 %48
  %v50 = vsel %vm18, %v42, 0.0
  %51 = vadd.xlane.f32.xlu0 %v50
  %v52 = vpop.xlane.xlu0 %51
  %v53 = vsel %vm18, %v43, 0.0
  %54 = vadd.xlane.f32.xlu0 %v53
  %v55 = vpop.xlane.xlu0 %54
  %v56 = vmul.f32 %v46, %v31
  %v57 = vmul.f32 %v49, %v31
  %v58 = vmul.f32 %v52, %v31
  %v59 = vmul.f32 %v55, %v31
  %v60 = vadd.f32 %v56, 1e-05
  %v61 = vadd.f32 %v57, 1e-05
  %v62 = vadd.f32 %v58, 1e-05
  %v63 = vadd.f32 %v59, 1e-05
  %v64 = vrsqrt.pop %v60
  %v65 = vrsqrt.pop %v61
  %v66 = vrsqrt.pop %v62
  %v67 = vrsqrt.pop %v63
  %v68 = vmul.f32 %v36, %v64
  %v69 = vmul.f32 %v37, %v65
  %v70 = vmul.f32 %v38, %v66
  %v71 = vmul.f32 %v39, %v67
  %v72 = vld [vmem:[%s1] sm:$0x1]
  %v74 = vlaneseq
  %v75 = vshrl.u32 %v74, 7
  %v76 = vsub.s32 0, %v75
  %v77 = vrot.slane %v72, %v76
  %v79 = vmul.f32 %v68, %v77
  %v80 = vmul.f32 %v69, %v77
  %v81 = vmul.f32 %v70, %v77
  %v82 = vmul.f32 %v71, %v77
  %v83 = vld [vmem:[%s2] sm:$0x1]
  %v85 = vlaneseq
  %v86 = vshrl.u32 %v85, 7
  %v87 = vsub.s32 0, %v86
  %v88 = vrot.slane %v83, %v87
  %v90 = vadd.f32 %v79, %v88
  %v91 = vadd.f32 %v80, %v88
  %v92 = vadd.f32 %v81, %v88
  %v93 = vadd.f32 %v82, %v88
  %94 = vst.msk [vmem:[%s3] sm:$0xff] %vm18, %v90
  %95 = vst.msk [vmem:[%s3 + $0x8] sm:$0xff] %vm18, %v91
  %96 = vst.msk [vmem:[%s3 + $0x10] sm:$0xff] %vm18, %v92
  %97 = vst.msk [vmem:[%s3 + $0x18] sm:$0xff] %vm18, %v93
  // Predicated region
  $region14: #{forward.23} parent=0 // pred_check
    _
  $region15: #{forward.23} parent=0 // pred_check_branch
    %99 = sbr.rel (0) target = $region17
  $region16: #{forward.23} parent=0 // pred_region
    _
  $region17: #{forward.23} parent=0 // pred_fallthru
    _
  // Predicated region
  $region18: #{forward.23} parent=0 // pred_check
    _
  $region19: #{forward.23} parent=0 // pred_check_branch
    %101 = sbr.rel (0) target = $region21
  $region20: #{forward.23} parent=0 // pred_region
    _
  $region21: #{forward.23} parent=0 // pred_fallthru
    _

// kernel: forward.26
$region0: #{forward.26}
  #allocation0 [shape = 'u32[]', space=smem, size = 0x4, offset = 0x4, fixed_abs, tag = 'smem constant byte address 0x4 - core index']
  #allocation1 [shape = 'u32[144,128]{1,0:T(1,128)}', space=vmem, size = 0x12000, scoped, tag = 'internal scratch']
  #allocation2 [shape = 'f32[32,64]{1,0:T(8,128)}', space=vmem, size = 0x4000, scoped, tag = 'scratch operand']
  %s0 = inlined_call_operand.vmem [shape: bf16[32,64], index: 0, kind: input, shape index: {}]
  %s1 = inlined_call_operand.vmem [shape: bf16[64,64], index: 1, kind: input, shape index: {}]
  %s2 = inlined_call_operand.vmem [shape: f32[1,64], index: 2, kind: input, shape index: {}]
  %s3 = inlined_call_operand.vmem [shape: f32[32,64], index: 3, kind: output, shape index: {}]
  %s4 = sld [smem:[#allocation0]]
  $region30: #{forward.26} parent=0
    _
  %s6 = ssub.s32 1, %s4
  %s7 = scalar_select 0, %s6, %s4
  // Predicated region
  $region2: #{forward.26} parent=0 // pred_check
    _
  $region3: #{forward.26} parent=0 // pred_check_branch
    %9 = sbr.rel (0) target = $region5
  $region4: #{forward.26} parent=0 // pred_region
    _
  $region5: #{forward.26} parent=0 // pred_fallthru
    _
  // Predicated region
  $region6: #{forward.26} parent=0 // pred_check
    _
  $region7: #{forward.26} parent=0 // pred_check_branch
    %11 = sbr.rel (0) target = $region9
  $region8: #{forward.26} parent=0 // pred_region
    _
  $region9: #{forward.26} parent=0 // pred_fallthru
    _
  // Predicated region
  $region10: #{forward.26} parent=0 // pred_check
    _
  $region11: #{forward.26} parent=0 // pred_check_branch
    %13 = sbr.rel (0) target = $region13
  $region12: #{forward.26} parent=0 // pred_region
    _
  $region13: #{forward.26} parent=0 // pred_fallthru
    _
  %p15 = scmp.eq.s32.totalorder 0, 0
  // Predicated region
  $region14: #{forward.26} parent=0 // pred_check
    %p16 = pneg %p15
  $region15: #{forward.26} parent=0 // pred_check_branch
    %18 = sbr.rel (%p16) target = $region17
  $region16: #{forward.26} parent=0 // pred_region
    %vm19 = vcmask 523264
    %20 = vst.msk [vmem:[#allocation2] sm:$0xff] %vm19, 0.0
    %21 = vst.msk [vmem:[#allocation2 + $0x8] sm:$0xff] %vm19, 0.0
    %22 = vst.msk [vmem:[#allocation2 + $0x10] sm:$0xff] %vm19, 0.0
    %23 = vst.msk [vmem:[#allocation2 + $0x18] sm:$0xff] %vm19, 0.0
  $region17: #{forward.26} parent=0 // pred_fallthru
    _
  %v24 = vld [vmem:[#allocation2] sm:$0xff]
  %v25 = vld [vmem:[#allocation2 + $0x8] sm:$0xff]
  %v26 = vld [vmem:[#allocation2 + $0x10] sm:$0xff]
  %v27 = vld [vmem:[#allocation2 + $0x18] sm:$0xff]
  %v28 = vld [vmem:[%s0] sm:$0xf]
  %v29 = vld [vmem:[%s0 + $0x4] sm:$0xf]
  %v30 = vld [vmem:[%s0 + $0x8] sm:$0xf]
  %v31 = vld [vmem:[%s0 + $0xc] sm:$0xf]
  %v32 = vld [vmem:[%s1] sm:$0xf]
  %v33 = vld [vmem:[%s1 + $0x4] sm:$0xf]
  %v34 = vld [vmem:[%s1 + $0x8] sm:$0xf]
  %v35 = vld [vmem:[%s1 + $0xc] sm:$0xf]
  %v36 = vld [vmem:[%s1 + $0x10] sm:$0xf]
  %v37 = vld [vmem:[%s1 + $0x14] sm:$0xf]
  %v38 = vld [vmem:[%s1 + $0x18] sm:$0xf]
  %v39 = vld [vmem:[%s1 + $0x1c] sm:$0xf]
  %v44 = vunpack.c.l.b16 %v28
  %v45 = vunpack.c.l.b16 %v29
  %v46 = vunpack.c.l.b16 %v30
  %v47 = vunpack.c.l.b16 %v31
  %v48 = vpack.c.b16 %v45, %v44
  %v49 = vpack.c.b16 %v47, %v46
  %v58 = vunpack.c.l.b16 %v32
  %v59 = vunpack.c.l.b16 %v33
  %v60 = vunpack.c.l.b16 %v34
  %v61 = vunpack.c.l.b16 %v35
  %v62 = vunpack.c.l.b16 %v36
  %v63 = vunpack.c.l.b16 %v37
  %v64 = vunpack.c.l.b16 %v38
  %v65 = vunpack.c.l.b16 %v39
  %v66 = vpack.c.b16 %v59, %v58
  %v67 = vpack.c.b16 %v61, %v60
  %v68 = vpack.c.b16 %v63, %v62
  %v69 = vpack.c.b16 %v65, %v64
  %vm74 = vcmask 523264
  %v76 = vsel %vm74, %v48, 0
  %v79 = vsel %vm74, %v49, 0
  %81 = vmatprep.subr.bf16.mxu0 0
  %82 = vmatpush1.bf16.msra.mxu0 %v66
  %83 = vmatprep.subr.bf16.mxu0 0
  %84 = vmatpush1.bf16.msra.mxu0 %v67
  %85 = vmatprep.subr.bf16.mxu0 0
  %86 = vmatpush1.bf16.msra.mxu0 %v68
  %87 = vmatprep.subr.bf16.mxu0 0
  %88 = vmatpush1.bf16.msra.mxu0 %v69
  %89 = vmatprep.subr.bf16.mxu0 0
  %90 = vmatpush1.bf16.msra.mxu0 0
  %91 = vmatprep.subr.bf16.mxu0 0
  %92 = vmatpush1.bf16.msra.mxu0 0
  %93 = vmatprep.subr.bf16.mxu0 0
  %94 = vmatpush1.bf16.msra.mxu0 0
  %95 = vmatprep.subr.bf16.mxu0 0
  %96 = vmatpush1.bf16.msra.mxu0 0
  %97 = vmatprep.subr.bf16.mxu0 0
  %98 = vmatpush1.bf16.msra.mxu0 0
  %99 = vmatprep.subr.bf16.mxu0 0
  %100 = vmatpush1.bf16.msra.mxu0 0
  %101 = vmatprep.subr.bf16.mxu0 0
  %102 = vmatpush1.bf16.msra.mxu0 0
  %103 = vmatprep.subr.bf16.mxu0 0
  %104 = vmatpush1.bf16.msra.mxu0 0
  %105 = vmatprep.subr.bf16.mxu0 0
  %106 = vmatpush1.bf16.msra.mxu0 0
  %107 = vmatprep.subr.bf16.mxu0 0
  %108 = vmatpush1.bf16.msra.mxu0 0
  %109 = vmatprep.subr.bf16.mxu0 0
  %110 = vmatpush1.bf16.msra.mxu0 0
  %111 = vmatprep.subr.bf16.mxu0 0
  %112 = vmatpush1.bf16.msra.mxu0 0
  %113 = vmatprep.mubr.bf16.mxu0 0
  %114 = vmatmul.mubr.bf16.gmra.mrb[0].mxu0 %v76
  %v115 = vpop.f32.mrb[0].mxu0
  %v116 = vadd.f32 0.0, %v115
  %v117 = vpop.f32.mrb[0].mxu0
  %v118 = vpop.f32.mrb[0].mxu0
  %v119 = vadd.f32 0.0, %v118
  %v120 = vpop.f32.mrb[0].mxu0
  %121 = vmatprep.mubr.bf16.mxu0 0
  %122 = vmatmul.mubr.bf16.gmra.mrb[0].mxu0 %v79
  %v123 = vpop.f32.mrb[0].mxu0
  %v124 = vadd.f32 0.0, %v123
  %v125 = vpop.f32.mrb[0].mxu0
  %v126 = vpop.f32.mrb[0].mxu0
  %v127 = vadd.f32 0.0, %v126
  %v128 = vpop.f32.mrb[0].mxu0
  %129 = vdwg.mxu0
  %v130 = vadd.f32 %v24, %v116
  %v131 = vadd.f32 %v25, %v119
  %v132 = vadd.f32 %v26, %v124
  %v133 = vadd.f32 %v27, %v127
  %134 = vst.msk [vmem:[#allocation2] sm:$0xff] %vm74, %v130
  %135 = vst.msk [vmem:[#allocation2 + $0x8] sm:$0xff] %vm74, %v131
  %136 = vst.msk [vmem:[#allocation2 + $0x10] sm:$0xff] %vm74, %v132
  %137 = vst.msk [vmem:[#allocation2 + $0x18] sm:$0xff] %vm74, %v133
  // Predicated region
  $region18: #{forward.26} parent=0 // pred_check
    %p138 = pneg %p15
  $region19: #{forward.26} parent=0 // pred_check_branch
    %140 = sbr.rel (%p138) target = $region21
  $region20: #{forward.26} parent=0 // pred_region
    %v141 = vld [vmem:[#allocation2] sm:$0xff]
    %v142 = vld [vmem:[#allocation2 + $0x8] sm:$0xff]
    %v143 = vld [vmem:[#allocation2 + $0x10] sm:$0xff]
    %v144 = vld [vmem:[#allocation2 + $0x18] sm:$0xff]
    %v145 = vld [vmem:[%s2] sm:$0x1]
    %v147 = vlaneseq
    %v148 = vshrl.u32 %v147, 7
    %v149 = vsub.s32 0, %v148
    %v150 = vrot.slane %v145, %v149
    %v152 = vadd.f32 %v141, %v150
    %v153 = vadd.f32 %v142, %v150
    %v154 = vadd.f32 %v143, %v150
    %v155 = vadd.f32 %v144, %v150
    %156 = vst.msk [vmem:[%s3] sm:$0xff] %vm74, %v152
    %157 = vst.msk [vmem:[%s3 + $0x8] sm:$0xff] %vm74, %v153
    %158 = vst.msk [vmem:[%s3 + $0x10] sm:$0xff] %vm74, %v154
    %159 = vst.msk [vmem:[%s3 + $0x18] sm:$0xff] %vm74, %v155
  $region21: #{forward.26} parent=0 // pred_fallthru
    _
  // Predicated region
  $region22: #{forward.26} parent=0 // pred_check
    _
  $region23: #{forward.26} parent=0 // pred_check_branch
    %161 = sbr.rel (0) target = $region25
  $region24: #{forward.26} parent=0 // pred_region
    _
  $region25: #{forward.26} parent=0 // pred_fallthru
    _
  // Predicated region
  $region26: #{forward.26} parent=0 // pred_check
    _
  $region27: #{forward.26} parent=0 // pred_check_branch
    %163 = sbr.rel (0) target = $region29
  $region28: #{forward.26} parent=0 // pred_region
    _
  $region29: #{forward.26} parent=0 // pred_fallthru
    _

// kernel: forward.28
$region0: #{forward.28}
  #allocation0 [shape = 'u32[]', space=smem, size = 0x4, offset = 0x4, fixed_abs, tag = 'smem constant byte address 0x4 - core index']
  #allocation1 [shape = 'u32[144,128]{1,0:T(1,128)}', space=vmem, size = 0x12000, scoped, tag = 'internal scratch']
  #allocation2 [shape = 'f32[32,128]{1,0:T(8,128)}', space=vmem, size = 0x4000, scoped, tag = 'scratch operand']
  %s0 = inlined_call_operand.vmem [shape: bf16[32,64], index: 0, kind: input, shape index: {}]
  %s1 = inlined_call_operand.vmem [shape: bf16[64,128], index: 1, kind: input, shape index: {}]
  %s2 = inlined_call_operand.vmem [shape: f32[1,128], index: 2, kind: input, shape index: {}]
  %s3 = inlined_call_operand.vmem [shape: bf16[32,128], index: 3, kind: output, shape index: {}]
  %s4 = sld [smem:[#allocation0]]
  $region30: #{forward.28} parent=0
    _
  %s6 = ssub.s32 1, %s4
  %s7 = scalar_select 0, %s6, %s4
  // Predicated region
  $region2: #{forward.28} parent=0 // pred_check
    _
  $region3: #{forward.28} parent=0 // pred_check_branch
    %9 = sbr.rel (0) target = $region5
  $region4: #{forward.28} parent=0 // pred_region
    _
  $region5: #{forward.28} parent=0 // pred_fallthru
    _
  // Predicated region
  $region6: #{forward.28} parent=0 // pred_check
    _
  $region7: #{forward.28} parent=0 // pred_check_branch
    %11 = sbr.rel (0) target = $region9
  $region8: #{forward.28} parent=0 // pred_region
    _
  $region9: #{forward.28} parent=0 // pred_fallthru
    _
  // Predicated region
  $region10: #{forward.28} parent=0 // pred_check
    _
  $region11: #{forward.28} parent=0 // pred_check_branch
    %13 = sbr.rel (0) target = $region13
  $region12: #{forward.28} parent=0 // pred_region
    _
  $region13: #{forward.28} parent=0 // pred_fallthru
    _
  %p15 = scmp.eq.s32.totalorder 0, 0
  // Predicated region
  $region14: #{forward.28} parent=0 // pred_check
    %p16 = pneg %p15
  $region15: #{forward.28} parent=0 // pred_check_branch
    %18 = sbr.rel (%p16) target = $region17
  $region16: #{forward.28} parent=0 // pred_region
    %19 = vst [vmem:[#allocation2] sm:$0xff] 0.0
    %20 = vst [vmem:[#allocation2 + $0x8] sm:$0xff] 0.0
    %21 = vst [vmem:[#allocation2 + $0x10] sm:$0xff] 0.0
    %22 = vst [vmem:[#allocation2 + $0x18] sm:$0xff] 0.0
  $region17: #{forward.28} parent=0 // pred_fallthru
    _
  %v23 = vld [vmem:[#allocation2] sm:$0xff]
  %v24 = vld [vmem:[#allocation2 + $0x8] sm:$0xff]
  %v25 = vld [vmem:[#allocation2 + $0x10] sm:$0xff]
  %v26 = vld [vmem:[#allocation2 + $0x18] sm:$0xff]
  %v27 = vld [vmem:[%s0] sm:$0xf]
  %v28 = vld [vmem:[%s0 + $0x4] sm:$0xf]
  %v29 = vld [vmem:[%s0 + $0x8] sm:$0xf]
  %v30 = vld [vmem:[%s0 + $0xc] sm:$0xf]
  %v31 = vld [vmem:[%s1] sm:$0xf]
  %v32 = vld [vmem:[%s1 + $0x4] sm:$0xf]
  %v33 = vld [vmem:[%s1 + $0x8] sm:$0xf]
  %v34 = vld [vmem:[%s1 + $0xc] sm:$0xf]
  %v35 = vld [vmem:[%s1 + $0x10] sm:$0xf]
  %v36 = vld [vmem:[%s1 + $0x14] sm:$0xf]
  %v37 = vld [vmem:[%s1 + $0x18] sm:$0xf]
  %v38 = vld [vmem:[%s1 + $0x1c] sm:$0xf]
  %v43 = vunpack.c.l.b16 %v27
  %v44 = vunpack.c.l.b16 %v28
  %v45 = vunpack.c.l.b16 %v29
  %v46 = vunpack.c.l.b16 %v30
  %v47 = vpack.c.b16 %v44, %v43
  %v48 = vpack.c.b16 %v46, %v45
  %v57 = vunpack.c.l.b16 %v31
  %v58 = vunpack.c.l.b16 %v32
  %v59 = vunpack.c.l.b16 %v33
  %v60 = vunpack.c.l.b16 %v34
  %v61 = vunpack.c.l.b16 %v35
  %v62 = vunpack.c.l.b16 %v36
  %v63 = vunpack.c.l.b16 %v37
  %v64 = vunpack.c.l.b16 %v38
  %v65 = vpack.c.b16 %v58, %v57
  %v66 = vpack.c.b16 %v60, %v59
  %v67 = vpack.c.b16 %v62, %v61
  %v68 = vpack.c.b16 %v64, %v63
  %vm73 = vcmask 523264
  %v75 = vsel %vm73, %v47, 0
  %v78 = vsel %vm73, %v48, 0
  %80 = vmatprep.subr.bf16.mxu0 0
  %81 = vmatpush1.bf16.msra.mxu0 %v65
  %82 = vmatprep.subr.bf16.mxu0 0
  %83 = vmatpush1.bf16.msra.mxu0 %v66
  %84 = vmatprep.subr.bf16.mxu0 0
  %85 = vmatpush1.bf16.msra.mxu0 %v67
  %86 = vmatprep.subr.bf16.mxu0 0
  %87 = vmatpush1.bf16.msra.mxu0 %v68
  %88 = vmatprep.subr.bf16.mxu0 0
  %89 = vmatpush1.bf16.msra.mxu0 0
  %90 = vmatprep.subr.bf16.mxu0 0
  %91 = vmatpush1.bf16.msra.mxu0 0
  %92 = vmatprep.subr.bf16.mxu0 0
  %93 = vmatpush1.bf16.msra.mxu0 0
  %94 = vmatprep.subr.bf16.mxu0 0
  %95 = vmatpush1.bf16.msra.mxu0 0
  %96 = vmatprep.subr.bf16.mxu0 0
  %97 = vmatpush1.bf16.msra.mxu0 0
  %98 = vmatprep.subr.bf16.mxu0 0
  %99 = vmatpush1.bf16.msra.mxu0 0
  %100 = vmatprep.subr.bf16.mxu0 0
  %101 = vmatpush1.bf16.msra.mxu0 0
  %102 = vmatprep.subr.bf16.mxu0 0
  %103 = vmatpush1.bf16.msra.mxu0 0
  %104 = vmatprep.subr.bf16.mxu0 0
  %105 = vmatpush1.bf16.msra.mxu0 0
  %106 = vmatprep.subr.bf16.mxu0 0
  %107 = vmatpush1.bf16.msra.mxu0 0
  %108 = vmatprep.subr.bf16.mxu0 0
  %109 = vmatpush1.bf16.msra.mxu0 0
  %110 = vmatprep.subr.bf16.mxu0 0
  %111 = vmatpush1.bf16.msra.mxu0 0
  %112 = vmatprep.mubr.bf16.mxu0 0
  %113 = vmatmul.mubr.bf16.gmra.mrb[0].mxu0 %v75
  %v114 = vpop.f32.mrb[0].mxu0
  %v115 = vadd.f32 0.0, %v114
  %v116 = vpop.f32.mrb[0].mxu0
  %v117 = vpop.f32.mrb[0].mxu0
  %v118 = vadd.f32 0.0, %v117
  %v119 = vpop.f32.mrb[0].mxu0
  %120 = vmatprep.mubr.bf16.mxu0 0
  %121 = vmatmul.mubr.bf16.gmra.mrb[0].mxu0 %v78
  %v122 = vpop.f32.mrb[0].mxu0
  %v123 = vadd.f32 0.0, %v122
  %v124 = vpop.f32.mrb[0].mxu0
  %v125 = vpop.f32.mrb[0].mxu0
  %v126 = vadd.f32 0.0, %v125
  %v127 = vpop.f32.mrb[0].mxu0
  %128 = vdwg.mxu0
  %v129 = vadd.f32 %v23, %v115
  %v130 = vadd.f32 %v24, %v118
  %v131 = vadd.f32 %v25, %v123
  %v132 = vadd.f32 %v26, %v126
  %133 = vst [vmem:[#allocation2] sm:$0xff] %v129
  %134 = vst [vmem:[#allocation2 + $0x8] sm:$0xff] %v130
  %135 = vst [vmem:[#allocation2 + $0x10] sm:$0xff] %v131
  %136 = vst [vmem:[#allocation2 + $0x18] sm:$0xff] %v132
  // Predicated region
  $region18: #{forward.28} parent=0 // pred_check
    %p137 = pneg %p15
  $region19: #{forward.28} parent=0 // pred_check_branch
    %139 = sbr.rel (%p137) target = $region21
  $region20: #{forward.28} parent=0 // pred_region
    %v140 = vld [vmem:[#allocation2] sm:$0xff]
    %v141 = vld [vmem:[#allocation2 + $0x8] sm:$0xff]
    %v142 = vld [vmem:[#allocation2 + $0x10] sm:$0xff]
    %v143 = vld [vmem:[#allocation2 + $0x18] sm:$0xff]
    %v144 = vld [vmem:[%s2] sm:$0x1]
    %v146 = vlaneseq
    %v147 = vshrl.u32 %v146, 7
    %v148 = vsub.s32 0, %v147
    %v149 = vrot.slane %v144, %v148
    %v151 = vadd.f32 %v140, %v149
    %v152 = vadd.f32 %v141, %v149
    %v153 = vadd.f32 %v142, %v149
    %v154 = vadd.f32 %v143, %v149
    %v155 = vmax.f32 %v151, 0.0
    %v156 = vmax.f32 %v152, 0.0
    %v157 = vmax.f32 %v153, 0.0
    %v158 = vmax.f32 %v154, 0.0
    %v159 = vpack.c.bf16 %v156, %v155
    %v160 = vpack.c.bf16 %v158, %v157
    %v163 = vunpack.c.l.b16 %v159
    %v164 = vunpack.c.h.b16 %v159
    %v165 = vunpack.c.l.b16 %v160
    %v166 = vunpack.c.h.b16 %v160
    %v167 = vpack.c.b16 %v163, %v163
    %v168 = vpack.c.b16 %v164, %v164
    %v169 = vpack.c.b16 %v165, %v165
    %v170 = vpack.c.b16 %v166, %v166
    %175 = vst [vmem:[%s3] sm:$0xf] %v167
    %176 = vst [vmem:[%s3 + $0x4] sm:$0xf] %v168
    %177 = vst [vmem:[%s3 + $0x8] sm:$0xf] %v169
    %178 = vst [vmem:[%s3 + $0xc] sm:$0xf] %v170
  $region21: #{forward.28} parent=0 // pred_fallthru
    _
  // Predicated region
  $region22: #{forward.28} parent=0 // pred_check
    _
  $region23: #{forward.28} parent=0 // pred_check_branch
    %180 = sbr.rel (0) target = $region25
  $region24: #{forward.28} parent=0 // pred_region
    _
  $region25: #{forward.28} parent=0 // pred_fallthru
    _
  // Predicated region
  $region26: #{forward.28} parent=0 // pred_check
    _
  $region27: #{forward.28} parent=0 // pred_check_branch
    %182 = sbr.rel (0) target = $region29
  $region28: #{forward.28} parent=0 // pred_region
    _
  $region29: #{forward.28} parent=0 // pred_fallthru
    _

// kernel: forward.27
$region0: #{forward.27}
  #allocation0 [shape = 'u32[]', space=smem, size = 0x4, offset = 0x4, fixed_abs, tag = 'smem constant byte address 0x4 - core index']
  #allocation1 [shape = 'u32[144,128]{1,0:T(1,128)}', space=vmem, size = 0x12000, scoped, tag = 'internal scratch']
  %s0 = inlined_call_operand.vmem [shape: f32[32,64], index: 0, kind: input, shape index: {}]
  %s1 = inlined_call_operand.vmem [shape: f32[32,64], index: 1, kind: input, shape index: {}]
  %s2 = inlined_call_operand.vmem [shape: f32[1,64], index: 2, kind: input, shape index: {}]
  %s3 = inlined_call_operand.vmem [shape: f32[1,64], index: 3, kind: input, shape index: {}]
  %s4 = inlined_call_operand.vmem [shape: f32[32,64], index: 4, kind: output, shape index: {0}]
  %s5 = inlined_call_operand.vmem [shape: f32[32,64], index: 5, kind: output, shape index: {1}]
  %6 = xla_tuple %s4, %s5
  %s7 = sld [smem:[#allocation0]]
  $region34: #{forward.27} parent=0
    _
  %s9 = ssub.s32 1, %s7
  %s10 = scalar_select 0, %s9, %s7
  // Predicated region
  $region2: #{forward.27} parent=0 // pred_check
    _
  $region3: #{forward.27} parent=0 // pred_check_branch
    %12 = sbr.rel (0) target = $region5
  $region4: #{forward.27} parent=0 // pred_region
    _
  $region5: #{forward.27} parent=0 // pred_fallthru
    _
  // Predicated region
  $region6: #{forward.27} parent=0 // pred_check
    _
  $region7: #{forward.27} parent=0 // pred_check_branch
    %14 = sbr.rel (0) target = $region9
  $region8: #{forward.27} parent=0 // pred_region
    _
  $region9: #{forward.27} parent=0 // pred_fallthru
    _
  // Predicated region
  $region10: #{forward.27} parent=0 // pred_check
    _
  $region11: #{forward.27} parent=0 // pred_check_branch
    %16 = sbr.rel (0) target = $region13
  $region12: #{forward.27} parent=0 // pred_region
    _
  $region13: #{forward.27} parent=0 // pred_fallthru
    _
  // Predicated region
  $region14: #{forward.27} parent=0 // pred_check
    _
  $region15: #{forward.27} parent=0 // pred_check_branch
    %18 = sbr.rel (0) target = $region17
  $region16: #{forward.27} parent=0 // pred_region
    _
  $region17: #{forward.27} parent=0 // pred_fallthru
    _
  %v19 = vld [vmem:[%s0] sm:$0xff]
  %v20 = vld [vmem:[%s0 + $0x8] sm:$0xff]
  %v21 = vld [vmem:[%s0 + $0x10] sm:$0xff]
  %v22 = vld [vmem:[%s0 + $0x18] sm:$0xff]
  %v23 = vld [vmem:[%s1] sm:$0xff]
  %v24 = vld [vmem:[%s1 + $0x8] sm:$0xff]
  %v25 = vld [vmem:[%s1 + $0x10] sm:$0xff]
  %v26 = vld [vmem:[%s1 + $0x18] sm:$0xff]
  %v27 = vadd.f32 %v19, %v23
  %v28 = vadd.f32 %v20, %v24
  %v29 = vadd.f32 %v21, %v25
  %v30 = vadd.f32 %v22, %v26
  %vm31 = vcmask 523264
  %32 = vst.msk [vmem:[%s4] sm:$0xff] %vm31, %v27
  %33 = vst.msk [vmem:[%s4 + $0x8] sm:$0xff] %vm31, %v28
  %34 = vst.msk [vmem:[%s4 + $0x10] sm:$0xff] %vm31, %v29
  %35 = vst.msk [vmem:[%s4 + $0x18] sm:$0xff] %vm31, %v30
  %v36 = vsel %vm31, %v27, 0.0
  %37 = vadd.xlane.f32.xlu0 %v36
  %v38 = vpop.xlane.xlu0 %37
  %v39 = vsel %vm31, %v28, 0.0
  %40 = vadd.xlane.f32.xlu0 %v39
  %v41 = vpop.xlane.xlu0 %40
  %v42 = vsel %vm31, %v29, 0.0
  %43 = vadd.xlane.f32.xlu0 %v42
  %v44 = vpop.xlane.xlu0 %43
  %v45 = vsel %vm31, %v30, 0.0
  %46 = vadd.xlane.f32.xlu0 %v45
  %v47 = vpop.xlane.xlu0 %46
  %v48 = vrcp.pop 64.0
  %v49 = vmul.f32 %v38, %v48
  %v50 = vmul.f32 %v41, %v48
  %v51 = vmul.f32 %v44, %v48
  %v52 = vmul.f32 %v47, %v48
  %v53 = vsub.f32 %v27, %v49
  %v54 = vsub.f32 %v28, %v50
  %v55 = vsub.f32 %v29, %v51
  %v56 = vsub.f32 %v30, %v52
  %v57 = vmul.f32 %v53, %v53
  %v58 = vmul.f32 %v54, %v54
  %v59 = vmul.f32 %v55, %v55
  %v60 = vmul.f32 %v56, %v56
  %v61 = vsel %vm31, %v57, 0.0
  %62 = vadd.xlane.f32.xlu0 %v61
  %v63 = vpop.xlane.xlu0 %62
  %v64 = vsel %vm31, %v58, 0.0
  %65 = vadd.xlane.f32.xlu0 %v64
  %v66 = vpop.xlane.xlu0 %65
  %v67 = vsel %vm31, %v59, 0.0
  %68 = vadd.xlane.f32.xlu0 %v67
  %v69 = vpop.xlane.xlu0 %68
  %v70 = vsel %vm31, %v60, 0.0
  %71 = vadd.xlane.f32.xlu0 %v70
  %v72 = vpop.xlane.xlu0 %71
  %v73 = vmul.f32 %v63, %v48
  %v74 = vmul.f32 %v66, %v48
  %v75 = vmul.f32 %v69, %v48
  %v76 = vmul.f32 %v72, %v48
  %v77 = vadd.f32 %v73, 1e-05
  %v78 = vadd.f32 %v74, 1e-05
  %v79 = vadd.f32 %v75, 1e-05
  %v80 = vadd.f32 %v76, 1e-05
  %v81 = vrsqrt.pop %v77
  %v82 = vrsqrt.pop %v78
  %v83 = vrsqrt.pop %v79
  %v84 = vrsqrt.pop %v80
  %v85 = vmul.f32 %v53, %v81
  %v86 = vmul.f32 %v54, %v82
  %v87 = vmul.f32 %v55, %v83
  %v88 = vmul.f32 %v56, %v84
  %v89 = vld [vmem:[%s2] sm:$0x1]
  %v91 = vlaneseq
  %v92 = vshrl.u32 %v91, 7
  %v93 = vsub.s32 0, %v92
  %v94 = vrot.slane %v89, %v93
  %v96 = vmul.f32 %v85, %v94
  %v97 = vmul.f32 %v86, %v94
  %v98 = vmul.f32 %v87, %v94
  %v99 = vmul.f32 %v88, %v94
  %v100 = vld [vmem:[%s3] sm:$0x1]
  %v102 = vlaneseq
  %v103 = vshrl.u32 %v102, 7
  %v104 = vsub.s32 0, %v103
  %v105 = vrot.slane %v100, %v104
  %v107 = vadd.f32 %v96, %v105
  %v108 = vadd.f32 %v97, %v105
  %v109 = vadd.f32 %v98, %v105
  %v110 = vadd.f32 %v99, %v105
  %111 = vst.msk [vmem:[%s5] sm:$0xff] %vm31, %v107
  %112 = vst.msk [vmem:[%s5 + $0x8] sm:$0xff] %vm31, %v108
  %113 = vst.msk [vmem:[%s5 + $0x10] sm:$0xff] %vm31, %v109
  %114 = vst.msk [vmem:[%s5 + $0x18] sm:$0xff] %vm31, %v110
  // Predicated region
  $region18: #{forward.27} parent=0 // pred_check
    _
  $region19: #{forward.27} parent=0 // pred_check_branch
    %116 = sbr.rel (0) target = $region21
  $region20: #{forward.27} parent=0 // pred_region
    _
  $region21: #{forward.27} parent=0 // pred_fallthru
    _
  // Predicated region
  $region22: #{forward.27} parent=0 // pred_check
    _
  $region23: #{forward.27} parent=0 // pred_check_branch
    %118 = sbr.rel (0) target = $region25
  $region24: #{forward.27} parent=0 // pred_region
    _
  $region25: #{forward.27} parent=0 // pred_fallthru
    _
  // Predicated region
  $region26: #{forward.27} parent=0 // pred_check
    _
  $region27: #{forward.27} parent=0 // pred_check_branch
    %120 = sbr.rel (0) target = $region29
  $region28: #{forward.27} parent=0 // pred_region
    _
  $region29: #{forward.27} parent=0 // pred_fallthru
    _
  // Predicated region
  $region30: #{forward.27} parent=0 // pred_check
    _
  $region31: #{forward.27} parent=0 // pred_check_branch
    %122 = sbr.rel (0) target = $region33
  $region32: #{forward.27} parent=0 // pred_region
    _
  $region33: #{forward.27} parent=0 // pred_fallthru
    _

// kernel: forward.37
$region0: #{forward.37}
  #allocation0 [shape = 'u32[]', space=smem, size = 0x4, offset = 0x4, fixed_abs, tag = 'smem constant byte address 0x4 - core index']
  #allocation1 [shape = 'u32[144,128]{1,0:T(1,128)}', space=vmem, size = 0x12000, scoped, tag = 'internal scratch']
  %s0 = inlined_call_operand.vmem [shape: f32[32,64], index: 0, kind: input, shape index: {}]
  %s1 = inlined_call_operand.vmem [shape: f32[32,64], index: 1, kind: input, shape index: {}]
  %s2 = inlined_call_operand.vmem [shape: f32[1,64], index: 2, kind: input, shape index: {}]
  %s3 = inlined_call_operand.vmem [shape: f32[1,64], index: 3, kind: input, shape index: {}]
  %s4 = inlined_call_operand.hbm [shape: f32[32,64], index: 4, kind: output, shape index: {0}]
  %s5 = inlined_call_operand.vmem [shape: f32[32,64], index: 5, kind: output, shape index: {1}]
  %6 = xla_tuple %s4, %s5
  %s7 = sld [smem:[#allocation0]]
  $region34: #{forward.37} parent=0
    _
  %s9 = ssub.s32 1, %s7
  %s10 = scalar_select 0, %s9, %s7
  $region1: #{forward.37} parent=0
    #allocation2 [shape = 'u8[16384]{0}', space=vmem, size = 0x4000, scoped, tag = 'output window, operand 0, single buffered']
    #allocation3 [shape = 's32[1]{0}', space=sflag, size = 0x4, scoped, tag = 'scoped memory for forward.37']
    %11 = vsyncpa [#allocation3], 0
    // Predicated region
    $region2: #{forward.37} parent=1 // pred_check
      _
    $region3: #{forward.37} parent=1 // pred_check_branch
      %13 = sbr.rel (0) target = $region5
    $region4: #{forward.37} parent=1 // pred_region
      _
    $region5: #{forward.37} parent=1 // pred_fallthru
      _
    // Predicated region
    $region6: #{forward.37} parent=1 // pred_check
      _
    $region7: #{forward.37} parent=1 // pred_check_branch
      %15 = sbr.rel (0) target = $region9
    $region8: #{forward.37} parent=1 // pred_region
      _
    $region9: #{forward.37} parent=1 // pred_fallthru
      _
    // Predicated region
    $region10: #{forward.37} parent=1 // pred_check
      _
    $region11: #{forward.37} parent=1 // pred_check_branch
      %17 = sbr.rel (0) target = $region13
    $region12: #{forward.37} parent=1 // pred_region
      _
    $region13: #{forward.37} parent=1 // pred_fallthru
      _
    // Predicated region
    $region14: #{forward.37} parent=1 // pred_check
      _
    $region15: #{forward.37} parent=1 // pred_check_branch
      %19 = sbr.rel (0) target = $region17
    $region16: #{forward.37} parent=1 // pred_region
      _
    $region17: #{forward.37} parent=1 // pred_fallthru
      _
    %v20 = vld [vmem:[%s0] sm:$0xff]
    %v21 = vld [vmem:[%s0 + $0x8] sm:$0xff]
    %v22 = vld [vmem:[%s0 + $0x10] sm:$0xff]
    %v23 = vld [vmem:[%s0 + $0x18] sm:$0xff]
    %v24 = vld [vmem:[%s1] sm:$0xff]
    %v25 = vld [vmem:[%s1 + $0x8] sm:$0xff]
    %v26 = vld [vmem:[%s1 + $0x10] sm:$0xff]
    %v27 = vld [vmem:[%s1 + $0x18] sm:$0xff]
    %v28 = vadd.f32 %v20, %v24
    %v29 = vadd.f32 %v21, %v25
    %v30 = vadd.f32 %v22, %v26
    %v31 = vadd.f32 %v23, %v27
    %vm32 = vcmask 523264
    %33 = vst.msk [vmem:[#allocation2] sm:$0xff] %vm32, %v28
    %34 = vst.msk [vmem:[#allocation2 + $0x8] sm:$0xff] %vm32, %v29
    %35 = vst.msk [vmem:[#allocation2 + $0x10] sm:$0xff] %vm32, %v30
    %36 = vst.msk [vmem:[#allocation2 + $0x18] sm:$0xff] %vm32, %v31
    %v37 = vsel %vm32, %v28, 0.0
    %38 = vadd.xlane.f32.xlu0 %v37
    %v39 = vpop.xlane.xlu0 %38
    %v40 = vsel %vm32, %v29, 0.0
    %41 = vadd.xlane.f32.xlu0 %v40
    %v42 = vpop.xlane.xlu0 %41
    %v43 = vsel %vm32, %v30, 0.0
    %44 = vadd.xlane.f32.xlu0 %v43
    %v45 = vpop.xlane.xlu0 %44
    %v46 = vsel %vm32, %v31, 0.0
    %47 = vadd.xlane.f32.xlu0 %v46
    %v48 = vpop.xlane.xlu0 %47
    %v49 = vrcp.pop 64.0
    %v50 = vmul.f32 %v39, %v49
    %v51 = vmul.f32 %v42, %v49
    %v52 = vmul.f32 %v45, %v49
    %v53 = vmul.f32 %v48, %v49
    %v54 = vsub.f32 %v28, %v50
    %v55 = vsub.f32 %v29, %v51
    %v56 = vsub.f32 %v30, %v52
    %v57 = vsub.f32 %v31, %v53
    %v58 = vmul.f32 %v54, %v54
    %v59 = vmul.f32 %v55, %v55
    %v60 = vmul.f32 %v56, %v56
    %v61 = vmul.f32 %v57, %v57
    %v62 = vsel %vm32, %v58, 0.0
    %63 = vadd.xlane.f32.xlu0 %v62
    %v64 = vpop.xlane.xlu0 %63
    %v65 = vsel %vm32, %v59, 0.0
    %66 = vadd.xlane.f32.xlu0 %v65
    %v67 = vpop.xlane.xlu0 %66
    %v68 = vsel %vm32, %v60, 0.0
    %69 = vadd.xlane.f32.xlu0 %v68
    %v70 = vpop.xlane.xlu0 %69
    %v71 = vsel %vm32, %v61, 0.0
    %72 = vadd.xlane.f32.xlu0 %v71
    %v73 = vpop.xlane.xlu0 %72
    %v74 = vmul.f32 %v64, %v49
    %v75 = vmul.f32 %v67, %v49
    %v76 = vmul.f32 %v70, %v49
    %v77 = vmul.f32 %v73, %v49
    %v78 = vadd.f32 %v74, 1e-05
    %v79 = vadd.f32 %v75, 1e-05
    %v80 = vadd.f32 %v76, 1e-05
    %v81 = vadd.f32 %v77, 1e-05
    %v82 = vrsqrt.pop %v78
    %v83 = vrsqrt.pop %v79
    %v84 = vrsqrt.pop %v80
    %v85 = vrsqrt.pop %v81
    %v86 = vmul.f32 %v54, %v82
    %v87 = vmul.f32 %v55, %v83
    %v88 = vmul.f32 %v56, %v84
    %v89 = vmul.f32 %v57, %v85
    %v90 = vld [vmem:[%s2] sm:$0x1]
    %v92 = vlaneseq
    %v93 = vshrl.u32 %v92, 7
    %v94 = vsub.s32 0, %v93
    %v95 = vrot.slane %v90, %v94
    %v97 = vmul.f32 %v86, %v95
    %v98 = vmul.f32 %v87, %v95
    %v99 = vmul.f32 %v88, %v95
    %v100 = vmul.f32 %v89, %v95
    %v101 = vld [vmem:[%s3] sm:$0x1]
    %v103 = vlaneseq
    %v104 = vshrl.u32 %v103, 7
    %v105 = vsub.s32 0, %v104
    %v106 = vrot.slane %v101, %v105
    %v108 = vadd.f32 %v97, %v106
    %v109 = vadd.f32 %v98, %v106
    %v110 = vadd.f32 %v99, %v106
    %v111 = vadd.f32 %v100, %v106
    %112 = vst.msk [vmem:[%s5] sm:$0xff] %vm32, %v108
    %113 = vst.msk [vmem:[%s5 + $0x8] sm:$0xff] %vm32, %v109
    %114 = vst.msk [vmem:[%s5 + $0x10] sm:$0xff] %vm32, %v110
    %115 = vst.msk [vmem:[%s5 + $0x18] sm:$0xff] %vm32, %v111
    // Predicated region
    $region18: #{forward.37} parent=1 // pred_check
      _
    $region19: #{forward.37} parent=1 // pred_check_branch
      %117 = sbr.rel (0) target = $region21
    $region20: #{forward.37} parent=1 // pred_region
      %s119 = ssub.s32 512, 512
      %120 = vsyncadd [#allocation3], %s119
      %s121 = sshll.u32 [#allocation2], 4
      %s122 = int_to_ptr.vmem [resolvable:$true] %s121
      %127 = dma.vmem_to_hbm [thread:$0]  %s122, 512, %s4, [#allocation3], 128, 128, 8
    $region21: #{forward.37} parent=1 // pred_fallthru
      _
    // Predicated region
    $region22: #{forward.37} parent=1 // pred_check
      _
    $region23: #{forward.37} parent=1 // pred_check_branch
      %129 = sbr.rel (0) target = $region25
    $region24: #{forward.37} parent=1 // pred_region
      _
    $region25: #{forward.37} parent=1 // pred_fallthru
      _
    // Predicated region
    $region26: #{forward.37} parent=1 // pred_check
      _
    $region27: #{forward.37} parent=1 // pred_check_branch
      %131 = sbr.rel (0) target = $region29
    $region28: #{forward.37} parent=1 // pred_region
      %132 = dma.done [#allocation3], 512
    $region29: #{forward.37} parent=1 // pred_fallthru
      _
    // Predicated region
    $region30: #{forward.37} parent=1 // pred_check
      _
    $region31: #{forward.37} parent=1 // pred_check_branch
      %134 = sbr.rel (0) target = $region33
    $region32: #{forward.37} parent=1 // pred_region
      _
    $region33: #{forward.37} parent=1 // pred_fallthru
      _
    %135 = vsyncpa [#allocation3], 1

// kernel: forward.29
$region0: #{forward.29}
  #allocation0 [shape = 'u32[]', space=smem, size = 0x4, offset = 0x4, fixed_abs, tag = 'smem constant byte address 0x4 - core index']
  #allocation1 [shape = 'u32[144,128]{1,0:T(1,128)}', space=vmem, size = 0x12000, scoped, tag = 'internal scratch']
  #allocation2 [shape = 'f32[32,64]{1,0:T(8,128)}', space=vmem, size = 0x4000, scoped, tag = 'scratch operand']
  %s0 = inlined_call_operand.vmem [shape: bf16[32,128], index: 0, kind: input, shape index: {}]
  %s1 = inlined_call_operand.vmem [shape: bf16[128,64], index: 1, kind: input, shape index: {}]
  %s2 = inlined_call_operand.vmem [shape: f32[1,64], index: 2, kind: input, shape index: {}]
  %s3 = inlined_call_operand.vmem [shape: f32[32,64], index: 3, kind: output, shape index: {}]
  %s4 = sld [smem:[#allocation0]]
  $region30: #{forward.29} parent=0
    _
  %s6 = ssub.s32 1, %s4
  %s7 = scalar_select 0, %s6, %s4
  // Predicated region
  $region2: #{forward.29} parent=0 // pred_check
    _
  $region3: #{forward.29} parent=0 // pred_check_branch
    %9 = sbr.rel (0) target = $region5
  $region4: #{forward.29} parent=0 // pred_region
    _
  $region5: #{forward.29} parent=0 // pred_fallthru
    _
  // Predicated region
  $region6: #{forward.29} parent=0 // pred_check
    _
  $region7: #{forward.29} parent=0 // pred_check_branch
    %11 = sbr.rel (0) target = $region9
  $region8: #{forward.29} parent=0 // pred_region
    _
  $region9: #{forward.29} parent=0 // pred_fallthru
    _
  // Predicated region
  $region10: #{forward.29} parent=0 // pred_check
    _
  $region11: #{forward.29} parent=0 // pred_check_branch
    %13 = sbr.rel (0) target = $region13
  $region12: #{forward.29} parent=0 // pred_region
    _
  $region13: #{forward.29} parent=0 // pred_fallthru
    _
  %p15 = scmp.eq.s32.totalorder 0, 0
  // Predicated region
  $region14: #{forward.29} parent=0 // pred_check
    %p16 = pneg %p15
  $region15: #{forward.29} parent=0 // pred_check_branch
    %18 = sbr.rel (%p16) target = $region17
  $region16: #{forward.29} parent=0 // pred_region
    %vm19 = vcmask 523264
    %20 = vst.msk [vmem:[#allocation2] sm:$0xff] %vm19, 0.0
    %21 = vst.msk [vmem:[#allocation2 + $0x8] sm:$0xff] %vm19, 0.0
    %22 = vst.msk [vmem:[#allocation2 + $0x10] sm:$0xff] %vm19, 0.0
    %23 = vst.msk [vmem:[#allocation2 + $0x18] sm:$0xff] %vm19, 0.0
  $region17: #{forward.29} parent=0 // pred_fallthru
    _
  %v24 = vld [vmem:[#allocation2] sm:$0xff]
  %v25 = vld [vmem:[#allocation2 + $0x8] sm:$0xff]
  %v26 = vld [vmem:[#allocation2 + $0x10] sm:$0xff]
  %v27 = vld [vmem:[#allocation2 + $0x18] sm:$0xff]
  %v28 = vld [vmem:[%s0] sm:$0xf]
  %v29 = vld [vmem:[%s0 + $0x4] sm:$0xf]
  %v30 = vld [vmem:[%s0 + $0x8] sm:$0xf]
  %v31 = vld [vmem:[%s0 + $0xc] sm:$0xf]
  %v32 = vld [vmem:[%s1] sm:$0xf]
  %v33 = vld [vmem:[%s1 + $0x4] sm:$0xf]
  %v34 = vld [vmem:[%s1 + $0x8] sm:$0xf]
  %v35 = vld [vmem:[%s1 + $0xc] sm:$0xf]
  %v36 = vld [vmem:[%s1 + $0x10] sm:$0xf]
  %v37 = vld [vmem:[%s1 + $0x14] sm:$0xf]
  %v38 = vld [vmem:[%s1 + $0x18] sm:$0xf]
  %v39 = vld [vmem:[%s1 + $0x1c] sm:$0xf]
  %v40 = vld [vmem:[%s1 + $0x20] sm:$0xf]
  %v41 = vld [vmem:[%s1 + $0x24] sm:$0xf]
  %v42 = vld [vmem:[%s1 + $0x28] sm:$0xf]
  %v43 = vld [vmem:[%s1 + $0x2c] sm:$0xf]
  %v44 = vld [vmem:[%s1 + $0x30] sm:$0xf]
  %v45 = vld [vmem:[%s1 + $0x34] sm:$0xf]
  %v46 = vld [vmem:[%s1 + $0x38] sm:$0xf]
  %v47 = vld [vmem:[%s1 + $0x3c] sm:$0xf]
  %v52 = vunpack.c.l.b16 %v28
  %v53 = vunpack.c.l.b16 %v29
  %v54 = vunpack.c.l.b16 %v30
  %v55 = vunpack.c.l.b16 %v31
  %v56 = vpack.c.b16 %v53, %v52
  %v57 = vpack.c.b16 %v55, %v54
  %v76 = vunpack.c.l.b16 %v32
  %v77 = vunpack.c.l.b16 %v33
  %v78 = vunpack.c.l.b16 %v34
  %v79 = vunpack.c.l.b16 %v35
  %v80 = vunpack.c.l.b16 %v36
  %v81 = vunpack.c.l.b16 %v37
  %v82 = vunpack.c.l.b16 %v38
  %v83 = vunpack.c.l.b16 %v39
  %v84 = vunpack.c.l.b16 %v40
  %v85 = vunpack.c.l.b16 %v41
  %v86 = vunpack.c.l.b16 %v42
  %v87 = vunpack.c.l.b16 %v43
  %v88 = vunpack.c.l.b16 %v44
  %v89 = vunpack.c.l.b16 %v45
  %v90 = vunpack.c.l.b16 %v46
  %v91 = vunpack.c.l.b16 %v47
  %v92 = vpack.c.b16 %v77, %v76
  %v93 = vpack.c.b16 %v79, %v78
  %v94 = vpack.c.b16 %v81, %v80
  %v95 = vpack.c.b16 %v83, %v82
  %v96 = vpack.c.b16 %v85, %v84
  %v97 = vpack.c.b16 %v87, %v86
  %v98 = vpack.c.b16 %v89, %v88
  %v99 = vpack.c.b16 %v91, %v90
  %108 = vmatprep.subr.bf16.mxu0 0
  %109 = vmatpush1.bf16.msra.mxu0 %v92
  %110 = vmatprep.subr.bf16.mxu0 0
  %111 = vmatpush1.bf16.msra.mxu0 %v93
  %112 = vmatprep.subr.bf16.mxu0 0
  %113 = vmatpush1.bf16.msra.mxu0 %v94
  %114 = vmatprep.subr.bf16.mxu0 0
  %115 = vmatpush1.bf16.msra.mxu0 %v95
  %116 = vmatprep.subr.bf16.mxu0 0
  %117 = vmatpush1.bf16.msra.mxu0 %v96
  %118 = vmatprep.subr.bf16.mxu0 0
  %119 = vmatpush1.bf16.msra.mxu0 %v97
  %120 = vmatprep.subr.bf16.mxu0 0
  %121 = vmatpush1.bf16.msra.mxu0 %v98
  %122 = vmatprep.subr.bf16.mxu0 0
  %123 = vmatpush1.bf16.msra.mxu0 %v99
  %124 = vmatprep.subr.bf16.mxu0 0
  %125 = vmatpush1.bf16.msra.mxu0 0
  %126 = vmatprep.subr.bf16.mxu0 0
  %127 = vmatpush1.bf16.msra.mxu0 0
  %128 = vmatprep.subr.bf16.mxu0 0
  %129 = vmatpush1.bf16.msra.mxu0 0
  %130 = vmatprep.subr.bf16.mxu0 0
  %131 = vmatpush1.bf16.msra.mxu0 0
  %132 = vmatprep.subr.bf16.mxu0 0
  %133 = vmatpush1.bf16.msra.mxu0 0
  %134 = vmatprep.subr.bf16.mxu0 0
  %135 = vmatpush1.bf16.msra.mxu0 0
  %136 = vmatprep.subr.bf16.mxu0 0
  %137 = vmatpush1.bf16.msra.mxu0 0
  %138 = vmatprep.subr.bf16.mxu0 0
  %139 = vmatpush1.bf16.msra.mxu0 0
  %140 = vmatprep.mubr.bf16.mxu0 0
  %141 = vmatmul.mubr.bf16.gmra.mrb[0].mxu0 %v56
  %v142 = vpop.f32.mrb[0].mxu0
  %v143 = vadd.f32 0.0, %v142
  %v144 = vpop.f32.mrb[0].mxu0
  %v145 = vpop.f32.mrb[0].mxu0
  %v146 = vadd.f32 0.0, %v145
  %v147 = vpop.f32.mrb[0].mxu0
  %148 = vmatprep.mubr.bf16.mxu0 0
  %149 = vmatmul.mubr.bf16.gmra.mrb[0].mxu0 %v57
  %v150 = vpop.f32.mrb[0].mxu0
  %v151 = vadd.f32 0.0, %v150
  %v152 = vpop.f32.mrb[0].mxu0
  %v153 = vpop.f32.mrb[0].mxu0
  %v154 = vadd.f32 0.0, %v153
  %v155 = vpop.f32.mrb[0].mxu0
  %156 = vdwg.mxu0
  %v157 = vadd.f32 %v24, %v143
  %v158 = vadd.f32 %v25, %v146
  %v159 = vadd.f32 %v26, %v151
  %v160 = vadd.f32 %v27, %v154
  %vm161 = vcmask 523264
  %162 = vst.msk [vmem:[#allocation2] sm:$0xff] %vm161, %v157
  %163 = vst.msk [vmem:[#allocation2 + $0x8] sm:$0xff] %vm161, %v158
  %164 = vst.msk [vmem:[#allocation2 + $0x10] sm:$0xff] %vm161, %v159
  %165 = vst.msk [vmem:[#allocation2 + $0x18] sm:$0xff] %vm161, %v160
  // Predicated region
  $region18: #{forward.29} parent=0 // pred_check
    %p166 = pneg %p15
  $region19: #{forward.29} parent=0 // pred_check_branch
    %168 = sbr.rel (%p166) target = $region21
  $region20: #{forward.29} parent=0 // pred_region
    %v169 = vld [vmem:[#allocation2] sm:$0xff]
    %v170 = vld [vmem:[#allocation2 + $0x8] sm:$0xff]
    %v171 = vld [vmem:[#allocation2 + $0x10] sm:$0xff]
    %v172 = vld [vmem:[#allocation2 + $0x18] sm:$0xff]
    %v173 = vld [vmem:[%s2] sm:$0x1]
    %v175 = vlaneseq
    %v176 = vshrl.u32 %v175, 7
    %v177 = vsub.s32 0, %v176
    %v178 = vrot.slane %v173, %v177
    %v180 = vadd.f32 %v169, %v178
    %v181 = vadd.f32 %v170, %v178
    %v182 = vadd.f32 %v171, %v178
    %v183 = vadd.f32 %v172, %v178
    %184 = vst.msk [vmem:[%s3] sm:$0xff] %vm161, %v180
    %185 = vst.msk [vmem:[%s3 + $0x8] sm:$0xff] %vm161, %v181
    %186 = vst.msk [vmem:[%s3 + $0x10] sm:$0xff] %vm161, %v182
    %187 = vst.msk [vmem:[%s3 + $0x18] sm:$0xff] %vm161, %v183
  $region21: #{forward.29} parent=0 // pred_fallthru
    _
  // Predicated region
  $region22: #{forward.29} parent=0 // pred_check
    _
  $region23: #{forward.29} parent=0 // pred_check_branch
    %189 = sbr.rel (0) target = $region25
  $region24: #{forward.29} parent=0 // pred_region
    _
  $region25: #{forward.29} parent=0 // pred_fallthru
    _
  // Predicated region
  $region26: #{forward.29} parent=0 // pred_check
    _
  $region27: #{forward.29} parent=0 // pred_check_branch
    %191 = sbr.rel (0) target = $region29
  $region28: #{forward.29} parent=0 // pred_region
    _
  $region29: #{forward.29} parent=0 // pred_fallthru
    _

// kernel: forward.39
$region0: #{forward.39}
  #allocation0 [shape = 'u32[]', space=smem, size = 0x4, offset = 0x4, fixed_abs, tag = 'smem constant byte address 0x4 - core index']
  #allocation1 [shape = 'u32[144,128]{1,0:T(1,128)}', space=vmem, size = 0x12000, scoped, tag = 'internal scratch']
  #allocation2 [shape = 'f32[2,300]{1,0:T(2,128)}', space=vmem, size = 0xc00, scoped, tag = 'scratch operand']
  %s0 = inlined_call_operand.vmem [shape: bf16[2,64], index: 0, kind: input, shape index: {}]
  %s1 = inlined_call_operand.vmem [shape: bf16[64,300], index: 1, kind: input, shape index: {}]
  %s2 = inlined_call_operand.vmem [shape: f32[1,300], index: 2, kind: input, shape index: {}]
  %s3 = inlined_call_operand.hbm [shape: f32[2,300], index: 3, kind: output, shape index: {}]
  %s4 = sld [smem:[#allocation0]]
  $region30: #{forward.39} parent=0
    _
  %s6 = ssub.s32 1, %s4
  %s7 = scalar_select 0, %s6, %s4
  $region1: #{forward.39} parent=0
    #allocation3 [shape = 'u8[3072]{0}', space=vmem, size = 0xc00, scoped, tag = 'output window, operand 0, single buffered']
    #allocation4 [shape = 's32[1]{0}', space=sflag, size = 0x4, scoped, tag = 'scoped memory for forward.39']
    %8 = vsyncpa [#allocation4], 0
    // Predicated region
    $region2: #{forward.39} parent=1 // pred_check
      _
    $region3: #{forward.39} parent=1 // pred_check_branch
      %10 = sbr.rel (0) target = $region5
    $region4: #{forward.39} parent=1 // pred_region
      _
    $region5: #{forward.39} parent=1 // pred_fallthru
      _
    // Predicated region
    $region6: #{forward.39} parent=1 // pred_check
      _
    $region7: #{forward.39} parent=1 // pred_check_branch
      %12 = sbr.rel (0) target = $region9
    $region8: #{forward.39} parent=1 // pred_region
      _
    $region9: #{forward.39} parent=1 // pred_fallthru
      _
    // Predicated region
    $region10: #{forward.39} parent=1 // pred_check
      _
    $region11: #{forward.39} parent=1 // pred_check_branch
      %14 = sbr.rel (0) target = $region13
    $region12: #{forward.39} parent=1 // pred_region
      _
    $region13: #{forward.39} parent=1 // pred_fallthru
      _
    %p16 = scmp.eq.s32.totalorder 0, 0
    // Predicated region
    $region14: #{forward.39} parent=1 // pred_check
      %p17 = pneg %p16
    $region15: #{forward.39} parent=1 // pred_check_branch
      %19 = sbr.rel (%p17) target = $region17
    $region16: #{forward.39} parent=1 // pred_region
      %vm20 = vcmask 1041408
      %vm21 = vcmask 1043458
      %vm22 = vmor %vm21, %vm20
      %vm23 = vcmask 357380
      %vm24 = vmor %vm23, %vm22
      %25 = vst.msk [vmem:[#allocation2] sm:$0x3f] %vm24, 0.0
    $region17: #{forward.39} parent=1 // pred_fallthru
      _
    %v26 = vld [vmem:[#allocation2] sm:$0x3f]
    %v27 = vld [vmem:[%s0] sm:$0x1]
    %v28 = vld [vmem:[%s1] sm:$0xff]
    %v29 = vld [vmem:[%s1 + $0x8] sm:$0xf]
    %v30 = vld [vmem:[%s1 + $0xc] sm:$0xff]
    %v31 = vld [vmem:[%s1 + $0x14] sm:$0xf]
    %v32 = vld [vmem:[%s1 + $0x18] sm:$0xff]
    %v33 = vld [vmem:[%s1 + $0x20] sm:$0xf]
    %v34 = vld [vmem:[%s1 + $0x24] sm:$0xff]
    %v35 = vld [vmem:[%s1 + $0x2c] sm:$0xf]
    %v36 = vld [vmem:[%s1 + $0x30] sm:$0xff]
    %v37 = vld [vmem:[%s1 + $0x38] sm:$0xf]
    %v38 = vld [vmem:[%s1 + $0x3c] sm:$0xff]
    %v39 = vld [vmem:[%s1 + $0x44] sm:$0xf]
    %v40 = vld [vmem:[%s1 + $0x48] sm:$0xff]
    %v41 = vld [vmem:[%s1 + $0x50] sm:$0xf]
    %v42 = vld [vmem:[%s1 + $0x54] sm:$0xff]
    %v43 = vld [vmem:[%s1 + $0x5c] sm:$0xf]
    %v60 = vunpack.c.l.b16 %v28
    %v61 = vunpack.c.h.b16 %v28
    %v62 = vunpack.c.l.b16 %v29
    %v63 = vunpack.c.l.b16 %v30
    %v64 = vunpack.c.h.b16 %v30
    %v65 = vunpack.c.l.b16 %v31
    %v66 = vunpack.c.l.b16 %v32
    %v67 = vunpack.c.h.b16 %v32
    %v68 = vunpack.c.l.b16 %v33
    %v69 = vunpack.c.l.b16 %v34
    %v70 = vunpack.c.h.b16 %v34
    %v71 = vunpack.c.l.b16 %v35
    %v72 = vunpack.c.l.b16 %v36
    %v73 = vunpack.c.h.b16 %v36
    %v74 = vunpack.c.l.b16 %v37
    %v75 = vunpack.c.l.b16 %v38
    %v76 = vunpack.c.h.b16 %v38
    %v77 = vunpack.c.l.b16 %v39
    %v78 = vunpack.c.l.b16 %v40
    %v79 = vunpack.c.h.b16 %v40
    %v80 = vunpack.c.l.b16 %v41
    %v81 = vunpack.c.l.b16 %v42
    %v82 = vunpack.c.h.b16 %v42
    %v83 = vunpack.c.l.b16 %v43
    %v84 = vpack.c.b16 %v63, %v60
    %v85 = vpack.c.b16 %v64, %v61
    %v86 = vpack.c.b16 %v65, %v62
    %v87 = vpack.c.b16 %v69, %v66
    %v88 = vpack.c.b16 %v70, %v67
    %v89 = vpack.c.b16 %v71, %v68
    %v90 = vpack.c.b16 %v75, %v72
    %v91 = vpack.c.b16 %v76, %v73
    %v92 = vpack.c.b16 %v77, %v74
    %v93 = vpack.c.b16 %v81, %v78
    %v94 = vpack.c.b16 %v82, %v79
    %v95 = vpack.c.b16 %v83, %v80
    %vm108 = vcmask 523264
    %v110 = vsel %vm108, %v27, 0
    %112 = vmatprep.subr.bf16.mxu0 %v85
    %113 = vmatpush1.bf16.msra.mxu0 %v84
    %114 = vmatprep.subr.bf16.mxu0 %v88
    %115 = vmatpush1.bf16.msra.mxu0 %v87
    %116 = vmatprep.subr.bf16.mxu0 %v91
    %117 = vmatpush1.bf16.msra.mxu0 %v90
    %118 = vmatprep.subr.bf16.mxu0 %v94
    %119 = vmatpush1.bf16.msra.mxu0 %v93
    %120 = vmatprep.subr.bf16.mxu0 0
    %121 = vmatpush1.bf16.msra.mxu0 0
    %122 = vmatprep.subr.bf16.mxu0 0
    %123 = vmatpush1.bf16.msra.mxu0 0
    %124 = vmatprep.subr.bf16.mxu0 0
    %125 = vmatpush1.bf16.msra.mxu0 0
    %126 = vmatprep.subr.bf16.mxu0 0
    %127 = vmatpush1.bf16.msra.mxu0 0
    %128 = vmatprep.subr.bf16.mxu0 0
    %129 = vmatpush1.bf16.msra.mxu0 0
    %130 = vmatprep.subr.bf16.mxu0 0
    %131 = vmatpush1.bf16.msra.mxu0 0
    %132 = vmatprep.subr.bf16.mxu0 0
    %133 = vmatpush1.bf16.msra.mxu0 0
    %134 = vmatprep.subr.bf16.mxu0 0
    %135 = vmatpush1.bf16.msra.mxu0 0
    %136 = vmatprep.subr.bf16.mxu0 0
    %137 = vmatpush1.bf16.msra.mxu0 0
    %138 = vmatprep.subr.bf16.mxu0 0
    %139 = vmatpush1.bf16.msra.mxu0 0
    %140 = vmatprep.subr.bf16.mxu0 0
    %141 = vmatpush1.bf16.msra.mxu0 0
    %142 = vmatprep.subr.bf16.mxu0 0
    %143 = vmatpush1.bf16.msra.mxu0 0
    %144 = vmatprep.mubr.bf16.mxu0 0
    %145 = vmatmul.mubr.bf16.gmra.mrb[0].mxu0 %v110
    %v146 = vpop.f32.mrb[0].mxu0
    %v147 = vadd.f32 0.0, %v146
    %v148 = vpop.f32.mrb[0].mxu0
    %v149 = vadd.f32 0.0, %v148
    %v150 = vpop.f32.mrb[0].mxu0
    %v151 = vpop.f32.mrb[0].mxu0
    %152 = vdwg.mxu0
    %153 = vmatprep.subr.bf16.mxu0 0
    %154 = vmatpush1.bf16.msra.mxu0 %v86
    %155 = vmatprep.subr.bf16.mxu0 0
    %156 = vmatpush1.bf16.msra.mxu0 %v89
    %157 = vmatprep.subr.bf16.mxu0 0
    %158 = vmatpush1.bf16.msra.mxu0 %v92
    %159 = vmatprep.subr.bf16.mxu0 0
    %160 = vmatpush1.bf16.msra.mxu0 %v95
    %161 = vmatprep.subr.bf16.mxu0 0
    %162 = vmatpush1.bf16.msra.mxu0 0
    %163 = vmatprep.subr.bf16.mxu0 0
    %164 = vmatpush1.bf16.msra.mxu0 0
    %165 = vmatprep.subr.bf16.mxu0 0
    %166 = vmatpush1.bf16.msra.mxu0 0
    %167 = vmatprep.subr.bf16.mxu0 0
    %168 = vmatpush1.bf16.msra.mxu0 0
    %169 = vmatprep.subr.bf16.mxu0 0
    %170 = vmatpush1.bf16.msra.mxu0 0
    %171 = vmatprep.subr.bf16.mxu0 0
    %172 = vmatpush1.bf16.msra.mxu0 0
    %173 = vmatprep.subr.bf16.mxu0 0
    %174 = vmatpush1.bf16.msra.mxu0 0
    %175 = vmatprep.subr.bf16.mxu0 0
    %176 = vmatpush1.bf16.msra.mxu0 0
    %177 = vmatprep.subr.bf16.mxu0 0
    %178 = vmatpush1.bf16.msra.mxu0 0
    %179 = vmatprep.subr.bf16.mxu0 0
    %180 = vmatpush1.bf16.msra.mxu0 0
    %181 = vmatprep.subr.bf16.mxu0 0
    %182 = vmatpush1.bf16.msra.mxu0 0
    %183 = vmatprep.subr.bf16.mxu0 0
    %184 = vmatpush1.bf16.msra.mxu0 0
    %185 = vmatprep.mubr.bf16.mxu0 0
    %186 = vmatmul.mubr.bf16.gmra.mrb[0].mxu0 %v110
    %v187 = vpop.f32.mrb[0].mxu0
    %v188 = vadd.f32 0.0, %v187
    %v189 = vpop.f32.mrb[0].mxu0
    %v190 = vpop.f32.mrb[0].mxu0
    %v191 = vpop.f32.mrb[0].mxu0
    %192 = vdwg.mxu0
    %v196 = vcombine.low %v147, %v149
    %v198 = vunpack.c.l.s4 1983009808
    %v199 = vunpack.c.0.s8 %v198
    %v200 = vlaneseq
    %v201 = vshrl.u32 %v200, 7
    %v202 = vsub.s32 %v199, %v201
    %v203 = vrot.slane %v196, %v202
    %v205 = vunpack.c.l.s4 1983009808
    %v206 = vunpack.c.0.s8 %v205
    %v207 = vlaneseq
    %v208 = vshrl.u32 %v207, 7
    %v209 = vsub.s32 %v206, %v208
    %v210 = vrot.slane %v188, %v209
    %v211 = vcombine.low %v203, %v210
    %v213 = vadd.f32 %v26, %v211
    %vm214 = vcmask 1041408
    %vm215 = vcmask 1043458
    %vm216 = vmor %vm215, %vm214
    %vm217 = vcmask 357380
    %vm218 = vmor %vm217, %vm216
    %219 = vst.msk [vmem:[#allocation2] sm:$0x3f] %vm218, %v213
    // Predicated region
    $region18: #{forward.39} parent=1 // pred_check
      %p220 = pneg %p16
    $region19: #{forward.39} parent=1 // pred_check_branch
      %222 = sbr.rel (%p220) target = $region21
    $region20: #{forward.39} parent=1 // pred_region
      %v223 = vld [vmem:[#allocation2] sm:$0x3f]
      %v224 = vld [vmem:[%s2] sm:$0x7]
      %v226 = vlaneseq
      %v227 = vshrl.u32 %v226, 7
      %v228 = vsub.s32 0, %v227
      %v229 = vrot.slane %v224, %v228
      %v230 = vlaneseq
      %v231 = vshrl.u32 %v230, 7
      %v232 = vsub.s32 1, %v231
      %v233 = vrot.slane %v224, %v232
      %v234 = vlaneseq
      %v235 = vshrl.u32 %v234, 7
      %v236 = vsub.s32 2, %v235
      %v237 = vrot.slane %v224, %v236
      %v238 = vcombine.low %v229, %v233
      %v240 = vunpack.c.l.s4 1983009808
      %v241 = vunpack.c.0.s8 %v240
      %v242 = vlaneseq
      %v243 = vshrl.u32 %v242, 7
      %v244 = vsub.s32 %v241, %v243
      %v245 = vrot.slane %v238, %v244
      %v247 = vunpack.c.l.s4 1983009808
      %v248 = vunpack.c.0.s8 %v247
      %v249 = vlaneseq
      %v250 = vshrl.u32 %v249, 7
      %v251 = vsub.s32 %v248, %v250
      %v252 = vrot.slane %v237, %v251
      %v253 = vcombine.low %v245, %v252
      %v255 = vadd.f32 %v223, %v253
      %256 = vst.msk [vmem:[#allocation3] sm:$0x3f] %vm218, %v255
    $region21: #{forward.39} parent=1 // pred_fallthru
      _
    // Predicated region
    $region22: #{forward.39} parent=1 // pred_check
      _
    $region23: #{forward.39} parent=1 // pred_check_branch
      %258 = sbr.rel (0) target = $region25
    $region24: #{forward.39} parent=1 // pred_region
      %s260 = ssub.s32 96, 96
      %261 = vsyncadd [#allocation4], %s260
      %s263 = sshll.u32 [#allocation3], 4
      %s264 = int_to_ptr.vmem [resolvable:$true] %s263
      %266 = dma.vmem_to_hbm [thread:$0]  %s264, 96, %s3, [#allocation4]
    $region25: #{forward.39} parent=1 // pred_fallthru
      _
    // Predicated region
    $region26: #{forward.39} parent=1 // pred_check
      _
    $region27: #{forward.39} parent=1 // pred_check_branch
      %268 = sbr.rel (0) target = $region29
    $region28: #{forward.39} parent=1 // pred_region
      %269 = dma.done [#allocation4], 96
    $region29: #{forward.39} parent=1 // pred_fallthru
      _
    %270 = vsyncpa [#allocation4], 1

// kernel: forward.38
$region0: #{forward.38}
  #allocation0 [shape = 'u32[]', space=smem, size = 0x4, offset = 0x4, fixed_abs, tag = 'smem constant byte address 0x4 - core index']
  #allocation1 [shape = 'u32[144,128]{1,0:T(1,128)}', space=vmem, size = 0x12000, scoped, tag = 'internal scratch']
  #allocation2 [shape = 'f32[32,2]{1,0:T(8,128)}', space=vmem, size = 0x4000, scoped, tag = 'scratch operand']
  %s0 = inlined_call_operand.vmem [shape: bf16[32,64], index: 0, kind: input, shape index: {}]
  %s1 = inlined_call_operand.vmem [shape: bf16[64,2], index: 1, kind: input, shape index: {}]
  %s2 = inlined_call_operand.vmem [shape: f32[1,2], index: 2, kind: input, shape index: {}]
  %s3 = inlined_call_operand.vmem [shape: f32[32,2], index: 3, kind: output, shape index: {}]
  %s4 = sld [smem:[#allocation0]]
  $region30: #{forward.38} parent=0
    _
  %s6 = ssub.s32 1, %s4
  %s7 = scalar_select 0, %s6, %s4
  // Predicated region
  $region2: #{forward.38} parent=0 // pred_check
    _
  $region3: #{forward.38} parent=0 // pred_check_branch
    %9 = sbr.rel (0) target = $region5
  $region4: #{forward.38} parent=0 // pred_region
    _
  $region5: #{forward.38} parent=0 // pred_fallthru
    _
  // Predicated region
  $region6: #{forward.38} parent=0 // pred_check
    _
  $region7: #{forward.38} parent=0 // pred_check_branch
    %11 = sbr.rel (0) target = $region9
  $region8: #{forward.38} parent=0 // pred_region
    _
  $region9: #{forward.38} parent=0 // pred_fallthru
    _
  // Predicated region
  $region10: #{forward.38} parent=0 // pred_check
    _
  $region11: #{forward.38} parent=0 // pred_check_branch
    %13 = sbr.rel (0) target = $region13
  $region12: #{forward.38} parent=0 // pred_region
    _
  $region13: #{forward.38} parent=0 // pred_fallthru
    _
  %p15 = scmp.eq.s32.totalorder 0, 0
  // Predicated region
  $region14: #{forward.38} parent=0 // pred_check
    %p16 = pneg %p15
  $region15: #{forward.38} parent=0 // pred_check_branch
    %18 = sbr.rel (%p16) target = $region17
  $region16: #{forward.38} parent=0 // pred_region
    %vm19 = vcmask 15360
    %20 = vst.msk [vmem:[#allocation2] sm:$0xff] %vm19, 0.0
    %21 = vst.msk [vmem:[#allocation2 + $0x8] sm:$0xff] %vm19, 0.0
    %22 = vst.msk [vmem:[#allocation2 + $0x10] sm:$0xff] %vm19, 0.0
    %23 = vst.msk [vmem:[#allocation2 + $0x18] sm:$0xff] %vm19, 0.0
  $region17: #{forward.38} parent=0 // pred_fallthru
    _
  %v24 = vld [vmem:[#allocation2] sm:$0xff]
  %v25 = vld [vmem:[#allocation2 + $0x8] sm:$0xff]
  %v26 = vld [vmem:[#allocation2 + $0x10] sm:$0xff]
  %v27 = vld [vmem:[#allocation2 + $0x18] sm:$0xff]
  %v28 = vld [vmem:[%s0] sm:$0xf]
  %v29 = vld [vmem:[%s0 + $0x4] sm:$0xf]
  %v30 = vld [vmem:[%s0 + $0x8] sm:$0xf]
  %v31 = vld [vmem:[%s0 + $0xc] sm:$0xf]
  %v32 = vld [vmem:[%s1] sm:$0xf]
  %v33 = vld [vmem:[%s1 + $0x4] sm:$0xf]
  %v34 = vld [vmem:[%s1 + $0x8] sm:$0xf]
  %v35 = vld [vmem:[%s1 + $0xc] sm:$0xf]
  %v36 = vld [vmem:[%s1 + $0x10] sm:$0xf]
  %v37 = vld [vmem:[%s1 + $0x14] sm:$0xf]
  %v38 = vld [vmem:[%s1 + $0x18] sm:$0xf]
  %v39 = vld [vmem:[%s1 + $0x1c] sm:$0xf]
  %v44 = vunpack.c.l.b16 %v28
  %v45 = vunpack.c.l.b16 %v29
  %v46 = vunpack.c.l.b16 %v30
  %v47 = vunpack.c.l.b16 %v31
  %v48 = vpack.c.b16 %v45, %v44
  %v49 = vpack.c.b16 %v47, %v46
  %v58 = vunpack.c.l.b16 %v32
  %v59 = vunpack.c.l.b16 %v33
  %v60 = vunpack.c.l.b16 %v34
  %v61 = vunpack.c.l.b16 %v35
  %v62 = vunpack.c.l.b16 %v36
  %v63 = vunpack.c.l.b16 %v37
  %v64 = vunpack.c.l.b16 %v38
  %v65 = vunpack.c.l.b16 %v39
  %v66 = vpack.c.b16 %v59, %v58
  %v67 = vpack.c.b16 %v61, %v60
  %v68 = vpack.c.b16 %v63, %v62
  %v69 = vpack.c.b16 %v65, %v64
  %vm74 = vcmask 523264
  %v76 = vsel %vm74, %v48, 0
  %v79 = vsel %vm74, %v49, 0
  %81 = vmatprep.subr.bf16.mxu0 0
  %82 = vmatpush1.bf16.msra.mxu0 %v66
  %83 = vmatprep.subr.bf16.mxu0 0
  %84 = vmatpush1.bf16.msra.mxu0 %v67
  %85 = vmatprep.subr.bf16.mxu0 0
  %86 = vmatpush1.bf16.msra.mxu0 %v68
  %87 = vmatprep.subr.bf16.mxu0 0
  %88 = vmatpush1.bf16.msra.mxu0 %v69
  %89 = vmatprep.subr.bf16.mxu0 0
  %90 = vmatpush1.bf16.msra.mxu0 0
  %91 = vmatprep.subr.bf16.mxu0 0
  %92 = vmatpush1.bf16.msra.mxu0 0
  %93 = vmatprep.subr.bf16.mxu0 0
  %94 = vmatpush1.bf16.msra.mxu0 0
  %95 = vmatprep.subr.bf16.mxu0 0
  %96 = vmatpush1.bf16.msra.mxu0 0
  %97 = vmatprep.subr.bf16.mxu0 0
  %98 = vmatpush1.bf16.msra.mxu0 0
  %99 = vmatprep.subr.bf16.mxu0 0
  %100 = vmatpush1.bf16.msra.mxu0 0
  %101 = vmatprep.subr.bf16.mxu0 0
  %102 = vmatpush1.bf16.msra.mxu0 0
  %103 = vmatprep.subr.bf16.mxu0 0
  %104 = vmatpush1.bf16.msra.mxu0 0
  %105 = vmatprep.subr.bf16.mxu0 0
  %106 = vmatpush1.bf16.msra.mxu0 0
  %107 = vmatprep.subr.bf16.mxu0 0
  %108 = vmatpush1.bf16.msra.mxu0 0
  %109 = vmatprep.subr.bf16.mxu0 0
  %110 = vmatpush1.bf16.msra.mxu0 0
  %111 = vmatprep.subr.bf16.mxu0 0
  %112 = vmatpush1.bf16.msra.mxu0 0
  %113 = vmatprep.mubr.bf16.mxu0 0
  %114 = vmatmul.mubr.bf16.gmra.mrb[0].mxu0 %v76
  %v115 = vpop.f32.mrb[0].mxu0
  %v116 = vadd.f32 0.0, %v115
  %v117 = vpop.f32.mrb[0].mxu0
  %v118 = vpop.f32.mrb[0].mxu0
  %v119 = vadd.f32 0.0, %v118
  %v120 = vpop.f32.mrb[0].mxu0
  %121 = vmatprep.mubr.bf16.mxu0 0
  %122 = vmatmul.mubr.bf16.gmra.mrb[0].mxu0 %v79
  %v123 = vpop.f32.mrb[0].mxu0
  %v124 = vadd.f32 0.0, %v123
  %v125 = vpop.f32.mrb[0].mxu0
  %v126 = vpop.f32.mrb[0].mxu0
  %v127 = vadd.f32 0.0, %v126
  %v128 = vpop.f32.mrb[0].mxu0
  %129 = vdwg.mxu0
  %v130 = vadd.f32 %v24, %v116
  %v131 = vadd.f32 %v25, %v119
  %v132 = vadd.f32 %v26, %v124
  %v133 = vadd.f32 %v27, %v127
  %vm134 = vcmask 15360
  %135 = vst.msk [vmem:[#allocation2] sm:$0xff] %vm134, %v130
  %136 = vst.msk [vmem:[#allocation2 + $0x8] sm:$0xff] %vm134, %v131
  %137 = vst.msk [vmem:[#allocation2 + $0x10] sm:$0xff] %vm134, %v132
  %138 = vst.msk [vmem:[#allocation2 + $0x18] sm:$0xff] %vm134, %v133
  // Predicated region
  $region18: #{forward.38} parent=0 // pred_check
    %p139 = pneg %p15
  $region19: #{forward.38} parent=0 // pred_check_branch
    %141 = sbr.rel (%p139) target = $region21
  $region20: #{forward.38} parent=0 // pred_region
    %v142 = vld [vmem:[#allocation2] sm:$0xff]
    %v143 = vld [vmem:[#allocation2 + $0x8] sm:$0xff]
    %v144 = vld [vmem:[#allocation2 + $0x10] sm:$0xff]
    %v145 = vld [vmem:[#allocation2 + $0x18] sm:$0xff]
    %v146 = vld [vmem:[%s2] sm:$0x1]
    %v148 = vlaneseq
    %v149 = vshrl.u32 %v148, 7
    %v150 = vsub.s32 0, %v149
    %v151 = vrot.slane %v146, %v150
    %v153 = vadd.f32 %v142, %v151
    %v154 = vadd.f32 %v143, %v151
    %v155 = vadd.f32 %v144, %v151
    %v156 = vadd.f32 %v145, %v151
    %157 = vst.msk [vmem:[%s3] sm:$0xff] %vm134, %v153
    %158 = vst.msk [vmem:[%s3 + $0x8] sm:$0xff] %vm134, %v154
    %159 = vst.msk [vmem:[%s3 + $0x10] sm:$0xff] %vm134, %v155
    %160 = vst.msk [vmem:[%s3 + $0x18] sm:$0xff] %vm134, %v156
  $region21: #{forward.38} parent=0 // pred_fallthru
    _
  // Predicated region
  $region22: #{forward.38} parent=0 // pred_check
    _
  $region23: #{forward.38} parent=0 // pred_check_branch
    %162 = sbr.rel (0) target = $region25
  $region24: #{forward.38} parent=0 // pred_region
    _
  $region25: #{forward.38} parent=0 // pred_fallthru
    _
  // Predicated region
  $region26: #{forward.38} parent=0 // pred_check
    _
  $region27: #{forward.38} parent=0 // pred_check_branch
    %164 = sbr.rel (0) target = $region29
  $region28: #{forward.38} parent=0 // pred_region
    _
  $region29: #{forward.38} parent=0 // pred_fallthru
    _

</llo_original>
